<compile_context>
chip_gen: v7x
topology: tpu7x:2x2x1
jax: 0.10.0
libtpu: 0.0.40
codegen_flags: <defaults>
</compile_context>

<pallas_src>
import functools

import jax
import jax.numpy as jnp
from jax.experimental import pallas as pl
from jax.experimental.pallas import tpu as pltpu


# ---------------------------------------------------------------------------
# Kernels
# ---------------------------------------------------------------------------
def _conv_stats_kernel(*refs, H, W, Cp, KH, KW, with_input_affine,
                       compute_dtype):
    """3x3 'SAME' conv (+ optional fused BN-affine+ReLU on the *input*) plus
    per-tile BatchNorm partial statistics.

    refs layout (set by the wrapper):
      with_input_affine: (x, scale, shift, w, b,  y, stats,  xpad_scratch)
      otherwise:         (x, w, b,                y, stats,  xpad_scratch)
    """
    if with_input_affine:
        (x_ref, scale_ref, shift_ref, w_ref, b_ref,
         y_ref, stats_ref, xpad_ref) = refs
    else:
        x_ref, w_ref, b_ref, y_ref, stats_ref, xpad_ref = refs

    x = x_ref[0].astype(jnp.float32)                      # (H, W, Cp)
    if with_input_affine:
        # Fused BatchNorm affine + ReLU of the previous ConvBlock (so the
        # normalized activation never hits HBM).
        x = jnp.maximum(x * scale_ref[...] + shift_ref[...], 0.0)

    ph, pw = (KH - 1) // 2, (KW - 1) // 2

    # Zero the halo border once; the scratch persists across grid steps and
    # only the interior is rewritten each step.
    @pl.when(pl.program_id(0) == 0)
    def _():
        xpad_ref[...] = jnp.zeros_like(xpad_ref)

    # 'SAME' zero padding inside VMEM scratch (no HBM pad copy).
    xpad_ref[ph:ph + H, pw:pw + W, :] = x

    # Conv as KH*KW shifted (H*W, Cp) x (Cp, Cp) matmuls on the MXU.  With Cp
    # a multiple of 128 both the contraction and the output are lane-dense.
    acc = jnp.zeros((H * W, Cp), jnp.float32)
    for kh in range(KH):
        for kw in range(KW):
            patch = xpad_ref[kh:kh + H, kw:kw + W, :].reshape(H * W, Cp)
            acc = acc + jnp.dot(patch.astype(compute_dtype),
                                w_ref[kh, kw],
                                preferred_element_type=jnp.float32)
    y = acc + b_ref[...]                                   # conv bias, (1, Cp)

    # Per-tile BatchNorm partials in the same pass (sum, sum of squares).
    ssum = jnp.sum(y, axis=0, keepdims=True)               # (1, Cp)
    ssq = jnp.sum(y * y, axis=0, keepdims=True)            # (1, Cp)
    stats_ref[...] = jnp.concatenate([ssum, ssq], axis=0)[None]

    y_ref[...] = y.reshape(1, H, W, Cp).astype(y_ref.dtype)


def _bn_residual_relu_kernel(y_ref, scale_ref, shift_ref, res_ref, out_ref):
    """Final epilogue: BN affine + residual add + ReLU, one store per tile."""
    y = y_ref[...].astype(jnp.float32)                     # (1, H, W, Cp)
    out = y * scale_ref[...] + shift_ref[...] + res_ref[...].astype(jnp.float32)
    out_ref[...] = jnp.maximum(out, 0.0).astype(out_ref.dtype)


# ---------------------------------------------------------------------------
# pallas_call wrappers
# ---------------------------------------------------------------------------
_VMEM_LIMIT = 32 * 1024 * 1024


def _conv_bn_stats_call(x, w, b, scale=None, shift=None, *, out_dtype):
    """One ConvBlock's conv (optionally fused with the previous block's
    BN+ReLU).  Returns (raw conv output, per-tile BN partial stats)."""
    N, H, W, Cp = x.shape
    KH, KW = int(w.shape[0]), int(w.shape[1])
    with_affine = scale is not None

    kern = functools.partial(
        _conv_stats_kernel, H=H, W=W, Cp=Cp, KH=KH, KW=KW,
        with_input_affine=with_affine, compute_dtype=w.dtype)

    act_spec = pl.BlockSpec((1, H, W, Cp), lambda i: (i, 0, 0, 0))
    row_spec = pl.BlockSpec((1, Cp), lambda i: (0, 0))
    w_spec = pl.BlockSpec((KH, KW, Cp, Cp), lambda i: (0, 0, 0, 0))
    stats_spec = pl.BlockSpec((1, 2, Cp), lambda i: (i, 0, 0))

    in_specs = [act_spec]
    inputs = [x]
    if with_affine:
        in_specs += [row_spec, row_spec]
        inputs += [scale, shift]
    in_specs += [w_spec, row_spec]
    inputs += [w, b]

    grid_spec = pltpu.PrefetchScalarGridSpec(
        num_scalar_prefetch=0,
        grid=(N,),
        in_specs=in_specs,
        out_specs=[act_spec, stats_spec],
        scratch_shapes=[pltpu.VMEM((H + KH - 1, W + KW - 1, Cp), jnp.float32)],
    )

    y, stats = pl.pallas_call(
        kern,
        grid_spec=grid_spec,
        out_shape=(jax.ShapeDtypeStruct((N, H, W, Cp), out_dtype),
                   jax.ShapeDtypeStruct((N, 2, Cp), jnp.float32)),
        compiler_params=pltpu.CompilerParams(
            dimension_semantics=("parallel",),
            vmem_limit_bytes=_VMEM_LIMIT),
    )(*inputs)
    return y, stats


def _bn_residual_relu_call(y, scale, shift, residual, *, out_dtype):
    N, H, W, Cp = y.shape
    act_spec = pl.BlockSpec((1, H, W, Cp), lambda i: (i, 0, 0, 0))
    row_spec = pl.BlockSpec((1, Cp), lambda i: (0, 0))

    grid_spec = pltpu.PrefetchScalarGridSpec(
        num_scalar_prefetch=0,
        grid=(N,),
        in_specs=[act_spec, row_spec, row_spec, act_spec],
        out_specs=act_spec,
    )
    return pl.pallas_call(
        _bn_residual_relu_kernel,
        grid_spec=grid_spec,
        out_shape=jax.ShapeDtypeStruct((N, H, W, Cp), out_dtype),
        compiler_params=pltpu.CompilerParams(
            dimension_semantics=("parallel",),
            vmem_limit_bytes=_VMEM_LIMIT),
    )(y, scale, shift, residual)


def _batchnorm_affine(stats, count, gamma, beta, eps):
    """(tiles, 2, Cp) partial [sum, sum_sq] -> fused per-channel scale/shift."""
    total = jnp.sum(stats, axis=0)                         # (2, Cp)
    mean = total[0] / count
    var = jnp.maximum(total[1] / count - mean * mean, 0.0)
    inv = jax.lax.rsqrt(var + eps)
    scale = gamma.reshape(-1) * inv
    shift = beta.reshape(-1) - mean * scale
    cp = scale.shape[0]
    return (scale.reshape(1, cp).astype(jnp.float32),
            shift.reshape(1, cp).astype(jnp.float32))


# ---------------------------------------------------------------------------
# ResidualBlock forward
# ---------------------------------------------------------------------------
def residual_block_forward(x_nchw, params, eps=1e-5,
                           compute_dtype=jnp.float32):
    """Pallas implementation of ResidualBlock.forward.  Input/output NCHW."""
    N, C, H, W = x_nchw.shape
    Cp = max(128, ((C + 127) // 128) * 128)                # lane-dense channels
    cpad = Cp - C
    count = float(N * H * W)

    x = jnp.transpose(x_nchw, (0, 2, 3, 1))                # NCHW -> NHWC
    x = jnp.pad(x, ((0, 0), (0, 0), (0, 0), (0, cpad)))

    def prep_w(w):                                         # (KH,KW,C,C)->(..,Cp,Cp)
        return jnp.pad(w, ((0, 0), (0, 0), (0, cpad), (0, cpad))
                       ).astype(compute_dtype)

    def prep_vec(v):                                       # (C,) -> (1, Cp)
        return jnp.pad(v, (0, cpad)).reshape(1, Cp).astype(jnp.float32)

    w1, b1 = prep_w(params["w1"]), prep_vec(params["b1"])
    w2, b2 = prep_w(params["w2"]), prep_vec(params["b2"])
    g1, be1 = prep_vec(params["g1"]), prep_vec(params["be1"])
    g2, be2 = prep_vec(params["g2"]), prep_vec(params["be2"])

    # Block 1 conv + BN partial stats.
    y1, st1 = _conv_bn_stats_call(x, w1, b1, out_dtype=compute_dtype)
    sc1, sh1 = _batchnorm_affine(st1, count, g1, be1, eps)

    # Block 1 BN+ReLU fused into block 2 conv (h never hits HBM).
    y2, st2 = _conv_bn_stats_call(y1, w2, b2, scale=sc1, shift=sh1,
                                  out_dtype=compute_dtype)
    sc2, sh2 = _batchnorm_affine(st2, count, g2, be2, eps)

    # Block 2 BN + residual add + ReLU.
    out = _bn_residual_relu_call(y2, sc2, sh2, x, out_dtype=x_nchw.dtype)

    out = out[..., :C]
    return jnp.transpose(out, (0, 3, 1, 2))                # NHWC -> NCHW


# ---------------------------------------------------------------------------
# Pure-JAX reference (module semantics: training-mode BatchNorm2d, eps=1e-5)
# ---------------------------------------------------------------------------
def ref_forward(x_nchw, p, eps=1e-5):
    x = jnp.transpose(x_nchw, (0, 2, 3, 1))

    def block(inp, w, b, g, be, res, relu_after_bn):
        y = jax.lax.conv_general_dilated(
            inp, w, (1, 1), "SAME",
            dimension_numbers=("NHWC", "HWIO", "NHWC")) + b
        mu = jnp.mean(y, axis=(0, 1, 2), keepdims=True)
        var = jnp.mean((y - mu) ** 2, axis=(0, 1, 2), keepdims=True)
        y = (y - mu) * jax.lax.rsqrt(var + eps) * g + be
        if relu_after_bn:
            y = jax.nn.relu(y)
        return y if res is None else jax.nn.relu(y + res)

    h = block(x, p["w1"], p["b1"], p["g1"], p["be1"], None, True)
    o = block(h, p["w2"], p["b2"], p["g2"], p["be2"], x, False)
    return jnp.transpose(o, (0, 3, 1, 2))


def init_params(key, C, K=3):
    """Deterministic synthetic parameters (Conv2d-style uniform init, BN
    gamma=1 / beta=0 as in nn.BatchNorm2d.__init__)."""
    k = jax.random.split(key, 4)
    bound = 1.0 / float(jnp.sqrt(C * K * K))

    def conv_init(kw_key, kb_key):
        w = jax.random.uniform(kw_key, (K, K, C, C), jnp.float32, -bound, bound)
        b = jax.random.uniform(kb_key, (C,), jnp.float32, -bound, bound)
        return w, b

    w1, b1 = conv_init(k[0], k[1])
    w2, b2 = conv_init(k[2], k[3])
    ones = jnp.ones((C,), jnp.float32)
    zeros = jnp.zeros((C,), jnp.float32)
    return dict(w1=w1, b1=b1, g1=ones, be1=zeros,
                w2=w2, b2=b2, g2=ones, be2=zeros)


if __name__ == "__main__":
    key = jax.random.PRNGKey(0)
    kx, kp = jax.random.split(key)

    N, C, H, W = 2, 4, 16, 16                 # ResidualBlock(channels=4, 3, 1, 1)
    x = jax.random.normal(kx, (N, C, H, W), jnp.float32)   # NCHW like PyTorch
    params = init_params(kp, C, K=3)

    ref = jax.block_until_ready(ref_forward(x, params))

    # float32 MXU operands: faithful to the PyTorch module's numerics.
    fwd_f32 = jax.jit(functools.partial(residual_block_forward,
                                        compute_dtype=jnp.float32))
    out = jax.block_until_ready(fwd_f32(x, params))
    assert out.shape == (N, C, H, W)
    err_f32 = float(jnp.max(jnp.abs(out - ref)))
    assert jnp.isfinite(out).all()
    # Tolerance covers MXU f32 decomposition-pass differences vs. XLA's conv.
    assert err_f32 < 2e-2, err_f32

    # bfloat16 MXU-operand variant (perf option: 2x MXU throughput on v6e/v7x,
    # half the HBM traffic for the intermediate activation).
    fwd_bf16 = jax.jit(functools.partial(residual_block_forward,
                                         compute_dtype=jnp.bfloat16))
    out_bf16 = jax.block_until_ready(fwd_bf16(x, params))
    assert out_bf16.shape == (N, C, H, W)
    err_bf16 = float(jnp.max(jnp.abs(out_bf16 - ref)))
    assert jnp.isfinite(out_bf16).all()
    assert err_bf16 < 2.5e-1, err_bf16     # loose sanity bound for bf16 operands

    print("KERNEL_OK")
</pallas_src>

<mosaic_0001>
module attributes {stable_mosaic.version = 11 : i64} {
  func.func @_conv_stats_kernel(%arg0: i32, %arg1: memref<1x16x16x128xf32, #tpu.memory_space<vmem>>, %arg2: memref<1x128xf32, #tpu.memory_space<vmem>>, %arg3: memref<1x128xf32, #tpu.memory_space<vmem>>, %arg4: memref<3x3x128x128xf32, #tpu.memory_space<vmem>>, %arg5: memref<1x128xf32, #tpu.memory_space<vmem>>, %arg6: memref<1x16x16x128xf32, #tpu.memory_space<vmem>>, %arg7: memref<1x2x128xf32, #tpu.memory_space<vmem>>, %arg8: memref<18x18x128xf32, #tpu.memory_space<vmem>>) attributes {dimension_semantics = [#tpu.dimension_semantics<parallel>], iteration_bounds = array<i64: 2>, scalar_prefetch = 0 : i64, scratch_operands = 1 : i64, tpu.core_type = #tpu.core_type<tc>, window_params = [{transform_indices = @transform_0, window_bounds = array<i64: 1, 16, 16, 128>}, {pipeline_mode = #tpu.pipeline_mode<synchronous>, transform_indices = @transform_1, window_bounds = array<i64: 1, 128>}, {pipeline_mode = #tpu.pipeline_mode<synchronous>, transform_indices = @transform_2, window_bounds = array<i64: 1, 128>}, {pipeline_mode = #tpu.pipeline_mode<synchronous>, transform_indices = @transform_3, window_bounds = array<i64: 3, 3, 128, 128>}, {pipeline_mode = #tpu.pipeline_mode<synchronous>, transform_indices = @transform_4, window_bounds = array<i64: 1, 128>}, {transform_indices = @transform_5, window_bounds = array<i64: 1, 16, 16, 128>}, {transform_indices = @transform_6, window_bounds = array<i64: 1, 2, 128>}]} {
    %c0 = arith.constant 0 : index
    %c0_0 = arith.constant 0 : index
    %c0_1 = arith.constant 0 : index
    %c0_2 = arith.constant 0 : index
    %0 = vector.load %arg1[%c0, %c0_0, %c0_1, %c0_2] : memref<1x16x16x128xf32, #tpu.memory_space<vmem>>, vector<1x16x16x128xf32>
    %1 = vector.shape_cast %0 : vector<1x16x16x128xf32> to vector<16x16x128xf32>
    %c0_3 = arith.constant 0 : index
    %c0_4 = arith.constant 0 : index
    %2 = vector.load %arg2[%c0_3, %c0_4] : memref<1x128xf32, #tpu.memory_space<vmem>>, vector<1x128xf32>
    %3 = vector.shape_cast %2 : vector<1x128xf32> to vector<1x1x128xf32>
    %4 = vector.broadcast %3 : vector<1x1x128xf32> to vector<16x16x128xf32>
    %5 = arith.mulf %1, %4 : vector<16x16x128xf32>
    %c0_5 = arith.constant 0 : index
    %c0_6 = arith.constant 0 : index
    %6 = vector.load %arg3[%c0_5, %c0_6] : memref<1x128xf32, #tpu.memory_space<vmem>>, vector<1x128xf32>
    %7 = vector.shape_cast %6 : vector<1x128xf32> to vector<1x1x128xf32>
    %8 = vector.broadcast %7 : vector<1x1x128xf32> to vector<16x16x128xf32>
    %9 = arith.addf %5, %8 : vector<16x16x128xf32>
    %cst = arith.constant 0.000000e+00 : f32
    %10 = vector.broadcast %cst : f32 to vector<16x16x128xf32>
    %11 = arith.maximumf %9, %10 : vector<16x16x128xf32>
    %c0_i32 = arith.constant 0 : i32
    %12 = arith.cmpi eq, %arg0, %c0_i32 : i32
    %13 = arith.extui %12 : i1 to i32
    %c0_i32_7 = arith.constant 0 : i32
    %14 = arith.cmpi ne, %13, %c0_i32_7 : i32
    scf.if %14 {
      %cst_93 = arith.constant 0.000000e+00 : f32
      %84 = vector.broadcast %cst_93 : f32 to vector<18x18x128xf32>
      %c0_94 = arith.constant 0 : index
      %c0_95 = arith.constant 0 : index
      %c0_96 = arith.constant 0 : index
      %85 = vector.load %arg8[%c0_94, %c0_95, %c0_96] : memref<18x18x128xf32, #tpu.memory_space<vmem>>, vector<18x18x128xf32>
      tpu.vector_store %arg8[%c0_94, %c0_95, %c0_96], %84 {strides = array<i32>} : memref<18x18x128xf32, #tpu.memory_space<vmem>>, vector<18x18x128xf32>,
    } else {
    }
    %c1 = arith.constant 1 : index
    %c1_8 = arith.constant 1 : index
    %c0_9 = arith.constant 0 : index
    %15 = vector.load %arg8[%c1, %c1_8, %c0_9] : memref<18x18x128xf32, #tpu.memory_space<vmem>>, vector<16x16x128xf32>
    tpu.vector_store %arg8[%c1, %c1_8, %c0_9], %11 {strides = array<i32>} : memref<18x18x128xf32, #tpu.memory_space<vmem>>, vector<16x16x128xf32>,
    %cst_10 = arith.constant 0.000000e+00 : f32
    %16 = vector.broadcast %cst_10 : f32 to vector<256x128xf32>
    %c0_11 = arith.constant 0 : index
    %c0_12 = arith.constant 0 : index
    %c0_13 = arith.constant 0 : index
    %17 = vector.load %arg8[%c0_11, %c0_12, %c0_13] : memref<18x18x128xf32, #tpu.memory_space<vmem>>, vector<16x16x128xf32>
    %18 = vector.shape_cast %17 : vector<16x16x128xf32> to vector<256x128xf32>
    %c0_14 = arith.constant 0 : index
    %c0_15 = arith.constant 0 : index
    %c0_16 = arith.constant 0 : index
    %c0_17 = arith.constant 0 : index
    %19 = vector.load %arg4[%c0_14, %c0_15, %c0_16, %c0_17] : memref<3x3x128x128xf32, #tpu.memory_space<vmem>>, vector<1x1x128x128xf32>
    %20 = vector.shape_cast %19 : vector<1x1x128x128xf32> to vector<128x128xf32>
    %cst_18 = arith.constant dense<0.000000e+00> : vector<256x128xf32>
    %21 = tpu.matmul %18, %20, %cst_18 {dimension_numbers = #tpu.dot_dimension_numbers<[1], [0], [0], [1], [0, 0, 1, 1], [], []>} : vector<256x128xf32>, vector<128x128xf32>, vector<256x128xf32> -> vector<256x128xf32>
    %22 = arith.addf %16, %21 : vector<256x128xf32>
    %c0_19 = arith.constant 0 : index
    %c1_20 = arith.constant 1 : index
    %c0_21 = arith.constant 0 : index
    %23 = vector.load %arg8[%c0_19, %c1_20, %c0_21] : memref<18x18x128xf32, #tpu.memory_space<vmem>>, vector<16x16x128xf32>
    %24 = vector.shape_cast %23 : vector<16x16x128xf32> to vector<256x128xf32>
    %c0_22 = arith.constant 0 : index
    %c1_23 = arith.constant 1 : index
    %c0_24 = arith.constant 0 : index
    %c0_25 = arith.constant 0 : index
    %25 = vector.load %arg4[%c0_22, %c1_23, %c0_24, %c0_25] : memref<3x3x128x128xf32, #tpu.memory_space<vmem>>, vector<1x1x128x128xf32>
    %26 = vector.shape_cast %25 : vector<1x1x128x128xf32> to vector<128x128xf32>
    %cst_26 = arith.constant dense<0.000000e+00> : vector<256x128xf32>
    %27 = tpu.matmul %24, %26, %cst_26 {dimension_numbers = #tpu.dot_dimension_numbers<[1], [0], [0], [1], [0, 0, 1, 1], [], []>} : vector<256x128xf32>, vector<128x128xf32>, vector<256x128xf32> -> vector<256x128xf32>
    %28 = arith.addf %22, %27 : vector<256x128xf32>
    %c0_27 = arith.constant 0 : index
    %c2 = arith.constant 2 : index
    %c0_28 = arith.constant 0 : index
    %29 = vector.load %arg8[%c0_27, %c2, %c0_28] : memref<18x18x128xf32, #tpu.memory_space<vmem>>, vector<16x16x128xf32>
    %30 = vector.shape_cast %29 : vector<16x16x128xf32> to vector<256x128xf32>
    %c0_29 = arith.constant 0 : index
    %c2_30 = arith.constant 2 : index
    %c0_31 = arith.constant 0 : index
    %c0_32 = arith.constant 0 : index
    %31 = vector.load %arg4[%c0_29, %c2_30, %c0_31, %c0_32] : memref<3x3x128x128xf32, #tpu.memory_space<vmem>>, vector<1x1x128x128xf32>
    %32 = vector.shape_cast %31 : vector<1x1x128x128xf32> to vector<128x128xf32>
    %cst_33 = arith.constant dense<0.000000e+00> : vector<256x128xf32>
    %33 = tpu.matmul %30, %32, %cst_33 {dimension_numbers = #tpu.dot_dimension_numbers<[1], [0], [0], [1], [0, 0, 1, 1], [], []>} : vector<256x128xf32>, vector<128x128xf32>, vector<256x128xf32> -> vector<256x128xf32>
    %34 = arith.addf %28, %33 : vector<256x128xf32>
    %c1_34 = arith.constant 1 : index
    %c0_35 = arith.constant 0 : index
    %c0_36 = arith.constant 0 : index
    %35 = vector.load %arg8[%c1_34, %c0_35, %c0_36] : memref<18x18x128xf32, #tpu.memory_space<vmem>>, vector<16x16x128xf32>
    %36 = vector.shape_cast %35 : vector<16x16x128xf32> to vector<256x128xf32>
    %c1_37 = arith.constant 1 : index
    %c0_38 = arith.constant 0 : index
    %c0_39 = arith.constant 0 : index
    %c0_40 = arith.constant 0 : index
    %37 = vector.load %arg4[%c1_37, %c0_38, %c0_39, %c0_40] : memref<3x3x128x128xf32, #tpu.memory_space<vmem>>, vector<1x1x128x128xf32>
    %38 = vector.shape_cast %37 : vector<1x1x128x128xf32> to vector<128x128xf32>
    %cst_41 = arith.constant dense<0.000000e+00> : vector<256x128xf32>
    %39 = tpu.matmul %36, %38, %cst_41 {dimension_numbers = #tpu.dot_dimension_numbers<[1], [0], [0], [1], [0, 0, 1, 1], [], []>} : vector<256x128xf32>, vector<128x128xf32>, vector<256x128xf32> -> vector<256x128xf32>
    %40 = arith.addf %34, %39 : vector<256x128xf32>
    %c1_42 = arith.constant 1 : index
    %c1_43 = arith.constant 1 : index
    %c0_44 = arith.constant 0 : index
    %41 = vector.load %arg8[%c1_42, %c1_43, %c0_44] : memref<18x18x128xf32, #tpu.memory_space<vmem>>, vector<16x16x128xf32>
    %42 = vector.shape_cast %41 : vector<16x16x128xf32> to vector<256x128xf32>
    %c1_45 = arith.constant 1 : index
    %c1_46 = arith.constant 1 : index
    %c0_47 = arith.constant 0 : index
    %c0_48 = arith.constant 0 : index
    %43 = vector.load %arg4[%c1_45, %c1_46, %c0_47, %c0_48] : memref<3x3x128x128xf32, #tpu.memory_space<vmem>>, vector<1x1x128x128xf32>
    %44 = vector.shape_cast %43 : vector<1x1x128x128xf32> to vector<128x128xf32>
    %cst_49 = arith.constant dense<0.000000e+00> : vector<256x128xf32>
    %45 = tpu.matmul %42, %44, %cst_49 {dimension_numbers = #tpu.dot_dimension_numbers<[1], [0], [0], [1], [0, 0, 1, 1], [], []>} : vector<256x128xf32>, vector<128x128xf32>, vector<256x128xf32> -> vector<256x128xf32>
    %46 = arith.addf %40, %45 : vector<256x128xf32>
    %c1_50 = arith.constant 1 : index
    %c2_51 = arith.constant 2 : index
    %c0_52 = arith.constant 0 : index
    %47 = vector.load %arg8[%c1_50, %c2_51, %c0_52] : memref<18x18x128xf32, #tpu.memory_space<vmem>>, vector<16x16x128xf32>
    %48 = vector.shape_cast %47 : vector<16x16x128xf32> to vector<256x128xf32>
    %c1_53 = arith.constant 1 : index
    %c2_54 = arith.constant 2 : index
    %c0_55 = arith.constant 0 : index
    %c0_56 = arith.constant 0 : index
    %49 = vector.load %arg4[%c1_53, %c2_54, %c0_55, %c0_56] : memref<3x3x128x128xf32, #tpu.memory_space<vmem>>, vector<1x1x128x128xf32>
    %50 = vector.shape_cast %49 : vector<1x1x128x128xf32> to vector<128x128xf32>
    %cst_57 = arith.constant dense<0.000000e+00> : vector<256x128xf32>
    %51 = tpu.matmul %48, %50, %cst_57 {dimension_numbers = #tpu.dot_dimension_numbers<[1], [0], [0], [1], [0, 0, 1, 1], [], []>} : vector<256x128xf32>, vector<128x128xf32>, vector<256x128xf32> -> vector<256x128xf32>
    %52 = arith.addf %46, %51 : vector<256x128xf32>
    %c2_58 = arith.constant 2 : index
    %c0_59 = arith.constant 0 : index
    %c0_60 = arith.constant 0 : index
    %53 = vector.load %arg8[%c2_58, %c0_59, %c0_60] : memref<18x18x128xf32, #tpu.memory_space<vmem>>, vector<16x16x128xf32>
    %54 = vector.shape_cast %53 : vector<16x16x128xf32> to vector<256x128xf32>
    %c2_61 = arith.constant 2 : index
    %c0_62 = arith.constant 0 : index
    %c0_63 = arith.constant 0 : index
    %c0_64 = arith.constant 0 : index
    %55 = vector.load %arg4[%c2_61, %c0_62, %c0_63, %c0_64] : memref<3x3x128x128xf32, #tpu.memory_space<vmem>>, vector<1x1x128x128xf32>
    %56 = vector.shape_cast %55 : vector<1x1x128x128xf32> to vector<128x128xf32>
    %cst_65 = arith.constant dense<0.000000e+00> : vector<256x128xf32>
    %57 = tpu.matmul %54, %56, %cst_65 {dimension_numbers = #tpu.dot_dimension_numbers<[1], [0], [0], [1], [0, 0, 1, 1], [], []>} : vector<256x128xf32>, vector<128x128xf32>, vector<256x128xf32> -> vector<256x128xf32>
    %58 = arith.addf %52, %57 : vector<256x128xf32>
    %c2_66 = arith.constant 2 : index
    %c1_67 = arith.constant 1 : index
    %c0_68 = arith.constant 0 : index
    %59 = vector.load %arg8[%c2_66, %c1_67, %c0_68] : memref<18x18x128xf32, #tpu.memory_space<vmem>>, vector<16x16x128xf32>
    %60 = vector.shape_cast %59 : vector<16x16x128xf32> to vector<256x128xf32>
    %c2_69 = arith.constant 2 : index
    %c1_70 = arith.constant 1 : index
    %c0_71 = arith.constant 0 : index
    %c0_72 = arith.constant 0 : index
    %61 = vector.load %arg4[%c2_69, %c1_70, %c0_71, %c0_72] : memref<3x3x128x128xf32, #tpu.memory_space<vmem>>, vector<1x1x128x128xf32>
    %62 = vector.shape_cast %61 : vector<1x1x128x128xf32> to vector<128x128xf32>
    %cst_73 = arith.constant dense<0.000000e+00> : vector<256x128xf32>
    %63 = tpu.matmul %60, %62, %cst_73 {dimension_numbers = #tpu.dot_dimension_numbers<[1], [0], [0], [1], [0, 0, 1, 1], [], []>} : vector<256x128xf32>, vector<128x128xf32>, vector<256x128xf32> -> vector<256x128xf32>
    %64 = arith.addf %58, %63 : vector<256x128xf32>
    %c2_74 = arith.constant 2 : index
    %c2_75 = arith.constant 2 : index
    %c0_76 = arith.constant 0 : index
    %65 = vector.load %arg8[%c2_74, %c2_75, %c0_76] : memref<18x18x128xf32, #tpu.memory_space<vmem>>, vector<16x16x128xf32>
    %66 = vector.shape_cast %65 : vector<16x16x128xf32> to vector<256x128xf32>
    %c2_77 = arith.constant 2 : index
    %c2_78 = arith.constant 2 : index
    %c0_79 = arith.constant 0 : index
    %c0_80 = arith.constant 0 : index
    %67 = vector.load %arg4[%c2_77, %c2_78, %c0_79, %c0_80] : memref<3x3x128x128xf32, #tpu.memory_space<vmem>>, vector<1x1x128x128xf32>
    %68 = vector.shape_cast %67 : vector<1x1x128x128xf32> to vector<128x128xf32>
    %cst_81 = arith.constant dense<0.000000e+00> : vector<256x128xf32>
    %69 = tpu.matmul %66, %68, %cst_81 {dimension_numbers = #tpu.dot_dimension_numbers<[1], [0], [0], [1], [0, 0, 1, 1], [], []>} : vector<256x128xf32>, vector<128x128xf32>, vector<256x128xf32> -> vector<256x128xf32>
    %70 = arith.addf %64, %69 : vector<256x128xf32>
    %c0_82 = arith.constant 0 : index
    %c0_83 = arith.constant 0 : index
    %71 = vector.load %arg5[%c0_82, %c0_83] : memref<1x128xf32, #tpu.memory_space<vmem>>, vector<1x128xf32>
    %72 = vector.broadcast %71 : vector<1x128xf32> to vector<256x128xf32>
    %73 = arith.addf %70, %72 : vector<256x128xf32>
    %cst_84 = arith.constant dense<0.000000e+00> : vector<128xf32>
    %74 = vector.multi_reduction <add>, %73, %cst_84 [0] : vector<256x128xf32> to vector<128xf32>
    %75 = vector.shape_cast %74 : vector<128xf32> to vector<1x128xf32>
    %76 = arith.mulf %73, %73 : vector<256x128xf32>
    %cst_85 = arith.constant dense<0.000000e+00> : vector<128xf32>
    %77 = vector.multi_reduction <add>, %76, %cst_85 [0] : vector<256x128xf32> to vector<128xf32>
    %78 = vector.shape_cast %77 : vector<128xf32> to vector<1x128xf32>
    %79 = tpu.concatenate %75, %78 in 0 : vector<1x128xf32>, vector<1x128xf32> -> vector<2x128xf32>
    %80 = vector.shape_cast %79 : vector<2x128xf32> to vector<1x2x128xf32>
    %c0_86 = arith.constant 0 : index
    %c0_87 = arith.constant 0 : index
    %c0_88 = arith.constant 0 : index
    %81 = vector.load %arg7[%c0_86, %c0_87, %c0_88] : memref<1x2x128xf32, #tpu.memory_space<vmem>>, vector<1x2x128xf32>
    tpu.vector_store %arg7[%c0_86, %c0_87, %c0_88], %80 {strides = array<i32>} : memref<1x2x128xf32, #tpu.memory_space<vmem>>, vector<1x2x128xf32>,
    %82 = vector.shape_cast %73 : vector<256x128xf32> to vector<1x16x16x128xf32>
    %c0_89 = arith.constant 0 : index
    %c0_90 = arith.constant 0 : index
    %c0_91 = arith.constant 0 : index
    %c0_92 = arith.constant 0 : index
    %83 = vector.load %arg6[%c0_89, %c0_90, %c0_91, %c0_92] : memref<1x16x16x128xf32, #tpu.memory_space<vmem>>, vector<1x16x16x128xf32>
    tpu.vector_store %arg6[%c0_89, %c0_90, %c0_91, %c0_92], %82 {strides = array<i32>} : memref<1x16x16x128xf32, #tpu.memory_space<vmem>>, vector<1x16x16x128xf32>,
    return
  }
  func.func @transform_0(%arg0: i32) -> (i32, i32, i32, i32) {
    %c0_i32 = arith.constant 0 : i32
    %c0_i32_0 = arith.constant 0 : i32
    %c0_i32_1 = arith.constant 0 : i32
    %c0_i32_2 = arith.constant 0 : i32
    return %arg0, %c0_i32, %c0_i32_0, %c0_i32_1 : i32, i32, i32, i32
  }
  func.func @transform_1(%arg0: i32) -> (i32, i32) {
    %c0_i32 = arith.constant 0 : i32
    %c0_i32_0 = arith.constant 0 : i32
    %c0_i32_1 = arith.constant 0 : i32
    return %c0_i32, %c0_i32_0 : i32, i32
  }
  func.func @transform_2(%arg0: i32) -> (i32, i32) {
    %c0_i32 = arith.constant 0 : i32
    %c0_i32_0 = arith.constant 0 : i32
    %c0_i32_1 = arith.constant 0 : i32
    return %c0_i32, %c0_i32_0 : i32, i32
  }
  func.func @transform_3(%arg0: i32) -> (i32, i32, i32, i32) {
    %c0_i32 = arith.constant 0 : i32
    %c0_i32_0 = arith.constant 0 : i32
    %c0_i32_1 = arith.constant 0 : i32
    %c0_i32_2 = arith.constant 0 : i32
    %c0_i32_3 = arith.constant 0 : i32
    return %c0_i32, %c0_i32_0, %c0_i32_1, %c0_i32_2 : i32, i32, i32, i32
  }
  func.func @transform_4(%arg0: i32) -> (i32, i32) {
    %c0_i32 = arith.constant 0 : i32
    %c0_i32_0 = arith.constant 0 : i32
    %c0_i32_1 = arith.constant 0 : i32
    return %c0_i32, %c0_i32_0 : i32, i32
  }
  func.func @transform_5(%arg0: i32) -> (i32, i32, i32, i32) {
    %c0_i32 = arith.constant 0 : i32
    %c0_i32_0 = arith.constant 0 : i32
    %c0_i32_1 = arith.constant 0 : i32
    %c0_i32_2 = arith.constant 0 : i32
    return %arg0, %c0_i32, %c0_i32_0, %c0_i32_1 : i32, i32, i32, i32
  }
  func.func @transform_6(%arg0: i32) -> (i32, i32, i32) {
    %c0_i32 = arith.constant 0 : i32
    %c0_i32_0 = arith.constant 0 : i32
    %c0_i32_1 = arith.constant 0 : i32
    return %arg0, %c0_i32, %c0_i32_0 : i32, i32, i32
  }
}

module attributes {stable_mosaic.version = 11 : i64} {
  func.func @_bn_residual_relu_kernel(%arg0: i32, %arg1: memref<1x16x16x128xf32, #tpu.memory_space<vmem>>, %arg2: memref<1x128xf32, #tpu.memory_space<vmem>>, %arg3: memref<1x128xf32, #tpu.memory_space<vmem>>, %arg4: memref<1x16x16x128xf32, #tpu.memory_space<vmem>>, %arg5: memref<1x16x16x128xf32, #tpu.memory_space<vmem>>) attributes {dimension_semantics = [#tpu.dimension_semantics<parallel>], iteration_bounds = array<i64: 2>, scalar_prefetch = 0 : i64, scratch_operands = 0 : i64, tpu.core_type = #tpu.core_type<tc>, window_params = [{transform_indices = @transform_0, window_bounds = array<i64: 1, 16, 16, 128>}, {pipeline_mode = #tpu.pipeline_mode<synchronous>, transform_indices = @transform_1, window_bounds = array<i64: 1, 128>}, {pipeline_mode = #tpu.pipeline_mode<synchronous>, transform_indices = @transform_2, window_bounds = array<i64: 1, 128>}, {transform_indices = @transform_3, window_bounds = array<i64: 1, 16, 16, 128>}, {transform_indices = @transform_4, window_bounds = array<i64: 1, 16, 16, 128>}]} {
    %c0 = arith.constant 0 : index
    %c0_0 = arith.constant 0 : index
    %c0_1 = arith.constant 0 : index
    %c0_2 = arith.constant 0 : index
    %0 = vector.load %arg1[%c0, %c0_0, %c0_1, %c0_2] : memref<1x16x16x128xf32, #tpu.memory_space<vmem>>, vector<1x16x16x128xf32>
    %c0_3 = arith.constant 0 : index
    %c0_4 = arith.constant 0 : index
    %1 = vector.load %arg2[%c0_3, %c0_4] : memref<1x128xf32, #tpu.memory_space<vmem>>, vector<1x128xf32>
    %2 = vector.shape_cast %1 : vector<1x128xf32> to vector<1x1x1x128xf32>
    %3 = vector.broadcast %2 : vector<1x1x1x128xf32> to vector<1x16x16x128xf32>
    %4 = arith.mulf %0, %3 : vector<1x16x16x128xf32>
    %c0_5 = arith.constant 0 : index
    %c0_6 = arith.constant 0 : index
    %5 = vector.load %arg3[%c0_5, %c0_6] : memref<1x128xf32, #tpu.memory_space<vmem>>, vector<1x128xf32>
    %6 = vector.shape_cast %5 : vector<1x128xf32> to vector<1x1x1x128xf32>
    %7 = vector.broadcast %6 : vector<1x1x1x128xf32> to vector<1x16x16x128xf32>
    %8 = arith.addf %4, %7 : vector<1x16x16x128xf32>
    %c0_7 = arith.constant 0 : index
    %c0_8 = arith.constant 0 : index
    %c0_9 = arith.constant 0 : index
    %c0_10 = arith.constant 0 : index
    %9 = vector.load %arg4[%c0_7, %c0_8, %c0_9, %c0_10] : memref<1x16x16x128xf32, #tpu.memory_space<vmem>>, vector<1x16x16x128xf32>
    %10 = arith.addf %8, %9 : vector<1x16x16x128xf32>
    %cst = arith.constant 0.000000e+00 : f32
    %11 = vector.broadcast %cst : f32 to vector<1x16x16x128xf32>
    %12 = arith.maximumf %10, %11 : vector<1x16x16x128xf32>
    %c0_11 = arith.constant 0 : index
    %c0_12 = arith.constant 0 : index
    %c0_13 = arith.constant 0 : index
    %c0_14 = arith.constant 0 : index
    %13 = vector.load %arg5[%c0_11, %c0_12, %c0_13, %c0_14] : memref<1x16x16x128xf32, #tpu.memory_space<vmem>>, vector<1x16x16x128xf32>
    tpu.vector_store %arg5[%c0_11, %c0_12, %c0_13, %c0_14], %12 {strides = array<i32>} : memref<1x16x16x128xf32, #tpu.memory_space<vmem>>, vector<1x16x16x128xf32>,
    return
  }
  func.func @transform_0(%arg0: i32) -> (i32, i32, i32, i32) {
    %c0_i32 = arith.constant 0 : i32
    %c0_i32_0 = arith.constant 0 : i32
    %c0_i32_1 = arith.constant 0 : i32
    %c0_i32_2 = arith.constant 0 : i32
    return %arg0, %c0_i32, %c0_i32_0, %c0_i32_1 : i32, i32, i32, i32
  }
  func.func @transform_1(%arg0: i32) -> (i32, i32) {
    %c0_i32 = arith.constant 0 : i32
    %c0_i32_0 = arith.constant 0 : i32
    %c0_i32_1 = arith.constant 0 : i32
    return %c0_i32, %c0_i32_0 : i32, i32
  }
  func.func @transform_2(%arg0: i32) -> (i32, i32) {
    %c0_i32 = arith.constant 0 : i32
    %c0_i32_0 = arith.constant 0 : i32
    %c0_i32_1 = arith.constant 0 : i32
    return %c0_i32, %c0_i32_0 : i32, i32
  }
  func.func @transform_3(%arg0: i32) -> (i32, i32, i32, i32) {
    %c0_i32 = arith.constant 0 : i32
    %c0_i32_0 = arith.constant 0 : i32
    %c0_i32_1 = arith.constant 0 : i32
    %c0_i32_2 = arith.constant 0 : i32
    return %arg0, %c0_i32, %c0_i32_0, %c0_i32_1 : i32, i32, i32, i32
  }
  func.func @transform_4(%arg0: i32) -> (i32, i32, i32, i32) {
    %c0_i32 = arith.constant 0 : i32
    %c0_i32_0 = arith.constant 0 : i32
    %c0_i32_1 = arith.constant 0 : i32
    %c0_i32_2 = arith.constant 0 : i32
    return %arg0, %c0_i32, %c0_i32_0, %c0_i32_1 : i32, i32, i32, i32
  }
}

module attributes {stable_mosaic.version = 11 : i64} {
  func.func @_conv_stats_kernel(%arg0: i32, %arg1: memref<1x16x16x128xf32, #tpu.memory_space<vmem>>, %arg2: memref<3x3x128x128xf32, #tpu.memory_space<vmem>>, %arg3: memref<1x128xf32, #tpu.memory_space<vmem>>, %arg4: memref<1x16x16x128xf32, #tpu.memory_space<vmem>>, %arg5: memref<1x2x128xf32, #tpu.memory_space<vmem>>, %arg6: memref<18x18x128xf32, #tpu.memory_space<vmem>>) attributes {dimension_semantics = [#tpu.dimension_semantics<parallel>], iteration_bounds = array<i64: 2>, scalar_prefetch = 0 : i64, scratch_operands = 1 : i64, tpu.core_type = #tpu.core_type<tc>, window_params = [{transform_indices = @transform_0, window_bounds = array<i64: 1, 16, 16, 128>}, {pipeline_mode = #tpu.pipeline_mode<synchronous>, transform_indices = @transform_1, window_bounds = array<i64: 3, 3, 128, 128>}, {pipeline_mode = #tpu.pipeline_mode<synchronous>, transform_indices = @transform_2, window_bounds = array<i64: 1, 128>}, {transform_indices = @transform_3, window_bounds = array<i64: 1, 16, 16, 128>}, {transform_indices = @transform_4, window_bounds = array<i64: 1, 2, 128>}]} {
    %c0 = arith.constant 0 : index
    %c0_0 = arith.constant 0 : index
    %c0_1 = arith.constant 0 : index
    %c0_2 = arith.constant 0 : index
    %0 = vector.load %arg1[%c0, %c0_0, %c0_1, %c0_2] : memref<1x16x16x128xf32, #tpu.memory_space<vmem>>, vector<1x16x16x128xf32>
    %1 = vector.shape_cast %0 : vector<1x16x16x128xf32> to vector<16x16x128xf32>
    %c0_i32 = arith.constant 0 : i32
    %2 = arith.cmpi eq, %arg0, %c0_i32 : i32
    %3 = arith.extui %2 : i1 to i32
    %c0_i32_3 = arith.constant 0 : i32
    %4 = arith.cmpi ne, %3, %c0_i32_3 : i32
    scf.if %4 {
      %cst_88 = arith.constant 0.000000e+00 : f32
      %74 = vector.broadcast %cst_88 : f32 to vector<18x18x128xf32>
      %c0_89 = arith.constant 0 : index
      %c0_90 = arith.constant 0 : index
      %c0_91 = arith.constant 0 : index
      %75 = vector.load %arg6[%c0_89, %c0_90, %c0_91] : memref<18x18x128xf32, #tpu.memory_space<vmem>>, vector<18x18x128xf32>
      tpu.vector_store %arg6[%c0_89, %c0_90, %c0_91], %74 {strides = array<i32>} : memref<18x18x128xf32, #tpu.memory_space<vmem>>, vector<18x18x128xf32>,
    } else {
    }
    %c1 = arith.constant 1 : index
    %c1_4 = arith.constant 1 : index
    %c0_5 = arith.constant 0 : index
    %5 = vector.load %arg6[%c1, %c1_4, %c0_5] : memref<18x18x128xf32, #tpu.memory_space<vmem>>, vector<16x16x128xf32>
    tpu.vector_store %arg6[%c1, %c1_4, %c0_5], %1 {strides = array<i32>} : memref<18x18x128xf32, #tpu.memory_space<vmem>>, vector<16x16x128xf32>,
    %cst = arith.constant 0.000000e+00 : f32
    %6 = vector.broadcast %cst : f32 to vector<256x128xf32>
    %c0_6 = arith.constant 0 : index
    %c0_7 = arith.constant 0 : index
    %c0_8 = arith.constant 0 : index
    %7 = vector.load %arg6[%c0_6, %c0_7, %c0_8] : memref<18x18x128xf32, #tpu.memory_space<vmem>>, vector<16x16x128xf32>
    %8 = vector.shape_cast %7 : vector<16x16x128xf32> to vector<256x128xf32>
    %c0_9 = arith.constant 0 : index
    %c0_10 = arith.constant 0 : index
    %c0_11 = arith.constant 0 : index
    %c0_12 = arith.constant 0 : index
    %9 = vector.load %arg2[%c0_9, %c0_10, %c0_11, %c0_12] : memref<3x3x128x128xf32, #tpu.memory_space<vmem>>, vector<1x1x128x128xf32>
    %10 = vector.shape_cast %9 : vector<1x1x128x128xf32> to vector<128x128xf32>
    %cst_13 = arith.constant dense<0.000000e+00> : vector<256x128xf32>
    %11 = tpu.matmul %8, %10, %cst_13 {dimension_numbers = #tpu.dot_dimension_numbers<[1], [0], [0], [1], [0, 0, 1, 1], [], []>} : vector<256x128xf32>, vector<128x128xf32>, vector<256x128xf32> -> vector<256x128xf32>
    %12 = arith.addf %6, %11 : vector<256x128xf32>
    %c0_14 = arith.constant 0 : index
    %c1_15 = arith.constant 1 : index
    %c0_16 = arith.constant 0 : index
    %13 = vector.load %arg6[%c0_14, %c1_15, %c0_16] : memref<18x18x128xf32, #tpu.memory_space<vmem>>, vector<16x16x128xf32>
    %14 = vector.shape_cast %13 : vector<16x16x128xf32> to vector<256x128xf32>
    %c0_17 = arith.constant 0 : index
    %c1_18 = arith.constant 1 : index
    %c0_19 = arith.constant 0 : index
    %c0_20 = arith.constant 0 : index
    %15 = vector.load %arg2[%c0_17, %c1_18, %c0_19, %c0_20] : memref<3x3x128x128xf32, #tpu.memory_space<vmem>>, vector<1x1x128x128xf32>
    %16 = vector.shape_cast %15 : vector<1x1x128x128xf32> to vector<128x128xf32>
    %cst_21 = arith.constant dense<0.000000e+00> : vector<256x128xf32>
    %17 = tpu.matmul %14, %16, %cst_21 {dimension_numbers = #tpu.dot_dimension_numbers<[1], [0], [0], [1], [0, 0, 1, 1], [], []>} : vector<256x128xf32>, vector<128x128xf32>, vector<256x128xf32> -> vector<256x128xf32>
    %18 = arith.addf %12, %17 : vector<256x128xf32>
    %c0_22 = arith.constant 0 : index
    %c2 = arith.constant 2 : index
    %c0_23 = arith.constant 0 : index
    %19 = vector.load %arg6[%c0_22, %c2, %c0_23] : memref<18x18x128xf32, #tpu.memory_space<vmem>>, vector<16x16x128xf32>
    %20 = vector.shape_cast %19 : vector<16x16x128xf32> to vector<256x128xf32>
    %c0_24 = arith.constant 0 : index
    %c2_25 = arith.constant 2 : index
    %c0_26 = arith.constant 0 : index
    %c0_27 = arith.constant 0 : index
    %21 = vector.load %arg2[%c0_24, %c2_25, %c0_26, %c0_27] : memref<3x3x128x128xf32, #tpu.memory_space<vmem>>, vector<1x1x128x128xf32>
    %22 = vector.shape_cast %21 : vector<1x1x128x128xf32> to vector<128x128xf32>
    %cst_28 = arith.constant dense<0.000000e+00> : vector<256x128xf32>
    %23 = tpu.matmul %20, %22, %cst_28 {dimension_numbers = #tpu.dot_dimension_numbers<[1], [0], [0], [1], [0, 0, 1, 1], [], []>} : vector<256x128xf32>, vector<128x128xf32>, vector<256x128xf32> -> vector<256x128xf32>
    %24 = arith.addf %18, %23 : vector<256x128xf32>
    %c1_29 = arith.constant 1 : index
    %c0_30 = arith.constant 0 : index
    %c0_31 = arith.constant 0 : index
    %25 = vector.load %arg6[%c1_29, %c0_30, %c0_31] : memref<18x18x128xf32, #tpu.memory_space<vmem>>, vector<16x16x128xf32>
    %26 = vector.shape_cast %25 : vector<16x16x128xf32> to vector<256x128xf32>
    %c1_32 = arith.constant 1 : index
    %c0_33 = arith.constant 0 : index
    %c0_34 = arith.constant 0 : index
    %c0_35 = arith.constant 0 : index
    %27 = vector.load %arg2[%c1_32, %c0_33, %c0_34, %c0_35] : memref<3x3x128x128xf32, #tpu.memory_space<vmem>>, vector<1x1x128x128xf32>
    %28 = vector.shape_cast %27 : vector<1x1x128x128xf32> to vector<128x128xf32>
    %cst_36 = arith.constant dense<0.000000e+00> : vector<256x128xf32>
    %29 = tpu.matmul %26, %28, %cst_36 {dimension_numbers = #tpu.dot_dimension_numbers<[1], [0], [0], [1], [0, 0, 1, 1], [], []>} : vector<256x128xf32>, vector<128x128xf32>, vector<256x128xf32> -> vector<256x128xf32>
    %30 = arith.addf %24, %29 : vector<256x128xf32>
    %c1_37 = arith.constant 1 : index
    %c1_38 = arith.constant 1 : index
    %c0_39 = arith.constant 0 : index
    %31 = vector.load %arg6[%c1_37, %c1_38, %c0_39] : memref<18x18x128xf32, #tpu.memory_space<vmem>>, vector<16x16x128xf32>
    %32 = vector.shape_cast %31 : vector<16x16x128xf32> to vector<256x128xf32>
    %c1_40 = arith.constant 1 : index
    %c1_41 = arith.constant 1 : index
    %c0_42 = arith.constant 0 : index
    %c0_43 = arith.constant 0 : index
    %33 = vector.load %arg2[%c1_40, %c1_41, %c0_42, %c0_43] : memref<3x3x128x128xf32, #tpu.memory_space<vmem>>, vector<1x1x128x128xf32>
    %34 = vector.shape_cast %33 : vector<1x1x128x128xf32> to vector<128x128xf32>
    %cst_44 = arith.constant dense<0.000000e+00> : vector<256x128xf32>
    %35 = tpu.matmul %32, %34, %cst_44 {dimension_numbers = #tpu.dot_dimension_numbers<[1], [0], [0], [1], [0, 0, 1, 1], [], []>} : vector<256x128xf32>, vector<128x128xf32>, vector<256x128xf32> -> vector<256x128xf32>
    %36 = arith.addf %30, %35 : vector<256x128xf32>
    %c1_45 = arith.constant 1 : index
    %c2_46 = arith.constant 2 : index
    %c0_47 = arith.constant 0 : index
    %37 = vector.load %arg6[%c1_45, %c2_46, %c0_47] : memref<18x18x128xf32, #tpu.memory_space<vmem>>, vector<16x16x128xf32>
    %38 = vector.shape_cast %37 : vector<16x16x128xf32> to vector<256x128xf32>
    %c1_48 = arith.constant 1 : index
    %c2_49 = arith.constant 2 : index
    %c0_50 = arith.constant 0 : index
    %c0_51 = arith.constant 0 : index
    %39 = vector.load %arg2[%c1_48, %c2_49, %c0_50, %c0_51] : memref<3x3x128x128xf32, #tpu.memory_space<vmem>>, vector<1x1x128x128xf32>
    %40 = vector.shape_cast %39 : vector<1x1x128x128xf32> to vector<128x128xf32>
    %cst_52 = arith.constant dense<0.000000e+00> : vector<256x128xf32>
    %41 = tpu.matmul %38, %40, %cst_52 {dimension_numbers = #tpu.dot_dimension_numbers<[1], [0], [0], [1], [0, 0, 1, 1], [], []>} : vector<256x128xf32>, vector<128x128xf32>, vector<256x128xf32> -> vector<256x128xf32>
    %42 = arith.addf %36, %41 : vector<256x128xf32>
    %c2_53 = arith.constant 2 : index
    %c0_54 = arith.constant 0 : index
    %c0_55 = arith.constant 0 : index
    %43 = vector.load %arg6[%c2_53, %c0_54, %c0_55] : memref<18x18x128xf32, #tpu.memory_space<vmem>>, vector<16x16x128xf32>
    %44 = vector.shape_cast %43 : vector<16x16x128xf32> to vector<256x128xf32>
    %c2_56 = arith.constant 2 : index
    %c0_57 = arith.constant 0 : index
    %c0_58 = arith.constant 0 : index
    %c0_59 = arith.constant 0 : index
    %45 = vector.load %arg2[%c2_56, %c0_57, %c0_58, %c0_59] : memref<3x3x128x128xf32, #tpu.memory_space<vmem>>, vector<1x1x128x128xf32>
    %46 = vector.shape_cast %45 : vector<1x1x128x128xf32> to vector<128x128xf32>
    %cst_60 = arith.constant dense<0.000000e+00> : vector<256x128xf32>
    %47 = tpu.matmul %44, %46, %cst_60 {dimension_numbers = #tpu.dot_dimension_numbers<[1], [0], [0], [1], [0, 0, 1, 1], [], []>} : vector<256x128xf32>, vector<128x128xf32>, vector<256x128xf32> -> vector<256x128xf32>
    %48 = arith.addf %42, %47 : vector<256x128xf32>
    %c2_61 = arith.constant 2 : index
    %c1_62 = arith.constant 1 : index
    %c0_63 = arith.constant 0 : index
    %49 = vector.load %arg6[%c2_61, %c1_62, %c0_63] : memref<18x18x128xf32, #tpu.memory_space<vmem>>, vector<16x16x128xf32>
    %50 = vector.shape_cast %49 : vector<16x16x128xf32> to vector<256x128xf32>
    %c2_64 = arith.constant 2 : index
    %c1_65 = arith.constant 1 : index
    %c0_66 = arith.constant 0 : index
    %c0_67 = arith.constant 0 : index
    %51 = vector.load %arg2[%c2_64, %c1_65, %c0_66, %c0_67] : memref<3x3x128x128xf32, #tpu.memory_space<vmem>>, vector<1x1x128x128xf32>
    %52 = vector.shape_cast %51 : vector<1x1x128x128xf32> to vector<128x128xf32>
    %cst_68 = arith.constant dense<0.000000e+00> : vector<256x128xf32>
    %53 = tpu.matmul %50, %52, %cst_68 {dimension_numbers = #tpu.dot_dimension_numbers<[1], [0], [0], [1], [0, 0, 1, 1], [], []>} : vector<256x128xf32>, vector<128x128xf32>, vector<256x128xf32> -> vector<256x128xf32>
    %54 = arith.addf %48, %53 : vector<256x128xf32>
    %c2_69 = arith.constant 2 : index
    %c2_70 = arith.constant 2 : index
    %c0_71 = arith.constant 0 : index
    %55 = vector.load %arg6[%c2_69, %c2_70, %c0_71] : memref<18x18x128xf32, #tpu.memory_space<vmem>>, vector<16x16x128xf32>
    %56 = vector.shape_cast %55 : vector<16x16x128xf32> to vector<256x128xf32>
    %c2_72 = arith.constant 2 : index
    %c2_73 = arith.constant 2 : index
    %c0_74 = arith.constant 0 : index
    %c0_75 = arith.constant 0 : index
    %57 = vector.load %arg2[%c2_72, %c2_73, %c0_74, %c0_75] : memref<3x3x128x128xf32, #tpu.memory_space<vmem>>, vector<1x1x128x128xf32>
    %58 = vector.shape_cast %57 : vector<1x1x128x128xf32> to vector<128x128xf32>
    %cst_76 = arith.constant dense<0.000000e+00> : vector<256x128xf32>
    %59 = tpu.matmul %56, %58, %cst_76 {dimension_numbers = #tpu.dot_dimension_numbers<[1], [0], [0], [1], [0, 0, 1, 1], [], []>} : vector<256x128xf32>, vector<128x128xf32>, vector<256x128xf32> -> vector<256x128xf32>
    %60 = arith.addf %54, %59 : vector<256x128xf32>
    %c0_77 = arith.constant 0 : index
    %c0_78 = arith.constant 0 : index
    %61 = vector.load %arg3[%c0_77, %c0_78] : memref<1x128xf32, #tpu.memory_space<vmem>>, vector<1x128xf32>
    %62 = vector.broadcast %61 : vector<1x128xf32> to vector<256x128xf32>
    %63 = arith.addf %60, %62 : vector<256x128xf32>
    %cst_79 = arith.constant dense<0.000000e+00> : vector<128xf32>
    %64 = vector.multi_reduction <add>, %63, %cst_79 [0] : vector<256x128xf32> to vector<128xf32>
    %65 = vector.shape_cast %64 : vector<128xf32> to vector<1x128xf32>
    %66 = arith.mulf %63, %63 : vector<256x128xf32>
    %cst_80 = arith.constant dense<0.000000e+00> : vector<128xf32>
    %67 = vector.multi_reduction <add>, %66, %cst_80 [0] : vector<256x128xf32> to vector<128xf32>
    %68 = vector.shape_cast %67 : vector<128xf32> to vector<1x128xf32>
    %69 = tpu.concatenate %65, %68 in 0 : vector<1x128xf32>, vector<1x128xf32> -> vector<2x128xf32>
    %70 = vector.shape_cast %69 : vector<2x128xf32> to vector<1x2x128xf32>
    %c0_81 = arith.constant 0 : index
    %c0_82 = arith.constant 0 : index
    %c0_83 = arith.constant 0 : index
    %71 = vector.load %arg5[%c0_81, %c0_82, %c0_83] : memref<1x2x128xf32, #tpu.memory_space<vmem>>, vector<1x2x128xf32>
    tpu.vector_store %arg5[%c0_81, %c0_82, %c0_83], %70 {strides = array<i32>} : memref<1x2x128xf32, #tpu.memory_space<vmem>>, vector<1x2x128xf32>,
    %72 = vector.shape_cast %63 : vector<256x128xf32> to vector<1x16x16x128xf32>
    %c0_84 = arith.constant 0 : index
    %c0_85 = arith.constant 0 : index
    %c0_86 = arith.constant 0 : index
    %c0_87 = arith.constant 0 : index
    %73 = vector.load %arg4[%c0_84, %c0_85, %c0_86, %c0_87] : memref<1x16x16x128xf32, #tpu.memory_space<vmem>>, vector<1x16x16x128xf32>
    tpu.vector_store %arg4[%c0_84, %c0_85, %c0_86, %c0_87], %72 {strides = array<i32>} : memref<1x16x16x128xf32, #tpu.memory_space<vmem>>, vector<1x16x16x128xf32>,
    return
  }
  func.func @transform_0(%arg0: i32) -> (i32, i32, i32, i32) {
    %c0_i32 = arith.constant 0 : i32
    %c0_i32_0 = arith.constant 0 : i32
    %c0_i32_1 = arith.constant 0 : i32
    %c0_i32_2 = arith.constant 0 : i32
    return %arg0, %c0_i32, %c0_i32_0, %c0_i32_1 : i32, i32, i32, i32
  }
  func.func @transform_1(%arg0: i32) -> (i32, i32, i32, i32) {
    %c0_i32 = arith.constant 0 : i32
    %c0_i32_0 = arith.constant 0 : i32
    %c0_i32_1 = arith.constant 0 : i32
    %c0_i32_2 = arith.constant 0 : i32
    %c0_i32_3 = arith.constant 0 : i32
    return %c0_i32, %c0_i32_0, %c0_i32_1, %c0_i32_2 : i32, i32, i32, i32
  }
  func.func @transform_2(%arg0: i32) -> (i32, i32) {
    %c0_i32 = arith.constant 0 : i32
    %c0_i32_0 = arith.constant 0 : i32
    %c0_i32_1 = arith.constant 0 : i32
    return %c0_i32, %c0_i32_0 : i32, i32
  }
  func.func @transform_3(%arg0: i32) -> (i32, i32, i32, i32) {
    %c0_i32 = arith.constant 0 : i32
    %c0_i32_0 = arith.constant 0 : i32
    %c0_i32_1 = arith.constant 0 : i32
    %c0_i32_2 = arith.constant 0 : i32
    return %arg0, %c0_i32, %c0_i32_0, %c0_i32_1 : i32, i32, i32, i32
  }
  func.func @transform_4(%arg0: i32) -> (i32, i32, i32) {
    %c0_i32 = arith.constant 0 : i32
    %c0_i32_0 = arith.constant 0 : i32
    %c0_i32_1 = arith.constant 0 : i32
    return %arg0, %c0_i32, %c0_i32_0 : i32, i32, i32
  }
}

</mosaic_0001>

<llo_original>
// kernel: residual_block_forward.5
$region0: #{residual_block_forward.5}
  #allocation0 [shape = 'u32[]', space=smem, size = 0x4, offset = 0x4, fixed_abs, tag = 'smem constant byte address 0x4 - core index']
  #allocation1 [shape = 'u32[144,128]{1,0:T(1,128)}', space=vmem, size = 0x12000, scoped, tag = 'internal scratch']
  %s0 = inlined_call_operand.vmem [shape: f32[2,16,16,128], index: 0, kind: input, shape index: {}]
  %s1 = inlined_call_operand.vmem [shape: f32[1,128], index: 1, kind: input, shape index: {}]
  %s2 = inlined_call_operand.vmem [shape: f32[1,128], index: 2, kind: input, shape index: {}]
  %s3 = inlined_call_operand.vmem [shape: f32[2,16,16,128], index: 3, kind: input, shape index: {}]
  %s4 = inlined_call_operand.vmem [shape: f32[2,16,16,128], index: 4, kind: output, shape index: {}]
  %s5 = sld [smem:[#allocation0]]
  $region49: #{residual_block_forward.5} parent=0
    _
  %s7 = ssub.s32 1, %s5
  %s8 = scalar_select 0, %s7, %s5
  loop: start=0, step=1, limit=4
  $region2: #{residual_block_forward.5} parent=0 // loop_pre_header
    _
  $region3: #{residual_block_forward.5} parent=0 // loop_header
    %s10 = sphi 0, %s14
    %p11 = scmp.ge.s32.totalorder %s10, 4
    %s20 = sphi 0, %s22
    %s23 = sphi 0, %s20
    %s24 = sphi 0, %s23
    %s40 = sphi 0, %s24
    %s44 = sphi 0, %s44
    %s46 = sphi 0, %s44
    %s47 = sphi 0, %s46
    %s61 = sphi 0, %s47
    %s65 = sphi 0, %s65
    %s67 = sphi 0, %s65
    %s68 = sphi 0, %s67
    %s82 = sphi 0, %s68
    %s88 = sphi 0, %s90
    %s91 = sphi 0, %s88
    %s92 = sphi 0, %s91
    %s108 = sphi 0, %s92
    %s114 = sphi 0, %s116
    %s117 = sphi 0, %s114
    %s118 = sphi 0, %s117
    %s134 = sphi 0, %s118
  $region4: #{residual_block_forward.5} parent=0 // loop_header_branch
    %13 = sbr.rel (%p11) target = $region8
  $region5: #{residual_block_forward.5} parent=0 // loop_body
    %s15 = ssub.s32 %s10, 1
    %s16 = ssub.s32 %s10, 2
    %s17 = sadd.s32 %s10, 1
    %s18 = ssub.s32 %s10, %s17
    %p19 = scmp.eq.s32.totalorder %s18, 0
    %s21 = sadd.s32 %s20, 1
    %s22 = scalar_select %p19, %s20, %s21
    %p25 = pneg %p19
    %p26 = scmp.eq.s32.totalorder %s10, 1
    %p27 = por %p25, %p26
    %p28 = scmp.ne.s32.totalorder %s20, %s23
    %p29 = scmp.eq.s32.totalorder %s10, 0
    %p30 = por %p28, %p29
    %p31 = scmp.ne.s32.totalorder %s20, %s23
    %p32 = scmp.eq.s32.totalorder %s15, 1
    %p33 = por %p31, %p32
    %p34 = scmp.ne.s32.totalorder %s23, %s24
    %p35 = scmp.eq.s32.totalorder %s15, 0
    %p36 = por %p34, %p35
    %p37 = scmp.ne.s32.totalorder %s23, %s24
    %p38 = scmp.eq.s32.totalorder %s16, 1
    %p39 = por %p37, %p38
    %p41 = scmp.ne.s32.totalorder %s24, %s40
    %p42 = scmp.eq.s32.totalorder %s16, 0
    %p43 = por %p41, %p42
    %s45 = sadd.s32 %s44, 1
    %p48 = scmp.eq.s32.totalorder %s10, 1
    %p49 = scmp.ne.s32.totalorder %s44, %s46
    %p50 = scmp.eq.s32.totalorder %s10, 0
    %p51 = por %p49, %p50
    %p52 = scmp.ne.s32.totalorder %s44, %s46
    %p53 = scmp.eq.s32.totalorder %s15, 1
    %p54 = por %p52, %p53
    %p55 = scmp.ne.s32.totalorder %s46, %s47
    %p56 = scmp.eq.s32.totalorder %s15, 0
    %p57 = por %p55, %p56
    %p58 = scmp.ne.s32.totalorder %s46, %s47
    %p59 = scmp.eq.s32.totalorder %s16, 1
    %p60 = por %p58, %p59
    %p62 = scmp.ne.s32.totalorder %s47, %s61
    %p63 = scmp.eq.s32.totalorder %s16, 0
    %p64 = por %p62, %p63
    %s66 = sadd.s32 %s65, 1
    %p69 = scmp.eq.s32.totalorder %s10, 1
    %p70 = scmp.ne.s32.totalorder %s65, %s67
    %p71 = scmp.eq.s32.totalorder %s10, 0
    %p72 = por %p70, %p71
    %p73 = scmp.ne.s32.totalorder %s65, %s67
    %p74 = scmp.eq.s32.totalorder %s15, 1
    %p75 = por %p73, %p74
    %p76 = scmp.ne.s32.totalorder %s67, %s68
    %p77 = scmp.eq.s32.totalorder %s15, 0
    %p78 = por %p76, %p77
    %p79 = scmp.ne.s32.totalorder %s67, %s68
    %p80 = scmp.eq.s32.totalorder %s16, 1
    %p81 = por %p79, %p80
    %p83 = scmp.ne.s32.totalorder %s68, %s82
    %p84 = scmp.eq.s32.totalorder %s16, 0
    %p85 = por %p83, %p84
    %s86 = ssub.s32 %s10, %s17
    %p87 = scmp.eq.s32.totalorder %s86, 0
    %s89 = sadd.s32 %s88, 1
    %s90 = scalar_select %p87, %s88, %s89
    %p93 = pneg %p87
    %p94 = scmp.eq.s32.totalorder %s10, 1
    %p95 = por %p93, %p94
    %p96 = scmp.ne.s32.totalorder %s88, %s91
    %p97 = scmp.eq.s32.totalorder %s10, 0
    %p98 = por %p96, %p97
    %p99 = scmp.ne.s32.totalorder %s88, %s91
    %p100 = scmp.eq.s32.totalorder %s15, 1
    %p101 = por %p99, %p100
    %p102 = scmp.ne.s32.totalorder %s91, %s92
    %p103 = scmp.eq.s32.totalorder %s15, 0
    %p104 = por %p102, %p103
    %p105 = scmp.ne.s32.totalorder %s91, %s92
    %p106 = scmp.eq.s32.totalorder %s16, 1
    %p107 = por %p105, %p106
    %p109 = scmp.ne.s32.totalorder %s92, %s108
    %p110 = scmp.eq.s32.totalorder %s16, 0
    %p111 = por %p109, %p110
    %s112 = ssub.s32 %s10, %s17
    %p113 = scmp.eq.s32.totalorder %s112, 0
    %s115 = sadd.s32 %s114, 1
    %s116 = scalar_select %p113, %s114, %s115
    %p119 = pneg %p113
    %p120 = scmp.eq.s32.totalorder %s10, 1
    %p121 = por %p119, %p120
    %p122 = scmp.ne.s32.totalorder %s114, %s117
    %p123 = scmp.eq.s32.totalorder %s10, 0
    %p124 = por %p122, %p123
    %p125 = scmp.ne.s32.totalorder %s114, %s117
    %p126 = scmp.eq.s32.totalorder %s15, 1
    %p127 = por %p125, %p126
    %p128 = scmp.ne.s32.totalorder %s117, %s118
    %p129 = scmp.eq.s32.totalorder %s15, 0
    %p130 = por %p128, %p129
    %p131 = scmp.ne.s32.totalorder %s117, %s118
    %p132 = scmp.eq.s32.totalorder %s16, 1
    %p133 = por %p131, %p132
    %p135 = scmp.ne.s32.totalorder %s118, %s134
    %p136 = scmp.eq.s32.totalorder %s16, 0
    %p137 = por %p135, %p136
    %p138 = scmp.le.s32.totalorder 1, %s10
    %p139 = scmp.lt.s32.totalorder %s10, 3
    %p140 = pnand %p138, %p139
    %p141 = pneg %p140
    // Predicated region
    $region9: #{residual_block_forward.5} parent=5 // pred_check
      _
    $region10: #{residual_block_forward.5} parent=5 // pred_check_branch
      %143 = sbr.rel (%p140) target = $region12
    $region11: #{residual_block_forward.5} parent=5 // pred_region
      %s144 = ssub.s32 %s10, 1
      // Predicated region
      $region13: #{residual_block_forward.5} parent=11 // pred_check
        %p145 = pneg %p57
      $region14: #{residual_block_forward.5} parent=11 // pred_check_branch
        %147 = sbr.rel (%p145) target = $region16
      $region15: #{residual_block_forward.5} parent=11 // pred_region
        _
      $region16: #{residual_block_forward.5} parent=11 // pred_fallthru
        _
      // Predicated region
      $region17: #{residual_block_forward.5} parent=11 // pred_check
        %p148 = pneg %p78
      $region18: #{residual_block_forward.5} parent=11 // pred_check_branch
        %150 = sbr.rel (%p148) target = $region20
      $region19: #{residual_block_forward.5} parent=11 // pred_region
        _
      $region20: #{residual_block_forward.5} parent=11 // pred_fallthru
        _
    $region12: #{residual_block_forward.5} parent=5 // pred_fallthru
      _
    %p151 = scmp.lt.s32.totalorder %s10, 2
    // Predicated region
    $region21: #{residual_block_forward.5} parent=5 // pred_check
      %p152 = pneg %p151
    $region22: #{residual_block_forward.5} parent=5 // pred_check_branch
      %154 = sbr.rel (%p152) target = $region24
    $region23: #{residual_block_forward.5} parent=5 // pred_region
      // Predicated region
      $region25: #{residual_block_forward.5} parent=23 // pred_check
        %p155 = pneg %p30
      $region26: #{residual_block_forward.5} parent=23 // pred_check_branch
        %157 = sbr.rel (%p155) target = $region28
      $region27: #{residual_block_forward.5} parent=23 // pred_region
        %p158 = scmp.lt.s32.totalorder %s10, 1
        %s159 = scalar_select %p158, %s10, 1
        %s160 = smul.addr %s159, 32
        %s161 = smul.addr %s160, 8
        %s162 = scalar_lea.vmem %s0, %s161
      $region28: #{residual_block_forward.5} parent=23 // pred_fallthru
        _
      // Predicated region
      $region29: #{residual_block_forward.5} parent=23 // pred_check
        %p163 = pneg %p98
      $region30: #{residual_block_forward.5} parent=23 // pred_check_branch
        %165 = sbr.rel (%p163) target = $region32
      $region31: #{residual_block_forward.5} parent=23 // pred_region
        %p166 = scmp.lt.s32.totalorder %s10, 1
        %s167 = scalar_select %p166, %s10, 1
        %s168 = smul.addr %s167, 32
        %s169 = smul.addr %s168, 8
        %s170 = scalar_lea.vmem %s3, %s169
      $region32: #{residual_block_forward.5} parent=23 // pred_fallthru
        _
    $region24: #{residual_block_forward.5} parent=5 // pred_fallthru
      _
    %p171 = scmp.le.s32.totalorder 1, %s10
    %p172 = scmp.lt.s32.totalorder %s10, 3
    %p173 = pnand %p171, %p172
    %p174 = pneg %p173
    // Predicated region
    $region33: #{residual_block_forward.5} parent=5 // pred_check
      _
    $region34: #{residual_block_forward.5} parent=5 // pred_check_branch
      %176 = sbr.rel (%p173) target = $region36
    $region35: #{residual_block_forward.5} parent=5 // pred_region
      %s177 = ssub.s32 %s10, 1
      %p178 = scmp.lt.s32.totalorder %s15, 1
      %s179 = scalar_select %p178, %s15, 1
      %s180 = smul.addr %s179, 32
      %s181 = smul.addr %s180, 8
      %s182 = scalar_lea.vmem %s0, %s181
      %p183 = pneg %p36
      %p184 = pneg %p33
      %p185 = pneg %p57
      %p186 = pneg %p54
      %p187 = pneg %p78
      %p188 = pneg %p75
      %p189 = scmp.lt.s32.totalorder %s15, 1
      %s190 = scalar_select %p189, %s15, 1
      %s191 = smul.addr %s190, 32
      %s192 = smul.addr %s191, 8
      %s193 = scalar_lea.vmem %s3, %s192
      %p194 = pneg %p104
      %p195 = pneg %p101
      %p196 = pneg %p130
      %p197 = pneg %p127
      %p198 = scmp.lt.s32.totalorder %s15, 1
      %s199 = scalar_select %p198, %s15, 1
      %s200 = smul.addr %s199, 32
      %s201 = smul.addr %s200, 8
      %s202 = scalar_lea.vmem %s4, %s201
      %p203 = scmp.lt.s32.totalorder %s15, 1
      %s204 = scalar_select %p203, %s15, 1
      %s205 = smul.addr %s204, 32
      %s206 = smul.addr %s205, 8
      %s207 = scalar_lea.vmem %s0, %s206
      %p208 = scmp.lt.s32.totalorder %s15, 1
      %s209 = scalar_select %p208, %s15, 1
      %s210 = smul.addr %s209, 32
      %s211 = smul.addr %s210, 8
      %s212 = scalar_lea.vmem %s3, %s211
      %p213 = scmp.lt.s32.totalorder %s15, 1
      %s214 = scalar_select %p213, %s15, 1
      %s215 = smul.addr %s214, 32
      %s216 = smul.addr %s215, 8
      %s217 = scalar_lea.vmem %s4, %s216
      %v218 = vld [vmem:[%s207] sm:$0xff]
      %v219 = vld [vmem:[%s207 + $0x8] sm:$0xff]
      %v220 = vld [vmem:[%s207 + $0x10] sm:$0xff]
      %v221 = vld [vmem:[%s207 + $0x18] sm:$0xff]
      %v222 = vld [vmem:[%s207 + $0x20] sm:$0xff]
      %v223 = vld [vmem:[%s207 + $0x28] sm:$0xff]
      %v224 = vld [vmem:[%s207 + $0x30] sm:$0xff]
      %v225 = vld [vmem:[%s207 + $0x38] sm:$0xff]
      %v226 = vld [vmem:[%s207 + $0x40] sm:$0xff]
      %v227 = vld [vmem:[%s207 + $0x48] sm:$0xff]
      %v228 = vld [vmem:[%s207 + $0x50] sm:$0xff]
      %v229 = vld [vmem:[%s207 + $0x58] sm:$0xff]
      %v230 = vld [vmem:[%s207 + $0x60] sm:$0xff]
      %v231 = vld [vmem:[%s207 + $0x68] sm:$0xff]
      %v232 = vld [vmem:[%s207 + $0x70] sm:$0xff]
      %v233 = vld [vmem:[%s207 + $0x78] sm:$0xff]
      %v234 = vld [vmem:[%s207 + $0x80] sm:$0xff]
      %v235 = vld [vmem:[%s207 + $0x88] sm:$0xff]
      %v236 = vld [vmem:[%s207 + $0x90] sm:$0xff]
      %v237 = vld [vmem:[%s207 + $0x98] sm:$0xff]
      %v238 = vld [vmem:[%s207 + $0xa0] sm:$0xff]
      %v239 = vld [vmem:[%s207 + $0xa8] sm:$0xff]
      %v240 = vld [vmem:[%s207 + $0xb0] sm:$0xff]
      %v241 = vld [vmem:[%s207 + $0xb8] sm:$0xff]
      %v242 = vld [vmem:[%s207 + $0xc0] sm:$0xff]
      %v243 = vld [vmem:[%s207 + $0xc8] sm:$0xff]
      %v244 = vld [vmem:[%s207 + $0xd0] sm:$0xff]
      %v245 = vld [vmem:[%s207 + $0xd8] sm:$0xff]
      %v246 = vld [vmem:[%s207 + $0xe0] sm:$0xff]
      %v247 = vld [vmem:[%s207 + $0xe8] sm:$0xff]
      %v248 = vld [vmem:[%s207 + $0xf0] sm:$0xff]
      %v249 = vld [vmem:[%s207 + $0xf8] sm:$0xff]
      %v250 = vld [vmem:[%s1] sm:$0x1]
      %v252 = vlaneseq
      %v253 = vshrl.u32 %v252, 7
      %v254 = vsub.s32 0, %v253
      %v255 = vrot.slane %v250, %v254
      %v257 = vmul.f32 %v218, %v255
      %v258 = vmul.f32 %v219, %v255
      %v259 = vmul.f32 %v220, %v255
      %v260 = vmul.f32 %v221, %v255
      %v261 = vmul.f32 %v222, %v255
      %v262 = vmul.f32 %v223, %v255
      %v263 = vmul.f32 %v224, %v255
      %v264 = vmul.f32 %v225, %v255
      %v265 = vmul.f32 %v226, %v255
      %v266 = vmul.f32 %v227, %v255
      %v267 = vmul.f32 %v228, %v255
      %v268 = vmul.f32 %v229, %v255
      %v269 = vmul.f32 %v230, %v255
      %v270 = vmul.f32 %v231, %v255
      %v271 = vmul.f32 %v232, %v255
      %v272 = vmul.f32 %v233, %v255
      %v273 = vmul.f32 %v234, %v255
      %v274 = vmul.f32 %v235, %v255
      %v275 = vmul.f32 %v236, %v255
      %v276 = vmul.f32 %v237, %v255
      %v277 = vmul.f32 %v238, %v255
      %v278 = vmul.f32 %v239, %v255
      %v279 = vmul.f32 %v240, %v255
      %v280 = vmul.f32 %v241, %v255
      %v281 = vmul.f32 %v242, %v255
      %v282 = vmul.f32 %v243, %v255
      %v283 = vmul.f32 %v244, %v255
      %v284 = vmul.f32 %v245, %v255
      %v285 = vmul.f32 %v246, %v255
      %v286 = vmul.f32 %v247, %v255
      %v287 = vmul.f32 %v248, %v255
      %v288 = vmul.f32 %v249, %v255
      %v289 = vld [vmem:[%s2] sm:$0x1]
      %v291 = vlaneseq
      %v292 = vshrl.u32 %v291, 7
      %v293 = vsub.s32 0, %v292
      %v294 = vrot.slane %v289, %v293
      %v296 = vadd.f32 %v257, %v294
      %v297 = vadd.f32 %v258, %v294
      %v298 = vadd.f32 %v259, %v294
      %v299 = vadd.f32 %v260, %v294
      %v300 = vadd.f32 %v261, %v294
      %v301 = vadd.f32 %v262, %v294
      %v302 = vadd.f32 %v263, %v294
      %v303 = vadd.f32 %v264, %v294
      %v304 = vadd.f32 %v265, %v294
      %v305 = vadd.f32 %v266, %v294
      %v306 = vadd.f32 %v267, %v294
      %v307 = vadd.f32 %v268, %v294
      %v308 = vadd.f32 %v269, %v294
      %v309 = vadd.f32 %v270, %v294
      %v310 = vadd.f32 %v271, %v294
      %v311 = vadd.f32 %v272, %v294
      %v312 = vadd.f32 %v273, %v294
      %v313 = vadd.f32 %v274, %v294
      %v314 = vadd.f32 %v275, %v294
      %v315 = vadd.f32 %v276, %v294
      %v316 = vadd.f32 %v277, %v294
      %v317 = vadd.f32 %v278, %v294
      %v318 = vadd.f32 %v279, %v294
      %v319 = vadd.f32 %v280, %v294
      %v320 = vadd.f32 %v281, %v294
      %v321 = vadd.f32 %v282, %v294
      %v322 = vadd.f32 %v283, %v294
      %v323 = vadd.f32 %v284, %v294
      %v324 = vadd.f32 %v285, %v294
      %v325 = vadd.f32 %v286, %v294
      %v326 = vadd.f32 %v287, %v294
      %v327 = vadd.f32 %v288, %v294
      %v328 = vld [vmem:[%s212] sm:$0xff]
      %v329 = vld [vmem:[%s212 + $0x8] sm:$0xff]
      %v330 = vld [vmem:[%s212 + $0x10] sm:$0xff]
      %v331 = vld [vmem:[%s212 + $0x18] sm:$0xff]
      %v332 = vld [vmem:[%s212 + $0x20] sm:$0xff]
      %v333 = vld [vmem:[%s212 + $0x28] sm:$0xff]
      %v334 = vld [vmem:[%s212 + $0x30] sm:$0xff]
      %v335 = vld [vmem:[%s212 + $0x38] sm:$0xff]
      %v336 = vld [vmem:[%s212 + $0x40] sm:$0xff]
      %v337 = vld [vmem:[%s212 + $0x48] sm:$0xff]
      %v338 = vld [vmem:[%s212 + $0x50] sm:$0xff]
      %v339 = vld [vmem:[%s212 + $0x58] sm:$0xff]
      %v340 = vld [vmem:[%s212 + $0x60] sm:$0xff]
      %v341 = vld [vmem:[%s212 + $0x68] sm:$0xff]
      %v342 = vld [vmem:[%s212 + $0x70] sm:$0xff]
      %v343 = vld [vmem:[%s212 + $0x78] sm:$0xff]
      %v344 = vld [vmem:[%s212 + $0x80] sm:$0xff]
      %v345 = vld [vmem:[%s212 + $0x88] sm:$0xff]
      %v346 = vld [vmem:[%s212 + $0x90] sm:$0xff]
      %v347 = vld [vmem:[%s212 + $0x98] sm:$0xff]
      %v348 = vld [vmem:[%s212 + $0xa0] sm:$0xff]
      %v349 = vld [vmem:[%s212 + $0xa8] sm:$0xff]
      %v350 = vld [vmem:[%s212 + $0xb0] sm:$0xff]
      %v351 = vld [vmem:[%s212 + $0xb8] sm:$0xff]
      %v352 = vld [vmem:[%s212 + $0xc0] sm:$0xff]
      %v353 = vld [vmem:[%s212 + $0xc8] sm:$0xff]
      %v354 = vld [vmem:[%s212 + $0xd0] sm:$0xff]
      %v355 = vld [vmem:[%s212 + $0xd8] sm:$0xff]
      %v356 = vld [vmem:[%s212 + $0xe0] sm:$0xff]
      %v357 = vld [vmem:[%s212 + $0xe8] sm:$0xff]
      %v358 = vld [vmem:[%s212 + $0xf0] sm:$0xff]
      %v359 = vld [vmem:[%s212 + $0xf8] sm:$0xff]
      %v360 = vadd.f32 %v296, %v328
      %v361 = vadd.f32 %v297, %v329
      %v362 = vadd.f32 %v298, %v330
      %v363 = vadd.f32 %v299, %v331
      %v364 = vadd.f32 %v300, %v332
      %v365 = vadd.f32 %v301, %v333
      %v366 = vadd.f32 %v302, %v334
      %v367 = vadd.f32 %v303, %v335
      %v368 = vadd.f32 %v304, %v336
      %v369 = vadd.f32 %v305, %v337
      %v370 = vadd.f32 %v306, %v338
      %v371 = vadd.f32 %v307, %v339
      %v372 = vadd.f32 %v308, %v340
      %v373 = vadd.f32 %v309, %v341
      %v374 = vadd.f32 %v310, %v342
      %v375 = vadd.f32 %v311, %v343
      %v376 = vadd.f32 %v312, %v344
      %v377 = vadd.f32 %v313, %v345
      %v378 = vadd.f32 %v314, %v346
      %v379 = vadd.f32 %v315, %v347
      %v380 = vadd.f32 %v316, %v348
      %v381 = vadd.f32 %v317, %v349
      %v382 = vadd.f32 %v318, %v350
      %v383 = vadd.f32 %v319, %v351
      %v384 = vadd.f32 %v320, %v352
      %v385 = vadd.f32 %v321, %v353
      %v386 = vadd.f32 %v322, %v354
      %v387 = vadd.f32 %v323, %v355
      %v388 = vadd.f32 %v324, %v356
      %v389 = vadd.f32 %v325, %v357
      %v390 = vadd.f32 %v326, %v358
      %v391 = vadd.f32 %v327, %v359
      %v392 = vmax.f32 %v360, 0.0
      %v393 = vmax.f32 %v361, 0.0
      %v394 = vmax.f32 %v362, 0.0
      %v395 = vmax.f32 %v363, 0.0
      %v396 = vmax.f32 %v364, 0.0
      %v397 = vmax.f32 %v365, 0.0
      %v398 = vmax.f32 %v366, 0.0
      %v399 = vmax.f32 %v367, 0.0
      %v400 = vmax.f32 %v368, 0.0
      %v401 = vmax.f32 %v369, 0.0
      %v402 = vmax.f32 %v370, 0.0
      %v403 = vmax.f32 %v371, 0.0
      %v404 = vmax.f32 %v372, 0.0
      %v405 = vmax.f32 %v373, 0.0
      %v406 = vmax.f32 %v374, 0.0
      %v407 = vmax.f32 %v375, 0.0
      %v408 = vmax.f32 %v376, 0.0
      %v409 = vmax.f32 %v377, 0.0
      %v410 = vmax.f32 %v378, 0.0
      %v411 = vmax.f32 %v379, 0.0
      %v412 = vmax.f32 %v380, 0.0
      %v413 = vmax.f32 %v381, 0.0
      %v414 = vmax.f32 %v382, 0.0
      %v415 = vmax.f32 %v383, 0.0
      %v416 = vmax.f32 %v384, 0.0
      %v417 = vmax.f32 %v385, 0.0
      %v418 = vmax.f32 %v386, 0.0
      %v419 = vmax.f32 %v387, 0.0
      %v420 = vmax.f32 %v388, 0.0
      %v421 = vmax.f32 %v389, 0.0
      %v422 = vmax.f32 %v390, 0.0
      %v423 = vmax.f32 %v391, 0.0
      %424 = vst [vmem:[%s217] sm:$0xff] %v392
      %425 = vst [vmem:[%s217 + $0x8] sm:$0xff] %v393
      %426 = vst [vmem:[%s217 + $0x10] sm:$0xff] %v394
      %427 = vst [vmem:[%s217 + $0x18] sm:$0xff] %v395
      %428 = vst [vmem:[%s217 + $0x20] sm:$0xff] %v396
      %429 = vst [vmem:[%s217 + $0x28] sm:$0xff] %v397
      %430 = vst [vmem:[%s217 + $0x30] sm:$0xff] %v398
      %431 = vst [vmem:[%s217 + $0x38] sm:$0xff] %v399
      %432 = vst [vmem:[%s217 + $0x40] sm:$0xff] %v400
      %433 = vst [vmem:[%s217 + $0x48] sm:$0xff] %v401
      %434 = vst [vmem:[%s217 + $0x50] sm:$0xff] %v402
      %435 = vst [vmem:[%s217 + $0x58] sm:$0xff] %v403
      %436 = vst [vmem:[%s217 + $0x60] sm:$0xff] %v404
      %437 = vst [vmem:[%s217 + $0x68] sm:$0xff] %v405
      %438 = vst [vmem:[%s217 + $0x70] sm:$0xff] %v406
      %439 = vst [vmem:[%s217 + $0x78] sm:$0xff] %v407
      %440 = vst [vmem:[%s217 + $0x80] sm:$0xff] %v408
      %441 = vst [vmem:[%s217 + $0x88] sm:$0xff] %v409
      %442 = vst [vmem:[%s217 + $0x90] sm:$0xff] %v410
      %443 = vst [vmem:[%s217 + $0x98] sm:$0xff] %v411
      %444 = vst [vmem:[%s217 + $0xa0] sm:$0xff] %v412
      %445 = vst [vmem:[%s217 + $0xa8] sm:$0xff] %v413
      %446 = vst [vmem:[%s217 + $0xb0] sm:$0xff] %v414
      %447 = vst [vmem:[%s217 + $0xb8] sm:$0xff] %v415
      %448 = vst [vmem:[%s217 + $0xc0] sm:$0xff] %v416
      %449 = vst [vmem:[%s217 + $0xc8] sm:$0xff] %v417
      %450 = vst [vmem:[%s217 + $0xd0] sm:$0xff] %v418
      %451 = vst [vmem:[%s217 + $0xd8] sm:$0xff] %v419
      %452 = vst [vmem:[%s217 + $0xe0] sm:$0xff] %v420
      %453 = vst [vmem:[%s217 + $0xe8] sm:$0xff] %v421
      %454 = vst [vmem:[%s217 + $0xf0] sm:$0xff] %v422
      %455 = vst [vmem:[%s217 + $0xf8] sm:$0xff] %v423
      %p456 = scmp.lt.s32.totalorder %s15, 1
      %s457 = scalar_select %p456, %s15, 1
      %s458 = smul.addr %s457, 32
      %s459 = smul.addr %s458, 8
      %s460 = scalar_lea.vmem %s4, %s459
      // Predicated region
      $region37: #{residual_block_forward.5} parent=35 // pred_check
        %p461 = pneg %p127
      $region38: #{residual_block_forward.5} parent=35 // pred_check_branch
        %463 = sbr.rel (%p461) target = $region40
      $region39: #{residual_block_forward.5} parent=35 // pred_region
        _
      $region40: #{residual_block_forward.5} parent=35 // pred_fallthru
        _
    $region36: #{residual_block_forward.5} parent=5 // pred_fallthru
      _
    %p464 = scmp.le.s32.totalorder 2, %s10
    // Predicated region
    $region41: #{residual_block_forward.5} parent=5 // pred_check
      %p465 = pneg %p464
    $region42: #{residual_block_forward.5} parent=5 // pred_check_branch
      %467 = sbr.rel (%p465) target = $region44
    $region43: #{residual_block_forward.5} parent=5 // pred_region
      %s468 = ssub.s32 %s10, 2
      // Predicated region
      $region45: #{residual_block_forward.5} parent=43 // pred_check
        %p469 = pneg %p133
      $region46: #{residual_block_forward.5} parent=43 // pred_check_branch
        %471 = sbr.rel (%p469) target = $region48
      $region47: #{residual_block_forward.5} parent=43 // pred_region
        %p472 = scmp.lt.s32.totalorder %s16, 1
        %s473 = scalar_select %p472, %s16, 1
        %s474 = smul.addr %s473, 32
        %s475 = smul.addr %s474, 8
        %s476 = scalar_lea.vmem %s4, %s475
      $region48: #{residual_block_forward.5} parent=43 // pred_fallthru
        _
    $region44: #{residual_block_forward.5} parent=5 // pred_fallthru
      _
  $region6: #{residual_block_forward.5} parent=0 // loop_footer
    %s14 = sadd.s32 1, %s10
  $region7: #{residual_block_forward.5} parent=0 // loop_footer_branch
    %9 = sbr.rel target = $region3
  $region8: #{residual_block_forward.5} parent=0 // loop_exit
    _

// kernel: residual_block_forward.4
$region0: #{residual_block_forward.4}
  #allocation0 [shape = 'u32[]', space=smem, size = 0x4, offset = 0x4, fixed_abs, tag = 'smem constant byte address 0x4 - core index']
  #allocation1 [shape = 'u32[144,128]{1,0:T(1,128)}', space=vmem, size = 0x12000, scoped, tag = 'internal scratch']
  #allocation2 [shape = 'f32[18,18,128]{2,1,0:T(8,128)}', space=vmem, size = 0x36000, scoped, tag = 'scratch operand']
  %s0 = inlined_call_operand.vmem [shape: f32[2,16,16,128], index: 0, kind: input, shape index: {}]
  %s1 = inlined_call_operand.vmem [shape: f32[1,128], index: 1, kind: input, shape index: {}]
  %s2 = inlined_call_operand.vmem [shape: f32[1,128], index: 2, kind: input, shape index: {}]
  %s3 = inlined_call_operand.vmem [shape: f32[3,3,128,128], index: 3, kind: input, shape index: {}]
  %s4 = inlined_call_operand.vmem [shape: f32[1,128], index: 4, kind: input, shape index: {}]
  %s5 = inlined_call_operand.vmem [shape: f32[2,16,16,128], index: 5, kind: output, shape index: {0}]
  %s6 = inlined_call_operand.vmem [shape: f32[2,2,128], index: 6, kind: output, shape index: {1}]
  %7 = xla_tuple %s5, %s6
  %s8 = sld [smem:[#allocation0]]
  $region65: #{residual_block_forward.4} parent=0
    _
  %s10 = ssub.s32 1, %s8
  %s11 = scalar_select 0, %s10, %s8
  loop: start=0, step=1, limit=4
  $region2: #{residual_block_forward.4} parent=0 // loop_pre_header
    _
  $region3: #{residual_block_forward.4} parent=0 // loop_header
    %s13 = sphi 0, %s17
    %p14 = scmp.ge.s32.totalorder %s13, 4
    %s23 = sphi 0, %s25
    %s26 = sphi 0, %s23
    %s27 = sphi 0, %s26
    %s43 = sphi 0, %s27
    %s47 = sphi 0, %s47
    %s49 = sphi 0, %s47
    %s50 = sphi 0, %s49
    %s64 = sphi 0, %s50
    %s68 = sphi 0, %s68
    %s70 = sphi 0, %s68
    %s71 = sphi 0, %s70
    %s85 = sphi 0, %s71
    %s89 = sphi 0, %s89
    %s91 = sphi 0, %s89
    %s92 = sphi 0, %s91
    %s106 = sphi 0, %s92
    %s110 = sphi 0, %s110
    %s112 = sphi 0, %s110
    %s113 = sphi 0, %s112
    %s127 = sphi 0, %s113
    %s133 = sphi 0, %s135
    %s136 = sphi 0, %s133
    %s137 = sphi 0, %s136
    %s153 = sphi 0, %s137
    %s159 = sphi 0, %s161
    %s162 = sphi 0, %s159
    %s163 = sphi 0, %s162
    %s179 = sphi 0, %s163
  $region4: #{residual_block_forward.4} parent=0 // loop_header_branch
    %16 = sbr.rel (%p14) target = $region8
  $region5: #{residual_block_forward.4} parent=0 // loop_body
    %s18 = ssub.s32 %s13, 1
    %s19 = ssub.s32 %s13, 2
    %s20 = sadd.s32 %s13, 1
    %s21 = ssub.s32 %s13, %s20
    %p22 = scmp.eq.s32.totalorder %s21, 0
    %s24 = sadd.s32 %s23, 1
    %s25 = scalar_select %p22, %s23, %s24
    %p28 = pneg %p22
    %p29 = scmp.eq.s32.totalorder %s13, 1
    %p30 = por %p28, %p29
    %p31 = scmp.ne.s32.totalorder %s23, %s26
    %p32 = scmp.eq.s32.totalorder %s13, 0
    %p33 = por %p31, %p32
    %p34 = scmp.ne.s32.totalorder %s23, %s26
    %p35 = scmp.eq.s32.totalorder %s18, 1
    %p36 = por %p34, %p35
    %p37 = scmp.ne.s32.totalorder %s26, %s27
    %p38 = scmp.eq.s32.totalorder %s18, 0
    %p39 = por %p37, %p38
    %p40 = scmp.ne.s32.totalorder %s26, %s27
    %p41 = scmp.eq.s32.totalorder %s19, 1
    %p42 = por %p40, %p41
    %p44 = scmp.ne.s32.totalorder %s27, %s43
    %p45 = scmp.eq.s32.totalorder %s19, 0
    %p46 = por %p44, %p45
    %s48 = sadd.s32 %s47, 1
    %p51 = scmp.eq.s32.totalorder %s13, 1
    %p52 = scmp.ne.s32.totalorder %s47, %s49
    %p53 = scmp.eq.s32.totalorder %s13, 0
    %p54 = por %p52, %p53
    %p55 = scmp.ne.s32.totalorder %s47, %s49
    %p56 = scmp.eq.s32.totalorder %s18, 1
    %p57 = por %p55, %p56
    %p58 = scmp.ne.s32.totalorder %s49, %s50
    %p59 = scmp.eq.s32.totalorder %s18, 0
    %p60 = por %p58, %p59
    %p61 = scmp.ne.s32.totalorder %s49, %s50
    %p62 = scmp.eq.s32.totalorder %s19, 1
    %p63 = por %p61, %p62
    %p65 = scmp.ne.s32.totalorder %s50, %s64
    %p66 = scmp.eq.s32.totalorder %s19, 0
    %p67 = por %p65, %p66
    %s69 = sadd.s32 %s68, 1
    %p72 = scmp.eq.s32.totalorder %s13, 1
    %p73 = scmp.ne.s32.totalorder %s68, %s70
    %p74 = scmp.eq.s32.totalorder %s13, 0
    %p75 = por %p73, %p74
    %p76 = scmp.ne.s32.totalorder %s68, %s70
    %p77 = scmp.eq.s32.totalorder %s18, 1
    %p78 = por %p76, %p77
    %p79 = scmp.ne.s32.totalorder %s70, %s71
    %p80 = scmp.eq.s32.totalorder %s18, 0
    %p81 = por %p79, %p80
    %p82 = scmp.ne.s32.totalorder %s70, %s71
    %p83 = scmp.eq.s32.totalorder %s19, 1
    %p84 = por %p82, %p83
    %p86 = scmp.ne.s32.totalorder %s71, %s85
    %p87 = scmp.eq.s32.totalorder %s19, 0
    %p88 = por %p86, %p87
    %s90 = sadd.s32 %s89, 1
    %p93 = scmp.eq.s32.totalorder %s13, 1
    %p94 = scmp.ne.s32.totalorder %s89, %s91
    %p95 = scmp.eq.s32.totalorder %s13, 0
    %p96 = por %p94, %p95
    %p97 = scmp.ne.s32.totalorder %s89, %s91
    %p98 = scmp.eq.s32.totalorder %s18, 1
    %p99 = por %p97, %p98
    %p100 = scmp.ne.s32.totalorder %s91, %s92
    %p101 = scmp.eq.s32.totalorder %s18, 0
    %p102 = por %p100, %p101
    %p103 = scmp.ne.s32.totalorder %s91, %s92
    %p104 = scmp.eq.s32.totalorder %s19, 1
    %p105 = por %p103, %p104
    %p107 = scmp.ne.s32.totalorder %s92, %s106
    %p108 = scmp.eq.s32.totalorder %s19, 0
    %p109 = por %p107, %p108
    %s111 = sadd.s32 %s110, 1
    %p114 = scmp.eq.s32.totalorder %s13, 1
    %p115 = scmp.ne.s32.totalorder %s110, %s112
    %p116 = scmp.eq.s32.totalorder %s13, 0
    %p117 = por %p115, %p116
    %p118 = scmp.ne.s32.totalorder %s110, %s112
    %p119 = scmp.eq.s32.totalorder %s18, 1
    %p120 = por %p118, %p119
    %p121 = scmp.ne.s32.totalorder %s112, %s113
    %p122 = scmp.eq.s32.totalorder %s18, 0
    %p123 = por %p121, %p122
    %p124 = scmp.ne.s32.totalorder %s112, %s113
    %p125 = scmp.eq.s32.totalorder %s19, 1
    %p126 = por %p124, %p125
    %p128 = scmp.ne.s32.totalorder %s113, %s127
    %p129 = scmp.eq.s32.totalorder %s19, 0
    %p130 = por %p128, %p129
    %s131 = ssub.s32 %s13, %s20
    %p132 = scmp.eq.s32.totalorder %s131, 0
    %s134 = sadd.s32 %s133, 1
    %s135 = scalar_select %p132, %s133, %s134
    %p138 = pneg %p132
    %p139 = scmp.eq.s32.totalorder %s13, 1
    %p140 = por %p138, %p139
    %p141 = scmp.ne.s32.totalorder %s133, %s136
    %p142 = scmp.eq.s32.totalorder %s13, 0
    %p143 = por %p141, %p142
    %p144 = scmp.ne.s32.totalorder %s133, %s136
    %p145 = scmp.eq.s32.totalorder %s18, 1
    %p146 = por %p144, %p145
    %p147 = scmp.ne.s32.totalorder %s136, %s137
    %p148 = scmp.eq.s32.totalorder %s18, 0
    %p149 = por %p147, %p148
    %p150 = scmp.ne.s32.totalorder %s136, %s137
    %p151 = scmp.eq.s32.totalorder %s19, 1
    %p152 = por %p150, %p151
    %p154 = scmp.ne.s32.totalorder %s137, %s153
    %p155 = scmp.eq.s32.totalorder %s19, 0
    %p156 = por %p154, %p155
    %s157 = ssub.s32 %s13, %s20
    %p158 = scmp.eq.s32.totalorder %s157, 0
    %s160 = sadd.s32 %s159, 1
    %s161 = scalar_select %p158, %s159, %s160
    %p164 = pneg %p158
    %p165 = scmp.eq.s32.totalorder %s13, 1
    %p166 = por %p164, %p165
    %p167 = scmp.ne.s32.totalorder %s159, %s162
    %p168 = scmp.eq.s32.totalorder %s13, 0
    %p169 = por %p167, %p168
    %p170 = scmp.ne.s32.totalorder %s159, %s162
    %p171 = scmp.eq.s32.totalorder %s18, 1
    %p172 = por %p170, %p171
    %p173 = scmp.ne.s32.totalorder %s162, %s163
    %p174 = scmp.eq.s32.totalorder %s18, 0
    %p175 = por %p173, %p174
    %p176 = scmp.ne.s32.totalorder %s162, %s163
    %p177 = scmp.eq.s32.totalorder %s19, 1
    %p178 = por %p176, %p177
    %p180 = scmp.ne.s32.totalorder %s163, %s179
    %p181 = scmp.eq.s32.totalorder %s19, 0
    %p182 = por %p180, %p181
    %p183 = scmp.le.s32.totalorder 1, %s13
    %p184 = scmp.lt.s32.totalorder %s13, 3
    %p185 = pnand %p183, %p184
    %p186 = pneg %p185
    // Predicated region
    $region9: #{residual_block_forward.4} parent=5 // pred_check
      _
    $region10: #{residual_block_forward.4} parent=5 // pred_check_branch
      %188 = sbr.rel (%p185) target = $region12
    $region11: #{residual_block_forward.4} parent=5 // pred_region
      %s189 = ssub.s32 %s13, 1
      // Predicated region
      $region13: #{residual_block_forward.4} parent=11 // pred_check
        %p190 = pneg %p60
      $region14: #{residual_block_forward.4} parent=11 // pred_check_branch
        %192 = sbr.rel (%p190) target = $region16
      $region15: #{residual_block_forward.4} parent=11 // pred_region
        _
      $region16: #{residual_block_forward.4} parent=11 // pred_fallthru
        _
      // Predicated region
      $region17: #{residual_block_forward.4} parent=11 // pred_check
        %p193 = pneg %p81
      $region18: #{residual_block_forward.4} parent=11 // pred_check_branch
        %195 = sbr.rel (%p193) target = $region20
      $region19: #{residual_block_forward.4} parent=11 // pred_region
        _
      $region20: #{residual_block_forward.4} parent=11 // pred_fallthru
        _
      // Predicated region
      $region21: #{residual_block_forward.4} parent=11 // pred_check
        %p196 = pneg %p102
      $region22: #{residual_block_forward.4} parent=11 // pred_check_branch
        %198 = sbr.rel (%p196) target = $region24
      $region23: #{residual_block_forward.4} parent=11 // pred_region
        _
      $region24: #{residual_block_forward.4} parent=11 // pred_fallthru
        _
      // Predicated region
      $region25: #{residual_block_forward.4} parent=11 // pred_check
        %p199 = pneg %p123
      $region26: #{residual_block_forward.4} parent=11 // pred_check_branch
        %201 = sbr.rel (%p199) target = $region28
      $region27: #{residual_block_forward.4} parent=11 // pred_region
        _
      $region28: #{residual_block_forward.4} parent=11 // pred_fallthru
        _
    $region12: #{residual_block_forward.4} parent=5 // pred_fallthru
      _
    %p202 = scmp.lt.s32.totalorder %s13, 2
    // Predicated region
    $region29: #{residual_block_forward.4} parent=5 // pred_check
      %p203 = pneg %p202
    $region30: #{residual_block_forward.4} parent=5 // pred_check_branch
      %205 = sbr.rel (%p203) target = $region32
    $region31: #{residual_block_forward.4} parent=5 // pred_region
      // Predicated region
      $region33: #{residual_block_forward.4} parent=31 // pred_check
        %p206 = pneg %p33
      $region34: #{residual_block_forward.4} parent=31 // pred_check_branch
        %208 = sbr.rel (%p206) target = $region36
      $region35: #{residual_block_forward.4} parent=31 // pred_region
        %p209 = scmp.lt.s32.totalorder %s13, 1
        %s210 = scalar_select %p209, %s13, 1
        %s211 = smul.addr %s210, 32
        %s212 = smul.addr %s211, 8
        %s213 = scalar_lea.vmem %s0, %s212
      $region36: #{residual_block_forward.4} parent=31 // pred_fallthru
        _
    $region32: #{residual_block_forward.4} parent=5 // pred_fallthru
      _
    %p214 = scmp.le.s32.totalorder 1, %s13
    %p215 = scmp.lt.s32.totalorder %s13, 3
    %p216 = pnand %p214, %p215
    %p217 = pneg %p216
    // Predicated region
    $region37: #{residual_block_forward.4} parent=5 // pred_check
      _
    $region38: #{residual_block_forward.4} parent=5 // pred_check_branch
      %219 = sbr.rel (%p216) target = $region40
    $region39: #{residual_block_forward.4} parent=5 // pred_region
      %s220 = ssub.s32 %s13, 1
      %p221 = scmp.lt.s32.totalorder %s18, 1
      %s222 = scalar_select %p221, %s18, 1
      %s223 = smul.addr %s222, 32
      %s224 = smul.addr %s223, 8
      %s225 = scalar_lea.vmem %s0, %s224
      %p226 = pneg %p39
      %p227 = pneg %p36
      %p228 = pneg %p60
      %p229 = pneg %p57
      %p230 = pneg %p81
      %p231 = pneg %p78
      %p232 = pneg %p102
      %p233 = pneg %p99
      %p234 = pneg %p123
      %p235 = pneg %p120
      %p236 = pneg %p149
      %p237 = pneg %p146
      %p238 = scmp.lt.s32.totalorder %s18, 1
      %s239 = scalar_select %p238, %s18, 1
      %s240 = smul.addr %s239, 32
      %s241 = smul.addr %s240, 8
      %s242 = scalar_lea.vmem %s5, %s241
      %p243 = pneg %p175
      %p244 = pneg %p172
      %p245 = scmp.lt.s32.totalorder %s18, 1
      %s246 = scalar_select %p245, %s18, 1
      %s247 = smul.addr %s246, 2
      %s248 = scalar_lea.vmem %s6, %s247
      %p249 = scmp.lt.s32.totalorder %s18, 1
      %s250 = scalar_select %p249, %s18, 1
      %s251 = smul.addr %s250, 32
      %s252 = smul.addr %s251, 8
      %s253 = scalar_lea.vmem %s0, %s252
      %p254 = scmp.lt.s32.totalorder %s18, 1
      %s255 = scalar_select %p254, %s18, 1
      %s256 = smul.addr %s255, 32
      %s257 = smul.addr %s256, 8
      %s258 = scalar_lea.vmem %s5, %s257
      %p259 = scmp.lt.s32.totalorder %s18, 1
      %s260 = scalar_select %p259, %s18, 1
      %s261 = smul.addr %s260, 2
      %s262 = scalar_lea.vmem %s6, %s261
      %v263 = vld [vmem:[%s253] sm:$0xff]
      %v264 = vld [vmem:[%s253 + $0x8] sm:$0xff]
      %v265 = vld [vmem:[%s253 + $0x10] sm:$0xff]
      %v266 = vld [vmem:[%s253 + $0x18] sm:$0xff]
      %v267 = vld [vmem:[%s253 + $0x20] sm:$0xff]
      %v268 = vld [vmem:[%s253 + $0x28] sm:$0xff]
      %v269 = vld [vmem:[%s253 + $0x30] sm:$0xff]
      %v270 = vld [vmem:[%s253 + $0x38] sm:$0xff]
      %v271 = vld [vmem:[%s253 + $0x40] sm:$0xff]
      %v272 = vld [vmem:[%s253 + $0x48] sm:$0xff]
      %v273 = vld [vmem:[%s253 + $0x50] sm:$0xff]
      %v274 = vld [vmem:[%s253 + $0x58] sm:$0xff]
      %v275 = vld [vmem:[%s253 + $0x60] sm:$0xff]
      %v276 = vld [vmem:[%s253 + $0x68] sm:$0xff]
      %v277 = vld [vmem:[%s253 + $0x70] sm:$0xff]
      %v278 = vld [vmem:[%s253 + $0x78] sm:$0xff]
      %v279 = vld [vmem:[%s253 + $0x80] sm:$0xff]
      %v280 = vld [vmem:[%s253 + $0x88] sm:$0xff]
      %v281 = vld [vmem:[%s253 + $0x90] sm:$0xff]
      %v282 = vld [vmem:[%s253 + $0x98] sm:$0xff]
      %v283 = vld [vmem:[%s253 + $0xa0] sm:$0xff]
      %v284 = vld [vmem:[%s253 + $0xa8] sm:$0xff]
      %v285 = vld [vmem:[%s253 + $0xb0] sm:$0xff]
      %v286 = vld [vmem:[%s253 + $0xb8] sm:$0xff]
      %v287 = vld [vmem:[%s253 + $0xc0] sm:$0xff]
      %v288 = vld [vmem:[%s253 + $0xc8] sm:$0xff]
      %v289 = vld [vmem:[%s253 + $0xd0] sm:$0xff]
      %v290 = vld [vmem:[%s253 + $0xd8] sm:$0xff]
      %v291 = vld [vmem:[%s253 + $0xe0] sm:$0xff]
      %v292 = vld [vmem:[%s253 + $0xe8] sm:$0xff]
      %v293 = vld [vmem:[%s253 + $0xf0] sm:$0xff]
      %v294 = vld [vmem:[%s253 + $0xf8] sm:$0xff]
      %v295 = vld [vmem:[%s1] sm:$0x1]
      %v297 = vlaneseq
      %v298 = vshrl.u32 %v297, 7
      %v299 = vsub.s32 0, %v298
      %v300 = vrot.slane %v295, %v299
      %v302 = vmul.f32 %v263, %v300
      %v303 = vmul.f32 %v264, %v300
      %v304 = vmul.f32 %v265, %v300
      %v305 = vmul.f32 %v266, %v300
      %v306 = vmul.f32 %v267, %v300
      %v307 = vmul.f32 %v268, %v300
      %v308 = vmul.f32 %v269, %v300
      %v309 = vmul.f32 %v270, %v300
      %v310 = vmul.f32 %v271, %v300
      %v311 = vmul.f32 %v272, %v300
      %v312 = vmul.f32 %v273, %v300
      %v313 = vmul.f32 %v274, %v300
      %v314 = vmul.f32 %v275, %v300
      %v315 = vmul.f32 %v276, %v300
      %v316 = vmul.f32 %v277, %v300
      %v317 = vmul.f32 %v278, %v300
      %v318 = vmul.f32 %v279, %v300
      %v319 = vmul.f32 %v280, %v300
      %v320 = vmul.f32 %v281, %v300
      %v321 = vmul.f32 %v282, %v300
      %v322 = vmul.f32 %v283, %v300
      %v323 = vmul.f32 %v284, %v300
      %v324 = vmul.f32 %v285, %v300
      %v325 = vmul.f32 %v286, %v300
      %v326 = vmul.f32 %v287, %v300
      %v327 = vmul.f32 %v288, %v300
      %v328 = vmul.f32 %v289, %v300
      %v329 = vmul.f32 %v290, %v300
      %v330 = vmul.f32 %v291, %v300
      %v331 = vmul.f32 %v292, %v300
      %v332 = vmul.f32 %v293, %v300
      %v333 = vmul.f32 %v294, %v300
      %v334 = vld [vmem:[%s2] sm:$0x1]
      %v336 = vlaneseq
      %v337 = vshrl.u32 %v336, 7
      %v338 = vsub.s32 0, %v337
      %v339 = vrot.slane %v334, %v338
      %v341 = vadd.f32 %v302, %v339
      %v342 = vadd.f32 %v303, %v339
      %v343 = vadd.f32 %v304, %v339
      %v344 = vadd.f32 %v305, %v339
      %v345 = vadd.f32 %v306, %v339
      %v346 = vadd.f32 %v307, %v339
      %v347 = vadd.f32 %v308, %v339
      %v348 = vadd.f32 %v309, %v339
      %v349 = vadd.f32 %v310, %v339
      %v350 = vadd.f32 %v311, %v339
      %v351 = vadd.f32 %v312, %v339
      %v352 = vadd.f32 %v313, %v339
      %v353 = vadd.f32 %v314, %v339
      %v354 = vadd.f32 %v315, %v339
      %v355 = vadd.f32 %v316, %v339
      %v356 = vadd.f32 %v317, %v339
      %v357 = vadd.f32 %v318, %v339
      %v358 = vadd.f32 %v319, %v339
      %v359 = vadd.f32 %v320, %v339
      %v360 = vadd.f32 %v321, %v339
      %v361 = vadd.f32 %v322, %v339
      %v362 = vadd.f32 %v323, %v339
      %v363 = vadd.f32 %v324, %v339
      %v364 = vadd.f32 %v325, %v339
      %v365 = vadd.f32 %v326, %v339
      %v366 = vadd.f32 %v327, %v339
      %v367 = vadd.f32 %v328, %v339
      %v368 = vadd.f32 %v329, %v339
      %v369 = vadd.f32 %v330, %v339
      %v370 = vadd.f32 %v331, %v339
      %v371 = vadd.f32 %v332, %v339
      %v372 = vadd.f32 %v333, %v339
      %v373 = vmax.f32 %v341, 0.0
      %v374 = vmax.f32 %v342, 0.0
      %v375 = vmax.f32 %v343, 0.0
      %v376 = vmax.f32 %v344, 0.0
      %v377 = vmax.f32 %v345, 0.0
      %v378 = vmax.f32 %v346, 0.0
      %v379 = vmax.f32 %v347, 0.0
      %v380 = vmax.f32 %v348, 0.0
      %v381 = vmax.f32 %v349, 0.0
      %v382 = vmax.f32 %v350, 0.0
      %v383 = vmax.f32 %v351, 0.0
      %v384 = vmax.f32 %v352, 0.0
      %v385 = vmax.f32 %v353, 0.0
      %v386 = vmax.f32 %v354, 0.0
      %v387 = vmax.f32 %v355, 0.0
      %v388 = vmax.f32 %v356, 0.0
      %v389 = vmax.f32 %v357, 0.0
      %v390 = vmax.f32 %v358, 0.0
      %v391 = vmax.f32 %v359, 0.0
      %v392 = vmax.f32 %v360, 0.0
      %v393 = vmax.f32 %v361, 0.0
      %v394 = vmax.f32 %v362, 0.0
      %v395 = vmax.f32 %v363, 0.0
      %v396 = vmax.f32 %v364, 0.0
      %v397 = vmax.f32 %v365, 0.0
      %v398 = vmax.f32 %v366, 0.0
      %v399 = vmax.f32 %v367, 0.0
      %v400 = vmax.f32 %v368, 0.0
      %v401 = vmax.f32 %v369, 0.0
      %v402 = vmax.f32 %v370, 0.0
      %v403 = vmax.f32 %v371, 0.0
      %v404 = vmax.f32 %v372, 0.0
      %p405 = scmp.eq.s32.totalorder %s18, 0
      // Predicated region
      $region41: #{residual_block_forward.4} parent=39 // pred_check
        %p406 = pneg %p405
      $region42: #{residual_block_forward.4} parent=39 // pred_check_branch
        %408 = sbr.rel (%p406) target = $region44
      $region43: #{residual_block_forward.4} parent=39 // pred_region
        %409 = vst [vmem:[#allocation2] sm:$0xff] 0.0
        %410 = vst [vmem:[#allocation2 + $0x8] sm:$0xff] 0.0
        %411 = vst [vmem:[#allocation2 + $0x10] sm:$0x3] 0.0
        %412 = vst [vmem:[#allocation2 + $0x18] sm:$0xff] 0.0
        %413 = vst [vmem:[#allocation2 + $0x20] sm:$0xff] 0.0
        %414 = vst [vmem:[#allocation2 + $0x28] sm:$0x3] 0.0
        %415 = vst [vmem:[#allocation2 + $0x30] sm:$0xff] 0.0
        %416 = vst [vmem:[#allocation2 + $0x38] sm:$0xff] 0.0
        %417 = vst [vmem:[#allocation2 + $0x40] sm:$0x3] 0.0
        %418 = vst [vmem:[#allocation2 + $0x48] sm:$0xff] 0.0
        %419 = vst [vmem:[#allocation2 + $0x50] sm:$0xff] 0.0
        %420 = vst [vmem:[#allocation2 + $0x58] sm:$0x3] 0.0
        %421 = vst [vmem:[#allocation2 + $0x60] sm:$0xff] 0.0
        %422 = vst [vmem:[#allocation2 + $0x68] sm:$0xff] 0.0
        %423 = vst [vmem:[#allocation2 + $0x70] sm:$0x3] 0.0
        %424 = vst [vmem:[#allocation2 + $0x78] sm:$0xff] 0.0
        %425 = vst [vmem:[#allocation2 + $0x80] sm:$0xff] 0.0
        %426 = vst [vmem:[#allocation2 + $0x88] sm:$0x3] 0.0
        %427 = vst [vmem:[#allocation2 + $0x90] sm:$0xff] 0.0
        %428 = vst [vmem:[#allocation2 + $0x98] sm:$0xff] 0.0
        %429 = vst [vmem:[#allocation2 + $0xa0] sm:$0x3] 0.0
        %430 = vst [vmem:[#allocation2 + $0xa8] sm:$0xff] 0.0
        %431 = vst [vmem:[#allocation2 + $0xb0] sm:$0xff] 0.0
        %432 = vst [vmem:[#allocation2 + $0xb8] sm:$0x3] 0.0
        %433 = vst [vmem:[#allocation2 + $0xc0] sm:$0xff] 0.0
        %434 = vst [vmem:[#allocation2 + $0xc8] sm:$0xff] 0.0
        %435 = vst [vmem:[#allocation2 + $0xd0] sm:$0x3] 0.0
        %436 = vst [vmem:[#allocation2 + $0xd8] sm:$0xff] 0.0
        %437 = vst [vmem:[#allocation2 + $0xe0] sm:$0xff] 0.0
        %438 = vst [vmem:[#allocation2 + $0xe8] sm:$0x3] 0.0
        %439 = vst [vmem:[#allocation2 + $0xf0] sm:$0xff] 0.0
        %440 = vst [vmem:[#allocation2 + $0xf8] sm:$0xff] 0.0
        %441 = vst [vmem:[#allocation2 + $0x100] sm:$0x3] 0.0
        %442 = vst [vmem:[#allocation2 + $0x108] sm:$0xff] 0.0
        %443 = vst [vmem:[#allocation2 + $0x110] sm:$0xff] 0.0
        %444 = vst [vmem:[#allocation2 + $0x118] sm:$0x3] 0.0
        %445 = vst [vmem:[#allocation2 + $0x120] sm:$0xff] 0.0
        %446 = vst [vmem:[#allocation2 + $0x128] sm:$0xff] 0.0
        %447 = vst [vmem:[#allocation2 + $0x130] sm:$0x3] 0.0
        %448 = vst [vmem:[#allocation2 + $0x138] sm:$0xff] 0.0
        %449 = vst [vmem:[#allocation2 + $0x140] sm:$0xff] 0.0
        %450 = vst [vmem:[#allocation2 + $0x148] sm:$0x3] 0.0
        %451 = vst [vmem:[#allocation2 + $0x150] sm:$0xff] 0.0
        %452 = vst [vmem:[#allocation2 + $0x158] sm:$0xff] 0.0
        %453 = vst [vmem:[#allocation2 + $0x160] sm:$0x3] 0.0
        %454 = vst [vmem:[#allocation2 + $0x168] sm:$0xff] 0.0
        %455 = vst [vmem:[#allocation2 + $0x170] sm:$0xff] 0.0
        %456 = vst [vmem:[#allocation2 + $0x178] sm:$0x3] 0.0
        %457 = vst [vmem:[#allocation2 + $0x180] sm:$0xff] 0.0
        %458 = vst [vmem:[#allocation2 + $0x188] sm:$0xff] 0.0
        %459 = vst [vmem:[#allocation2 + $0x190] sm:$0x3] 0.0
        %460 = vst [vmem:[#allocation2 + $0x198] sm:$0xff] 0.0
        %461 = vst [vmem:[#allocation2 + $0x1a0] sm:$0xff] 0.0
        %462 = vst [vmem:[#allocation2 + $0x1a8] sm:$0x3] 0.0
      $region44: #{residual_block_forward.4} parent=39 // pred_fallthru
        _
      %s463 = scalar_lea.vmem [#allocation2], 24
      %464 = vst [vmem:[%s463 + $0x1] sm:$0xff] %v373
      %465 = vst [vmem:[%s463 + $0x9] sm:$0xff] %v374
      %466 = vst [vmem:[%s463 + $0x19] sm:$0xff] %v375
      %467 = vst [vmem:[%s463 + $0x21] sm:$0xff] %v376
      %468 = vst [vmem:[%s463 + $0x31] sm:$0xff] %v377
      %469 = vst [vmem:[%s463 + $0x39] sm:$0xff] %v378
      %470 = vst [vmem:[%s463 + $0x49] sm:$0xff] %v379
      %471 = vst [vmem:[%s463 + $0x51] sm:$0xff] %v380
      %472 = vst [vmem:[%s463 + $0x61] sm:$0xff] %v381
      %473 = vst [vmem:[%s463 + $0x69] sm:$0xff] %v382
      %474 = vst [vmem:[%s463 + $0x79] sm:$0xff] %v383
      %475 = vst [vmem:[%s463 + $0x81] sm:$0xff] %v384
      %476 = vst [vmem:[%s463 + $0x91] sm:$0xff] %v385
      %477 = vst [vmem:[%s463 + $0x99] sm:$0xff] %v386
      %478 = vst [vmem:[%s463 + $0xa9] sm:$0xff] %v387
      %479 = vst [vmem:[%s463 + $0xb1] sm:$0xff] %v388
      %480 = vst [vmem:[%s463 + $0xc1] sm:$0xff] %v389
      %481 = vst [vmem:[%s463 + $0xc9] sm:$0xff] %v390
      %482 = vst [vmem:[%s463 + $0xd9] sm:$0xff] %v391
      %483 = vst [vmem:[%s463 + $0xe1] sm:$0xff] %v392
      %484 = vst [vmem:[%s463 + $0xf1] sm:$0xff] %v393
      %485 = vst [vmem:[%s463 + $0xf9] sm:$0xff] %v394
      %486 = vst [vmem:[%s463 + $0x109] sm:$0xff] %v395
      %487 = vst [vmem:[%s463 + $0x111] sm:$0xff] %v396
      %488 = vst [vmem:[%s463 + $0x121] sm:$0xff] %v397
      %489 = vst [vmem:[%s463 + $0x129] sm:$0xff] %v398
      %490 = vst [vmem:[%s463 + $0x139] sm:$0xff] %v399
      %491 = vst [vmem:[%s463 + $0x141] sm:$0xff] %v400
      %492 = vst [vmem:[%s463 + $0x151] sm:$0xff] %v401
      %493 = vst [vmem:[%s463 + $0x159] sm:$0xff] %v402
      %494 = vst [vmem:[%s463 + $0x169] sm:$0xff] %v403
      %495 = vst [vmem:[%s463 + $0x171] sm:$0xff] %v404
      %v496 = vld [vmem:[#allocation2] sm:$0xff]
      %v497 = vld [vmem:[#allocation2 + $0x8] sm:$0xff]
      %v498 = vld [vmem:[#allocation2 + $0x18] sm:$0xff]
      %v499 = vld [vmem:[#allocation2 + $0x20] sm:$0xff]
      %v500 = vld [vmem:[#allocation2 + $0x30] sm:$0xff]
      %v501 = vld [vmem:[#allocation2 + $0x38] sm:$0xff]
      %v502 = vld [vmem:[#allocation2 + $0x48] sm:$0xff]
      %v503 = vld [vmem:[#allocation2 + $0x50] sm:$0xff]
      %v504 = vld [vmem:[#allocation2 + $0x60] sm:$0xff]
      %v505 = vld [vmem:[#allocation2 + $0x68] sm:$0xff]
      %v506 = vld [vmem:[#allocation2 + $0x78] sm:$0xff]
      %v507 = vld [vmem:[#allocation2 + $0x80] sm:$0xff]
      %v508 = vld [vmem:[#allocation2 + $0x90] sm:$0xff]
      %v509 = vld [vmem:[#allocation2 + $0x98] sm:$0xff]
      %v510 = vld [vmem:[#allocation2 + $0xa8] sm:$0xff]
      %v511 = vld [vmem:[#allocation2 + $0xb0] sm:$0xff]
      %v512 = vld [vmem:[#allocation2 + $0xc0] sm:$0xff]
      %v513 = vld [vmem:[#allocation2 + $0xc8] sm:$0xff]
      %v514 = vld [vmem:[#allocation2 + $0xd8] sm:$0xff]
      %v515 = vld [vmem:[#allocation2 + $0xe0] sm:$0xff]
      %v516 = vld [vmem:[#allocation2 + $0xf0] sm:$0xff]
      %v517 = vld [vmem:[#allocation2 + $0xf8] sm:$0xff]
      %v518 = vld [vmem:[#allocation2 + $0x108] sm:$0xff]
      %v519 = vld [vmem:[#allocation2 + $0x110] sm:$0xff]
      %v520 = vld [vmem:[#allocation2 + $0x120] sm:$0xff]
      %v521 = vld [vmem:[#allocation2 + $0x128] sm:$0xff]
      %v522 = vld [vmem:[#allocation2 + $0x138] sm:$0xff]
      %v523 = vld [vmem:[#allocation2 + $0x140] sm:$0xff]
      %v524 = vld [vmem:[#allocation2 + $0x150] sm:$0xff]
      %v525 = vld [vmem:[#allocation2 + $0x158] sm:$0xff]
      %v526 = vld [vmem:[#allocation2 + $0x168] sm:$0xff]
      %v527 = vld [vmem:[#allocation2 + $0x170] sm:$0xff]
      %v528 = vld [vmem:[%s3] sm:$0xff]
      %v529 = vld [vmem:[%s3 + $0x8] sm:$0xff]
      %v530 = vld [vmem:[%s3 + $0x10] sm:$0xff]
      %v531 = vld [vmem:[%s3 + $0x18] sm:$0xff]
      %v532 = vld [vmem:[%s3 + $0x20] sm:$0xff]
      %v533 = vld [vmem:[%s3 + $0x28] sm:$0xff]
      %v534 = vld [vmem:[%s3 + $0x30] sm:$0xff]
      %v535 = vld [vmem:[%s3 + $0x38] sm:$0xff]
      %v536 = vld [vmem:[%s3 + $0x40] sm:$0xff]
      %v537 = vld [vmem:[%s3 + $0x48] sm:$0xff]
      %v538 = vld [vmem:[%s3 + $0x50] sm:$0xff]
      %v539 = vld [vmem:[%s3 + $0x58] sm:$0xff]
      %v540 = vld [vmem:[%s3 + $0x60] sm:$0xff]
      %v541 = vld [vmem:[%s3 + $0x68] sm:$0xff]
      %v542 = vld [vmem:[%s3 + $0x70] sm:$0xff]
      %v543 = vld [vmem:[%s3 + $0x78] sm:$0xff]
      %v544 = vld [vmem:[#allocation2 + $0x1] sm:$0xff]
      %v545 = vld [vmem:[#allocation2 + $0x9] sm:$0xff]
      %v546 = vld [vmem:[#allocation2 + $0x19] sm:$0xff]
      %v547 = vld [vmem:[#allocation2 + $0x21] sm:$0xff]
      %v548 = vld [vmem:[#allocation2 + $0x31] sm:$0xff]
      %v549 = vld [vmem:[#allocation2 + $0x39] sm:$0xff]
      %v550 = vld [vmem:[#allocation2 + $0x49] sm:$0xff]
      %v551 = vld [vmem:[#allocation2 + $0x51] sm:$0xff]
      %v552 = vld [vmem:[#allocation2 + $0x61] sm:$0xff]
      %v553 = vld [vmem:[#allocation2 + $0x69] sm:$0xff]
      %v554 = vld [vmem:[#allocation2 + $0x79] sm:$0xff]
      %v555 = vld [vmem:[#allocation2 + $0x81] sm:$0xff]
      %v556 = vld [vmem:[#allocation2 + $0x91] sm:$0xff]
      %v557 = vld [vmem:[#allocation2 + $0x99] sm:$0xff]
      %v558 = vld [vmem:[#allocation2 + $0xa9] sm:$0xff]
      %v559 = vld [vmem:[#allocation2 + $0xb1] sm:$0xff]
      %v560 = vld [vmem:[#allocation2 + $0xc1] sm:$0xff]
      %v561 = vld [vmem:[#allocation2 + $0xc9] sm:$0xff]
      %v562 = vld [vmem:[#allocation2 + $0xd9] sm:$0xff]
      %v563 = vld [vmem:[#allocation2 + $0xe1] sm:$0xff]
      %v564 = vld [vmem:[#allocation2 + $0xf1] sm:$0xff]
      %v565 = vld [vmem:[#allocation2 + $0xf9] sm:$0xff]
      %v566 = vld [vmem:[#allocation2 + $0x109] sm:$0xff]
      %v567 = vld [vmem:[#allocation2 + $0x111] sm:$0xff]
      %v568 = vld [vmem:[#allocation2 + $0x121] sm:$0xff]
      %v569 = vld [vmem:[#allocation2 + $0x129] sm:$0xff]
      %v570 = vld [vmem:[#allocation2 + $0x139] sm:$0xff]
      %v571 = vld [vmem:[#allocation2 + $0x141] sm:$0xff]
      %v572 = vld [vmem:[#allocation2 + $0x151] sm:$0xff]
      %v573 = vld [vmem:[#allocation2 + $0x159] sm:$0xff]
      %v574 = vld [vmem:[#allocation2 + $0x169] sm:$0xff]
      %v575 = vld [vmem:[#allocation2 + $0x171] sm:$0xff]
      %s576 = scalar_lea.vmem %s3, 128
      %v577 = vld [vmem:[%s576] sm:$0xff]
      %v578 = vld [vmem:[%s576 + $0x8] sm:$0xff]
      %v579 = vld [vmem:[%s576 + $0x10] sm:$0xff]
      %v580 = vld [vmem:[%s576 + $0x18] sm:$0xff]
      %v581 = vld [vmem:[%s576 + $0x20] sm:$0xff]
      %v582 = vld [vmem:[%s576 + $0x28] sm:$0xff]
      %v583 = vld [vmem:[%s576 + $0x30] sm:$0xff]
      %v584 = vld [vmem:[%s576 + $0x38] sm:$0xff]
      %v585 = vld [vmem:[%s576 + $0x40] sm:$0xff]
      %v586 = vld [vmem:[%s576 + $0x48] sm:$0xff]
      %v587 = vld [vmem:[%s576 + $0x50] sm:$0xff]
      %v588 = vld [vmem:[%s576 + $0x58] sm:$0xff]
      %v589 = vld [vmem:[%s576 + $0x60] sm:$0xff]
      %v590 = vld [vmem:[%s576 + $0x68] sm:$0xff]
      %v591 = vld [vmem:[%s576 + $0x70] sm:$0xff]
      %v592 = vld [vmem:[%s576 + $0x78] sm:$0xff]
      %593 = vmatprep.subr.mxu0 0.0
      %594 = vmatpush1.msra.mxu0 %v577
      %595 = vmatprep.subr.mxu0 0.0
      %596 = vmatpush1.msra.mxu0 %v578
      %597 = vmatprep.subr.mxu0 0.0
      %598 = vmatpush1.msra.mxu0 %v579
      %599 = vmatprep.subr.mxu0 0.0
      %600 = vmatpush1.msra.mxu0 %v580
      %601 = vmatprep.subr.mxu0 0.0
      %602 = vmatpush1.msra.mxu0 %v581
      %603 = vmatprep.subr.mxu0 0.0
      %604 = vmatpush1.msra.mxu0 %v582
      %605 = vmatprep.subr.mxu0 0.0
      %606 = vmatpush1.msra.mxu0 %v583
      %607 = vmatprep.subr.mxu0 0.0
      %608 = vmatpush1.msra.mxu0 %v584
      %609 = vmatprep.subr.mxu0 0.0
      %610 = vmatpush1.msra.mxu0 %v585
      %611 = vmatprep.subr.mxu0 0.0
      %612 = vmatpush1.msra.mxu0 %v586
      %613 = vmatprep.subr.mxu0 0.0
      %614 = vmatpush1.msra.mxu0 %v587
      %615 = vmatprep.subr.mxu0 0.0
      %616 = vmatpush1.msra.mxu0 %v588
      %617 = vmatprep.subr.mxu0 0.0
      %618 = vmatpush1.msra.mxu0 %v589
      %619 = vmatprep.subr.mxu0 0.0
      %620 = vmatpush1.msra.mxu0 %v590
      %621 = vmatprep.subr.mxu0 0.0
      %622 = vmatpush1.msra.mxu0 %v591
      %623 = vmatprep.subr.mxu0 0.0
      %624 = vmatpush1.msra.mxu0 %v592
      %625 = vmatprep.subr.mxu0 0.0
      %626 = vmatpush1.msra.mxu0 0.0
      %627 = vmatprep.subr.mxu0 0.0
      %628 = vmatpush1.msra.mxu0 0.0
      %629 = vmatprep.subr.mxu0 0.0
      %630 = vmatpush1.msra.mxu0 0.0
      %631 = vmatprep.subr.mxu0 0.0
      %632 = vmatpush1.msra.mxu0 0.0
      %633 = vmatprep.subr.mxu0 0.0
      %634 = vmatpush1.msra.mxu0 0.0
      %635 = vmatprep.subr.mxu0 0.0
      %636 = vmatpush1.msra.mxu0 0.0
      %637 = vmatprep.subr.mxu0 0.0
      %638 = vmatpush1.msra.mxu0 0.0
      %639 = vmatprep.subr.mxu0 0.0
      %640 = vmatpush1.msra.mxu0 0.0
      %641 = vmatprep.subr.mxu0 0.0
      %642 = vmatpush1.msra.mxu0 0.0
      %643 = vmatprep.subr.mxu0 0.0
      %644 = vmatpush1.msra.mxu0 0.0
      %645 = vmatprep.subr.mxu0 0.0
      %646 = vmatpush1.msra.mxu0 0.0
      %647 = vmatprep.subr.mxu0 0.0
      %648 = vmatpush1.msra.mxu0 0.0
      %649 = vmatprep.subr.mxu0 0.0
      %650 = vmatpush1.msra.mxu0 0.0
      %651 = vmatprep.subr.mxu0 0.0
      %652 = vmatpush1.msra.mxu0 0.0
      %653 = vmatprep.subr.mxu0 0.0
      %654 = vmatpush1.msra.mxu0 0.0
      %655 = vmatprep.subr.mxu0 0.0
      %656 = vmatpush1.msra.mxu0 0.0
      %657 = vmatprep.mubr.f32.mxu0 0.0
      %658 = vmatmul.mubr.f32.gmra.mrb[0].mxu0 %v544
      %v659 = vpop.f32.mrb[0].mxu0
      %v660 = vadd.f32 0.0, %v659
      %v661 = vpop.f32.mrb[0].mxu0
      %662 = vmatprep.mubr.f32.mxu0 0.0
      %663 = vmatmul.mubr.f32.gmra.mrb[0].mxu0 %v545
      %v664 = vpop.f32.mrb[0].mxu0
      %v665 = vadd.f32 0.0, %v664
      %v666 = vpop.f32.mrb[0].mxu0
      %667 = vmatprep.mubr.f32.mxu0 0.0
      %668 = vmatmul.mubr.f32.gmra.mrb[0].mxu0 %v546
      %v669 = vpop.f32.mrb[0].mxu0
      %v670 = vadd.f32 0.0, %v669
      %v671 = vpop.f32.mrb[0].mxu0
      %672 = vmatprep.mubr.f32.mxu0 0.0
      %673 = vmatmul.mubr.f32.gmra.mrb[0].mxu0 %v547
      %v674 = vpop.f32.mrb[0].mxu0
      %v675 = vadd.f32 0.0, %v674
      %v676 = vpop.f32.mrb[0].mxu0
      %677 = vmatprep.mubr.f32.mxu0 0.0
      %678 = vmatmul.mubr.f32.gmra.mrb[0].mxu0 %v548
      %v679 = vpop.f32.mrb[0].mxu0
      %v680 = vadd.f32 0.0, %v679
      %v681 = vpop.f32.mrb[0].mxu0
      %682 = vmatprep.mubr.f32.mxu0 0.0
      %683 = vmatmul.mubr.f32.gmra.mrb[0].mxu0 %v549
      %v684 = vpop.f32.mrb[0].mxu0
      %v685 = vadd.f32 0.0, %v684
      %v686 = vpop.f32.mrb[0].mxu0
      %687 = vmatprep.mubr.f32.mxu0 0.0
      %688 = vmatmul.mubr.f32.gmra.mrb[0].mxu0 %v550
      %v689 = vpop.f32.mrb[0].mxu0
      %v690 = vadd.f32 0.0, %v689
      %v691 = vpop.f32.mrb[0].mxu0
      %692 = vmatprep.mubr.f32.mxu0 0.0
      %693 = vmatmul.mubr.f32.gmra.mrb[0].mxu0 %v551
      %v694 = vpop.f32.mrb[0].mxu0
      %v695 = vadd.f32 0.0, %v694
      %v696 = vpop.f32.mrb[0].mxu0
      %697 = vmatprep.mubr.f32.mxu0 0.0
      %698 = vmatmul.mubr.f32.gmra.mrb[0].mxu0 %v552
      %v699 = vpop.f32.mrb[0].mxu0
      %v700 = vadd.f32 0.0, %v699
      %v701 = vpop.f32.mrb[0].mxu0
      %702 = vmatprep.mubr.f32.mxu0 0.0
      %703 = vmatmul.mubr.f32.gmra.mrb[0].mxu0 %v553
      %v704 = vpop.f32.mrb[0].mxu0
      %v705 = vadd.f32 0.0, %v704
      %v706 = vpop.f32.mrb[0].mxu0
      %707 = vmatprep.mubr.f32.mxu0 0.0
      %708 = vmatmul.mubr.f32.gmra.mrb[0].mxu0 %v554
      %v709 = vpop.f32.mrb[0].mxu0
      %v710 = vadd.f32 0.0, %v709
      %v711 = vpop.f32.mrb[0].mxu0
      %712 = vmatprep.mubr.f32.mxu0 0.0
      %713 = vmatmul.mubr.f32.gmra.mrb[0].mxu0 %v555
      %v714 = vpop.f32.mrb[0].mxu0
      %v715 = vadd.f32 0.0, %v714
      %v716 = vpop.f32.mrb[0].mxu0
      %717 = vmatprep.mubr.f32.mxu0 0.0
      %718 = vmatmul.mubr.f32.gmra.mrb[0].mxu0 %v556
      %v719 = vpop.f32.mrb[0].mxu0
      %v720 = vadd.f32 0.0, %v719
      %v721 = vpop.f32.mrb[0].mxu0
      %722 = vmatprep.mubr.f32.mxu0 0.0
      %723 = vmatmul.mubr.f32.gmra.mrb[0].mxu0 %v557
      %v724 = vpop.f32.mrb[0].mxu0
      %v725 = vadd.f32 0.0, %v724
      %v726 = vpop.f32.mrb[0].mxu0
      %727 = vmatprep.mubr.f32.mxu0 0.0
      %728 = vmatmul.mubr.f32.gmra.mrb[0].mxu0 %v558
      %v729 = vpop.f32.mrb[0].mxu0
      %v730 = vadd.f32 0.0, %v729
      %v731 = vpop.f32.mrb[0].mxu0
      %732 = vmatprep.mubr.f32.mxu0 0.0
      %733 = vmatmul.mubr.f32.gmra.mrb[0].mxu0 %v559
      %v734 = vpop.f32.mrb[0].mxu0
      %v735 = vadd.f32 0.0, %v734
      %v736 = vpop.f32.mrb[0].mxu0
      %737 = vmatprep.mubr.f32.mxu0 0.0
      %738 = vmatmul.mubr.f32.gmra.mrb[0].mxu0 %v560
      %v739 = vpop.f32.mrb[0].mxu0
      %v740 = vadd.f32 0.0, %v739
      %v741 = vpop.f32.mrb[0].mxu0
      %742 = vmatprep.mubr.f32.mxu0 0.0
      %743 = vmatmul.mubr.f32.gmra.mrb[0].mxu0 %v561
      %v744 = vpop.f32.mrb[0].mxu0
      %v745 = vadd.f32 0.0, %v744
      %v746 = vpop.f32.mrb[0].mxu0
      %747 = vmatprep.mubr.f32.mxu0 0.0
      %748 = vmatmul.mubr.f32.gmra.mrb[0].mxu0 %v562
      %v749 = vpop.f32.mrb[0].mxu0
      %v750 = vadd.f32 0.0, %v749
      %v751 = vpop.f32.mrb[0].mxu0
      %752 = vmatprep.mubr.f32.mxu0 0.0
      %753 = vmatmul.mubr.f32.gmra.mrb[0].mxu0 %v563
      %v754 = vpop.f32.mrb[0].mxu0
      %v755 = vadd.f32 0.0, %v754
      %v756 = vpop.f32.mrb[0].mxu0
      %757 = vmatprep.mubr.f32.mxu0 0.0
      %758 = vmatmul.mubr.f32.gmra.mrb[0].mxu0 %v564
      %v759 = vpop.f32.mrb[0].mxu0
      %v760 = vadd.f32 0.0, %v759
      %v761 = vpop.f32.mrb[0].mxu0
      %762 = vmatprep.mubr.f32.mxu0 0.0
      %763 = vmatmul.mubr.f32.gmra.mrb[0].mxu0 %v565
      %v764 = vpop.f32.mrb[0].mxu0
      %v765 = vadd.f32 0.0, %v764
      %v766 = vpop.f32.mrb[0].mxu0
      %767 = vmatprep.mubr.f32.mxu0 0.0
      %768 = vmatmul.mubr.f32.gmra.mrb[0].mxu0 %v566
      %v769 = vpop.f32.mrb[0].mxu0
      %v770 = vadd.f32 0.0, %v769
      %v771 = vpop.f32.mrb[0].mxu0
      %772 = vmatprep.mubr.f32.mxu0 0.0
      %773 = vmatmul.mubr.f32.gmra.mrb[0].mxu0 %v567
      %v774 = vpop.f32.mrb[0].mxu0
      %v775 = vadd.f32 0.0, %v774
      %v776 = vpop.f32.mrb[0].mxu0
      %777 = vmatprep.mubr.f32.mxu0 0.0
      %778 = vmatmul.mubr.f32.gmra.mrb[0].mxu0 %v568
      %v779 = vpop.f32.mrb[0].mxu0
      %v780 = vadd.f32 0.0, %v779
      %v781 = vpop.f32.mrb[0].mxu0
      %782 = vmatprep.mubr.f32.mxu0 0.0
      %783 = vmatmul.mubr.f32.gmra.mrb[0].mxu0 %v569
      %v784 = vpop.f32.mrb[0].mxu0
      %v785 = vadd.f32 0.0, %v784
      %v786 = vpop.f32.mrb[0].mxu0
      %787 = vmatprep.mubr.f32.mxu0 0.0
      %788 = vmatmul.mubr.f32.gmra.mrb[0].mxu0 %v570
      %v789 = vpop.f32.mrb[0].mxu0
      %v790 = vadd.f32 0.0, %v789
      %v791 = vpop.f32.mrb[0].mxu0
      %792 = vmatprep.mubr.f32.mxu0 0.0
      %793 = vmatmul.mubr.f32.gmra.mrb[0].mxu0 %v571
      %v794 = vpop.f32.mrb[0].mxu0
      %v795 = vadd.f32 0.0, %v794
      %v796 = vpop.f32.mrb[0].mxu0
      %797 = vmatprep.mubr.f32.mxu0 0.0
      %798 = vmatmul.mubr.f32.gmra.mrb[0].mxu0 %v572
      %v799 = vpop.f32.mrb[0].mxu0
      %v800 = vadd.f32 0.0, %v799
      %v801 = vpop.f32.mrb[0].mxu0
      %802 = vmatprep.mubr.f32.mxu0 0.0
      %803 = vmatmul.mubr.f32.gmra.mrb[0].mxu0 %v573
      %v804 = vpop.f32.mrb[0].mxu0
      %v805 = vadd.f32 0.0, %v804
      %v806 = vpop.f32.mrb[0].mxu0
      %807 = vmatprep.mubr.f32.mxu0 0.0
      %808 = vmatmul.mubr.f32.gmra.mrb[0].mxu0 %v574
      %v809 = vpop.f32.mrb[0].mxu0
      %v810 = vadd.f32 0.0, %v809
      %v811 = vpop.f32.mrb[0].mxu0
      %812 = vmatprep.mubr.f32.mxu0 0.0
      %813 = vmatmul.mubr.f32.gmra.mrb[0].mxu0 %v575
      %v814 = vpop.f32.mrb[0].mxu0
      %v815 = vadd.f32 0.0, %v814
      %v816 = vpop.f32.mrb[0].mxu0
      %817 = vdwg.mxu0
      %818 = vmatprep.subr.mxu0 0.0
      %819 = vmatpush1.msra.mxu0 %v528
      %820 = vmatprep.subr.mxu0 0.0
      %821 = vmatpush1.msra.mxu0 %v529
      %822 = vmatprep.subr.mxu0 0.0
      %823 = vmatpush1.msra.mxu0 %v530
      %824 = vmatprep.subr.mxu0 0.0
      %825 = vmatpush1.msra.mxu0 %v531
      %826 = vmatprep.subr.mxu0 0.0
      %827 = vmatpush1.msra.mxu0 %v532
      %828 = vmatprep.subr.mxu0 0.0
      %829 = vmatpush1.msra.mxu0 %v533
      %830 = vmatprep.subr.mxu0 0.0
      %831 = vmatpush1.msra.mxu0 %v534
      %832 = vmatprep.subr.mxu0 0.0
      %833 = vmatpush1.msra.mxu0 %v535
      %834 = vmatprep.subr.mxu0 0.0
      %835 = vmatpush1.msra.mxu0 %v536
      %836 = vmatprep.subr.mxu0 0.0
      %837 = vmatpush1.msra.mxu0 %v537
      %838 = vmatprep.subr.mxu0 0.0
      %839 = vmatpush1.msra.mxu0 %v538
      %840 = vmatprep.subr.mxu0 0.0
      %841 = vmatpush1.msra.mxu0 %v539
      %842 = vmatprep.subr.mxu0 0.0
      %843 = vmatpush1.msra.mxu0 %v540
      %844 = vmatprep.subr.mxu0 0.0
      %845 = vmatpush1.msra.mxu0 %v541
      %846 = vmatprep.subr.mxu0 0.0
      %847 = vmatpush1.msra.mxu0 %v542
      %848 = vmatprep.subr.mxu0 0.0
      %849 = vmatpush1.msra.mxu0 %v543
      %850 = vmatprep.subr.mxu0 0.0
      %851 = vmatpush1.msra.mxu0 0.0
      %852 = vmatprep.subr.mxu0 0.0
      %853 = vmatpush1.msra.mxu0 0.0
      %854 = vmatprep.subr.mxu0 0.0
      %855 = vmatpush1.msra.mxu0 0.0
      %856 = vmatprep.subr.mxu0 0.0
      %857 = vmatpush1.msra.mxu0 0.0
      %858 = vmatprep.subr.mxu0 0.0
      %859 = vmatpush1.msra.mxu0 0.0
      %860 = vmatprep.subr.mxu0 0.0
      %861 = vmatpush1.msra.mxu0 0.0
      %862 = vmatprep.subr.mxu0 0.0
      %863 = vmatpush1.msra.mxu0 0.0
      %864 = vmatprep.subr.mxu0 0.0
      %865 = vmatpush1.msra.mxu0 0.0
      %866 = vmatprep.subr.mxu0 0.0
      %867 = vmatpush1.msra.mxu0 0.0
      %868 = vmatprep.subr.mxu0 0.0
      %869 = vmatpush1.msra.mxu0 0.0
      %870 = vmatprep.subr.mxu0 0.0
      %871 = vmatpush1.msra.mxu0 0.0
      %872 = vmatprep.subr.mxu0 0.0
      %873 = vmatpush1.msra.mxu0 0.0
      %874 = vmatprep.subr.mxu0 0.0
      %875 = vmatpush1.msra.mxu0 0.0
      %876 = vmatprep.subr.mxu0 0.0
      %877 = vmatpush1.msra.mxu0 0.0
      %878 = vmatprep.subr.mxu0 0.0
      %879 = vmatpush1.msra.mxu0 0.0
      %880 = vmatprep.subr.mxu0 0.0
      %881 = vmatpush1.msra.mxu0 0.0
      %882 = vmatprep.mubr.f32.mxu0 0.0
      %883 = vmatmul.mubr.f32.gmra.mrb[0].mxu0 %v496
      %v884 = vpop.f32.mrb[0].mxu0
      %v885 = vadd.f32 %v660, %v884
      %v886 = vpop.f32.mrb[0].mxu0
      %887 = vmatprep.mubr.f32.mxu0 0.0
      %888 = vmatmul.mubr.f32.gmra.mrb[0].mxu0 %v497
      %v889 = vpop.f32.mrb[0].mxu0
      %v890 = vadd.f32 %v665, %v889
      %v891 = vpop.f32.mrb[0].mxu0
      %892 = vmatprep.mubr.f32.mxu0 0.0
      %893 = vmatmul.mubr.f32.gmra.mrb[0].mxu0 %v498
      %v894 = vpop.f32.mrb[0].mxu0
      %v895 = vadd.f32 %v670, %v894
      %v896 = vpop.f32.mrb[0].mxu0
      %897 = vmatprep.mubr.f32.mxu0 0.0
      %898 = vmatmul.mubr.f32.gmra.mrb[0].mxu0 %v499
      %v899 = vpop.f32.mrb[0].mxu0
      %v900 = vadd.f32 %v675, %v899
      %v901 = vpop.f32.mrb[0].mxu0
      %902 = vmatprep.mubr.f32.mxu0 0.0
      %903 = vmatmul.mubr.f32.gmra.mrb[0].mxu0 %v500
      %v904 = vpop.f32.mrb[0].mxu0
      %v905 = vadd.f32 %v680, %v904
      %v906 = vpop.f32.mrb[0].mxu0
      %907 = vmatprep.mubr.f32.mxu0 0.0
      %908 = vmatmul.mubr.f32.gmra.mrb[0].mxu0 %v501
      %v909 = vpop.f32.mrb[0].mxu0
      %v910 = vadd.f32 %v685, %v909
      %v911 = vpop.f32.mrb[0].mxu0
      %912 = vmatprep.mubr.f32.mxu0 0.0
      %913 = vmatmul.mubr.f32.gmra.mrb[0].mxu0 %v502
      %v914 = vpop.f32.mrb[0].mxu0
      %v915 = vadd.f32 %v690, %v914
      %v916 = vpop.f32.mrb[0].mxu0
      %917 = vmatprep.mubr.f32.mxu0 0.0
      %918 = vmatmul.mubr.f32.gmra.mrb[0].mxu0 %v503
      %v919 = vpop.f32.mrb[0].mxu0
      %v920 = vadd.f32 %v695, %v919
      %v921 = vpop.f32.mrb[0].mxu0
      %922 = vmatprep.mubr.f32.mxu0 0.0
      %923 = vmatmul.mubr.f32.gmra.mrb[0].mxu0 %v504
      %v924 = vpop.f32.mrb[0].mxu0
      %v925 = vadd.f32 %v700, %v924
      %v926 = vpop.f32.mrb[0].mxu0
      %927 = vmatprep.mubr.f32.mxu0 0.0
      %928 = vmatmul.mubr.f32.gmra.mrb[0].mxu0 %v505
      %v929 = vpop.f32.mrb[0].mxu0
      %v930 = vadd.f32 %v705, %v929
      %v931 = vpop.f32.mrb[0].mxu0
      %932 = vmatprep.mubr.f32.mxu0 0.0
      %933 = vmatmul.mubr.f32.gmra.mrb[0].mxu0 %v506
      %v934 = vpop.f32.mrb[0].mxu0
      %v935 = vadd.f32 %v710, %v934
      %v936 = vpop.f32.mrb[0].mxu0
      %937 = vmatprep.mubr.f32.mxu0 0.0
      %938 = vmatmul.mubr.f32.gmra.mrb[0].mxu0 %v507
      %v939 = vpop.f32.mrb[0].mxu0
      %v940 = vadd.f32 %v715, %v939
      %v941 = vpop.f32.mrb[0].mxu0
      %942 = vmatprep.mubr.f32.mxu0 0.0
      %943 = vmatmul.mubr.f32.gmra.mrb[0].mxu0 %v508
      %v944 = vpop.f32.mrb[0].mxu0
      %v945 = vadd.f32 %v720, %v944
      %v946 = vpop.f32.mrb[0].mxu0
      %947 = vmatprep.mubr.f32.mxu0 0.0
      %948 = vmatmul.mubr.f32.gmra.mrb[0].mxu0 %v509
      %v949 = vpop.f32.mrb[0].mxu0
      %v950 = vadd.f32 %v725, %v949
      %v951 = vpop.f32.mrb[0].mxu0
      %952 = vmatprep.mubr.f32.mxu0 0.0
      %953 = vmatmul.mubr.f32.gmra.mrb[0].mxu0 %v510
      %v954 = vpop.f32.mrb[0].mxu0
      %v955 = vadd.f32 %v730, %v954
      %v956 = vpop.f32.mrb[0].mxu0
      %957 = vmatprep.mubr.f32.mxu0 0.0
      %958 = vmatmul.mubr.f32.gmra.mrb[0].mxu0 %v511
      %v959 = vpop.f32.mrb[0].mxu0
      %v960 = vadd.f32 %v735, %v959
      %v961 = vpop.f32.mrb[0].mxu0
      %962 = vmatprep.mubr.f32.mxu0 0.0
      %963 = vmatmul.mubr.f32.gmra.mrb[0].mxu0 %v512
      %v964 = vpop.f32.mrb[0].mxu0
      %v965 = vadd.f32 %v740, %v964
      %v966 = vpop.f32.mrb[0].mxu0
      %967 = vmatprep.mubr.f32.mxu0 0.0
      %968 = vmatmul.mubr.f32.gmra.mrb[0].mxu0 %v513
      %v969 = vpop.f32.mrb[0].mxu0
      %v970 = vadd.f32 %v745, %v969
      %v971 = vpop.f32.mrb[0].mxu0
      %972 = vmatprep.mubr.f32.mxu0 0.0
      %973 = vmatmul.mubr.f32.gmra.mrb[0].mxu0 %v514
      %v974 = vpop.f32.mrb[0].mxu0
      %v975 = vadd.f32 %v750, %v974
      %v976 = vpop.f32.mrb[0].mxu0
      %977 = vmatprep.mubr.f32.mxu0 0.0
      %978 = vmatmul.mubr.f32.gmra.mrb[0].mxu0 %v515
      %v979 = vpop.f32.mrb[0].mxu0
      %v980 = vadd.f32 %v755, %v979
      %v981 = vpop.f32.mrb[0].mxu0
      %982 = vmatprep.mubr.f32.mxu0 0.0
      %983 = vmatmul.mubr.f32.gmra.mrb[0].mxu0 %v516
      %v984 = vpop.f32.mrb[0].mxu0
      %v985 = vadd.f32 %v760, %v984
      %v986 = vpop.f32.mrb[0].mxu0
      %987 = vmatprep.mubr.f32.mxu0 0.0
      %988 = vmatmul.mubr.f32.gmra.mrb[0].mxu0 %v517
      %v989 = vpop.f32.mrb[0].mxu0
      %v990 = vadd.f32 %v765, %v989
      %v991 = vpop.f32.mrb[0].mxu0
      %992 = vmatprep.mubr.f32.mxu0 0.0
      %993 = vmatmul.mubr.f32.gmra.mrb[0].mxu0 %v518
      %v994 = vpop.f32.mrb[0].mxu0
      %v995 = vadd.f32 %v770, %v994
      %v996 = vpop.f32.mrb[0].mxu0
      %997 = vmatprep.mubr.f32.mxu0 0.0
      %998 = vmatmul.mubr.f32.gmra.mrb[0].mxu0 %v519
      %v999 = vpop.f32.mrb[0].mxu0
      %v1000 = vadd.f32 %v775, %v999
      %v1001 = vpop.f32.mrb[0].mxu0
      %1002 = vmatprep.mubr.f32.mxu0 0.0
      %1003 = vmatmul.mubr.f32.gmra.mrb[0].mxu0 %v520
      %v1004 = vpop.f32.mrb[0].mxu0
      %v1005 = vadd.f32 %v780, %v1004
      %v1006 = vpop.f32.mrb[0].mxu0
      %1007 = vmatprep.mubr.f32.mxu0 0.0
      %1008 = vmatmul.mubr.f32.gmra.mrb[0].mxu0 %v521
      %v1009 = vpop.f32.mrb[0].mxu0
      %v1010 = vadd.f32 %v785, %v1009
      %v1011 = vpop.f32.mrb[0].mxu0
      %1012 = vmatprep.mubr.f32.mxu0 0.0
      %1013 = vmatmul.mubr.f32.gmra.mrb[0].mxu0 %v522
      %v1014 = vpop.f32.mrb[0].mxu0
      %v1015 = vadd.f32 %v790, %v1014
      %v1016 = vpop.f32.mrb[0].mxu0
      %1017 = vmatprep.mubr.f32.mxu0 0.0
      %1018 = vmatmul.mubr.f32.gmra.mrb[0].mxu0 %v523
      %v1019 = vpop.f32.mrb[0].mxu0
      %v1020 = vadd.f32 %v795, %v1019
      %v1021 = vpop.f32.mrb[0].mxu0
      %1022 = vmatprep.mubr.f32.mxu0 0.0
      %1023 = vmatmul.mubr.f32.gmra.mrb[0].mxu0 %v524
      %v1024 = vpop.f32.mrb[0].mxu0
      %v1025 = vadd.f32 %v800, %v1024
      %v1026 = vpop.f32.mrb[0].mxu0
      %1027 = vmatprep.mubr.f32.mxu0 0.0
      %1028 = vmatmul.mubr.f32.gmra.mrb[0].mxu0 %v525
      %v1029 = vpop.f32.mrb[0].mxu0
      %v1030 = vadd.f32 %v805, %v1029
      %v1031 = vpop.f32.mrb[0].mxu0
      %1032 = vmatprep.mubr.f32.mxu0 0.0
      %1033 = vmatmul.mubr.f32.gmra.mrb[0].mxu0 %v526
      %v1034 = vpop.f32.mrb[0].mxu0
      %v1035 = vadd.f32 %v810, %v1034
      %v1036 = vpop.f32.mrb[0].mxu0
      %1037 = vmatprep.mubr.f32.mxu0 0.0
      %1038 = vmatmul.mubr.f32.gmra.mrb[0].mxu0 %v527
      %v1039 = vpop.f32.mrb[0].mxu0
      %v1040 = vadd.f32 %v815, %v1039
      %v1041 = vpop.f32.mrb[0].mxu0
      %1042 = vdwg.mxu0
      %v1043 = vld [vmem:[#allocation2 + $0x2] sm:$0xff]
      %v1044 = vld [vmem:[#allocation2 + $0xa] sm:$0xff]
      %v1045 = vld [vmem:[#allocation2 + $0x1a] sm:$0xff]
      %v1046 = vld [vmem:[#allocation2 + $0x22] sm:$0xff]
      %v1047 = vld [vmem:[#allocation2 + $0x32] sm:$0xff]
      %v1048 = vld [vmem:[#allocation2 + $0x3a] sm:$0xff]
      %v1049 = vld [vmem:[#allocation2 + $0x4a] sm:$0xff]
      %v1050 = vld [vmem:[#allocation2 + $0x52] sm:$0xff]
      %v1051 = vld [vmem:[#allocation2 + $0x62] sm:$0xff]
      %v1052 = vld [vmem:[#allocation2 + $0x6a] sm:$0xff]
      %v1053 = vld [vmem:[#allocation2 + $0x7a] sm:$0xff]
      %v1054 = vld [vmem:[#allocation2 + $0x82] sm:$0xff]
      %v1055 = vld [vmem:[#allocation2 + $0x92] sm:$0xff]
      %v1056 = vld [vmem:[#allocation2 + $0x9a] sm:$0xff]
      %v1057 = vld [vmem:[#allocation2 + $0xaa] sm:$0xff]
      %v1058 = vld [vmem:[#allocation2 + $0xb2] sm:$0xff]
      %v1059 = vld [vmem:[#allocation2 + $0xc2] sm:$0xff]
      %v1060 = vld [vmem:[#allocation2 + $0xca] sm:$0xff]
      %v1061 = vld [vmem:[#allocation2 + $0xda] sm:$0xff]
      %v1062 = vld [vmem:[#allocation2 + $0xe2] sm:$0xff]
      %v1063 = vld [vmem:[#allocation2 + $0xf2] sm:$0xff]
      %v1064 = vld [vmem:[#allocation2 + $0xfa] sm:$0xff]
      %v1065 = vld [vmem:[#allocation2 + $0x10a] sm:$0xff]
      %v1066 = vld [vmem:[#allocation2 + $0x112] sm:$0xff]
      %v1067 = vld [vmem:[#allocation2 + $0x122] sm:$0xff]
      %v1068 = vld [vmem:[#allocation2 + $0x12a] sm:$0xff]
      %v1069 = vld [vmem:[#allocation2 + $0x13a] sm:$0xff]
      %v1070 = vld [vmem:[#allocation2 + $0x142] sm:$0xff]
      %v1071 = vld [vmem:[#allocation2 + $0x152] sm:$0xff]
      %v1072 = vld [vmem:[#allocation2 + $0x15a] sm:$0xff]
      %v1073 = vld [vmem:[#allocation2 + $0x16a] sm:$0xff]
      %v1074 = vld [vmem:[#allocation2 + $0x172] sm:$0xff]
      %s1075 = scalar_lea.vmem %s3, 256
      %v1076 = vld [vmem:[%s1075] sm:$0xff]
      %v1077 = vld [vmem:[%s1075 + $0x8] sm:$0xff]
      %v1078 = vld [vmem:[%s1075 + $0x10] sm:$0xff]
      %v1079 = vld [vmem:[%s1075 + $0x18] sm:$0xff]
      %v1080 = vld [vmem:[%s1075 + $0x20] sm:$0xff]
      %v1081 = vld [vmem:[%s1075 + $0x28] sm:$0xff]
      %v1082 = vld [vmem:[%s1075 + $0x30] sm:$0xff]
      %v1083 = vld [vmem:[%s1075 + $0x38] sm:$0xff]
      %v1084 = vld [vmem:[%s1075 + $0x40] sm:$0xff]
      %v1085 = vld [vmem:[%s1075 + $0x48] sm:$0xff]
      %v1086 = vld [vmem:[%s1075 + $0x50] sm:$0xff]
      %v1087 = vld [vmem:[%s1075 + $0x58] sm:$0xff]
      %v1088 = vld [vmem:[%s1075 + $0x60] sm:$0xff]
      %v1089 = vld [vmem:[%s1075 + $0x68] sm:$0xff]
      %v1090 = vld [vmem:[%s1075 + $0x70] sm:$0xff]
      %v1091 = vld [vmem:[%s1075 + $0x78] sm:$0xff]
      %1092 = vmatprep.subr.mxu0 0.0
      %1093 = vmatpush1.msra.mxu0 %v1076
      %1094 = vmatprep.subr.mxu0 0.0
      %1095 = vmatpush1.msra.mxu0 %v1077
      %1096 = vmatprep.subr.mxu0 0.0
      %1097 = vmatpush1.msra.mxu0 %v1078
      %1098 = vmatprep.subr.mxu0 0.0
      %1099 = vmatpush1.msra.mxu0 %v1079
      %1100 = vmatprep.subr.mxu0 0.0
      %1101 = vmatpush1.msra.mxu0 %v1080
      %1102 = vmatprep.subr.mxu0 0.0
      %1103 = vmatpush1.msra.mxu0 %v1081
      %1104 = vmatprep.subr.mxu0 0.0
      %1105 = vmatpush1.msra.mxu0 %v1082
      %1106 = vmatprep.subr.mxu0 0.0
      %1107 = vmatpush1.msra.mxu0 %v1083
      %1108 = vmatprep.subr.mxu0 0.0
      %1109 = vmatpush1.msra.mxu0 %v1084
      %1110 = vmatprep.subr.mxu0 0.0
      %1111 = vmatpush1.msra.mxu0 %v1085
      %1112 = vmatprep.subr.mxu0 0.0
      %1113 = vmatpush1.msra.mxu0 %v1086
      %1114 = vmatprep.subr.mxu0 0.0
      %1115 = vmatpush1.msra.mxu0 %v1087
      %1116 = vmatprep.subr.mxu0 0.0
      %1117 = vmatpush1.msra.mxu0 %v1088
      %1118 = vmatprep.subr.mxu0 0.0
      %1119 = vmatpush1.msra.mxu0 %v1089
      %1120 = vmatprep.subr.mxu0 0.0
      %1121 = vmatpush1.msra.mxu0 %v1090
      %1122 = vmatprep.subr.mxu0 0.0
      %1123 = vmatpush1.msra.mxu0 %v1091
      %1124 = vmatprep.subr.mxu0 0.0
      %1125 = vmatpush1.msra.mxu0 0.0
      %1126 = vmatprep.subr.mxu0 0.0
      %1127 = vmatpush1.msra.mxu0 0.0
      %1128 = vmatprep.subr.mxu0 0.0
      %1129 = vmatpush1.msra.mxu0 0.0
      %1130 = vmatprep.subr.mxu0 0.0
      %1131 = vmatpush1.msra.mxu0 0.0
      %1132 = vmatprep.subr.mxu0 0.0
      %1133 = vmatpush1.msra.mxu0 0.0
      %1134 = vmatprep.subr.mxu0 0.0
      %1135 = vmatpush1.msra.mxu0 0.0
      %1136 = vmatprep.subr.mxu0 0.0
      %1137 = vmatpush1.msra.mxu0 0.0
      %1138 = vmatprep.subr.mxu0 0.0
      %1139 = vmatpush1.msra.mxu0 0.0
      %1140 = vmatprep.subr.mxu0 0.0
      %1141 = vmatpush1.msra.mxu0 0.0
      %1142 = vmatprep.subr.mxu0 0.0
      %1143 = vmatpush1.msra.mxu0 0.0
      %1144 = vmatprep.subr.mxu0 0.0
      %1145 = vmatpush1.msra.mxu0 0.0
      %1146 = vmatprep.subr.mxu0 0.0
      %1147 = vmatpush1.msra.mxu0 0.0
      %1148 = vmatprep.subr.mxu0 0.0
      %1149 = vmatpush1.msra.mxu0 0.0
      %1150 = vmatprep.subr.mxu0 0.0
      %1151 = vmatpush1.msra.mxu0 0.0
      %1152 = vmatprep.subr.mxu0 0.0
      %1153 = vmatpush1.msra.mxu0 0.0
      %1154 = vmatprep.subr.mxu0 0.0
      %1155 = vmatpush1.msra.mxu0 0.0
      %1156 = vmatprep.mubr.f32.mxu0 0.0
      %1157 = vmatmul.mubr.f32.gmra.mrb[0].mxu0 %v1043
      %v1158 = vpop.f32.mrb[0].mxu0
      %v1159 = vadd.f32 0.0, %v1158
      %v1160 = vpop.f32.mrb[0].mxu0
      %1161 = vmatprep.mubr.f32.mxu0 0.0
      %1162 = vmatmul.mubr.f32.gmra.mrb[0].mxu0 %v1044
      %v1163 = vpop.f32.mrb[0].mxu0
      %v1164 = vadd.f32 0.0, %v1163
      %v1165 = vpop.f32.mrb[0].mxu0
      %1166 = vmatprep.mubr.f32.mxu0 0.0
      %1167 = vmatmul.mubr.f32.gmra.mrb[0].mxu0 %v1045
      %v1168 = vpop.f32.mrb[0].mxu0
      %v1169 = vadd.f32 0.0, %v1168
      %v1170 = vpop.f32.mrb[0].mxu0
      %1171 = vmatprep.mubr.f32.mxu0 0.0
      %1172 = vmatmul.mubr.f32.gmra.mrb[0].mxu0 %v1046
      %v1173 = vpop.f32.mrb[0].mxu0
      %v1174 = vadd.f32 0.0, %v1173
      %v1175 = vpop.f32.mrb[0].mxu0
      %1176 = vmatprep.mubr.f32.mxu0 0.0
      %1177 = vmatmul.mubr.f32.gmra.mrb[0].mxu0 %v1047
      %v1178 = vpop.f32.mrb[0].mxu0
      %v1179 = vadd.f32 0.0, %v1178
      %v1180 = vpop.f32.mrb[0].mxu0
      %1181 = vmatprep.mubr.f32.mxu0 0.0
      %1182 = vmatmul.mubr.f32.gmra.mrb[0].mxu0 %v1048
      %v1183 = vpop.f32.mrb[0].mxu0
      %v1184 = vadd.f32 0.0, %v1183
      %v1185 = vpop.f32.mrb[0].mxu0
      %1186 = vmatprep.mubr.f32.mxu0 0.0
      %1187 = vmatmul.mubr.f32.gmra.mrb[0].mxu0 %v1049
      %v1188 = vpop.f32.mrb[0].mxu0
      %v1189 = vadd.f32 0.0, %v1188
      %v1190 = vpop.f32.mrb[0].mxu0
      %1191 = vmatprep.mubr.f32.mxu0 0.0
      %1192 = vmatmul.mubr.f32.gmra.mrb[0].mxu0 %v1050
      %v1193 = vpop.f32.mrb[0].mxu0
      %v1194 = vadd.f32 0.0, %v1193
      %v1195 = vpop.f32.mrb[0].mxu0
      %1196 = vmatprep.mubr.f32.mxu0 0.0
      %1197 = vmatmul.mubr.f32.gmra.mrb[0].mxu0 %v1051
      %v1198 = vpop.f32.mrb[0].mxu0
      %v1199 = vadd.f32 0.0, %v1198
      %v1200 = vpop.f32.mrb[0].mxu0
      %1201 = vmatprep.mubr.f32.mxu0 0.0
      %1202 = vmatmul.mubr.f32.gmra.mrb[0].mxu0 %v1052
      %v1203 = vpop.f32.mrb[0].mxu0
      %v1204 = vadd.f32 0.0, %v1203
      %v1205 = vpop.f32.mrb[0].mxu0
      %1206 = vmatprep.mubr.f32.mxu0 0.0
      %1207 = vmatmul.mubr.f32.gmra.mrb[0].mxu0 %v1053
      %v1208 = vpop.f32.mrb[0].mxu0
      %v1209 = vadd.f32 0.0, %v1208
      %v1210 = vpop.f32.mrb[0].mxu0
      %1211 = vmatprep.mubr.f32.mxu0 0.0
      %1212 = vmatmul.mubr.f32.gmra.mrb[0].mxu0 %v1054
      %v1213 = vpop.f32.mrb[0].mxu0
      %v1214 = vadd.f32 0.0, %v1213
      %v1215 = vpop.f32.mrb[0].mxu0
      %1216 = vmatprep.mubr.f32.mxu0 0.0
      %1217 = vmatmul.mubr.f32.gmra.mrb[0].mxu0 %v1055
      %v1218 = vpop.f32.mrb[0].mxu0
      %v1219 = vadd.f32 0.0, %v1218
      %v1220 = vpop.f32.mrb[0].mxu0
      %1221 = vmatprep.mubr.f32.mxu0 0.0
      %1222 = vmatmul.mubr.f32.gmra.mrb[0].mxu0 %v1056
      %v1223 = vpop.f32.mrb[0].mxu0
      %v1224 = vadd.f32 0.0, %v1223
      %v1225 = vpop.f32.mrb[0].mxu0
      %1226 = vmatprep.mubr.f32.mxu0 0.0
      %1227 = vmatmul.mubr.f32.gmra.mrb[0].mxu0 %v1057
      %v1228 = vpop.f32.mrb[0].mxu0
      %v1229 = vadd.f32 0.0, %v1228
      %v1230 = vpop.f32.mrb[0].mxu0
      %1231 = vmatprep.mubr.f32.mxu0 0.0
      %1232 = vmatmul.mubr.f32.gmra.mrb[0].mxu0 %v1058
      %v1233 = vpop.f32.mrb[0].mxu0
      %v1234 = vadd.f32 0.0, %v1233
      %v1235 = vpop.f32.mrb[0].mxu0
      %1236 = vmatprep.mubr.f32.mxu0 0.0
      %1237 = vmatmul.mubr.f32.gmra.mrb[0].mxu0 %v1059
      %v1238 = vpop.f32.mrb[0].mxu0
      %v1239 = vadd.f32 0.0, %v1238
      %v1240 = vpop.f32.mrb[0].mxu0
      %1241 = vmatprep.mubr.f32.mxu0 0.0
      %1242 = vmatmul.mubr.f32.gmra.mrb[0].mxu0 %v1060
      %v1243 = vpop.f32.mrb[0].mxu0
      %v1244 = vadd.f32 0.0, %v1243
      %v1245 = vpop.f32.mrb[0].mxu0
      %1246 = vmatprep.mubr.f32.mxu0 0.0
      %1247 = vmatmul.mubr.f32.gmra.mrb[0].mxu0 %v1061
      %v1248 = vpop.f32.mrb[0].mxu0
      %v1249 = vadd.f32 0.0, %v1248
      %v1250 = vpop.f32.mrb[0].mxu0
      %1251 = vmatprep.mubr.f32.mxu0 0.0
      %1252 = vmatmul.mubr.f32.gmra.mrb[0].mxu0 %v1062
      %v1253 = vpop.f32.mrb[0].mxu0
      %v1254 = vadd.f32 0.0, %v1253
      %v1255 = vpop.f32.mrb[0].mxu0
      %1256 = vmatprep.mubr.f32.mxu0 0.0
      %1257 = vmatmul.mubr.f32.gmra.mrb[0].mxu0 %v1063
      %v1258 = vpop.f32.mrb[0].mxu0
      %v1259 = vadd.f32 0.0, %v1258
      %v1260 = vpop.f32.mrb[0].mxu0
      %1261 = vmatprep.mubr.f32.mxu0 0.0
      %1262 = vmatmul.mubr.f32.gmra.mrb[0].mxu0 %v1064
      %v1263 = vpop.f32.mrb[0].mxu0
      %v1264 = vadd.f32 0.0, %v1263
      %v1265 = vpop.f32.mrb[0].mxu0
      %1266 = vmatprep.mubr.f32.mxu0 0.0
      %1267 = vmatmul.mubr.f32.gmra.mrb[0].mxu0 %v1065
      %v1268 = vpop.f32.mrb[0].mxu0
      %v1269 = vadd.f32 0.0, %v1268
      %v1270 = vpop.f32.mrb[0].mxu0
      %1271 = vmatprep.mubr.f32.mxu0 0.0
      %1272 = vmatmul.mubr.f32.gmra.mrb[0].mxu0 %v1066
      %v1273 = vpop.f32.mrb[0].mxu0
      %v1274 = vadd.f32 0.0, %v1273
      %v1275 = vpop.f32.mrb[0].mxu0
      %1276 = vmatprep.mubr.f32.mxu0 0.0
      %1277 = vmatmul.mubr.f32.gmra.mrb[0].mxu0 %v1067
      %v1278 = vpop.f32.mrb[0].mxu0
      %v1279 = vadd.f32 0.0, %v1278
      %v1280 = vpop.f32.mrb[0].mxu0
      %1281 = vmatprep.mubr.f32.mxu0 0.0
      %1282 = vmatmul.mubr.f32.gmra.mrb[0].mxu0 %v1068
      %v1283 = vpop.f32.mrb[0].mxu0
      %v1284 = vadd.f32 0.0, %v1283
      %v1285 = vpop.f32.mrb[0].mxu0
      %1286 = vmatprep.mubr.f32.mxu0 0.0
      %1287 = vmatmul.mubr.f32.gmra.mrb[0].mxu0 %v1069
      %v1288 = vpop.f32.mrb[0].mxu0
      %v1289 = vadd.f32 0.0, %v1288
      %v1290 = vpop.f32.mrb[0].mxu0
      %1291 = vmatprep.mubr.f32.mxu0 0.0
      %1292 = vmatmul.mubr.f32.gmra.mrb[0].mxu0 %v1070
      %v1293 = vpop.f32.mrb[0].mxu0
      %v1294 = vadd.f32 0.0, %v1293
      %v1295 = vpop.f32.mrb[0].mxu0
      %1296 = vmatprep.mubr.f32.mxu0 0.0
      %1297 = vmatmul.mubr.f32.gmra.mrb[0].mxu0 %v1071
      %v1298 = vpop.f32.mrb[0].mxu0
      %v1299 = vadd.f32 0.0, %v1298
      %v1300 = vpop.f32.mrb[0].mxu0
      %1301 = vmatprep.mubr.f32.mxu0 0.0
      %1302 = vmatmul.mubr.f32.gmra.mrb[0].mxu0 %v1072
      %v1303 = vpop.f32.mrb[0].mxu0
      %v1304 = vadd.f32 0.0, %v1303
      %v1305 = vpop.f32.mrb[0].mxu0
      %1306 = vmatprep.mubr.f32.mxu0 0.0
      %1307 = vmatmul.mubr.f32.gmra.mrb[0].mxu0 %v1073
      %v1308 = vpop.f32.mrb[0].mxu0
      %v1309 = vadd.f32 0.0, %v1308
      %v1310 = vpop.f32.mrb[0].mxu0
      %1311 = vmatprep.mubr.f32.mxu0 0.0
      %1312 = vmatmul.mubr.f32.gmra.mrb[0].mxu0 %v1074
      %v1313 = vpop.f32.mrb[0].mxu0
      %v1314 = vadd.f32 0.0, %v1313
      %v1315 = vpop.f32.mrb[0].mxu0
      %1316 = vdwg.mxu0
      %v1317 = vadd.f32 %v885, %v1159
      %v1318 = vadd.f32 %v890, %v1164
      %v1319 = vadd.f32 %v895, %v1169
      %v1320 = vadd.f32 %v900, %v1174
      %v1321 = vadd.f32 %v905, %v1179
      %v1322 = vadd.f32 %v910, %v1184
      %v1323 = vadd.f32 %v915, %v1189
      %v1324 = vadd.f32 %v920, %v1194
      %v1325 = vadd.f32 %v925, %v1199
      %v1326 = vadd.f32 %v930, %v1204
      %v1327 = vadd.f32 %v935, %v1209
      %v1328 = vadd.f32 %v940, %v1214
      %v1329 = vadd.f32 %v945, %v1219
      %v1330 = vadd.f32 %v950, %v1224
      %v1331 = vadd.f32 %v955, %v1229
      %v1332 = vadd.f32 %v960, %v1234
      %v1333 = vadd.f32 %v965, %v1239
      %v1334 = vadd.f32 %v970, %v1244
      %v1335 = vadd.f32 %v975, %v1249
      %v1336 = vadd.f32 %v980, %v1254
      %v1337 = vadd.f32 %v985, %v1259
      %v1338 = vadd.f32 %v990, %v1264
      %v1339 = vadd.f32 %v995, %v1269
      %v1340 = vadd.f32 %v1000, %v1274
      %v1341 = vadd.f32 %v1005, %v1279
      %v1342 = vadd.f32 %v1010, %v1284
      %v1343 = vadd.f32 %v1015, %v1289
      %v1344 = vadd.f32 %v1020, %v1294
      %v1345 = vadd.f32 %v1025, %v1299
      %v1346 = vadd.f32 %v1030, %v1304
      %v1347 = vadd.f32 %v1035, %v1309
      %v1348 = vadd.f32 %v1040, %v1314
      %v1349 = vld [vmem:[%s463] sm:$0xff]
      %v1350 = vld [vmem:[%s463 + $0x8] sm:$0xff]
      %v1351 = vld [vmem:[%s463 + $0x18] sm:$0xff]
      %v1352 = vld [vmem:[%s463 + $0x20] sm:$0xff]
      %v1353 = vld [vmem:[%s463 + $0x30] sm:$0xff]
      %v1354 = vld [vmem:[%s463 + $0x38] sm:$0xff]
      %v1355 = vld [vmem:[%s463 + $0x48] sm:$0xff]
      %v1356 = vld [vmem:[%s463 + $0x50] sm:$0xff]
      %v1357 = vld [vmem:[%s463 + $0x60] sm:$0xff]
      %v1358 = vld [vmem:[%s463 + $0x68] sm:$0xff]
      %v1359 = vld [vmem:[%s463 + $0x78] sm:$0xff]
      %v1360 = vld [vmem:[%s463 + $0x80] sm:$0xff]
      %v1361 = vld [vmem:[%s463 + $0x90] sm:$0xff]
      %v1362 = vld [vmem:[%s463 + $0x98] sm:$0xff]
      %v1363 = vld [vmem:[%s463 + $0xa8] sm:$0xff]
      %v1364 = vld [vmem:[%s463 + $0xb0] sm:$0xff]
      %v1365 = vld [vmem:[%s463 + $0xc0] sm:$0xff]
      %v1366 = vld [vmem:[%s463 + $0xc8] sm:$0xff]
      %v1367 = vld [vmem:[%s463 + $0xd8] sm:$0xff]
      %v1368 = vld [vmem:[%s463 + $0xe0] sm:$0xff]
      %v1369 = vld [vmem:[%s463 + $0xf0] sm:$0xff]
      %v1370 = vld [vmem:[%s463 + $0xf8] sm:$0xff]
      %v1371 = vld [vmem:[%s463 + $0x108] sm:$0xff]
      %v1372 = vld [vmem:[%s463 + $0x110] sm:$0xff]
      %v1373 = vld [vmem:[%s463 + $0x120] sm:$0xff]
      %v1374 = vld [vmem:[%s463 + $0x128] sm:$0xff]
      %v1375 = vld [vmem:[%s463 + $0x138] sm:$0xff]
      %v1376 = vld [vmem:[%s463 + $0x140] sm:$0xff]
      %v1377 = vld [vmem:[%s463 + $0x150] sm:$0xff]
      %v1378 = vld [vmem:[%s463 + $0x158] sm:$0xff]
      %v1379 = vld [vmem:[%s463 + $0x168] sm:$0xff]
      %v1380 = vld [vmem:[%s463 + $0x170] sm:$0xff]
      %s1381 = scalar_lea.vmem %s3, 384
      %v1382 = vld [vmem:[%s1381] sm:$0xff]
      %v1383 = vld [vmem:[%s1381 + $0x8] sm:$0xff]
      %v1384 = vld [vmem:[%s1381 + $0x10] sm:$0xff]
      %v1385 = vld [vmem:[%s1381 + $0x18] sm:$0xff]
      %v1386 = vld [vmem:[%s1381 + $0x20] sm:$0xff]
      %v1387 = vld [vmem:[%s1381 + $0x28] sm:$0xff]
      %v1388 = vld [vmem:[%s1381 + $0x30] sm:$0xff]
      %v1389 = vld [vmem:[%s1381 + $0x38] sm:$0xff]
      %v1390 = vld [vmem:[%s1381 + $0x40] sm:$0xff]
      %v1391 = vld [vmem:[%s1381 + $0x48] sm:$0xff]
      %v1392 = vld [vmem:[%s1381 + $0x50] sm:$0xff]
      %v1393 = vld [vmem:[%s1381 + $0x58] sm:$0xff]
      %v1394 = vld [vmem:[%s1381 + $0x60] sm:$0xff]
      %v1395 = vld [vmem:[%s1381 + $0x68] sm:$0xff]
      %v1396 = vld [vmem:[%s1381 + $0x70] sm:$0xff]
      %v1397 = vld [vmem:[%s1381 + $0x78] sm:$0xff]
      %1398 = vmatprep.subr.mxu0 0.0
      %1399 = vmatpush1.msra.mxu0 %v1382
      %1400 = vmatprep.subr.mxu0 0.0
      %1401 = vmatpush1.msra.mxu0 %v1383
      %1402 = vmatprep.subr.mxu0 0.0
      %1403 = vmatpush1.msra.mxu0 %v1384
      %1404 = vmatprep.subr.mxu0 0.0
      %1405 = vmatpush1.msra.mxu0 %v1385
      %1406 = vmatprep.subr.mxu0 0.0
      %1407 = vmatpush1.msra.mxu0 %v1386
      %1408 = vmatprep.subr.mxu0 0.0
      %1409 = vmatpush1.msra.mxu0 %v1387
      %1410 = vmatprep.subr.mxu0 0.0
      %1411 = vmatpush1.msra.mxu0 %v1388
      %1412 = vmatprep.subr.mxu0 0.0
      %1413 = vmatpush1.msra.mxu0 %v1389
      %1414 = vmatprep.subr.mxu0 0.0
      %1415 = vmatpush1.msra.mxu0 %v1390
      %1416 = vmatprep.subr.mxu0 0.0
      %1417 = vmatpush1.msra.mxu0 %v1391
      %1418 = vmatprep.subr.mxu0 0.0
      %1419 = vmatpush1.msra.mxu0 %v1392
      %1420 = vmatprep.subr.mxu0 0.0
      %1421 = vmatpush1.msra.mxu0 %v1393
      %1422 = vmatprep.subr.mxu0 0.0
      %1423 = vmatpush1.msra.mxu0 %v1394
      %1424 = vmatprep.subr.mxu0 0.0
      %1425 = vmatpush1.msra.mxu0 %v1395
      %1426 = vmatprep.subr.mxu0 0.0
      %1427 = vmatpush1.msra.mxu0 %v1396
      %1428 = vmatprep.subr.mxu0 0.0
      %1429 = vmatpush1.msra.mxu0 %v1397
      %1430 = vmatprep.subr.mxu0 0.0
      %1431 = vmatpush1.msra.mxu0 0.0
      %1432 = vmatprep.subr.mxu0 0.0
      %1433 = vmatpush1.msra.mxu0 0.0
      %1434 = vmatprep.subr.mxu0 0.0
      %1435 = vmatpush1.msra.mxu0 0.0
      %1436 = vmatprep.subr.mxu0 0.0
      %1437 = vmatpush1.msra.mxu0 0.0
      %1438 = vmatprep.subr.mxu0 0.0
      %1439 = vmatpush1.msra.mxu0 0.0
      %1440 = vmatprep.subr.mxu0 0.0
      %1441 = vmatpush1.msra.mxu0 0.0
      %1442 = vmatprep.subr.mxu0 0.0
      %1443 = vmatpush1.msra.mxu0 0.0
      %1444 = vmatprep.subr.mxu0 0.0
      %1445 = vmatpush1.msra.mxu0 0.0
      %1446 = vmatprep.subr.mxu0 0.0
      %1447 = vmatpush1.msra.mxu0 0.0
      %1448 = vmatprep.subr.mxu0 0.0
      %1449 = vmatpush1.msra.mxu0 0.0
      %1450 = vmatprep.subr.mxu0 0.0
      %1451 = vmatpush1.msra.mxu0 0.0
      %1452 = vmatprep.subr.mxu0 0.0
      %1453 = vmatpush1.msra.mxu0 0.0
      %1454 = vmatprep.subr.mxu0 0.0
      %1455 = vmatpush1.msra.mxu0 0.0
      %1456 = vmatprep.subr.mxu0 0.0
      %1457 = vmatpush1.msra.mxu0 0.0
      %1458 = vmatprep.subr.mxu0 0.0
      %1459 = vmatpush1.msra.mxu0 0.0
      %1460 = vmatprep.subr.mxu0 0.0
      %1461 = vmatpush1.msra.mxu0 0.0
      %1462 = vmatprep.mubr.f32.mxu0 0.0
      %1463 = vmatmul.mubr.f32.gmra.mrb[0].mxu0 %v1349
      %v1464 = vpop.f32.mrb[0].mxu0
      %v1465 = vadd.f32 0.0, %v1464
      %v1466 = vpop.f32.mrb[0].mxu0
      %1467 = vmatprep.mubr.f32.mxu0 0.0
      %1468 = vmatmul.mubr.f32.gmra.mrb[0].mxu0 %v1350
      %v1469 = vpop.f32.mrb[0].mxu0
      %v1470 = vadd.f32 0.0, %v1469
      %v1471 = vpop.f32.mrb[0].mxu0
      %1472 = vmatprep.mubr.f32.mxu0 0.0
      %1473 = vmatmul.mubr.f32.gmra.mrb[0].mxu0 %v1351
      %v1474 = vpop.f32.mrb[0].mxu0
      %v1475 = vadd.f32 0.0, %v1474
      %v1476 = vpop.f32.mrb[0].mxu0
      %1477 = vmatprep.mubr.f32.mxu0 0.0
      %1478 = vmatmul.mubr.f32.gmra.mrb[0].mxu0 %v1352
      %v1479 = vpop.f32.mrb[0].mxu0
      %v1480 = vadd.f32 0.0, %v1479
      %v1481 = vpop.f32.mrb[0].mxu0
      %1482 = vmatprep.mubr.f32.mxu0 0.0
      %1483 = vmatmul.mubr.f32.gmra.mrb[0].mxu0 %v1353
      %v1484 = vpop.f32.mrb[0].mxu0
      %v1485 = vadd.f32 0.0, %v1484
      %v1486 = vpop.f32.mrb[0].mxu0
      %1487 = vmatprep.mubr.f32.mxu0 0.0
      %1488 = vmatmul.mubr.f32.gmra.mrb[0].mxu0 %v1354
      %v1489 = vpop.f32.mrb[0].mxu0
      %v1490 = vadd.f32 0.0, %v1489
      %v1491 = vpop.f32.mrb[0].mxu0
      %1492 = vmatprep.mubr.f32.mxu0 0.0
      %1493 = vmatmul.mubr.f32.gmra.mrb[0].mxu0 %v1355
      %v1494 = vpop.f32.mrb[0].mxu0
      %v1495 = vadd.f32 0.0, %v1494
      %v1496 = vpop.f32.mrb[0].mxu0
      %1497 = vmatprep.mubr.f32.mxu0 0.0
      %1498 = vmatmul.mubr.f32.gmra.mrb[0].mxu0 %v1356
      %v1499 = vpop.f32.mrb[0].mxu0
      %v1500 = vadd.f32 0.0, %v1499
      %v1501 = vpop.f32.mrb[0].mxu0
      %1502 = vmatprep.mubr.f32.mxu0 0.0
      %1503 = vmatmul.mubr.f32.gmra.mrb[0].mxu0 %v1357
      %v1504 = vpop.f32.mrb[0].mxu0
      %v1505 = vadd.f32 0.0, %v1504
      %v1506 = vpop.f32.mrb[0].mxu0
      %1507 = vmatprep.mubr.f32.mxu0 0.0
      %1508 = vmatmul.mubr.f32.gmra.mrb[0].mxu0 %v1358
      %v1509 = vpop.f32.mrb[0].mxu0
      %v1510 = vadd.f32 0.0, %v1509
      %v1511 = vpop.f32.mrb[0].mxu0
      %1512 = vmatprep.mubr.f32.mxu0 0.0
      %1513 = vmatmul.mubr.f32.gmra.mrb[0].mxu0 %v1359
      %v1514 = vpop.f32.mrb[0].mxu0
      %v1515 = vadd.f32 0.0, %v1514
      %v1516 = vpop.f32.mrb[0].mxu0
      %1517 = vmatprep.mubr.f32.mxu0 0.0
      %1518 = vmatmul.mubr.f32.gmra.mrb[0].mxu0 %v1360
      %v1519 = vpop.f32.mrb[0].mxu0
      %v1520 = vadd.f32 0.0, %v1519
      %v1521 = vpop.f32.mrb[0].mxu0
      %1522 = vmatprep.mubr.f32.mxu0 0.0
      %1523 = vmatmul.mubr.f32.gmra.mrb[0].mxu0 %v1361
      %v1524 = vpop.f32.mrb[0].mxu0
      %v1525 = vadd.f32 0.0, %v1524
      %v1526 = vpop.f32.mrb[0].mxu0
      %1527 = vmatprep.mubr.f32.mxu0 0.0
      %1528 = vmatmul.mubr.f32.gmra.mrb[0].mxu0 %v1362
      %v1529 = vpop.f32.mrb[0].mxu0
      %v1530 = vadd.f32 0.0, %v1529
      %v1531 = vpop.f32.mrb[0].mxu0
      %1532 = vmatprep.mubr.f32.mxu0 0.0
      %1533 = vmatmul.mubr.f32.gmra.mrb[0].mxu0 %v1363
      %v1534 = vpop.f32.mrb[0].mxu0
      %v1535 = vadd.f32 0.0, %v1534
      %v1536 = vpop.f32.mrb[0].mxu0
      %1537 = vmatprep.mubr.f32.mxu0 0.0
      %1538 = vmatmul.mubr.f32.gmra.mrb[0].mxu0 %v1364
      %v1539 = vpop.f32.mrb[0].mxu0
      %v1540 = vadd.f32 0.0, %v1539
      %v1541 = vpop.f32.mrb[0].mxu0
      %1542 = vmatprep.mubr.f32.mxu0 0.0
      %1543 = vmatmul.mubr.f32.gmra.mrb[0].mxu0 %v1365
      %v1544 = vpop.f32.mrb[0].mxu0
      %v1545 = vadd.f32 0.0, %v1544
      %v1546 = vpop.f32.mrb[0].mxu0
      %1547 = vmatprep.mubr.f32.mxu0 0.0
      %1548 = vmatmul.mubr.f32.gmra.mrb[0].mxu0 %v1366
      %v1549 = vpop.f32.mrb[0].mxu0
      %v1550 = vadd.f32 0.0, %v1549
      %v1551 = vpop.f32.mrb[0].mxu0
      %1552 = vmatprep.mubr.f32.mxu0 0.0
      %1553 = vmatmul.mubr.f32.gmra.mrb[0].mxu0 %v1367
      %v1554 = vpop.f32.mrb[0].mxu0
      %v1555 = vadd.f32 0.0, %v1554
      %v1556 = vpop.f32.mrb[0].mxu0
      %1557 = vmatprep.mubr.f32.mxu0 0.0
      %1558 = vmatmul.mubr.f32.gmra.mrb[0].mxu0 %v1368
      %v1559 = vpop.f32.mrb[0].mxu0
      %v1560 = vadd.f32 0.0, %v1559
      %v1561 = vpop.f32.mrb[0].mxu0
      %1562 = vmatprep.mubr.f32.mxu0 0.0
      %1563 = vmatmul.mubr.f32.gmra.mrb[0].mxu0 %v1369
      %v1564 = vpop.f32.mrb[0].mxu0
      %v1565 = vadd.f32 0.0, %v1564
      %v1566 = vpop.f32.mrb[0].mxu0
      %1567 = vmatprep.mubr.f32.mxu0 0.0
      %1568 = vmatmul.mubr.f32.gmra.mrb[0].mxu0 %v1370
      %v1569 = vpop.f32.mrb[0].mxu0
      %v1570 = vadd.f32 0.0, %v1569
      %v1571 = vpop.f32.mrb[0].mxu0
      %1572 = vmatprep.mubr.f32.mxu0 0.0
      %1573 = vmatmul.mubr.f32.gmra.mrb[0].mxu0 %v1371
      %v1574 = vpop.f32.mrb[0].mxu0
      %v1575 = vadd.f32 0.0, %v1574
      %v1576 = vpop.f32.mrb[0].mxu0
      %1577 = vmatprep.mubr.f32.mxu0 0.0
      %1578 = vmatmul.mubr.f32.gmra.mrb[0].mxu0 %v1372
      %v1579 = vpop.f32.mrb[0].mxu0
      %v1580 = vadd.f32 0.0, %v1579
      %v1581 = vpop.f32.mrb[0].mxu0
      %1582 = vmatprep.mubr.f32.mxu0 0.0
      %1583 = vmatmul.mubr.f32.gmra.mrb[0].mxu0 %v1373
      %v1584 = vpop.f32.mrb[0].mxu0
      %v1585 = vadd.f32 0.0, %v1584
      %v1586 = vpop.f32.mrb[0].mxu0
      %1587 = vmatprep.mubr.f32.mxu0 0.0
      %1588 = vmatmul.mubr.f32.gmra.mrb[0].mxu0 %v1374
      %v1589 = vpop.f32.mrb[0].mxu0
      %v1590 = vadd.f32 0.0, %v1589
      %v1591 = vpop.f32.mrb[0].mxu0
      %1592 = vmatprep.mubr.f32.mxu0 0.0
      %1593 = vmatmul.mubr.f32.gmra.mrb[0].mxu0 %v1375
      %v1594 = vpop.f32.mrb[0].mxu0
      %v1595 = vadd.f32 0.0, %v1594
      %v1596 = vpop.f32.mrb[0].mxu0
      %1597 = vmatprep.mubr.f32.mxu0 0.0
      %1598 = vmatmul.mubr.f32.gmra.mrb[0].mxu0 %v1376
      %v1599 = vpop.f32.mrb[0].mxu0
      %v1600 = vadd.f32 0.0, %v1599
      %v1601 = vpop.f32.mrb[0].mxu0
      %1602 = vmatprep.mubr.f32.mxu0 0.0
      %1603 = vmatmul.mubr.f32.gmra.mrb[0].mxu0 %v1377
      %v1604 = vpop.f32.mrb[0].mxu0
      %v1605 = vadd.f32 0.0, %v1604
      %v1606 = vpop.f32.mrb[0].mxu0
      %1607 = vmatprep.mubr.f32.mxu0 0.0
      %1608 = vmatmul.mubr.f32.gmra.mrb[0].mxu0 %v1378
      %v1609 = vpop.f32.mrb[0].mxu0
      %v1610 = vadd.f32 0.0, %v1609
      %v1611 = vpop.f32.mrb[0].mxu0
      %1612 = vmatprep.mubr.f32.mxu0 0.0
      %1613 = vmatmul.mubr.f32.gmra.mrb[0].mxu0 %v1379
      %v1614 = vpop.f32.mrb[0].mxu0
      %v1615 = vadd.f32 0.0, %v1614
      %v1616 = vpop.f32.mrb[0].mxu0
      %1617 = vmatprep.mubr.f32.mxu0 0.0
      %1618 = vmatmul.mubr.f32.gmra.mrb[0].mxu0 %v1380
      %v1619 = vpop.f32.mrb[0].mxu0
      %v1620 = vadd.f32 0.0, %v1619
      %v1621 = vpop.f32.mrb[0].mxu0
      %1622 = vdwg.mxu0
      %v1623 = vadd.f32 %v1317, %v1465
      %v1624 = vadd.f32 %v1318, %v1470
      %v1625 = vadd.f32 %v1319, %v1475
      %v1626 = vadd.f32 %v1320, %v1480
      %v1627 = vadd.f32 %v1321, %v1485
      %v1628 = vadd.f32 %v1322, %v1490
      %v1629 = vadd.f32 %v1323, %v1495
      %v1630 = vadd.f32 %v1324, %v1500
      %v1631 = vadd.f32 %v1325, %v1505
      %v1632 = vadd.f32 %v1326, %v1510
      %v1633 = vadd.f32 %v1327, %v1515
      %v1634 = vadd.f32 %v1328, %v1520
      %v1635 = vadd.f32 %v1329, %v1525
      %v1636 = vadd.f32 %v1330, %v1530
      %v1637 = vadd.f32 %v1331, %v1535
      %v1638 = vadd.f32 %v1332, %v1540
      %v1639 = vadd.f32 %v1333, %v1545
      %v1640 = vadd.f32 %v1334, %v1550
      %v1641 = vadd.f32 %v1335, %v1555
      %v1642 = vadd.f32 %v1336, %v1560
      %v1643 = vadd.f32 %v1337, %v1565
      %v1644 = vadd.f32 %v1338, %v1570
      %v1645 = vadd.f32 %v1339, %v1575
      %v1646 = vadd.f32 %v1340, %v1580
      %v1647 = vadd.f32 %v1341, %v1585
      %v1648 = vadd.f32 %v1342, %v1590
      %v1649 = vadd.f32 %v1343, %v1595
      %v1650 = vadd.f32 %v1344, %v1600
      %v1651 = vadd.f32 %v1345, %v1605
      %v1652 = vadd.f32 %v1346, %v1610
      %v1653 = vadd.f32 %v1347, %v1615
      %v1654 = vadd.f32 %v1348, %v1620
      %v1655 = vld [vmem:[%s463 + $0x1] sm:$0xff]
      %v1656 = vld [vmem:[%s463 + $0x9] sm:$0xff]
      %v1657 = vld [vmem:[%s463 + $0x19] sm:$0xff]
      %v1658 = vld [vmem:[%s463 + $0x21] sm:$0xff]
      %v1659 = vld [vmem:[%s463 + $0x31] sm:$0xff]
      %v1660 = vld [vmem:[%s463 + $0x39] sm:$0xff]
      %v1661 = vld [vmem:[%s463 + $0x49] sm:$0xff]
      %v1662 = vld [vmem:[%s463 + $0x51] sm:$0xff]
      %v1663 = vld [vmem:[%s463 + $0x61] sm:$0xff]
      %v1664 = vld [vmem:[%s463 + $0x69] sm:$0xff]
      %v1665 = vld [vmem:[%s463 + $0x79] sm:$0xff]
      %v1666 = vld [vmem:[%s463 + $0x81] sm:$0xff]
      %v1667 = vld [vmem:[%s463 + $0x91] sm:$0xff]
      %v1668 = vld [vmem:[%s463 + $0x99] sm:$0xff]
      %v1669 = vld [vmem:[%s463 + $0xa9] sm:$0xff]
      %v1670 = vld [vmem:[%s463 + $0xb1] sm:$0xff]
      %v1671 = vld [vmem:[%s463 + $0xc1] sm:$0xff]
      %v1672 = vld [vmem:[%s463 + $0xc9] sm:$0xff]
      %v1673 = vld [vmem:[%s463 + $0xd9] sm:$0xff]
      %v1674 = vld [vmem:[%s463 + $0xe1] sm:$0xff]
      %v1675 = vld [vmem:[%s463 + $0xf1] sm:$0xff]
      %v1676 = vld [vmem:[%s463 + $0xf9] sm:$0xff]
      %v1677 = vld [vmem:[%s463 + $0x109] sm:$0xff]
      %v1678 = vld [vmem:[%s463 + $0x111] sm:$0xff]
      %v1679 = vld [vmem:[%s463 + $0x121] sm:$0xff]
      %v1680 = vld [vmem:[%s463 + $0x129] sm:$0xff]
      %v1681 = vld [vmem:[%s463 + $0x139] sm:$0xff]
      %v1682 = vld [vmem:[%s463 + $0x141] sm:$0xff]
      %v1683 = vld [vmem:[%s463 + $0x151] sm:$0xff]
      %v1684 = vld [vmem:[%s463 + $0x159] sm:$0xff]
      %v1685 = vld [vmem:[%s463 + $0x169] sm:$0xff]
      %v1686 = vld [vmem:[%s463 + $0x171] sm:$0xff]
      %s1687 = scalar_lea.vmem %s3, 512
      %v1688 = vld [vmem:[%s1687] sm:$0xff]
      %v1689 = vld [vmem:[%s1687 + $0x8] sm:$0xff]
      %v1690 = vld [vmem:[%s1687 + $0x10] sm:$0xff]
      %v1691 = vld [vmem:[%s1687 + $0x18] sm:$0xff]
      %v1692 = vld [vmem:[%s1687 + $0x20] sm:$0xff]
      %v1693 = vld [vmem:[%s1687 + $0x28] sm:$0xff]
      %v1694 = vld [vmem:[%s1687 + $0x30] sm:$0xff]
      %v1695 = vld [vmem:[%s1687 + $0x38] sm:$0xff]
      %v1696 = vld [vmem:[%s1687 + $0x40] sm:$0xff]
      %v1697 = vld [vmem:[%s1687 + $0x48] sm:$0xff]
      %v1698 = vld [vmem:[%s1687 + $0x50] sm:$0xff]
      %v1699 = vld [vmem:[%s1687 + $0x58] sm:$0xff]
      %v1700 = vld [vmem:[%s1687 + $0x60] sm:$0xff]
      %v1701 = vld [vmem:[%s1687 + $0x68] sm:$0xff]
      %v1702 = vld [vmem:[%s1687 + $0x70] sm:$0xff]
      %v1703 = vld [vmem:[%s1687 + $0x78] sm:$0xff]
      %1704 = vmatprep.subr.mxu0 0.0
      %1705 = vmatpush1.msra.mxu0 %v1688
      %1706 = vmatprep.subr.mxu0 0.0
      %1707 = vmatpush1.msra.mxu0 %v1689
      %1708 = vmatprep.subr.mxu0 0.0
      %1709 = vmatpush1.msra.mxu0 %v1690
      %1710 = vmatprep.subr.mxu0 0.0
      %1711 = vmatpush1.msra.mxu0 %v1691
      %1712 = vmatprep.subr.mxu0 0.0
      %1713 = vmatpush1.msra.mxu0 %v1692
      %1714 = vmatprep.subr.mxu0 0.0
      %1715 = vmatpush1.msra.mxu0 %v1693
      %1716 = vmatprep.subr.mxu0 0.0
      %1717 = vmatpush1.msra.mxu0 %v1694
      %1718 = vmatprep.subr.mxu0 0.0
      %1719 = vmatpush1.msra.mxu0 %v1695
      %1720 = vmatprep.subr.mxu0 0.0
      %1721 = vmatpush1.msra.mxu0 %v1696
      %1722 = vmatprep.subr.mxu0 0.0
      %1723 = vmatpush1.msra.mxu0 %v1697
      %1724 = vmatprep.subr.mxu0 0.0
      %1725 = vmatpush1.msra.mxu0 %v1698
      %1726 = vmatprep.subr.mxu0 0.0
      %1727 = vmatpush1.msra.mxu0 %v1699
      %1728 = vmatprep.subr.mxu0 0.0
      %1729 = vmatpush1.msra.mxu0 %v1700
      %1730 = vmatprep.subr.mxu0 0.0
      %1731 = vmatpush1.msra.mxu0 %v1701
      %1732 = vmatprep.subr.mxu0 0.0
      %1733 = vmatpush1.msra.mxu0 %v1702
      %1734 = vmatprep.subr.mxu0 0.0
      %1735 = vmatpush1.msra.mxu0 %v1703
      %1736 = vmatprep.subr.mxu0 0.0
      %1737 = vmatpush1.msra.mxu0 0.0
      %1738 = vmatprep.subr.mxu0 0.0
      %1739 = vmatpush1.msra.mxu0 0.0
      %1740 = vmatprep.subr.mxu0 0.0
      %1741 = vmatpush1.msra.mxu0 0.0
      %1742 = vmatprep.subr.mxu0 0.0
      %1743 = vmatpush1.msra.mxu0 0.0
      %1744 = vmatprep.subr.mxu0 0.0
      %1745 = vmatpush1.msra.mxu0 0.0
      %1746 = vmatprep.subr.mxu0 0.0
      %1747 = vmatpush1.msra.mxu0 0.0
      %1748 = vmatprep.subr.mxu0 0.0
      %1749 = vmatpush1.msra.mxu0 0.0
      %1750 = vmatprep.subr.mxu0 0.0
      %1751 = vmatpush1.msra.mxu0 0.0
      %1752 = vmatprep.subr.mxu0 0.0
      %1753 = vmatpush1.msra.mxu0 0.0
      %1754 = vmatprep.subr.mxu0 0.0
      %1755 = vmatpush1.msra.mxu0 0.0
      %1756 = vmatprep.subr.mxu0 0.0
      %1757 = vmatpush1.msra.mxu0 0.0
      %1758 = vmatprep.subr.mxu0 0.0
      %1759 = vmatpush1.msra.mxu0 0.0
      %1760 = vmatprep.subr.mxu0 0.0
      %1761 = vmatpush1.msra.mxu0 0.0
      %1762 = vmatprep.subr.mxu0 0.0
      %1763 = vmatpush1.msra.mxu0 0.0
      %1764 = vmatprep.subr.mxu0 0.0
      %1765 = vmatpush1.msra.mxu0 0.0
      %1766 = vmatprep.subr.mxu0 0.0
      %1767 = vmatpush1.msra.mxu0 0.0
      %1768 = vmatprep.mubr.f32.mxu0 0.0
      %1769 = vmatmul.mubr.f32.gmra.mrb[0].mxu0 %v1655
      %v1770 = vpop.f32.mrb[0].mxu0
      %v1771 = vadd.f32 0.0, %v1770
      %v1772 = vpop.f32.mrb[0].mxu0
      %1773 = vmatprep.mubr.f32.mxu0 0.0
      %1774 = vmatmul.mubr.f32.gmra.mrb[0].mxu0 %v1656
      %v1775 = vpop.f32.mrb[0].mxu0
      %v1776 = vadd.f32 0.0, %v1775
      %v1777 = vpop.f32.mrb[0].mxu0
      %1778 = vmatprep.mubr.f32.mxu0 0.0
      %1779 = vmatmul.mubr.f32.gmra.mrb[0].mxu0 %v1657
      %v1780 = vpop.f32.mrb[0].mxu0
      %v1781 = vadd.f32 0.0, %v1780
      %v1782 = vpop.f32.mrb[0].mxu0
      %1783 = vmatprep.mubr.f32.mxu0 0.0
      %1784 = vmatmul.mubr.f32.gmra.mrb[0].mxu0 %v1658
      %v1785 = vpop.f32.mrb[0].mxu0
      %v1786 = vadd.f32 0.0, %v1785
      %v1787 = vpop.f32.mrb[0].mxu0
      %1788 = vmatprep.mubr.f32.mxu0 0.0
      %1789 = vmatmul.mubr.f32.gmra.mrb[0].mxu0 %v1659
      %v1790 = vpop.f32.mrb[0].mxu0
      %v1791 = vadd.f32 0.0, %v1790
      %v1792 = vpop.f32.mrb[0].mxu0
      %1793 = vmatprep.mubr.f32.mxu0 0.0
      %1794 = vmatmul.mubr.f32.gmra.mrb[0].mxu0 %v1660
      %v1795 = vpop.f32.mrb[0].mxu0
      %v1796 = vadd.f32 0.0, %v1795
      %v1797 = vpop.f32.mrb[0].mxu0
      %1798 = vmatprep.mubr.f32.mxu0 0.0
      %1799 = vmatmul.mubr.f32.gmra.mrb[0].mxu0 %v1661
      %v1800 = vpop.f32.mrb[0].mxu0
      %v1801 = vadd.f32 0.0, %v1800
      %v1802 = vpop.f32.mrb[0].mxu0
      %1803 = vmatprep.mubr.f32.mxu0 0.0
      %1804 = vmatmul.mubr.f32.gmra.mrb[0].mxu0 %v1662
      %v1805 = vpop.f32.mrb[0].mxu0
      %v1806 = vadd.f32 0.0, %v1805
      %v1807 = vpop.f32.mrb[0].mxu0
      %1808 = vmatprep.mubr.f32.mxu0 0.0
      %1809 = vmatmul.mubr.f32.gmra.mrb[0].mxu0 %v1663
      %v1810 = vpop.f32.mrb[0].mxu0
      %v1811 = vadd.f32 0.0, %v1810
      %v1812 = vpop.f32.mrb[0].mxu0
      %1813 = vmatprep.mubr.f32.mxu0 0.0
      %1814 = vmatmul.mubr.f32.gmra.mrb[0].mxu0 %v1664
      %v1815 = vpop.f32.mrb[0].mxu0
      %v1816 = vadd.f32 0.0, %v1815
      %v1817 = vpop.f32.mrb[0].mxu0
      %1818 = vmatprep.mubr.f32.mxu0 0.0
      %1819 = vmatmul.mubr.f32.gmra.mrb[0].mxu0 %v1665
      %v1820 = vpop.f32.mrb[0].mxu0
      %v1821 = vadd.f32 0.0, %v1820
      %v1822 = vpop.f32.mrb[0].mxu0
      %1823 = vmatprep.mubr.f32.mxu0 0.0
      %1824 = vmatmul.mubr.f32.gmra.mrb[0].mxu0 %v1666
      %v1825 = vpop.f32.mrb[0].mxu0
      %v1826 = vadd.f32 0.0, %v1825
      %v1827 = vpop.f32.mrb[0].mxu0
      %1828 = vmatprep.mubr.f32.mxu0 0.0
      %1829 = vmatmul.mubr.f32.gmra.mrb[0].mxu0 %v1667
      %v1830 = vpop.f32.mrb[0].mxu0
      %v1831 = vadd.f32 0.0, %v1830
      %v1832 = vpop.f32.mrb[0].mxu0
      %1833 = vmatprep.mubr.f32.mxu0 0.0
      %1834 = vmatmul.mubr.f32.gmra.mrb[0].mxu0 %v1668
      %v1835 = vpop.f32.mrb[0].mxu0
      %v1836 = vadd.f32 0.0, %v1835
      %v1837 = vpop.f32.mrb[0].mxu0
      %1838 = vmatprep.mubr.f32.mxu0 0.0
      %1839 = vmatmul.mubr.f32.gmra.mrb[0].mxu0 %v1669
      %v1840 = vpop.f32.mrb[0].mxu0
      %v1841 = vadd.f32 0.0, %v1840
      %v1842 = vpop.f32.mrb[0].mxu0
      %1843 = vmatprep.mubr.f32.mxu0 0.0
      %1844 = vmatmul.mubr.f32.gmra.mrb[0].mxu0 %v1670
      %v1845 = vpop.f32.mrb[0].mxu0
      %v1846 = vadd.f32 0.0, %v1845
      %v1847 = vpop.f32.mrb[0].mxu0
      %1848 = vmatprep.mubr.f32.mxu0 0.0
      %1849 = vmatmul.mubr.f32.gmra.mrb[0].mxu0 %v1671
      %v1850 = vpop.f32.mrb[0].mxu0
      %v1851 = vadd.f32 0.0, %v1850
      %v1852 = vpop.f32.mrb[0].mxu0
      %1853 = vmatprep.mubr.f32.mxu0 0.0
      %1854 = vmatmul.mubr.f32.gmra.mrb[0].mxu0 %v1672
      %v1855 = vpop.f32.mrb[0].mxu0
      %v1856 = vadd.f32 0.0, %v1855
      %v1857 = vpop.f32.mrb[0].mxu0
      %1858 = vmatprep.mubr.f32.mxu0 0.0
      %1859 = vmatmul.mubr.f32.gmra.mrb[0].mxu0 %v1673
      %v1860 = vpop.f32.mrb[0].mxu0
      %v1861 = vadd.f32 0.0, %v1860
      %v1862 = vpop.f32.mrb[0].mxu0
      %1863 = vmatprep.mubr.f32.mxu0 0.0
      %1864 = vmatmul.mubr.f32.gmra.mrb[0].mxu0 %v1674
      %v1865 = vpop.f32.mrb[0].mxu0
      %v1866 = vadd.f32 0.0, %v1865
      %v1867 = vpop.f32.mrb[0].mxu0
      %1868 = vmatprep.mubr.f32.mxu0 0.0
      %1869 = vmatmul.mubr.f32.gmra.mrb[0].mxu0 %v1675
      %v1870 = vpop.f32.mrb[0].mxu0
      %v1871 = vadd.f32 0.0, %v1870
      %v1872 = vpop.f32.mrb[0].mxu0
      %1873 = vmatprep.mubr.f32.mxu0 0.0
      %1874 = vmatmul.mubr.f32.gmra.mrb[0].mxu0 %v1676
      %v1875 = vpop.f32.mrb[0].mxu0
      %v1876 = vadd.f32 0.0, %v1875
      %v1877 = vpop.f32.mrb[0].mxu0
      %1878 = vmatprep.mubr.f32.mxu0 0.0
      %1879 = vmatmul.mubr.f32.gmra.mrb[0].mxu0 %v1677
      %v1880 = vpop.f32.mrb[0].mxu0
      %v1881 = vadd.f32 0.0, %v1880
      %v1882 = vpop.f32.mrb[0].mxu0
      %1883 = vmatprep.mubr.f32.mxu0 0.0
      %1884 = vmatmul.mubr.f32.gmra.mrb[0].mxu0 %v1678
      %v1885 = vpop.f32.mrb[0].mxu0
      %v1886 = vadd.f32 0.0, %v1885
      %v1887 = vpop.f32.mrb[0].mxu0
      %1888 = vmatprep.mubr.f32.mxu0 0.0
      %1889 = vmatmul.mubr.f32.gmra.mrb[0].mxu0 %v1679
      %v1890 = vpop.f32.mrb[0].mxu0
      %v1891 = vadd.f32 0.0, %v1890
      %v1892 = vpop.f32.mrb[0].mxu0
      %1893 = vmatprep.mubr.f32.mxu0 0.0
      %1894 = vmatmul.mubr.f32.gmra.mrb[0].mxu0 %v1680
      %v1895 = vpop.f32.mrb[0].mxu0
      %v1896 = vadd.f32 0.0, %v1895
      %v1897 = vpop.f32.mrb[0].mxu0
      %1898 = vmatprep.mubr.f32.mxu0 0.0
      %1899 = vmatmul.mubr.f32.gmra.mrb[0].mxu0 %v1681
      %v1900 = vpop.f32.mrb[0].mxu0
      %v1901 = vadd.f32 0.0, %v1900
      %v1902 = vpop.f32.mrb[0].mxu0
      %1903 = vmatprep.mubr.f32.mxu0 0.0
      %1904 = vmatmul.mubr.f32.gmra.mrb[0].mxu0 %v1682
      %v1905 = vpop.f32.mrb[0].mxu0
      %v1906 = vadd.f32 0.0, %v1905
      %v1907 = vpop.f32.mrb[0].mxu0
      %1908 = vmatprep.mubr.f32.mxu0 0.0
      %1909 = vmatmul.mubr.f32.gmra.mrb[0].mxu0 %v1683
      %v1910 = vpop.f32.mrb[0].mxu0
      %v1911 = vadd.f32 0.0, %v1910
      %v1912 = vpop.f32.mrb[0].mxu0
      %1913 = vmatprep.mubr.f32.mxu0 0.0
      %1914 = vmatmul.mubr.f32.gmra.mrb[0].mxu0 %v1684
      %v1915 = vpop.f32.mrb[0].mxu0
      %v1916 = vadd.f32 0.0, %v1915
      %v1917 = vpop.f32.mrb[0].mxu0
      %1918 = vmatprep.mubr.f32.mxu0 0.0
      %1919 = vmatmul.mubr.f32.gmra.mrb[0].mxu0 %v1685
      %v1920 = vpop.f32.mrb[0].mxu0
      %v1921 = vadd.f32 0.0, %v1920
      %v1922 = vpop.f32.mrb[0].mxu0
      %1923 = vmatprep.mubr.f32.mxu0 0.0
      %1924 = vmatmul.mubr.f32.gmra.mrb[0].mxu0 %v1686
      %v1925 = vpop.f32.mrb[0].mxu0
      %v1926 = vadd.f32 0.0, %v1925
      %v1927 = vpop.f32.mrb[0].mxu0
      %1928 = vdwg.mxu0
      %v1929 = vadd.f32 %v1623, %v1771
      %v1930 = vadd.f32 %v1624, %v1776
      %v1931 = vadd.f32 %v1625, %v1781
      %v1932 = vadd.f32 %v1626, %v1786
      %v1933 = vadd.f32 %v1627, %v1791
      %v1934 = vadd.f32 %v1628, %v1796
      %v1935 = vadd.f32 %v1629, %v1801
      %v1936 = vadd.f32 %v1630, %v1806
      %v1937 = vadd.f32 %v1631, %v1811
      %v1938 = vadd.f32 %v1632, %v1816
      %v1939 = vadd.f32 %v1633, %v1821
      %v1940 = vadd.f32 %v1634, %v1826
      %v1941 = vadd.f32 %v1635, %v1831
      %v1942 = vadd.f32 %v1636, %v1836
      %v1943 = vadd.f32 %v1637, %v1841
      %v1944 = vadd.f32 %v1638, %v1846
      %v1945 = vadd.f32 %v1639, %v1851
      %v1946 = vadd.f32 %v1640, %v1856
      %v1947 = vadd.f32 %v1641, %v1861
      %v1948 = vadd.f32 %v1642, %v1866
      %v1949 = vadd.f32 %v1643, %v1871
      %v1950 = vadd.f32 %v1644, %v1876
      %v1951 = vadd.f32 %v1645, %v1881
      %v1952 = vadd.f32 %v1646, %v1886
      %v1953 = vadd.f32 %v1647, %v1891
      %v1954 = vadd.f32 %v1648, %v1896
      %v1955 = vadd.f32 %v1649, %v1901
      %v1956 = vadd.f32 %v1650, %v1906
      %v1957 = vadd.f32 %v1651, %v1911
      %v1958 = vadd.f32 %v1652, %v1916
      %v1959 = vadd.f32 %v1653, %v1921
      %v1960 = vadd.f32 %v1654, %v1926
      %v1961 = vld [vmem:[%s463 + $0x2] sm:$0xff]
      %v1962 = vld [vmem:[%s463 + $0xa] sm:$0xff]
      %v1963 = vld [vmem:[%s463 + $0x1a] sm:$0xff]
      %v1964 = vld [vmem:[%s463 + $0x22] sm:$0xff]
      %v1965 = vld [vmem:[%s463 + $0x32] sm:$0xff]
      %v1966 = vld [vmem:[%s463 + $0x3a] sm:$0xff]
      %v1967 = vld [vmem:[%s463 + $0x4a] sm:$0xff]
      %v1968 = vld [vmem:[%s463 + $0x52] sm:$0xff]
      %v1969 = vld [vmem:[%s463 + $0x62] sm:$0xff]
      %v1970 = vld [vmem:[%s463 + $0x6a] sm:$0xff]
      %v1971 = vld [vmem:[%s463 + $0x7a] sm:$0xff]
      %v1972 = vld [vmem:[%s463 + $0x82] sm:$0xff]
      %v1973 = vld [vmem:[%s463 + $0x92] sm:$0xff]
      %v1974 = vld [vmem:[%s463 + $0x9a] sm:$0xff]
      %v1975 = vld [vmem:[%s463 + $0xaa] sm:$0xff]
      %v1976 = vld [vmem:[%s463 + $0xb2] sm:$0xff]
      %v1977 = vld [vmem:[%s463 + $0xc2] sm:$0xff]
      %v1978 = vld [vmem:[%s463 + $0xca] sm:$0xff]
      %v1979 = vld [vmem:[%s463 + $0xda] sm:$0xff]
      %v1980 = vld [vmem:[%s463 + $0xe2] sm:$0xff]
      %v1981 = vld [vmem:[%s463 + $0xf2] sm:$0xff]
      %v1982 = vld [vmem:[%s463 + $0xfa] sm:$0xff]
      %v1983 = vld [vmem:[%s463 + $0x10a] sm:$0xff]
      %v1984 = vld [vmem:[%s463 + $0x112] sm:$0xff]
      %v1985 = vld [vmem:[%s463 + $0x122] sm:$0xff]
      %v1986 = vld [vmem:[%s463 + $0x12a] sm:$0xff]
      %v1987 = vld [vmem:[%s463 + $0x13a] sm:$0xff]
      %v1988 = vld [vmem:[%s463 + $0x142] sm:$0xff]
      %v1989 = vld [vmem:[%s463 + $0x152] sm:$0xff]
      %v1990 = vld [vmem:[%s463 + $0x15a] sm:$0xff]
      %v1991 = vld [vmem:[%s463 + $0x16a] sm:$0xff]
      %v1992 = vld [vmem:[%s463 + $0x172] sm:$0xff]
      %s1993 = scalar_lea.vmem %s3, 640
      %v1994 = vld [vmem:[%s1993] sm:$0xff]
      %v1995 = vld [vmem:[%s1993 + $0x8] sm:$0xff]
      %v1996 = vld [vmem:[%s1993 + $0x10] sm:$0xff]
      %v1997 = vld [vmem:[%s1993 + $0x18] sm:$0xff]
      %v1998 = vld [vmem:[%s1993 + $0x20] sm:$0xff]
      %v1999 = vld [vmem:[%s1993 + $0x28] sm:$0xff]
      %v2000 = vld [vmem:[%s1993 + $0x30] sm:$0xff]
      %v2001 = vld [vmem:[%s1993 + $0x38] sm:$0xff]
      %v2002 = vld [vmem:[%s1993 + $0x40] sm:$0xff]
      %v2003 = vld [vmem:[%s1993 + $0x48] sm:$0xff]
      %v2004 = vld [vmem:[%s1993 + $0x50] sm:$0xff]
      %v2005 = vld [vmem:[%s1993 + $0x58] sm:$0xff]
      %v2006 = vld [vmem:[%s1993 + $0x60] sm:$0xff]
      %v2007 = vld [vmem:[%s1993 + $0x68] sm:$0xff]
      %v2008 = vld [vmem:[%s1993 + $0x70] sm:$0xff]
      %v2009 = vld [vmem:[%s1993 + $0x78] sm:$0xff]
      %2010 = vmatprep.subr.mxu0 0.0
      %2011 = vmatpush1.msra.mxu0 %v1994
      %2012 = vmatprep.subr.mxu0 0.0
      %2013 = vmatpush1.msra.mxu0 %v1995
      %2014 = vmatprep.subr.mxu0 0.0
      %2015 = vmatpush1.msra.mxu0 %v1996
      %2016 = vmatprep.subr.mxu0 0.0
      %2017 = vmatpush1.msra.mxu0 %v1997
      %2018 = vmatprep.subr.mxu0 0.0
      %2019 = vmatpush1.msra.mxu0 %v1998
      %2020 = vmatprep.subr.mxu0 0.0
      %2021 = vmatpush1.msra.mxu0 %v1999
      %2022 = vmatprep.subr.mxu0 0.0
      %2023 = vmatpush1.msra.mxu0 %v2000
      %2024 = vmatprep.subr.mxu0 0.0
      %2025 = vmatpush1.msra.mxu0 %v2001
      %2026 = vmatprep.subr.mxu0 0.0
      %2027 = vmatpush1.msra.mxu0 %v2002
      %2028 = vmatprep.subr.mxu0 0.0
      %2029 = vmatpush1.msra.mxu0 %v2003
      %2030 = vmatprep.subr.mxu0 0.0
      %2031 = vmatpush1.msra.mxu0 %v2004
      %2032 = vmatprep.subr.mxu0 0.0
      %2033 = vmatpush1.msra.mxu0 %v2005
      %2034 = vmatprep.subr.mxu0 0.0
      %2035 = vmatpush1.msra.mxu0 %v2006
      %2036 = vmatprep.subr.mxu0 0.0
      %2037 = vmatpush1.msra.mxu0 %v2007
      %2038 = vmatprep.subr.mxu0 0.0
      %2039 = vmatpush1.msra.mxu0 %v2008
      %2040 = vmatprep.subr.mxu0 0.0
      %2041 = vmatpush1.msra.mxu0 %v2009
      %2042 = vmatprep.subr.mxu0 0.0
      %2043 = vmatpush1.msra.mxu0 0.0
      %2044 = vmatprep.subr.mxu0 0.0
      %2045 = vmatpush1.msra.mxu0 0.0
      %2046 = vmatprep.subr.mxu0 0.0
      %2047 = vmatpush1.msra.mxu0 0.0
      %2048 = vmatprep.subr.mxu0 0.0
      %2049 = vmatpush1.msra.mxu0 0.0
      %2050 = vmatprep.subr.mxu0 0.0
      %2051 = vmatpush1.msra.mxu0 0.0
      %2052 = vmatprep.subr.mxu0 0.0
      %2053 = vmatpush1.msra.mxu0 0.0
      %2054 = vmatprep.subr.mxu0 0.0
      %2055 = vmatpush1.msra.mxu0 0.0
      %2056 = vmatprep.subr.mxu0 0.0
      %2057 = vmatpush1.msra.mxu0 0.0
      %2058 = vmatprep.subr.mxu0 0.0
      %2059 = vmatpush1.msra.mxu0 0.0
      %2060 = vmatprep.subr.mxu0 0.0
      %2061 = vmatpush1.msra.mxu0 0.0
      %2062 = vmatprep.subr.mxu0 0.0
      %2063 = vmatpush1.msra.mxu0 0.0
      %2064 = vmatprep.subr.mxu0 0.0
      %2065 = vmatpush1.msra.mxu0 0.0
      %2066 = vmatprep.subr.mxu0 0.0
      %2067 = vmatpush1.msra.mxu0 0.0
      %2068 = vmatprep.subr.mxu0 0.0
      %2069 = vmatpush1.msra.mxu0 0.0
      %2070 = vmatprep.subr.mxu0 0.0
      %2071 = vmatpush1.msra.mxu0 0.0
      %2072 = vmatprep.subr.mxu0 0.0
      %2073 = vmatpush1.msra.mxu0 0.0
      %2074 = vmatprep.mubr.f32.mxu0 0.0
      %2075 = vmatmul.mubr.f32.gmra.mrb[0].mxu0 %v1961
      %v2076 = vpop.f32.mrb[0].mxu0
      %v2077 = vadd.f32 0.0, %v2076
      %v2078 = vpop.f32.mrb[0].mxu0
      %2079 = vmatprep.mubr.f32.mxu0 0.0
      %2080 = vmatmul.mubr.f32.gmra.mrb[0].mxu0 %v1962
      %v2081 = vpop.f32.mrb[0].mxu0
      %v2082 = vadd.f32 0.0, %v2081
      %v2083 = vpop.f32.mrb[0].mxu0
      %2084 = vmatprep.mubr.f32.mxu0 0.0
      %2085 = vmatmul.mubr.f32.gmra.mrb[0].mxu0 %v1963
      %v2086 = vpop.f32.mrb[0].mxu0
      %v2087 = vadd.f32 0.0, %v2086
      %v2088 = vpop.f32.mrb[0].mxu0
      %2089 = vmatprep.mubr.f32.mxu0 0.0
      %2090 = vmatmul.mubr.f32.gmra.mrb[0].mxu0 %v1964
      %v2091 = vpop.f32.mrb[0].mxu0
      %v2092 = vadd.f32 0.0, %v2091
      %v2093 = vpop.f32.mrb[0].mxu0
      %2094 = vmatprep.mubr.f32.mxu0 0.0
      %2095 = vmatmul.mubr.f32.gmra.mrb[0].mxu0 %v1965
      %v2096 = vpop.f32.mrb[0].mxu0
      %v2097 = vadd.f32 0.0, %v2096
      %v2098 = vpop.f32.mrb[0].mxu0
      %2099 = vmatprep.mubr.f32.mxu0 0.0
      %2100 = vmatmul.mubr.f32.gmra.mrb[0].mxu0 %v1966
      %v2101 = vpop.f32.mrb[0].mxu0
      %v2102 = vadd.f32 0.0, %v2101
      %v2103 = vpop.f32.mrb[0].mxu0
      %2104 = vmatprep.mubr.f32.mxu0 0.0
      %2105 = vmatmul.mubr.f32.gmra.mrb[0].mxu0 %v1967
      %v2106 = vpop.f32.mrb[0].mxu0
      %v2107 = vadd.f32 0.0, %v2106
      %v2108 = vpop.f32.mrb[0].mxu0
      %2109 = vmatprep.mubr.f32.mxu0 0.0
      %2110 = vmatmul.mubr.f32.gmra.mrb[0].mxu0 %v1968
      %v2111 = vpop.f32.mrb[0].mxu0
      %v2112 = vadd.f32 0.0, %v2111
      %v2113 = vpop.f32.mrb[0].mxu0
      %2114 = vmatprep.mubr.f32.mxu0 0.0
      %2115 = vmatmul.mubr.f32.gmra.mrb[0].mxu0 %v1969
      %v2116 = vpop.f32.mrb[0].mxu0
      %v2117 = vadd.f32 0.0, %v2116
      %v2118 = vpop.f32.mrb[0].mxu0
      %2119 = vmatprep.mubr.f32.mxu0 0.0
      %2120 = vmatmul.mubr.f32.gmra.mrb[0].mxu0 %v1970
      %v2121 = vpop.f32.mrb[0].mxu0
      %v2122 = vadd.f32 0.0, %v2121
      %v2123 = vpop.f32.mrb[0].mxu0
      %2124 = vmatprep.mubr.f32.mxu0 0.0
      %2125 = vmatmul.mubr.f32.gmra.mrb[0].mxu0 %v1971
      %v2126 = vpop.f32.mrb[0].mxu0
      %v2127 = vadd.f32 0.0, %v2126
      %v2128 = vpop.f32.mrb[0].mxu0
      %2129 = vmatprep.mubr.f32.mxu0 0.0
      %2130 = vmatmul.mubr.f32.gmra.mrb[0].mxu0 %v1972
      %v2131 = vpop.f32.mrb[0].mxu0
      %v2132 = vadd.f32 0.0, %v2131
      %v2133 = vpop.f32.mrb[0].mxu0
      %2134 = vmatprep.mubr.f32.mxu0 0.0
      %2135 = vmatmul.mubr.f32.gmra.mrb[0].mxu0 %v1973
      %v2136 = vpop.f32.mrb[0].mxu0
      %v2137 = vadd.f32 0.0, %v2136
      %v2138 = vpop.f32.mrb[0].mxu0
      %2139 = vmatprep.mubr.f32.mxu0 0.0
      %2140 = vmatmul.mubr.f32.gmra.mrb[0].mxu0 %v1974
      %v2141 = vpop.f32.mrb[0].mxu0
      %v2142 = vadd.f32 0.0, %v2141
      %v2143 = vpop.f32.mrb[0].mxu0
      %2144 = vmatprep.mubr.f32.mxu0 0.0
      %2145 = vmatmul.mubr.f32.gmra.mrb[0].mxu0 %v1975
      %v2146 = vpop.f32.mrb[0].mxu0
      %v2147 = vadd.f32 0.0, %v2146
      %v2148 = vpop.f32.mrb[0].mxu0
      %2149 = vmatprep.mubr.f32.mxu0 0.0
      %2150 = vmatmul.mubr.f32.gmra.mrb[0].mxu0 %v1976
      %v2151 = vpop.f32.mrb[0].mxu0
      %v2152 = vadd.f32 0.0, %v2151
      %v2153 = vpop.f32.mrb[0].mxu0
      %2154 = vmatprep.mubr.f32.mxu0 0.0
      %2155 = vmatmul.mubr.f32.gmra.mrb[0].mxu0 %v1977
      %v2156 = vpop.f32.mrb[0].mxu0
      %v2157 = vadd.f32 0.0, %v2156
      %v2158 = vpop.f32.mrb[0].mxu0
      %2159 = vmatprep.mubr.f32.mxu0 0.0
      %2160 = vmatmul.mubr.f32.gmra.mrb[0].mxu0 %v1978
      %v2161 = vpop.f32.mrb[0].mxu0
      %v2162 = vadd.f32 0.0, %v2161
      %v2163 = vpop.f32.mrb[0].mxu0
      %2164 = vmatprep.mubr.f32.mxu0 0.0
      %2165 = vmatmul.mubr.f32.gmra.mrb[0].mxu0 %v1979
      %v2166 = vpop.f32.mrb[0].mxu0
      %v2167 = vadd.f32 0.0, %v2166
      %v2168 = vpop.f32.mrb[0].mxu0
      %2169 = vmatprep.mubr.f32.mxu0 0.0
      %2170 = vmatmul.mubr.f32.gmra.mrb[0].mxu0 %v1980
      %v2171 = vpop.f32.mrb[0].mxu0
      %v2172 = vadd.f32 0.0, %v2171
      %v2173 = vpop.f32.mrb[0].mxu0
      %2174 = vmatprep.mubr.f32.mxu0 0.0
      %2175 = vmatmul.mubr.f32.gmra.mrb[0].mxu0 %v1981
      %v2176 = vpop.f32.mrb[0].mxu0
      %v2177 = vadd.f32 0.0, %v2176
      %v2178 = vpop.f32.mrb[0].mxu0
      %2179 = vmatprep.mubr.f32.mxu0 0.0
      %2180 = vmatmul.mubr.f32.gmra.mrb[0].mxu0 %v1982
      %v2181 = vpop.f32.mrb[0].mxu0
      %v2182 = vadd.f32 0.0, %v2181
      %v2183 = vpop.f32.mrb[0].mxu0
      %2184 = vmatprep.mubr.f32.mxu0 0.0
      %2185 = vmatmul.mubr.f32.gmra.mrb[0].mxu0 %v1983
      %v2186 = vpop.f32.mrb[0].mxu0
      %v2187 = vadd.f32 0.0, %v2186
      %v2188 = vpop.f32.mrb[0].mxu0
      %2189 = vmatprep.mubr.f32.mxu0 0.0
      %2190 = vmatmul.mubr.f32.gmra.mrb[0].mxu0 %v1984
      %v2191 = vpop.f32.mrb[0].mxu0
      %v2192 = vadd.f32 0.0, %v2191
      %v2193 = vpop.f32.mrb[0].mxu0
      %2194 = vmatprep.mubr.f32.mxu0 0.0
      %2195 = vmatmul.mubr.f32.gmra.mrb[0].mxu0 %v1985
      %v2196 = vpop.f32.mrb[0].mxu0
      %v2197 = vadd.f32 0.0, %v2196
      %v2198 = vpop.f32.mrb[0].mxu0
      %2199 = vmatprep.mubr.f32.mxu0 0.0
      %2200 = vmatmul.mubr.f32.gmra.mrb[0].mxu0 %v1986
      %v2201 = vpop.f32.mrb[0].mxu0
      %v2202 = vadd.f32 0.0, %v2201
      %v2203 = vpop.f32.mrb[0].mxu0
      %2204 = vmatprep.mubr.f32.mxu0 0.0
      %2205 = vmatmul.mubr.f32.gmra.mrb[0].mxu0 %v1987
      %v2206 = vpop.f32.mrb[0].mxu0
      %v2207 = vadd.f32 0.0, %v2206
      %v2208 = vpop.f32.mrb[0].mxu0
      %2209 = vmatprep.mubr.f32.mxu0 0.0
      %2210 = vmatmul.mubr.f32.gmra.mrb[0].mxu0 %v1988
      %v2211 = vpop.f32.mrb[0].mxu0
      %v2212 = vadd.f32 0.0, %v2211
      %v2213 = vpop.f32.mrb[0].mxu0
      %2214 = vmatprep.mubr.f32.mxu0 0.0
      %2215 = vmatmul.mubr.f32.gmra.mrb[0].mxu0 %v1989
      %v2216 = vpop.f32.mrb[0].mxu0
      %v2217 = vadd.f32 0.0, %v2216
      %v2218 = vpop.f32.mrb[0].mxu0
      %2219 = vmatprep.mubr.f32.mxu0 0.0
      %2220 = vmatmul.mubr.f32.gmra.mrb[0].mxu0 %v1990
      %v2221 = vpop.f32.mrb[0].mxu0
      %v2222 = vadd.f32 0.0, %v2221
      %v2223 = vpop.f32.mrb[0].mxu0
      %2224 = vmatprep.mubr.f32.mxu0 0.0
      %2225 = vmatmul.mubr.f32.gmra.mrb[0].mxu0 %v1991
      %v2226 = vpop.f32.mrb[0].mxu0
      %v2227 = vadd.f32 0.0, %v2226
      %v2228 = vpop.f32.mrb[0].mxu0
      %2229 = vmatprep.mubr.f32.mxu0 0.0
      %2230 = vmatmul.mubr.f32.gmra.mrb[0].mxu0 %v1992
      %v2231 = vpop.f32.mrb[0].mxu0
      %v2232 = vadd.f32 0.0, %v2231
      %v2233 = vpop.f32.mrb[0].mxu0
      %2234 = vdwg.mxu0
      %v2235 = vadd.f32 %v1929, %v2077
      %v2236 = vadd.f32 %v1930, %v2082
      %v2237 = vadd.f32 %v1931, %v2087
      %v2238 = vadd.f32 %v1932, %v2092
      %v2239 = vadd.f32 %v1933, %v2097
      %v2240 = vadd.f32 %v1934, %v2102
      %v2241 = vadd.f32 %v1935, %v2107
      %v2242 = vadd.f32 %v1936, %v2112
      %v2243 = vadd.f32 %v1937, %v2117
      %v2244 = vadd.f32 %v1938, %v2122
      %v2245 = vadd.f32 %v1939, %v2127
      %v2246 = vadd.f32 %v1940, %v2132
      %v2247 = vadd.f32 %v1941, %v2137
      %v2248 = vadd.f32 %v1942, %v2142
      %v2249 = vadd.f32 %v1943, %v2147
      %v2250 = vadd.f32 %v1944, %v2152
      %v2251 = vadd.f32 %v1945, %v2157
      %v2252 = vadd.f32 %v1946, %v2162
      %v2253 = vadd.f32 %v1947, %v2167
      %v2254 = vadd.f32 %v1948, %v2172
      %v2255 = vadd.f32 %v1949, %v2177
      %v2256 = vadd.f32 %v1950, %v2182
      %v2257 = vadd.f32 %v1951, %v2187
      %v2258 = vadd.f32 %v1952, %v2192
      %v2259 = vadd.f32 %v1953, %v2197
      %v2260 = vadd.f32 %v1954, %v2202
      %v2261 = vadd.f32 %v1955, %v2207
      %v2262 = vadd.f32 %v1956, %v2212
      %v2263 = vadd.f32 %v1957, %v2217
      %v2264 = vadd.f32 %v1958, %v2222
      %v2265 = vadd.f32 %v1959, %v2227
      %v2266 = vadd.f32 %v1960, %v2232
      %s2267 = scalar_lea.vmem [#allocation2], 48
      %v2268 = vld [vmem:[%s2267] sm:$0xff]
      %v2269 = vld [vmem:[%s2267 + $0x8] sm:$0xff]
      %v2270 = vld [vmem:[%s2267 + $0x18] sm:$0xff]
      %v2271 = vld [vmem:[%s2267 + $0x20] sm:$0xff]
      %v2272 = vld [vmem:[%s2267 + $0x30] sm:$0xff]
      %v2273 = vld [vmem:[%s2267 + $0x38] sm:$0xff]
      %v2274 = vld [vmem:[%s2267 + $0x48] sm:$0xff]
      %v2275 = vld [vmem:[%s2267 + $0x50] sm:$0xff]
      %v2276 = vld [vmem:[%s2267 + $0x60] sm:$0xff]
      %v2277 = vld [vmem:[%s2267 + $0x68] sm:$0xff]
      %v2278 = vld [vmem:[%s2267 + $0x78] sm:$0xff]
      %v2279 = vld [vmem:[%s2267 + $0x80] sm:$0xff]
      %v2280 = vld [vmem:[%s2267 + $0x90] sm:$0xff]
      %v2281 = vld [vmem:[%s2267 + $0x98] sm:$0xff]
      %v2282 = vld [vmem:[%s2267 + $0xa8] sm:$0xff]
      %v2283 = vld [vmem:[%s2267 + $0xb0] sm:$0xff]
      %v2284 = vld [vmem:[%s2267 + $0xc0] sm:$0xff]
      %v2285 = vld [vmem:[%s2267 + $0xc8] sm:$0xff]
      %v2286 = vld [vmem:[%s2267 + $0xd8] sm:$0xff]
      %v2287 = vld [vmem:[%s2267 + $0xe0] sm:$0xff]
      %v2288 = vld [vmem:[%s2267 + $0xf0] sm:$0xff]
      %v2289 = vld [vmem:[%s2267 + $0xf8] sm:$0xff]
      %v2290 = vld [vmem:[%s2267 + $0x108] sm:$0xff]
      %v2291 = vld [vmem:[%s2267 + $0x110] sm:$0xff]
      %v2292 = vld [vmem:[%s2267 + $0x120] sm:$0xff]
      %v2293 = vld [vmem:[%s2267 + $0x128] sm:$0xff]
      %v2294 = vld [vmem:[%s2267 + $0x138] sm:$0xff]
      %v2295 = vld [vmem:[%s2267 + $0x140] sm:$0xff]
      %v2296 = vld [vmem:[%s2267 + $0x150] sm:$0xff]
      %v2297 = vld [vmem:[%s2267 + $0x158] sm:$0xff]
      %v2298 = vld [vmem:[%s2267 + $0x168] sm:$0xff]
      %v2299 = vld [vmem:[%s2267 + $0x170] sm:$0xff]
      %s2300 = scalar_lea.vmem %s3, 768
      %v2301 = vld [vmem:[%s2300] sm:$0xff]
      %v2302 = vld [vmem:[%s2300 + $0x8] sm:$0xff]
      %v2303 = vld [vmem:[%s2300 + $0x10] sm:$0xff]
      %v2304 = vld [vmem:[%s2300 + $0x18] sm:$0xff]
      %v2305 = vld [vmem:[%s2300 + $0x20] sm:$0xff]
      %v2306 = vld [vmem:[%s2300 + $0x28] sm:$0xff]
      %v2307 = vld [vmem:[%s2300 + $0x30] sm:$0xff]
      %v2308 = vld [vmem:[%s2300 + $0x38] sm:$0xff]
      %v2309 = vld [vmem:[%s2300 + $0x40] sm:$0xff]
      %v2310 = vld [vmem:[%s2300 + $0x48] sm:$0xff]
      %v2311 = vld [vmem:[%s2300 + $0x50] sm:$0xff]
      %v2312 = vld [vmem:[%s2300 + $0x58] sm:$0xff]
      %v2313 = vld [vmem:[%s2300 + $0x60] sm:$0xff]
      %v2314 = vld [vmem:[%s2300 + $0x68] sm:$0xff]
      %v2315 = vld [vmem:[%s2300 + $0x70] sm:$0xff]
      %v2316 = vld [vmem:[%s2300 + $0x78] sm:$0xff]
      %2317 = vmatprep.subr.mxu0 0.0
      %2318 = vmatpush1.msra.mxu0 %v2301
      %2319 = vmatprep.subr.mxu0 0.0
      %2320 = vmatpush1.msra.mxu0 %v2302
      %2321 = vmatprep.subr.mxu0 0.0
      %2322 = vmatpush1.msra.mxu0 %v2303
      %2323 = vmatprep.subr.mxu0 0.0
      %2324 = vmatpush1.msra.mxu0 %v2304
      %2325 = vmatprep.subr.mxu0 0.0
      %2326 = vmatpush1.msra.mxu0 %v2305
      %2327 = vmatprep.subr.mxu0 0.0
      %2328 = vmatpush1.msra.mxu0 %v2306
      %2329 = vmatprep.subr.mxu0 0.0
      %2330 = vmatpush1.msra.mxu0 %v2307
      %2331 = vmatprep.subr.mxu0 0.0
      %2332 = vmatpush1.msra.mxu0 %v2308
      %2333 = vmatprep.subr.mxu0 0.0
      %2334 = vmatpush1.msra.mxu0 %v2309
      %2335 = vmatprep.subr.mxu0 0.0
      %2336 = vmatpush1.msra.mxu0 %v2310
      %2337 = vmatprep.subr.mxu0 0.0
      %2338 = vmatpush1.msra.mxu0 %v2311
      %2339 = vmatprep.subr.mxu0 0.0
      %2340 = vmatpush1.msra.mxu0 %v2312
      %2341 = vmatprep.subr.mxu0 0.0
      %2342 = vmatpush1.msra.mxu0 %v2313
      %2343 = vmatprep.subr.mxu0 0.0
      %2344 = vmatpush1.msra.mxu0 %v2314
      %2345 = vmatprep.subr.mxu0 0.0
      %2346 = vmatpush1.msra.mxu0 %v2315
      %2347 = vmatprep.subr.mxu0 0.0
      %2348 = vmatpush1.msra.mxu0 %v2316
      %2349 = vmatprep.subr.mxu0 0.0
      %2350 = vmatpush1.msra.mxu0 0.0
      %2351 = vmatprep.subr.mxu0 0.0
      %2352 = vmatpush1.msra.mxu0 0.0
      %2353 = vmatprep.subr.mxu0 0.0
      %2354 = vmatpush1.msra.mxu0 0.0
      %2355 = vmatprep.subr.mxu0 0.0
      %2356 = vmatpush1.msra.mxu0 0.0
      %2357 = vmatprep.subr.mxu0 0.0
      %2358 = vmatpush1.msra.mxu0 0.0
      %2359 = vmatprep.subr.mxu0 0.0
      %2360 = vmatpush1.msra.mxu0 0.0
      %2361 = vmatprep.subr.mxu0 0.0
      %2362 = vmatpush1.msra.mxu0 0.0
      %2363 = vmatprep.subr.mxu0 0.0
      %2364 = vmatpush1.msra.mxu0 0.0
      %2365 = vmatprep.subr.mxu0 0.0
      %2366 = vmatpush1.msra.mxu0 0.0
      %2367 = vmatprep.subr.mxu0 0.0
      %2368 = vmatpush1.msra.mxu0 0.0
      %2369 = vmatprep.subr.mxu0 0.0
      %2370 = vmatpush1.msra.mxu0 0.0
      %2371 = vmatprep.subr.mxu0 0.0
      %2372 = vmatpush1.msra.mxu0 0.0
      %2373 = vmatprep.subr.mxu0 0.0
      %2374 = vmatpush1.msra.mxu0 0.0
      %2375 = vmatprep.subr.mxu0 0.0
      %2376 = vmatpush1.msra.mxu0 0.0
      %2377 = vmatprep.subr.mxu0 0.0
      %2378 = vmatpush1.msra.mxu0 0.0
      %2379 = vmatprep.subr.mxu0 0.0
      %2380 = vmatpush1.msra.mxu0 0.0
      %2381 = vmatprep.mubr.f32.mxu0 0.0
      %2382 = vmatmul.mubr.f32.gmra.mrb[0].mxu0 %v2268
      %v2383 = vpop.f32.mrb[0].mxu0
      %v2384 = vadd.f32 0.0, %v2383
      %v2385 = vpop.f32.mrb[0].mxu0
      %2386 = vmatprep.mubr.f32.mxu0 0.0
      %2387 = vmatmul.mubr.f32.gmra.mrb[0].mxu0 %v2269
      %v2388 = vpop.f32.mrb[0].mxu0
      %v2389 = vadd.f32 0.0, %v2388
      %v2390 = vpop.f32.mrb[0].mxu0
      %2391 = vmatprep.mubr.f32.mxu0 0.0
      %2392 = vmatmul.mubr.f32.gmra.mrb[0].mxu0 %v2270
      %v2393 = vpop.f32.mrb[0].mxu0
      %v2394 = vadd.f32 0.0, %v2393
      %v2395 = vpop.f32.mrb[0].mxu0
      %2396 = vmatprep.mubr.f32.mxu0 0.0
      %2397 = vmatmul.mubr.f32.gmra.mrb[0].mxu0 %v2271
      %v2398 = vpop.f32.mrb[0].mxu0
      %v2399 = vadd.f32 0.0, %v2398
      %v2400 = vpop.f32.mrb[0].mxu0
      %2401 = vmatprep.mubr.f32.mxu0 0.0
      %2402 = vmatmul.mubr.f32.gmra.mrb[0].mxu0 %v2272
      %v2403 = vpop.f32.mrb[0].mxu0
      %v2404 = vadd.f32 0.0, %v2403
      %v2405 = vpop.f32.mrb[0].mxu0
      %2406 = vmatprep.mubr.f32.mxu0 0.0
      %2407 = vmatmul.mubr.f32.gmra.mrb[0].mxu0 %v2273
      %v2408 = vpop.f32.mrb[0].mxu0
      %v2409 = vadd.f32 0.0, %v2408
      %v2410 = vpop.f32.mrb[0].mxu0
      %2411 = vmatprep.mubr.f32.mxu0 0.0
      %2412 = vmatmul.mubr.f32.gmra.mrb[0].mxu0 %v2274
      %v2413 = vpop.f32.mrb[0].mxu0
      %v2414 = vadd.f32 0.0, %v2413
      %v2415 = vpop.f32.mrb[0].mxu0
      %2416 = vmatprep.mubr.f32.mxu0 0.0
      %2417 = vmatmul.mubr.f32.gmra.mrb[0].mxu0 %v2275
      %v2418 = vpop.f32.mrb[0].mxu0
      %v2419 = vadd.f32 0.0, %v2418
      %v2420 = vpop.f32.mrb[0].mxu0
      %2421 = vmatprep.mubr.f32.mxu0 0.0
      %2422 = vmatmul.mubr.f32.gmra.mrb[0].mxu0 %v2276
      %v2423 = vpop.f32.mrb[0].mxu0
      %v2424 = vadd.f32 0.0, %v2423
      %v2425 = vpop.f32.mrb[0].mxu0
      %2426 = vmatprep.mubr.f32.mxu0 0.0
      %2427 = vmatmul.mubr.f32.gmra.mrb[0].mxu0 %v2277
      %v2428 = vpop.f32.mrb[0].mxu0
      %v2429 = vadd.f32 0.0, %v2428
      %v2430 = vpop.f32.mrb[0].mxu0
      %2431 = vmatprep.mubr.f32.mxu0 0.0
      %2432 = vmatmul.mubr.f32.gmra.mrb[0].mxu0 %v2278
      %v2433 = vpop.f32.mrb[0].mxu0
      %v2434 = vadd.f32 0.0, %v2433
      %v2435 = vpop.f32.mrb[0].mxu0
      %2436 = vmatprep.mubr.f32.mxu0 0.0
      %2437 = vmatmul.mubr.f32.gmra.mrb[0].mxu0 %v2279
      %v2438 = vpop.f32.mrb[0].mxu0
      %v2439 = vadd.f32 0.0, %v2438
      %v2440 = vpop.f32.mrb[0].mxu0
      %2441 = vmatprep.mubr.f32.mxu0 0.0
      %2442 = vmatmul.mubr.f32.gmra.mrb[0].mxu0 %v2280
      %v2443 = vpop.f32.mrb[0].mxu0
      %v2444 = vadd.f32 0.0, %v2443
      %v2445 = vpop.f32.mrb[0].mxu0
      %2446 = vmatprep.mubr.f32.mxu0 0.0
      %2447 = vmatmul.mubr.f32.gmra.mrb[0].mxu0 %v2281
      %v2448 = vpop.f32.mrb[0].mxu0
      %v2449 = vadd.f32 0.0, %v2448
      %v2450 = vpop.f32.mrb[0].mxu0
      %2451 = vmatprep.mubr.f32.mxu0 0.0
      %2452 = vmatmul.mubr.f32.gmra.mrb[0].mxu0 %v2282
      %v2453 = vpop.f32.mrb[0].mxu0
      %v2454 = vadd.f32 0.0, %v2453
      %v2455 = vpop.f32.mrb[0].mxu0
      %2456 = vmatprep.mubr.f32.mxu0 0.0
      %2457 = vmatmul.mubr.f32.gmra.mrb[0].mxu0 %v2283
      %v2458 = vpop.f32.mrb[0].mxu0
      %v2459 = vadd.f32 0.0, %v2458
      %v2460 = vpop.f32.mrb[0].mxu0
      %2461 = vmatprep.mubr.f32.mxu0 0.0
      %2462 = vmatmul.mubr.f32.gmra.mrb[0].mxu0 %v2284
      %v2463 = vpop.f32.mrb[0].mxu0
      %v2464 = vadd.f32 0.0, %v2463
      %v2465 = vpop.f32.mrb[0].mxu0
      %2466 = vmatprep.mubr.f32.mxu0 0.0
      %2467 = vmatmul.mubr.f32.gmra.mrb[0].mxu0 %v2285
      %v2468 = vpop.f32.mrb[0].mxu0
      %v2469 = vadd.f32 0.0, %v2468
      %v2470 = vpop.f32.mrb[0].mxu0
      %2471 = vmatprep.mubr.f32.mxu0 0.0
      %2472 = vmatmul.mubr.f32.gmra.mrb[0].mxu0 %v2286
      %v2473 = vpop.f32.mrb[0].mxu0
      %v2474 = vadd.f32 0.0, %v2473
      %v2475 = vpop.f32.mrb[0].mxu0
      %2476 = vmatprep.mubr.f32.mxu0 0.0
      %2477 = vmatmul.mubr.f32.gmra.mrb[0].mxu0 %v2287
      %v2478 = vpop.f32.mrb[0].mxu0
      %v2479 = vadd.f32 0.0, %v2478
      %v2480 = vpop.f32.mrb[0].mxu0
      %2481 = vmatprep.mubr.f32.mxu0 0.0
      %2482 = vmatmul.mubr.f32.gmra.mrb[0].mxu0 %v2288
      %v2483 = vpop.f32.mrb[0].mxu0
      %v2484 = vadd.f32 0.0, %v2483
      %v2485 = vpop.f32.mrb[0].mxu0
      %2486 = vmatprep.mubr.f32.mxu0 0.0
      %2487 = vmatmul.mubr.f32.gmra.mrb[0].mxu0 %v2289
      %v2488 = vpop.f32.mrb[0].mxu0
      %v2489 = vadd.f32 0.0, %v2488
      %v2490 = vpop.f32.mrb[0].mxu0
      %2491 = vmatprep.mubr.f32.mxu0 0.0
      %2492 = vmatmul.mubr.f32.gmra.mrb[0].mxu0 %v2290
      %v2493 = vpop.f32.mrb[0].mxu0
      %v2494 = vadd.f32 0.0, %v2493
      %v2495 = vpop.f32.mrb[0].mxu0
      %2496 = vmatprep.mubr.f32.mxu0 0.0
      %2497 = vmatmul.mubr.f32.gmra.mrb[0].mxu0 %v2291
      %v2498 = vpop.f32.mrb[0].mxu0
      %v2499 = vadd.f32 0.0, %v2498
      %v2500 = vpop.f32.mrb[0].mxu0
      %2501 = vmatprep.mubr.f32.mxu0 0.0
      %2502 = vmatmul.mubr.f32.gmra.mrb[0].mxu0 %v2292
      %v2503 = vpop.f32.mrb[0].mxu0
      %v2504 = vadd.f32 0.0, %v2503
      %v2505 = vpop.f32.mrb[0].mxu0
      %2506 = vmatprep.mubr.f32.mxu0 0.0
      %2507 = vmatmul.mubr.f32.gmra.mrb[0].mxu0 %v2293
      %v2508 = vpop.f32.mrb[0].mxu0
      %v2509 = vadd.f32 0.0, %v2508
      %v2510 = vpop.f32.mrb[0].mxu0
      %2511 = vmatprep.mubr.f32.mxu0 0.0
      %2512 = vmatmul.mubr.f32.gmra.mrb[0].mxu0 %v2294
      %v2513 = vpop.f32.mrb[0].mxu0
      %v2514 = vadd.f32 0.0, %v2513
      %v2515 = vpop.f32.mrb[0].mxu0
      %2516 = vmatprep.mubr.f32.mxu0 0.0
      %2517 = vmatmul.mubr.f32.gmra.mrb[0].mxu0 %v2295
      %v2518 = vpop.f32.mrb[0].mxu0
      %v2519 = vadd.f32 0.0, %v2518
      %v2520 = vpop.f32.mrb[0].mxu0
      %2521 = vmatprep.mubr.f32.mxu0 0.0
      %2522 = vmatmul.mubr.f32.gmra.mrb[0].mxu0 %v2296
      %v2523 = vpop.f32.mrb[0].mxu0
      %v2524 = vadd.f32 0.0, %v2523
      %v2525 = vpop.f32.mrb[0].mxu0
      %2526 = vmatprep.mubr.f32.mxu0 0.0
      %2527 = vmatmul.mubr.f32.gmra.mrb[0].mxu0 %v2297
      %v2528 = vpop.f32.mrb[0].mxu0
      %v2529 = vadd.f32 0.0, %v2528
      %v2530 = vpop.f32.mrb[0].mxu0
      %2531 = vmatprep.mubr.f32.mxu0 0.0
      %2532 = vmatmul.mubr.f32.gmra.mrb[0].mxu0 %v2298
      %v2533 = vpop.f32.mrb[0].mxu0
      %v2534 = vadd.f32 0.0, %v2533
      %v2535 = vpop.f32.mrb[0].mxu0
      %2536 = vmatprep.mubr.f32.mxu0 0.0
      %2537 = vmatmul.mubr.f32.gmra.mrb[0].mxu0 %v2299
      %v2538 = vpop.f32.mrb[0].mxu0
      %v2539 = vadd.f32 0.0, %v2538
      %v2540 = vpop.f32.mrb[0].mxu0
      %2541 = vdwg.mxu0
      %v2542 = vadd.f32 %v2235, %v2384
      %v2543 = vadd.f32 %v2236, %v2389
      %v2544 = vadd.f32 %v2237, %v2394
      %v2545 = vadd.f32 %v2238, %v2399
      %v2546 = vadd.f32 %v2239, %v2404
      %v2547 = vadd.f32 %v2240, %v2409
      %v2548 = vadd.f32 %v2241, %v2414
      %v2549 = vadd.f32 %v2242, %v2419
      %v2550 = vadd.f32 %v2243, %v2424
      %v2551 = vadd.f32 %v2244, %v2429
      %v2552 = vadd.f32 %v2245, %v2434
      %v2553 = vadd.f32 %v2246, %v2439
      %v2554 = vadd.f32 %v2247, %v2444
      %v2555 = vadd.f32 %v2248, %v2449
      %v2556 = vadd.f32 %v2249, %v2454
      %v2557 = vadd.f32 %v2250, %v2459
      %v2558 = vadd.f32 %v2251, %v2464
      %v2559 = vadd.f32 %v2252, %v2469
      %v2560 = vadd.f32 %v2253, %v2474
      %v2561 = vadd.f32 %v2254, %v2479
      %v2562 = vadd.f32 %v2255, %v2484
      %v2563 = vadd.f32 %v2256, %v2489
      %v2564 = vadd.f32 %v2257, %v2494
      %v2565 = vadd.f32 %v2258, %v2499
      %v2566 = vadd.f32 %v2259, %v2504
      %v2567 = vadd.f32 %v2260, %v2509
      %v2568 = vadd.f32 %v2261, %v2514
      %v2569 = vadd.f32 %v2262, %v2519
      %v2570 = vadd.f32 %v2263, %v2524
      %v2571 = vadd.f32 %v2264, %v2529
      %v2572 = vadd.f32 %v2265, %v2534
      %v2573 = vadd.f32 %v2266, %v2539
      %v2574 = vld [vmem:[%s2267 + $0x1] sm:$0xff]
      %v2575 = vld [vmem:[%s2267 + $0x9] sm:$0xff]
      %v2576 = vld [vmem:[%s2267 + $0x19] sm:$0xff]
      %v2577 = vld [vmem:[%s2267 + $0x21] sm:$0xff]
      %v2578 = vld [vmem:[%s2267 + $0x31] sm:$0xff]
      %v2579 = vld [vmem:[%s2267 + $0x39] sm:$0xff]
      %v2580 = vld [vmem:[%s2267 + $0x49] sm:$0xff]
      %v2581 = vld [vmem:[%s2267 + $0x51] sm:$0xff]
      %v2582 = vld [vmem:[%s2267 + $0x61] sm:$0xff]
      %v2583 = vld [vmem:[%s2267 + $0x69] sm:$0xff]
      %v2584 = vld [vmem:[%s2267 + $0x79] sm:$0xff]
      %v2585 = vld [vmem:[%s2267 + $0x81] sm:$0xff]
      %v2586 = vld [vmem:[%s2267 + $0x91] sm:$0xff]
      %v2587 = vld [vmem:[%s2267 + $0x99] sm:$0xff]
      %v2588 = vld [vmem:[%s2267 + $0xa9] sm:$0xff]
      %v2589 = vld [vmem:[%s2267 + $0xb1] sm:$0xff]
      %v2590 = vld [vmem:[%s2267 + $0xc1] sm:$0xff]
      %v2591 = vld [vmem:[%s2267 + $0xc9] sm:$0xff]
      %v2592 = vld [vmem:[%s2267 + $0xd9] sm:$0xff]
      %v2593 = vld [vmem:[%s2267 + $0xe1] sm:$0xff]
      %v2594 = vld [vmem:[%s2267 + $0xf1] sm:$0xff]
      %v2595 = vld [vmem:[%s2267 + $0xf9] sm:$0xff]
      %v2596 = vld [vmem:[%s2267 + $0x109] sm:$0xff]
      %v2597 = vld [vmem:[%s2267 + $0x111] sm:$0xff]
      %v2598 = vld [vmem:[%s2267 + $0x121] sm:$0xff]
      %v2599 = vld [vmem:[%s2267 + $0x129] sm:$0xff]
      %v2600 = vld [vmem:[%s2267 + $0x139] sm:$0xff]
      %v2601 = vld [vmem:[%s2267 + $0x141] sm:$0xff]
      %v2602 = vld [vmem:[%s2267 + $0x151] sm:$0xff]
      %v2603 = vld [vmem:[%s2267 + $0x159] sm:$0xff]
      %v2604 = vld [vmem:[%s2267 + $0x169] sm:$0xff]
      %v2605 = vld [vmem:[%s2267 + $0x171] sm:$0xff]
      %s2606 = scalar_lea.vmem %s3, 896
      %v2607 = vld [vmem:[%s2606] sm:$0xff]
      %v2608 = vld [vmem:[%s2606 + $0x8] sm:$0xff]
      %v2609 = vld [vmem:[%s2606 + $0x10] sm:$0xff]
      %v2610 = vld [vmem:[%s2606 + $0x18] sm:$0xff]
      %v2611 = vld [vmem:[%s2606 + $0x20] sm:$0xff]
      %v2612 = vld [vmem:[%s2606 + $0x28] sm:$0xff]
      %v2613 = vld [vmem:[%s2606 + $0x30] sm:$0xff]
      %v2614 = vld [vmem:[%s2606 + $0x38] sm:$0xff]
      %v2615 = vld [vmem:[%s2606 + $0x40] sm:$0xff]
      %v2616 = vld [vmem:[%s2606 + $0x48] sm:$0xff]
      %v2617 = vld [vmem:[%s2606 + $0x50] sm:$0xff]
      %v2618 = vld [vmem:[%s2606 + $0x58] sm:$0xff]
      %v2619 = vld [vmem:[%s2606 + $0x60] sm:$0xff]
      %v2620 = vld [vmem:[%s2606 + $0x68] sm:$0xff]
      %v2621 = vld [vmem:[%s2606 + $0x70] sm:$0xff]
      %v2622 = vld [vmem:[%s2606 + $0x78] sm:$0xff]
      %2623 = vmatprep.subr.mxu0 0.0
      %2624 = vmatpush1.msra.mxu0 %v2607
      %2625 = vmatprep.subr.mxu0 0.0
      %2626 = vmatpush1.msra.mxu0 %v2608
      %2627 = vmatprep.subr.mxu0 0.0
      %2628 = vmatpush1.msra.mxu0 %v2609
      %2629 = vmatprep.subr.mxu0 0.0
      %2630 = vmatpush1.msra.mxu0 %v2610
      %2631 = vmatprep.subr.mxu0 0.0
      %2632 = vmatpush1.msra.mxu0 %v2611
      %2633 = vmatprep.subr.mxu0 0.0
      %2634 = vmatpush1.msra.mxu0 %v2612
      %2635 = vmatprep.subr.mxu0 0.0
      %2636 = vmatpush1.msra.mxu0 %v2613
      %2637 = vmatprep.subr.mxu0 0.0
      %2638 = vmatpush1.msra.mxu0 %v2614
      %2639 = vmatprep.subr.mxu0 0.0
      %2640 = vmatpush1.msra.mxu0 %v2615
      %2641 = vmatprep.subr.mxu0 0.0
      %2642 = vmatpush1.msra.mxu0 %v2616
      %2643 = vmatprep.subr.mxu0 0.0
      %2644 = vmatpush1.msra.mxu0 %v2617
      %2645 = vmatprep.subr.mxu0 0.0
      %2646 = vmatpush1.msra.mxu0 %v2618
      %2647 = vmatprep.subr.mxu0 0.0
      %2648 = vmatpush1.msra.mxu0 %v2619
      %2649 = vmatprep.subr.mxu0 0.0
      %2650 = vmatpush1.msra.mxu0 %v2620
      %2651 = vmatprep.subr.mxu0 0.0
      %2652 = vmatpush1.msra.mxu0 %v2621
      %2653 = vmatprep.subr.mxu0 0.0
      %2654 = vmatpush1.msra.mxu0 %v2622
      %2655 = vmatprep.subr.mxu0 0.0
      %2656 = vmatpush1.msra.mxu0 0.0
      %2657 = vmatprep.subr.mxu0 0.0
      %2658 = vmatpush1.msra.mxu0 0.0
      %2659 = vmatprep.subr.mxu0 0.0
      %2660 = vmatpush1.msra.mxu0 0.0
      %2661 = vmatprep.subr.mxu0 0.0
      %2662 = vmatpush1.msra.mxu0 0.0
      %2663 = vmatprep.subr.mxu0 0.0
      %2664 = vmatpush1.msra.mxu0 0.0
      %2665 = vmatprep.subr.mxu0 0.0
      %2666 = vmatpush1.msra.mxu0 0.0
      %2667 = vmatprep.subr.mxu0 0.0
      %2668 = vmatpush1.msra.mxu0 0.0
      %2669 = vmatprep.subr.mxu0 0.0
      %2670 = vmatpush1.msra.mxu0 0.0
      %2671 = vmatprep.subr.mxu0 0.0
      %2672 = vmatpush1.msra.mxu0 0.0
      %2673 = vmatprep.subr.mxu0 0.0
      %2674 = vmatpush1.msra.mxu0 0.0
      %2675 = vmatprep.subr.mxu0 0.0
      %2676 = vmatpush1.msra.mxu0 0.0
      %2677 = vmatprep.subr.mxu0 0.0
      %2678 = vmatpush1.msra.mxu0 0.0
      %2679 = vmatprep.subr.mxu0 0.0
      %2680 = vmatpush1.msra.mxu0 0.0
      %2681 = vmatprep.subr.mxu0 0.0
      %2682 = vmatpush1.msra.mxu0 0.0
      %2683 = vmatprep.subr.mxu0 0.0
      %2684 = vmatpush1.msra.mxu0 0.0
      %2685 = vmatprep.subr.mxu0 0.0
      %2686 = vmatpush1.msra.mxu0 0.0
      %2687 = vmatprep.mubr.f32.mxu0 0.0
      %2688 = vmatmul.mubr.f32.gmra.mrb[0].mxu0 %v2574
      %v2689 = vpop.f32.mrb[0].mxu0
      %v2690 = vadd.f32 0.0, %v2689
      %v2691 = vpop.f32.mrb[0].mxu0
      %2692 = vmatprep.mubr.f32.mxu0 0.0
      %2693 = vmatmul.mubr.f32.gmra.mrb[0].mxu0 %v2575
      %v2694 = vpop.f32.mrb[0].mxu0
      %v2695 = vadd.f32 0.0, %v2694
      %v2696 = vpop.f32.mrb[0].mxu0
      %2697 = vmatprep.mubr.f32.mxu0 0.0
      %2698 = vmatmul.mubr.f32.gmra.mrb[0].mxu0 %v2576
      %v2699 = vpop.f32.mrb[0].mxu0
      %v2700 = vadd.f32 0.0, %v2699
      %v2701 = vpop.f32.mrb[0].mxu0
      %2702 = vmatprep.mubr.f32.mxu0 0.0
      %2703 = vmatmul.mubr.f32.gmra.mrb[0].mxu0 %v2577
      %v2704 = vpop.f32.mrb[0].mxu0
      %v2705 = vadd.f32 0.0, %v2704
      %v2706 = vpop.f32.mrb[0].mxu0
      %2707 = vmatprep.mubr.f32.mxu0 0.0
      %2708 = vmatmul.mubr.f32.gmra.mrb[0].mxu0 %v2578
      %v2709 = vpop.f32.mrb[0].mxu0
      %v2710 = vadd.f32 0.0, %v2709
      %v2711 = vpop.f32.mrb[0].mxu0
      %2712 = vmatprep.mubr.f32.mxu0 0.0
      %2713 = vmatmul.mubr.f32.gmra.mrb[0].mxu0 %v2579
      %v2714 = vpop.f32.mrb[0].mxu0
      %v2715 = vadd.f32 0.0, %v2714
      %v2716 = vpop.f32.mrb[0].mxu0
      %2717 = vmatprep.mubr.f32.mxu0 0.0
      %2718 = vmatmul.mubr.f32.gmra.mrb[0].mxu0 %v2580
      %v2719 = vpop.f32.mrb[0].mxu0
      %v2720 = vadd.f32 0.0, %v2719
      %v2721 = vpop.f32.mrb[0].mxu0
      %2722 = vmatprep.mubr.f32.mxu0 0.0
      %2723 = vmatmul.mubr.f32.gmra.mrb[0].mxu0 %v2581
      %v2724 = vpop.f32.mrb[0].mxu0
      %v2725 = vadd.f32 0.0, %v2724
      %v2726 = vpop.f32.mrb[0].mxu0
      %2727 = vmatprep.mubr.f32.mxu0 0.0
      %2728 = vmatmul.mubr.f32.gmra.mrb[0].mxu0 %v2582
      %v2729 = vpop.f32.mrb[0].mxu0
      %v2730 = vadd.f32 0.0, %v2729
      %v2731 = vpop.f32.mrb[0].mxu0
      %2732 = vmatprep.mubr.f32.mxu0 0.0
      %2733 = vmatmul.mubr.f32.gmra.mrb[0].mxu0 %v2583
      %v2734 = vpop.f32.mrb[0].mxu0
      %v2735 = vadd.f32 0.0, %v2734
      %v2736 = vpop.f32.mrb[0].mxu0
      %2737 = vmatprep.mubr.f32.mxu0 0.0
      %2738 = vmatmul.mubr.f32.gmra.mrb[0].mxu0 %v2584
      %v2739 = vpop.f32.mrb[0].mxu0
      %v2740 = vadd.f32 0.0, %v2739
      %v2741 = vpop.f32.mrb[0].mxu0
      %2742 = vmatprep.mubr.f32.mxu0 0.0
      %2743 = vmatmul.mubr.f32.gmra.mrb[0].mxu0 %v2585
      %v2744 = vpop.f32.mrb[0].mxu0
      %v2745 = vadd.f32 0.0, %v2744
      %v2746 = vpop.f32.mrb[0].mxu0
      %2747 = vmatprep.mubr.f32.mxu0 0.0
      %2748 = vmatmul.mubr.f32.gmra.mrb[0].mxu0 %v2586
      %v2749 = vpop.f32.mrb[0].mxu0
      %v2750 = vadd.f32 0.0, %v2749
      %v2751 = vpop.f32.mrb[0].mxu0
      %2752 = vmatprep.mubr.f32.mxu0 0.0
      %2753 = vmatmul.mubr.f32.gmra.mrb[0].mxu0 %v2587
      %v2754 = vpop.f32.mrb[0].mxu0
      %v2755 = vadd.f32 0.0, %v2754
      %v2756 = vpop.f32.mrb[0].mxu0
      %2757 = vmatprep.mubr.f32.mxu0 0.0
      %2758 = vmatmul.mubr.f32.gmra.mrb[0].mxu0 %v2588
      %v2759 = vpop.f32.mrb[0].mxu0
      %v2760 = vadd.f32 0.0, %v2759
      %v2761 = vpop.f32.mrb[0].mxu0
      %2762 = vmatprep.mubr.f32.mxu0 0.0
      %2763 = vmatmul.mubr.f32.gmra.mrb[0].mxu0 %v2589
      %v2764 = vpop.f32.mrb[0].mxu0
      %v2765 = vadd.f32 0.0, %v2764
      %v2766 = vpop.f32.mrb[0].mxu0
      %2767 = vmatprep.mubr.f32.mxu0 0.0
      %2768 = vmatmul.mubr.f32.gmra.mrb[0].mxu0 %v2590
      %v2769 = vpop.f32.mrb[0].mxu0
      %v2770 = vadd.f32 0.0, %v2769
      %v2771 = vpop.f32.mrb[0].mxu0
      %2772 = vmatprep.mubr.f32.mxu0 0.0
      %2773 = vmatmul.mubr.f32.gmra.mrb[0].mxu0 %v2591
      %v2774 = vpop.f32.mrb[0].mxu0
      %v2775 = vadd.f32 0.0, %v2774
      %v2776 = vpop.f32.mrb[0].mxu0
      %2777 = vmatprep.mubr.f32.mxu0 0.0
      %2778 = vmatmul.mubr.f32.gmra.mrb[0].mxu0 %v2592
      %v2779 = vpop.f32.mrb[0].mxu0
      %v2780 = vadd.f32 0.0, %v2779
      %v2781 = vpop.f32.mrb[0].mxu0
      %2782 = vmatprep.mubr.f32.mxu0 0.0
      %2783 = vmatmul.mubr.f32.gmra.mrb[0].mxu0 %v2593
      %v2784 = vpop.f32.mrb[0].mxu0
      %v2785 = vadd.f32 0.0, %v2784
      %v2786 = vpop.f32.mrb[0].mxu0
      %2787 = vmatprep.mubr.f32.mxu0 0.0
      %2788 = vmatmul.mubr.f32.gmra.mrb[0].mxu0 %v2594
      %v2789 = vpop.f32.mrb[0].mxu0
      %v2790 = vadd.f32 0.0, %v2789
      %v2791 = vpop.f32.mrb[0].mxu0
      %2792 = vmatprep.mubr.f32.mxu0 0.0
      %2793 = vmatmul.mubr.f32.gmra.mrb[0].mxu0 %v2595
      %v2794 = vpop.f32.mrb[0].mxu0
      %v2795 = vadd.f32 0.0, %v2794
      %v2796 = vpop.f32.mrb[0].mxu0
      %2797 = vmatprep.mubr.f32.mxu0 0.0
      %2798 = vmatmul.mubr.f32.gmra.mrb[0].mxu0 %v2596
      %v2799 = vpop.f32.mrb[0].mxu0
      %v2800 = vadd.f32 0.0, %v2799
      %v2801 = vpop.f32.mrb[0].mxu0
      %2802 = vmatprep.mubr.f32.mxu0 0.0
      %2803 = vmatmul.mubr.f32.gmra.mrb[0].mxu0 %v2597
      %v2804 = vpop.f32.mrb[0].mxu0
      %v2805 = vadd.f32 0.0, %v2804
      %v2806 = vpop.f32.mrb[0].mxu0
      %2807 = vmatprep.mubr.f32.mxu0 0.0
      %2808 = vmatmul.mubr.f32.gmra.mrb[0].mxu0 %v2598
      %v2809 = vpop.f32.mrb[0].mxu0
      %v2810 = vadd.f32 0.0, %v2809
      %v2811 = vpop.f32.mrb[0].mxu0
      %2812 = vmatprep.mubr.f32.mxu0 0.0
      %2813 = vmatmul.mubr.f32.gmra.mrb[0].mxu0 %v2599
      %v2814 = vpop.f32.mrb[0].mxu0
      %v2815 = vadd.f32 0.0, %v2814
      %v2816 = vpop.f32.mrb[0].mxu0
      %2817 = vmatprep.mubr.f32.mxu0 0.0
      %2818 = vmatmul.mubr.f32.gmra.mrb[0].mxu0 %v2600
      %v2819 = vpop.f32.mrb[0].mxu0
      %v2820 = vadd.f32 0.0, %v2819
      %v2821 = vpop.f32.mrb[0].mxu0
      %2822 = vmatprep.mubr.f32.mxu0 0.0
      %2823 = vmatmul.mubr.f32.gmra.mrb[0].mxu0 %v2601
      %v2824 = vpop.f32.mrb[0].mxu0
      %v2825 = vadd.f32 0.0, %v2824
      %v2826 = vpop.f32.mrb[0].mxu0
      %2827 = vmatprep.mubr.f32.mxu0 0.0
      %2828 = vmatmul.mubr.f32.gmra.mrb[0].mxu0 %v2602
      %v2829 = vpop.f32.mrb[0].mxu0
      %v2830 = vadd.f32 0.0, %v2829
      %v2831 = vpop.f32.mrb[0].mxu0
      %2832 = vmatprep.mubr.f32.mxu0 0.0
      %2833 = vmatmul.mubr.f32.gmra.mrb[0].mxu0 %v2603
      %v2834 = vpop.f32.mrb[0].mxu0
      %v2835 = vadd.f32 0.0, %v2834
      %v2836 = vpop.f32.mrb[0].mxu0
      %2837 = vmatprep.mubr.f32.mxu0 0.0
      %2838 = vmatmul.mubr.f32.gmra.mrb[0].mxu0 %v2604
      %v2839 = vpop.f32.mrb[0].mxu0
      %v2840 = vadd.f32 0.0, %v2839
      %v2841 = vpop.f32.mrb[0].mxu0
      %2842 = vmatprep.mubr.f32.mxu0 0.0
      %2843 = vmatmul.mubr.f32.gmra.mrb[0].mxu0 %v2605
      %v2844 = vpop.f32.mrb[0].mxu0
      %v2845 = vadd.f32 0.0, %v2844
      %v2846 = vpop.f32.mrb[0].mxu0
      %2847 = vdwg.mxu0
      %v2848 = vadd.f32 %v2542, %v2690
      %v2849 = vadd.f32 %v2543, %v2695
      %v2850 = vadd.f32 %v2544, %v2700
      %v2851 = vadd.f32 %v2545, %v2705
      %v2852 = vadd.f32 %v2546, %v2710
      %v2853 = vadd.f32 %v2547, %v2715
      %v2854 = vadd.f32 %v2548, %v2720
      %v2855 = vadd.f32 %v2549, %v2725
      %v2856 = vadd.f32 %v2550, %v2730
      %v2857 = vadd.f32 %v2551, %v2735
      %v2858 = vadd.f32 %v2552, %v2740
      %v2859 = vadd.f32 %v2553, %v2745
      %v2860 = vadd.f32 %v2554, %v2750
      %v2861 = vadd.f32 %v2555, %v2755
      %v2862 = vadd.f32 %v2556, %v2760
      %v2863 = vadd.f32 %v2557, %v2765
      %v2864 = vadd.f32 %v2558, %v2770
      %v2865 = vadd.f32 %v2559, %v2775
      %v2866 = vadd.f32 %v2560, %v2780
      %v2867 = vadd.f32 %v2561, %v2785
      %v2868 = vadd.f32 %v2562, %v2790
      %v2869 = vadd.f32 %v2563, %v2795
      %v2870 = vadd.f32 %v2564, %v2800
      %v2871 = vadd.f32 %v2565, %v2805
      %v2872 = vadd.f32 %v2566, %v2810
      %v2873 = vadd.f32 %v2567, %v2815
      %v2874 = vadd.f32 %v2568, %v2820
      %v2875 = vadd.f32 %v2569, %v2825
      %v2876 = vadd.f32 %v2570, %v2830
      %v2877 = vadd.f32 %v2571, %v2835
      %v2878 = vadd.f32 %v2572, %v2840
      %v2879 = vadd.f32 %v2573, %v2845
      %v2880 = vld [vmem:[%s2267 + $0x2] sm:$0xff]
      %v2881 = vld [vmem:[%s2267 + $0xa] sm:$0xff]
      %v2882 = vld [vmem:[%s2267 + $0x1a] sm:$0xff]
      %v2883 = vld [vmem:[%s2267 + $0x22] sm:$0xff]
      %v2884 = vld [vmem:[%s2267 + $0x32] sm:$0xff]
      %v2885 = vld [vmem:[%s2267 + $0x3a] sm:$0xff]
      %v2886 = vld [vmem:[%s2267 + $0x4a] sm:$0xff]
      %v2887 = vld [vmem:[%s2267 + $0x52] sm:$0xff]
      %v2888 = vld [vmem:[%s2267 + $0x62] sm:$0xff]
      %v2889 = vld [vmem:[%s2267 + $0x6a] sm:$0xff]
      %v2890 = vld [vmem:[%s2267 + $0x7a] sm:$0xff]
      %v2891 = vld [vmem:[%s2267 + $0x82] sm:$0xff]
      %v2892 = vld [vmem:[%s2267 + $0x92] sm:$0xff]
      %v2893 = vld [vmem:[%s2267 + $0x9a] sm:$0xff]
      %v2894 = vld [vmem:[%s2267 + $0xaa] sm:$0xff]
      %v2895 = vld [vmem:[%s2267 + $0xb2] sm:$0xff]
      %v2896 = vld [vmem:[%s2267 + $0xc2] sm:$0xff]
      %v2897 = vld [vmem:[%s2267 + $0xca] sm:$0xff]
      %v2898 = vld [vmem:[%s2267 + $0xda] sm:$0xff]
      %v2899 = vld [vmem:[%s2267 + $0xe2] sm:$0xff]
      %v2900 = vld [vmem:[%s2267 + $0xf2] sm:$0xff]
      %v2901 = vld [vmem:[%s2267 + $0xfa] sm:$0xff]
      %v2902 = vld [vmem:[%s2267 + $0x10a] sm:$0xff]
      %v2903 = vld [vmem:[%s2267 + $0x112] sm:$0xff]
      %v2904 = vld [vmem:[%s2267 + $0x122] sm:$0xff]
      %v2905 = vld [vmem:[%s2267 + $0x12a] sm:$0xff]
      %v2906 = vld [vmem:[%s2267 + $0x13a] sm:$0xff]
      %v2907 = vld [vmem:[%s2267 + $0x142] sm:$0xff]
      %v2908 = vld [vmem:[%s2267 + $0x152] sm:$0xff]
      %v2909 = vld [vmem:[%s2267 + $0x15a] sm:$0xff]
      %v2910 = vld [vmem:[%s2267 + $0x16a] sm:$0xff]
      %v2911 = vld [vmem:[%s2267 + $0x172] sm:$0xff]
      %s2912 = scalar_lea.vmem %s3, 1024
      %v2913 = vld [vmem:[%s2912] sm:$0xff]
      %v2914 = vld [vmem:[%s2912 + $0x8] sm:$0xff]
      %v2915 = vld [vmem:[%s2912 + $0x10] sm:$0xff]
      %v2916 = vld [vmem:[%s2912 + $0x18] sm:$0xff]
      %v2917 = vld [vmem:[%s2912 + $0x20] sm:$0xff]
      %v2918 = vld [vmem:[%s2912 + $0x28] sm:$0xff]
      %v2919 = vld [vmem:[%s2912 + $0x30] sm:$0xff]
      %v2920 = vld [vmem:[%s2912 + $0x38] sm:$0xff]
      %v2921 = vld [vmem:[%s2912 + $0x40] sm:$0xff]
      %v2922 = vld [vmem:[%s2912 + $0x48] sm:$0xff]
      %v2923 = vld [vmem:[%s2912 + $0x50] sm:$0xff]
      %v2924 = vld [vmem:[%s2912 + $0x58] sm:$0xff]
      %v2925 = vld [vmem:[%s2912 + $0x60] sm:$0xff]
      %v2926 = vld [vmem:[%s2912 + $0x68] sm:$0xff]
      %v2927 = vld [vmem:[%s2912 + $0x70] sm:$0xff]
      %v2928 = vld [vmem:[%s2912 + $0x78] sm:$0xff]
      %2929 = vmatprep.subr.mxu0 0.0
      %2930 = vmatpush1.msra.mxu0 %v2913
      %2931 = vmatprep.subr.mxu0 0.0
      %2932 = vmatpush1.msra.mxu0 %v2914
      %2933 = vmatprep.subr.mxu0 0.0
      %2934 = vmatpush1.msra.mxu0 %v2915
      %2935 = vmatprep.subr.mxu0 0.0
      %2936 = vmatpush1.msra.mxu0 %v2916
      %2937 = vmatprep.subr.mxu0 0.0
      %2938 = vmatpush1.msra.mxu0 %v2917
      %2939 = vmatprep.subr.mxu0 0.0
      %2940 = vmatpush1.msra.mxu0 %v2918
      %2941 = vmatprep.subr.mxu0 0.0
      %2942 = vmatpush1.msra.mxu0 %v2919
      %2943 = vmatprep.subr.mxu0 0.0
      %2944 = vmatpush1.msra.mxu0 %v2920
      %2945 = vmatprep.subr.mxu0 0.0
      %2946 = vmatpush1.msra.mxu0 %v2921
      %2947 = vmatprep.subr.mxu0 0.0
      %2948 = vmatpush1.msra.mxu0 %v2922
      %2949 = vmatprep.subr.mxu0 0.0
      %2950 = vmatpush1.msra.mxu0 %v2923
      %2951 = vmatprep.subr.mxu0 0.0
      %2952 = vmatpush1.msra.mxu0 %v2924
      %2953 = vmatprep.subr.mxu0 0.0
      %2954 = vmatpush1.msra.mxu0 %v2925
      %2955 = vmatprep.subr.mxu0 0.0
      %2956 = vmatpush1.msra.mxu0 %v2926
      %2957 = vmatprep.subr.mxu0 0.0
      %2958 = vmatpush1.msra.mxu0 %v2927
      %2959 = vmatprep.subr.mxu0 0.0
      %2960 = vmatpush1.msra.mxu0 %v2928
      %2961 = vmatprep.subr.mxu0 0.0
      %2962 = vmatpush1.msra.mxu0 0.0
      %2963 = vmatprep.subr.mxu0 0.0
      %2964 = vmatpush1.msra.mxu0 0.0
      %2965 = vmatprep.subr.mxu0 0.0
      %2966 = vmatpush1.msra.mxu0 0.0
      %2967 = vmatprep.subr.mxu0 0.0
      %2968 = vmatpush1.msra.mxu0 0.0
      %2969 = vmatprep.subr.mxu0 0.0
      %2970 = vmatpush1.msra.mxu0 0.0
      %2971 = vmatprep.subr.mxu0 0.0
      %2972 = vmatpush1.msra.mxu0 0.0
      %2973 = vmatprep.subr.mxu0 0.0
      %2974 = vmatpush1.msra.mxu0 0.0
      %2975 = vmatprep.subr.mxu0 0.0
      %2976 = vmatpush1.msra.mxu0 0.0
      %2977 = vmatprep.subr.mxu0 0.0
      %2978 = vmatpush1.msra.mxu0 0.0
      %2979 = vmatprep.subr.mxu0 0.0
      %2980 = vmatpush1.msra.mxu0 0.0
      %2981 = vmatprep.subr.mxu0 0.0
      %2982 = vmatpush1.msra.mxu0 0.0
      %2983 = vmatprep.subr.mxu0 0.0
      %2984 = vmatpush1.msra.mxu0 0.0
      %2985 = vmatprep.subr.mxu0 0.0
      %2986 = vmatpush1.msra.mxu0 0.0
      %2987 = vmatprep.subr.mxu0 0.0
      %2988 = vmatpush1.msra.mxu0 0.0
      %2989 = vmatprep.subr.mxu0 0.0
      %2990 = vmatpush1.msra.mxu0 0.0
      %2991 = vmatprep.subr.mxu0 0.0
      %2992 = vmatpush1.msra.mxu0 0.0
      %2993 = vmatprep.mubr.f32.mxu0 0.0
      %2994 = vmatmul.mubr.f32.gmra.mrb[0].mxu0 %v2880
      %v2995 = vpop.f32.mrb[0].mxu0
      %v2996 = vadd.f32 0.0, %v2995
      %v2997 = vpop.f32.mrb[0].mxu0
      %2998 = vmatprep.mubr.f32.mxu0 0.0
      %2999 = vmatmul.mubr.f32.gmra.mrb[0].mxu0 %v2881
      %v3000 = vpop.f32.mrb[0].mxu0
      %v3001 = vadd.f32 0.0, %v3000
      %v3002 = vpop.f32.mrb[0].mxu0
      %3003 = vmatprep.mubr.f32.mxu0 0.0
      %3004 = vmatmul.mubr.f32.gmra.mrb[0].mxu0 %v2882
      %v3005 = vpop.f32.mrb[0].mxu0
      %v3006 = vadd.f32 0.0, %v3005
      %v3007 = vpop.f32.mrb[0].mxu0
      %3008 = vmatprep.mubr.f32.mxu0 0.0
      %3009 = vmatmul.mubr.f32.gmra.mrb[0].mxu0 %v2883
      %v3010 = vpop.f32.mrb[0].mxu0
      %v3011 = vadd.f32 0.0, %v3010
      %v3012 = vpop.f32.mrb[0].mxu0
      %3013 = vmatprep.mubr.f32.mxu0 0.0
      %3014 = vmatmul.mubr.f32.gmra.mrb[0].mxu0 %v2884
      %v3015 = vpop.f32.mrb[0].mxu0
      %v3016 = vadd.f32 0.0, %v3015
      %v3017 = vpop.f32.mrb[0].mxu0
      %3018 = vmatprep.mubr.f32.mxu0 0.0
      %3019 = vmatmul.mubr.f32.gmra.mrb[0].mxu0 %v2885
      %v3020 = vpop.f32.mrb[0].mxu0
      %v3021 = vadd.f32 0.0, %v3020
      %v3022 = vpop.f32.mrb[0].mxu0
      %3023 = vmatprep.mubr.f32.mxu0 0.0
      %3024 = vmatmul.mubr.f32.gmra.mrb[0].mxu0 %v2886
      %v3025 = vpop.f32.mrb[0].mxu0
      %v3026 = vadd.f32 0.0, %v3025
      %v3027 = vpop.f32.mrb[0].mxu0
      %3028 = vmatprep.mubr.f32.mxu0 0.0
      %3029 = vmatmul.mubr.f32.gmra.mrb[0].mxu0 %v2887
      %v3030 = vpop.f32.mrb[0].mxu0
      %v3031 = vadd.f32 0.0, %v3030
      %v3032 = vpop.f32.mrb[0].mxu0
      %3033 = vmatprep.mubr.f32.mxu0 0.0
      %3034 = vmatmul.mubr.f32.gmra.mrb[0].mxu0 %v2888
      %v3035 = vpop.f32.mrb[0].mxu0
      %v3036 = vadd.f32 0.0, %v3035
      %v3037 = vpop.f32.mrb[0].mxu0
      %3038 = vmatprep.mubr.f32.mxu0 0.0
      %3039 = vmatmul.mubr.f32.gmra.mrb[0].mxu0 %v2889
      %v3040 = vpop.f32.mrb[0].mxu0
      %v3041 = vadd.f32 0.0, %v3040
      %v3042 = vpop.f32.mrb[0].mxu0
      %3043 = vmatprep.mubr.f32.mxu0 0.0
      %3044 = vmatmul.mubr.f32.gmra.mrb[0].mxu0 %v2890
      %v3045 = vpop.f32.mrb[0].mxu0
      %v3046 = vadd.f32 0.0, %v3045
      %v3047 = vpop.f32.mrb[0].mxu0
      %3048 = vmatprep.mubr.f32.mxu0 0.0
      %3049 = vmatmul.mubr.f32.gmra.mrb[0].mxu0 %v2891
      %v3050 = vpop.f32.mrb[0].mxu0
      %v3051 = vadd.f32 0.0, %v3050
      %v3052 = vpop.f32.mrb[0].mxu0
      %3053 = vmatprep.mubr.f32.mxu0 0.0
      %3054 = vmatmul.mubr.f32.gmra.mrb[0].mxu0 %v2892
      %v3055 = vpop.f32.mrb[0].mxu0
      %v3056 = vadd.f32 0.0, %v3055
      %v3057 = vpop.f32.mrb[0].mxu0
      %3058 = vmatprep.mubr.f32.mxu0 0.0
      %3059 = vmatmul.mubr.f32.gmra.mrb[0].mxu0 %v2893
      %v3060 = vpop.f32.mrb[0].mxu0
      %v3061 = vadd.f32 0.0, %v3060
      %v3062 = vpop.f32.mrb[0].mxu0
      %3063 = vmatprep.mubr.f32.mxu0 0.0
      %3064 = vmatmul.mubr.f32.gmra.mrb[0].mxu0 %v2894
      %v3065 = vpop.f32.mrb[0].mxu0
      %v3066 = vadd.f32 0.0, %v3065
      %v3067 = vpop.f32.mrb[0].mxu0
      %3068 = vmatprep.mubr.f32.mxu0 0.0
      %3069 = vmatmul.mubr.f32.gmra.mrb[0].mxu0 %v2895
      %v3070 = vpop.f32.mrb[0].mxu0
      %v3071 = vadd.f32 0.0, %v3070
      %v3072 = vpop.f32.mrb[0].mxu0
      %3073 = vmatprep.mubr.f32.mxu0 0.0
      %3074 = vmatmul.mubr.f32.gmra.mrb[0].mxu0 %v2896
      %v3075 = vpop.f32.mrb[0].mxu0
      %v3076 = vadd.f32 0.0, %v3075
      %v3077 = vpop.f32.mrb[0].mxu0
      %3078 = vmatprep.mubr.f32.mxu0 0.0
      %3079 = vmatmul.mubr.f32.gmra.mrb[0].mxu0 %v2897
      %v3080 = vpop.f32.mrb[0].mxu0
      %v3081 = vadd.f32 0.0, %v3080
      %v3082 = vpop.f32.mrb[0].mxu0
      %3083 = vmatprep.mubr.f32.mxu0 0.0
      %3084 = vmatmul.mubr.f32.gmra.mrb[0].mxu0 %v2898
      %v3085 = vpop.f32.mrb[0].mxu0
      %v3086 = vadd.f32 0.0, %v3085
      %v3087 = vpop.f32.mrb[0].mxu0
      %3088 = vmatprep.mubr.f32.mxu0 0.0
      %3089 = vmatmul.mubr.f32.gmra.mrb[0].mxu0 %v2899
      %v3090 = vpop.f32.mrb[0].mxu0
      %v3091 = vadd.f32 0.0, %v3090
      %v3092 = vpop.f32.mrb[0].mxu0
      %3093 = vmatprep.mubr.f32.mxu0 0.0
      %3094 = vmatmul.mubr.f32.gmra.mrb[0].mxu0 %v2900
      %v3095 = vpop.f32.mrb[0].mxu0
      %v3096 = vadd.f32 0.0, %v3095
      %v3097 = vpop.f32.mrb[0].mxu0
      %3098 = vmatprep.mubr.f32.mxu0 0.0
      %3099 = vmatmul.mubr.f32.gmra.mrb[0].mxu0 %v2901
      %v3100 = vpop.f32.mrb[0].mxu0
      %v3101 = vadd.f32 0.0, %v3100
      %v3102 = vpop.f32.mrb[0].mxu0
      %3103 = vmatprep.mubr.f32.mxu0 0.0
      %3104 = vmatmul.mubr.f32.gmra.mrb[0].mxu0 %v2902
      %v3105 = vpop.f32.mrb[0].mxu0
      %v3106 = vadd.f32 0.0, %v3105
      %v3107 = vpop.f32.mrb[0].mxu0
      %3108 = vmatprep.mubr.f32.mxu0 0.0
      %3109 = vmatmul.mubr.f32.gmra.mrb[0].mxu0 %v2903
      %v3110 = vpop.f32.mrb[0].mxu0
      %v3111 = vadd.f32 0.0, %v3110
      %v3112 = vpop.f32.mrb[0].mxu0
      %3113 = vmatprep.mubr.f32.mxu0 0.0
      %3114 = vmatmul.mubr.f32.gmra.mrb[0].mxu0 %v2904
      %v3115 = vpop.f32.mrb[0].mxu0
      %v3116 = vadd.f32 0.0, %v3115
      %v3117 = vpop.f32.mrb[0].mxu0
      %3118 = vmatprep.mubr.f32.mxu0 0.0
      %3119 = vmatmul.mubr.f32.gmra.mrb[0].mxu0 %v2905
      %v3120 = vpop.f32.mrb[0].mxu0
      %v3121 = vadd.f32 0.0, %v3120
      %v3122 = vpop.f32.mrb[0].mxu0
      %3123 = vmatprep.mubr.f32.mxu0 0.0
      %3124 = vmatmul.mubr.f32.gmra.mrb[0].mxu0 %v2906
      %v3125 = vpop.f32.mrb[0].mxu0
      %v3126 = vadd.f32 0.0, %v3125
      %v3127 = vpop.f32.mrb[0].mxu0
      %3128 = vmatprep.mubr.f32.mxu0 0.0
      %3129 = vmatmul.mubr.f32.gmra.mrb[0].mxu0 %v2907
      %v3130 = vpop.f32.mrb[0].mxu0
      %v3131 = vadd.f32 0.0, %v3130
      %v3132 = vpop.f32.mrb[0].mxu0
      %3133 = vmatprep.mubr.f32.mxu0 0.0
      %3134 = vmatmul.mubr.f32.gmra.mrb[0].mxu0 %v2908
      %v3135 = vpop.f32.mrb[0].mxu0
      %v3136 = vadd.f32 0.0, %v3135
      %v3137 = vpop.f32.mrb[0].mxu0
      %3138 = vmatprep.mubr.f32.mxu0 0.0
      %3139 = vmatmul.mubr.f32.gmra.mrb[0].mxu0 %v2909
      %v3140 = vpop.f32.mrb[0].mxu0
      %v3141 = vadd.f32 0.0, %v3140
      %v3142 = vpop.f32.mrb[0].mxu0
      %3143 = vmatprep.mubr.f32.mxu0 0.0
      %3144 = vmatmul.mubr.f32.gmra.mrb[0].mxu0 %v2910
      %v3145 = vpop.f32.mrb[0].mxu0
      %v3146 = vadd.f32 0.0, %v3145
      %v3147 = vpop.f32.mrb[0].mxu0
      %3148 = vmatprep.mubr.f32.mxu0 0.0
      %3149 = vmatmul.mubr.f32.gmra.mrb[0].mxu0 %v2911
      %v3150 = vpop.f32.mrb[0].mxu0
      %v3151 = vadd.f32 0.0, %v3150
      %v3152 = vpop.f32.mrb[0].mxu0
      %3153 = vdwg.mxu0
      %v3154 = vadd.f32 %v2848, %v2996
      %v3155 = vadd.f32 %v2849, %v3001
      %v3156 = vadd.f32 %v2850, %v3006
      %v3157 = vadd.f32 %v2851, %v3011
      %v3158 = vadd.f32 %v2852, %v3016
      %v3159 = vadd.f32 %v2853, %v3021
      %v3160 = vadd.f32 %v2854, %v3026
      %v3161 = vadd.f32 %v2855, %v3031
      %v3162 = vadd.f32 %v2856, %v3036
      %v3163 = vadd.f32 %v2857, %v3041
      %v3164 = vadd.f32 %v2858, %v3046
      %v3165 = vadd.f32 %v2859, %v3051
      %v3166 = vadd.f32 %v2860, %v3056
      %v3167 = vadd.f32 %v2861, %v3061
      %v3168 = vadd.f32 %v2862, %v3066
      %v3169 = vadd.f32 %v2863, %v3071
      %v3170 = vadd.f32 %v2864, %v3076
      %v3171 = vadd.f32 %v2865, %v3081
      %v3172 = vadd.f32 %v2866, %v3086
      %v3173 = vadd.f32 %v2867, %v3091
      %v3174 = vadd.f32 %v2868, %v3096
      %v3175 = vadd.f32 %v2869, %v3101
      %v3176 = vadd.f32 %v2870, %v3106
      %v3177 = vadd.f32 %v2871, %v3111
      %v3178 = vadd.f32 %v2872, %v3116
      %v3179 = vadd.f32 %v2873, %v3121
      %v3180 = vadd.f32 %v2874, %v3126
      %v3181 = vadd.f32 %v2875, %v3131
      %v3182 = vadd.f32 %v2876, %v3136
      %v3183 = vadd.f32 %v2877, %v3141
      %v3184 = vadd.f32 %v2878, %v3146
      %v3185 = vadd.f32 %v2879, %v3151
      %v3186 = vld [vmem:[%s4] sm:$0x1]
      %v3188 = vlaneseq
      %v3189 = vshrl.u32 %v3188, 7
      %v3190 = vsub.s32 0, %v3189
      %v3191 = vrot.slane %v3186, %v3190
      %v3193 = vadd.f32 %v3154, %v3191
      %v3194 = vadd.f32 %v3155, %v3191
      %v3195 = vadd.f32 %v3156, %v3191
      %v3196 = vadd.f32 %v3157, %v3191
      %v3197 = vadd.f32 %v3158, %v3191
      %v3198 = vadd.f32 %v3159, %v3191
      %v3199 = vadd.f32 %v3160, %v3191
      %v3200 = vadd.f32 %v3161, %v3191
      %v3201 = vadd.f32 %v3162, %v3191
      %v3202 = vadd.f32 %v3163, %v3191
      %v3203 = vadd.f32 %v3164, %v3191
      %v3204 = vadd.f32 %v3165, %v3191
      %v3205 = vadd.f32 %v3166, %v3191
      %v3206 = vadd.f32 %v3167, %v3191
      %v3207 = vadd.f32 %v3168, %v3191
      %v3208 = vadd.f32 %v3169, %v3191
      %v3209 = vadd.f32 %v3170, %v3191
      %v3210 = vadd.f32 %v3171, %v3191
      %v3211 = vadd.f32 %v3172, %v3191
      %v3212 = vadd.f32 %v3173, %v3191
      %v3213 = vadd.f32 %v3174, %v3191
      %v3214 = vadd.f32 %v3175, %v3191
      %v3215 = vadd.f32 %v3176, %v3191
      %v3216 = vadd.f32 %v3177, %v3191
      %v3217 = vadd.f32 %v3178, %v3191
      %v3218 = vadd.f32 %v3179, %v3191
      %v3219 = vadd.f32 %v3180, %v3191
      %v3220 = vadd.f32 %v3181, %v3191
      %v3221 = vadd.f32 %v3182, %v3191
      %v3222 = vadd.f32 %v3183, %v3191
      %v3223 = vadd.f32 %v3184, %v3191
      %v3224 = vadd.f32 %v3185, %v3191
      %v3225 = vadd.f32 %v3193, %v3194
      %v3226 = vadd.f32 %v3225, %v3195
      %v3227 = vadd.f32 %v3226, %v3196
      %v3228 = vadd.f32 %v3227, %v3197
      %v3229 = vadd.f32 %v3228, %v3198
      %v3230 = vadd.f32 %v3229, %v3199
      %v3231 = vadd.f32 %v3230, %v3200
      %v3232 = vadd.f32 %v3231, %v3201
      %v3233 = vadd.f32 %v3232, %v3202
      %v3234 = vadd.f32 %v3233, %v3203
      %v3235 = vadd.f32 %v3234, %v3204
      %v3236 = vadd.f32 %v3235, %v3205
      %v3237 = vadd.f32 %v3236, %v3206
      %v3238 = vadd.f32 %v3237, %v3207
      %v3239 = vadd.f32 %v3238, %v3208
      %v3240 = vadd.f32 %v3239, %v3209
      %v3241 = vadd.f32 %v3240, %v3210
      %v3242 = vadd.f32 %v3241, %v3211
      %v3243 = vadd.f32 %v3242, %v3212
      %v3244 = vadd.f32 %v3243, %v3213
      %v3245 = vadd.f32 %v3244, %v3214
      %v3246 = vadd.f32 %v3245, %v3215
      %v3247 = vadd.f32 %v3246, %v3216
      %v3248 = vadd.f32 %v3247, %v3217
      %v3249 = vadd.f32 %v3248, %v3218
      %v3250 = vadd.f32 %v3249, %v3219
      %v3251 = vadd.f32 %v3250, %v3220
      %v3252 = vadd.f32 %v3251, %v3221
      %v3253 = vadd.f32 %v3252, %v3222
      %v3254 = vadd.f32 %v3253, %v3223
      %v3255 = vadd.f32 %v3254, %v3224
      %v3256 = vrot.slane %v3255, 4
      %v3257 = vadd.f32 %v3255, %v3256
      %v3258 = vrot.slane %v3257, 2
      %v3259 = vadd.f32 %v3257, %v3258
      %v3260 = vrot.slane %v3259, 1
      %v3261 = vadd.f32 %v3259, %v3260
      %v3262 = vmul.f32 %v3193, %v3193
      %v3263 = vmul.f32 %v3194, %v3194
      %v3264 = vmul.f32 %v3195, %v3195
      %v3265 = vmul.f32 %v3196, %v3196
      %v3266 = vmul.f32 %v3197, %v3197
      %v3267 = vmul.f32 %v3198, %v3198
      %v3268 = vmul.f32 %v3199, %v3199
      %v3269 = vmul.f32 %v3200, %v3200
      %v3270 = vmul.f32 %v3201, %v3201
      %v3271 = vmul.f32 %v3202, %v3202
      %v3272 = vmul.f32 %v3203, %v3203
      %v3273 = vmul.f32 %v3204, %v3204
      %v3274 = vmul.f32 %v3205, %v3205
      %v3275 = vmul.f32 %v3206, %v3206
      %v3276 = vmul.f32 %v3207, %v3207
      %v3277 = vmul.f32 %v3208, %v3208
      %v3278 = vmul.f32 %v3209, %v3209
      %v3279 = vmul.f32 %v3210, %v3210
      %v3280 = vmul.f32 %v3211, %v3211
      %v3281 = vmul.f32 %v3212, %v3212
      %v3282 = vmul.f32 %v3213, %v3213
      %v3283 = vmul.f32 %v3214, %v3214
      %v3284 = vmul.f32 %v3215, %v3215
      %v3285 = vmul.f32 %v3216, %v3216
      %v3286 = vmul.f32 %v3217, %v3217
      %v3287 = vmul.f32 %v3218, %v3218
      %v3288 = vmul.f32 %v3219, %v3219
      %v3289 = vmul.f32 %v3220, %v3220
      %v3290 = vmul.f32 %v3221, %v3221
      %v3291 = vmul.f32 %v3222, %v3222
      %v3292 = vmul.f32 %v3223, %v3223
      %v3293 = vmul.f32 %v3224, %v3224
      %v3294 = vadd.f32 %v3262, %v3263
      %v3295 = vadd.f32 %v3294, %v3264
      %v3296 = vadd.f32 %v3295, %v3265
      %v3297 = vadd.f32 %v3296, %v3266
      %v3298 = vadd.f32 %v3297, %v3267
      %v3299 = vadd.f32 %v3298, %v3268
      %v3300 = vadd.f32 %v3299, %v3269
      %v3301 = vadd.f32 %v3300, %v3270
      %v3302 = vadd.f32 %v3301, %v3271
      %v3303 = vadd.f32 %v3302, %v3272
      %v3304 = vadd.f32 %v3303, %v3273
      %v3305 = vadd.f32 %v3304, %v3274
      %v3306 = vadd.f32 %v3305, %v3275
      %v3307 = vadd.f32 %v3306, %v3276
      %v3308 = vadd.f32 %v3307, %v3277
      %v3309 = vadd.f32 %v3308, %v3278
      %v3310 = vadd.f32 %v3309, %v3279
      %v3311 = vadd.f32 %v3310, %v3280
      %v3312 = vadd.f32 %v3311, %v3281
      %v3313 = vadd.f32 %v3312, %v3282
      %v3314 = vadd.f32 %v3313, %v3283
      %v3315 = vadd.f32 %v3314, %v3284
      %v3316 = vadd.f32 %v3315, %v3285
      %v3317 = vadd.f32 %v3316, %v3286
      %v3318 = vadd.f32 %v3317, %v3287
      %v3319 = vadd.f32 %v3318, %v3288
      %v3320 = vadd.f32 %v3319, %v3289
      %v3321 = vadd.f32 %v3320, %v3290
      %v3322 = vadd.f32 %v3321, %v3291
      %v3323 = vadd.f32 %v3322, %v3292
      %v3324 = vadd.f32 %v3323, %v3293
      %v3325 = vrot.slane %v3324, 4
      %v3326 = vadd.f32 %v3324, %v3325
      %v3327 = vrot.slane %v3326, 2
      %v3328 = vadd.f32 %v3326, %v3327
      %v3329 = vrot.slane %v3328, 1
      %v3330 = vadd.f32 %v3328, %v3329
      %vm3331 = vcmask 1040384
      %v3332 = vsel %vm3331, %v3261, %v3330
      %3333 = vst [vmem:[%s262] sm:$0x3] %v3332
      %3334 = vst [vmem:[%s258] sm:$0xff] %v3193
      %3335 = vst [vmem:[%s258 + $0x8] sm:$0xff] %v3194
      %3336 = vst [vmem:[%s258 + $0x10] sm:$0xff] %v3195
      %3337 = vst [vmem:[%s258 + $0x18] sm:$0xff] %v3196
      %3338 = vst [vmem:[%s258 + $0x20] sm:$0xff] %v3197
      %3339 = vst [vmem:[%s258 + $0x28] sm:$0xff] %v3198
      %3340 = vst [vmem:[%s258 + $0x30] sm:$0xff] %v3199
      %3341 = vst [vmem:[%s258 + $0x38] sm:$0xff] %v3200
      %3342 = vst [vmem:[%s258 + $0x40] sm:$0xff] %v3201
      %3343 = vst [vmem:[%s258 + $0x48] sm:$0xff] %v3202
      %3344 = vst [vmem:[%s258 + $0x50] sm:$0xff] %v3203
      %3345 = vst [vmem:[%s258 + $0x58] sm:$0xff] %v3204
      %3346 = vst [vmem:[%s258 + $0x60] sm:$0xff] %v3205
      %3347 = vst [vmem:[%s258 + $0x68] sm:$0xff] %v3206
      %3348 = vst [vmem:[%s258 + $0x70] sm:$0xff] %v3207
      %3349 = vst [vmem:[%s258 + $0x78] sm:$0xff] %v3208
      %3350 = vst [vmem:[%s258 + $0x80] sm:$0xff] %v3209
      %3351 = vst [vmem:[%s258 + $0x88] sm:$0xff] %v3210
      %3352 = vst [vmem:[%s258 + $0x90] sm:$0xff] %v3211
      %3353 = vst [vmem:[%s258 + $0x98] sm:$0xff] %v3212
      %3354 = vst [vmem:[%s258 + $0xa0] sm:$0xff] %v3213
      %3355 = vst [vmem:[%s258 + $0xa8] sm:$0xff] %v3214
      %3356 = vst [vmem:[%s258 + $0xb0] sm:$0xff] %v3215
      %3357 = vst [vmem:[%s258 + $0xb8] sm:$0xff] %v3216
      %3358 = vst [vmem:[%s258 + $0xc0] sm:$0xff] %v3217
      %3359 = vst [vmem:[%s258 + $0xc8] sm:$0xff] %v3218
      %3360 = vst [vmem:[%s258 + $0xd0] sm:$0xff] %v3219
      %3361 = vst [vmem:[%s258 + $0xd8] sm:$0xff] %v3220
      %3362 = vst [vmem:[%s258 + $0xe0] sm:$0xff] %v3221
      %3363 = vst [vmem:[%s258 + $0xe8] sm:$0xff] %v3222
      %3364 = vst [vmem:[%s258 + $0xf0] sm:$0xff] %v3223
      %3365 = vst [vmem:[%s258 + $0xf8] sm:$0xff] %v3224
      %p3366 = scmp.lt.s32.totalorder %s18, 1
      %s3367 = scalar_select %p3366, %s18, 1
      %s3368 = smul.addr %s3367, 32
      %s3369 = smul.addr %s3368, 8
      %s3370 = scalar_lea.vmem %s5, %s3369
      %p3371 = scmp.lt.s32.totalorder %s18, 1
      %s3372 = scalar_select %p3371, %s18, 1
      %s3373 = smul.addr %s3372, 2
      %s3374 = scalar_lea.vmem %s6, %s3373
      // Predicated region
      $region45: #{residual_block_forward.4} parent=39 // pred_check
        %p3375 = pneg %p146
      $region46: #{residual_block_forward.4} parent=39 // pred_check_branch
        %3377 = sbr.rel (%p3375) target = $region48
      $region47: #{residual_block_forward.4} parent=39 // pred_region
        _
      $region48: #{residual_block_forward.4} parent=39 // pred_fallthru
        _
      // Predicated region
      $region49: #{residual_block_forward.4} parent=39 // pred_check
        %p3378 = pneg %p172
      $region50: #{residual_block_forward.4} parent=39 // pred_check_branch
        %3380 = sbr.rel (%p3378) target = $region52
      $region51: #{residual_block_forward.4} parent=39 // pred_region
        _
      $region52: #{residual_block_forward.4} parent=39 // pred_fallthru
        _
    $region40: #{residual_block_forward.4} parent=5 // pred_fallthru
      _
    %p3381 = scmp.le.s32.totalorder 2, %s13
    // Predicated region
    $region53: #{residual_block_forward.4} parent=5 // pred_check
      %p3382 = pneg %p3381
    $region54: #{residual_block_forward.4} parent=5 // pred_check_branch
      %3384 = sbr.rel (%p3382) target = $region56
    $region55: #{residual_block_forward.4} parent=5 // pred_region
      %s3385 = ssub.s32 %s13, 2
      // Predicated region
      $region57: #{residual_block_forward.4} parent=55 // pred_check
        %p3386 = pneg %p152
      $region58: #{residual_block_forward.4} parent=55 // pred_check_branch
        %3388 = sbr.rel (%p3386) target = $region60
      $region59: #{residual_block_forward.4} parent=55 // pred_region
        %p3389 = scmp.lt.s32.totalorder %s19, 1
        %s3390 = scalar_select %p3389, %s19, 1
        %s3391 = smul.addr %s3390, 32
        %s3392 = smul.addr %s3391, 8
        %s3393 = scalar_lea.vmem %s5, %s3392
      $region60: #{residual_block_forward.4} parent=55 // pred_fallthru
        _
      // Predicated region
      $region61: #{residual_block_forward.4} parent=55 // pred_check
        %p3394 = pneg %p178
      $region62: #{residual_block_forward.4} parent=55 // pred_check_branch
        %3396 = sbr.rel (%p3394) target = $region64
      $region63: #{residual_block_forward.4} parent=55 // pred_region
        %p3397 = scmp.lt.s32.totalorder %s19, 1
        %s3398 = scalar_select %p3397, %s19, 1
        %s3399 = smul.addr %s3398, 2
        %s3400 = scalar_lea.vmem %s6, %s3399
      $region64: #{residual_block_forward.4} parent=55 // pred_fallthru
        _
    $region56: #{residual_block_forward.4} parent=5 // pred_fallthru
      _
  $region6: #{residual_block_forward.4} parent=0 // loop_footer
    %s17 = sadd.s32 1, %s13
  $region7: #{residual_block_forward.4} parent=0 // loop_footer_branch
    %12 = sbr.rel target = $region3
  $region8: #{residual_block_forward.4} parent=0 // loop_exit
    _

// kernel: residual_block_forward.3
$region0: #{residual_block_forward.3}
  #allocation0 [shape = 'u32[]', space=smem, size = 0x4, offset = 0x4, fixed_abs, tag = 'smem constant byte address 0x4 - core index']
  #allocation1 [shape = 'u32[144,128]{1,0:T(1,128)}', space=vmem, size = 0x12000, scoped, tag = 'internal scratch']
  #allocation2 [shape = 'f32[18,18,128]{2,1,0:T(8,128)}', space=vmem, size = 0x36000, scoped, tag = 'scratch operand']
  %s0 = inlined_call_operand.vmem [shape: f32[2,16,16,128], index: 0, kind: input, shape index: {}]
  %s1 = inlined_call_operand.vmem [shape: f32[3,3,128,128], index: 1, kind: input, shape index: {}]
  %s2 = inlined_call_operand.vmem [shape: f32[1,128], index: 2, kind: input, shape index: {}]
  %s3 = inlined_call_operand.vmem [shape: f32[2,16,16,128], index: 3, kind: output, shape index: {0}]
  %s4 = inlined_call_operand.vmem [shape: f32[2,2,128], index: 4, kind: output, shape index: {1}]
  %5 = xla_tuple %s3, %s4
  %s6 = sld [smem:[#allocation0]]
  $region57: #{residual_block_forward.3} parent=0
    _
  %s8 = ssub.s32 1, %s6
  %s9 = scalar_select 0, %s8, %s6
  loop: start=0, step=1, limit=4
  $region2: #{residual_block_forward.3} parent=0 // loop_pre_header
    _
  $region3: #{residual_block_forward.3} parent=0 // loop_header
    %s11 = sphi 0, %s15
    %p12 = scmp.ge.s32.totalorder %s11, 4
    %s21 = sphi 0, %s23
    %s24 = sphi 0, %s21
    %s25 = sphi 0, %s24
    %s41 = sphi 0, %s25
    %s45 = sphi 0, %s45
    %s47 = sphi 0, %s45
    %s48 = sphi 0, %s47
    %s62 = sphi 0, %s48
    %s66 = sphi 0, %s66
    %s68 = sphi 0, %s66
    %s69 = sphi 0, %s68
    %s83 = sphi 0, %s69
    %s89 = sphi 0, %s91
    %s92 = sphi 0, %s89
    %s93 = sphi 0, %s92
    %s109 = sphi 0, %s93
    %s115 = sphi 0, %s117
    %s118 = sphi 0, %s115
    %s119 = sphi 0, %s118
    %s135 = sphi 0, %s119
  $region4: #{residual_block_forward.3} parent=0 // loop_header_branch
    %14 = sbr.rel (%p12) target = $region8
  $region5: #{residual_block_forward.3} parent=0 // loop_body
    %s16 = ssub.s32 %s11, 1
    %s17 = ssub.s32 %s11, 2
    %s18 = sadd.s32 %s11, 1
    %s19 = ssub.s32 %s11, %s18
    %p20 = scmp.eq.s32.totalorder %s19, 0
    %s22 = sadd.s32 %s21, 1
    %s23 = scalar_select %p20, %s21, %s22
    %p26 = pneg %p20
    %p27 = scmp.eq.s32.totalorder %s11, 1
    %p28 = por %p26, %p27
    %p29 = scmp.ne.s32.totalorder %s21, %s24
    %p30 = scmp.eq.s32.totalorder %s11, 0
    %p31 = por %p29, %p30
    %p32 = scmp.ne.s32.totalorder %s21, %s24
    %p33 = scmp.eq.s32.totalorder %s16, 1
    %p34 = por %p32, %p33
    %p35 = scmp.ne.s32.totalorder %s24, %s25
    %p36 = scmp.eq.s32.totalorder %s16, 0
    %p37 = por %p35, %p36
    %p38 = scmp.ne.s32.totalorder %s24, %s25
    %p39 = scmp.eq.s32.totalorder %s17, 1
    %p40 = por %p38, %p39
    %p42 = scmp.ne.s32.totalorder %s25, %s41
    %p43 = scmp.eq.s32.totalorder %s17, 0
    %p44 = por %p42, %p43
    %s46 = sadd.s32 %s45, 1
    %p49 = scmp.eq.s32.totalorder %s11, 1
    %p50 = scmp.ne.s32.totalorder %s45, %s47
    %p51 = scmp.eq.s32.totalorder %s11, 0
    %p52 = por %p50, %p51
    %p53 = scmp.ne.s32.totalorder %s45, %s47
    %p54 = scmp.eq.s32.totalorder %s16, 1
    %p55 = por %p53, %p54
    %p56 = scmp.ne.s32.totalorder %s47, %s48
    %p57 = scmp.eq.s32.totalorder %s16, 0
    %p58 = por %p56, %p57
    %p59 = scmp.ne.s32.totalorder %s47, %s48
    %p60 = scmp.eq.s32.totalorder %s17, 1
    %p61 = por %p59, %p60
    %p63 = scmp.ne.s32.totalorder %s48, %s62
    %p64 = scmp.eq.s32.totalorder %s17, 0
    %p65 = por %p63, %p64
    %s67 = sadd.s32 %s66, 1
    %p70 = scmp.eq.s32.totalorder %s11, 1
    %p71 = scmp.ne.s32.totalorder %s66, %s68
    %p72 = scmp.eq.s32.totalorder %s11, 0
    %p73 = por %p71, %p72
    %p74 = scmp.ne.s32.totalorder %s66, %s68
    %p75 = scmp.eq.s32.totalorder %s16, 1
    %p76 = por %p74, %p75
    %p77 = scmp.ne.s32.totalorder %s68, %s69
    %p78 = scmp.eq.s32.totalorder %s16, 0
    %p79 = por %p77, %p78
    %p80 = scmp.ne.s32.totalorder %s68, %s69
    %p81 = scmp.eq.s32.totalorder %s17, 1
    %p82 = por %p80, %p81
    %p84 = scmp.ne.s32.totalorder %s69, %s83
    %p85 = scmp.eq.s32.totalorder %s17, 0
    %p86 = por %p84, %p85
    %s87 = ssub.s32 %s11, %s18
    %p88 = scmp.eq.s32.totalorder %s87, 0
    %s90 = sadd.s32 %s89, 1
    %s91 = scalar_select %p88, %s89, %s90
    %p94 = pneg %p88
    %p95 = scmp.eq.s32.totalorder %s11, 1
    %p96 = por %p94, %p95
    %p97 = scmp.ne.s32.totalorder %s89, %s92
    %p98 = scmp.eq.s32.totalorder %s11, 0
    %p99 = por %p97, %p98
    %p100 = scmp.ne.s32.totalorder %s89, %s92
    %p101 = scmp.eq.s32.totalorder %s16, 1
    %p102 = por %p100, %p101
    %p103 = scmp.ne.s32.totalorder %s92, %s93
    %p104 = scmp.eq.s32.totalorder %s16, 0
    %p105 = por %p103, %p104
    %p106 = scmp.ne.s32.totalorder %s92, %s93
    %p107 = scmp.eq.s32.totalorder %s17, 1
    %p108 = por %p106, %p107
    %p110 = scmp.ne.s32.totalorder %s93, %s109
    %p111 = scmp.eq.s32.totalorder %s17, 0
    %p112 = por %p110, %p111
    %s113 = ssub.s32 %s11, %s18
    %p114 = scmp.eq.s32.totalorder %s113, 0
    %s116 = sadd.s32 %s115, 1
    %s117 = scalar_select %p114, %s115, %s116
    %p120 = pneg %p114
    %p121 = scmp.eq.s32.totalorder %s11, 1
    %p122 = por %p120, %p121
    %p123 = scmp.ne.s32.totalorder %s115, %s118
    %p124 = scmp.eq.s32.totalorder %s11, 0
    %p125 = por %p123, %p124
    %p126 = scmp.ne.s32.totalorder %s115, %s118
    %p127 = scmp.eq.s32.totalorder %s16, 1
    %p128 = por %p126, %p127
    %p129 = scmp.ne.s32.totalorder %s118, %s119
    %p130 = scmp.eq.s32.totalorder %s16, 0
    %p131 = por %p129, %p130
    %p132 = scmp.ne.s32.totalorder %s118, %s119
    %p133 = scmp.eq.s32.totalorder %s17, 1
    %p134 = por %p132, %p133
    %p136 = scmp.ne.s32.totalorder %s119, %s135
    %p137 = scmp.eq.s32.totalorder %s17, 0
    %p138 = por %p136, %p137
    %p139 = scmp.le.s32.totalorder 1, %s11
    %p140 = scmp.lt.s32.totalorder %s11, 3
    %p141 = pnand %p139, %p140
    %p142 = pneg %p141
    // Predicated region
    $region9: #{residual_block_forward.3} parent=5 // pred_check
      _
    $region10: #{residual_block_forward.3} parent=5 // pred_check_branch
      %144 = sbr.rel (%p141) target = $region12
    $region11: #{residual_block_forward.3} parent=5 // pred_region
      %s145 = ssub.s32 %s11, 1
      // Predicated region
      $region13: #{residual_block_forward.3} parent=11 // pred_check
        %p146 = pneg %p58
      $region14: #{residual_block_forward.3} parent=11 // pred_check_branch
        %148 = sbr.rel (%p146) target = $region16
      $region15: #{residual_block_forward.3} parent=11 // pred_region
        _
      $region16: #{residual_block_forward.3} parent=11 // pred_fallthru
        _
      // Predicated region
      $region17: #{residual_block_forward.3} parent=11 // pred_check
        %p149 = pneg %p79
      $region18: #{residual_block_forward.3} parent=11 // pred_check_branch
        %151 = sbr.rel (%p149) target = $region20
      $region19: #{residual_block_forward.3} parent=11 // pred_region
        _
      $region20: #{residual_block_forward.3} parent=11 // pred_fallthru
        _
    $region12: #{residual_block_forward.3} parent=5 // pred_fallthru
      _
    %p152 = scmp.lt.s32.totalorder %s11, 2
    // Predicated region
    $region21: #{residual_block_forward.3} parent=5 // pred_check
      %p153 = pneg %p152
    $region22: #{residual_block_forward.3} parent=5 // pred_check_branch
      %155 = sbr.rel (%p153) target = $region24
    $region23: #{residual_block_forward.3} parent=5 // pred_region
      // Predicated region
      $region25: #{residual_block_forward.3} parent=23 // pred_check
        %p156 = pneg %p31
      $region26: #{residual_block_forward.3} parent=23 // pred_check_branch
        %158 = sbr.rel (%p156) target = $region28
      $region27: #{residual_block_forward.3} parent=23 // pred_region
        %p159 = scmp.lt.s32.totalorder %s11, 1
        %s160 = scalar_select %p159, %s11, 1
        %s161 = smul.addr %s160, 32
        %s162 = smul.addr %s161, 8
        %s163 = scalar_lea.vmem %s0, %s162
      $region28: #{residual_block_forward.3} parent=23 // pred_fallthru
        _
    $region24: #{residual_block_forward.3} parent=5 // pred_fallthru
      _
    %p164 = scmp.le.s32.totalorder 1, %s11
    %p165 = scmp.lt.s32.totalorder %s11, 3
    %p166 = pnand %p164, %p165
    %p167 = pneg %p166
    // Predicated region
    $region29: #{residual_block_forward.3} parent=5 // pred_check
      _
    $region30: #{residual_block_forward.3} parent=5 // pred_check_branch
      %169 = sbr.rel (%p166) target = $region32
    $region31: #{residual_block_forward.3} parent=5 // pred_region
      %s170 = ssub.s32 %s11, 1
      %p171 = scmp.lt.s32.totalorder %s16, 1
      %s172 = scalar_select %p171, %s16, 1
      %s173 = smul.addr %s172, 32
      %s174 = smul.addr %s173, 8
      %s175 = scalar_lea.vmem %s0, %s174
      %p176 = pneg %p37
      %p177 = pneg %p34
      %p178 = pneg %p58
      %p179 = pneg %p55
      %p180 = pneg %p79
      %p181 = pneg %p76
      %p182 = pneg %p105
      %p183 = pneg %p102
      %p184 = scmp.lt.s32.totalorder %s16, 1
      %s185 = scalar_select %p184, %s16, 1
      %s186 = smul.addr %s185, 32
      %s187 = smul.addr %s186, 8
      %s188 = scalar_lea.vmem %s3, %s187
      %p189 = pneg %p131
      %p190 = pneg %p128
      %p191 = scmp.lt.s32.totalorder %s16, 1
      %s192 = scalar_select %p191, %s16, 1
      %s193 = smul.addr %s192, 2
      %s194 = scalar_lea.vmem %s4, %s193
      %p195 = scmp.lt.s32.totalorder %s16, 1
      %s196 = scalar_select %p195, %s16, 1
      %s197 = smul.addr %s196, 32
      %s198 = smul.addr %s197, 8
      %s199 = scalar_lea.vmem %s0, %s198
      %p200 = scmp.lt.s32.totalorder %s16, 1
      %s201 = scalar_select %p200, %s16, 1
      %s202 = smul.addr %s201, 32
      %s203 = smul.addr %s202, 8
      %s204 = scalar_lea.vmem %s3, %s203
      %p205 = scmp.lt.s32.totalorder %s16, 1
      %s206 = scalar_select %p205, %s16, 1
      %s207 = smul.addr %s206, 2
      %s208 = scalar_lea.vmem %s4, %s207
      %v209 = vld [vmem:[%s199] sm:$0xff]
      %v210 = vld [vmem:[%s199 + $0x8] sm:$0xff]
      %v211 = vld [vmem:[%s199 + $0x10] sm:$0xff]
      %v212 = vld [vmem:[%s199 + $0x18] sm:$0xff]
      %v213 = vld [vmem:[%s199 + $0x20] sm:$0xff]
      %v214 = vld [vmem:[%s199 + $0x28] sm:$0xff]
      %v215 = vld [vmem:[%s199 + $0x30] sm:$0xff]
      %v216 = vld [vmem:[%s199 + $0x38] sm:$0xff]
      %v217 = vld [vmem:[%s199 + $0x40] sm:$0xff]
      %v218 = vld [vmem:[%s199 + $0x48] sm:$0xff]
      %v219 = vld [vmem:[%s199 + $0x50] sm:$0xff]
      %v220 = vld [vmem:[%s199 + $0x58] sm:$0xff]
      %v221 = vld [vmem:[%s199 + $0x60] sm:$0xff]
      %v222 = vld [vmem:[%s199 + $0x68] sm:$0xff]
      %v223 = vld [vmem:[%s199 + $0x70] sm:$0xff]
      %v224 = vld [vmem:[%s199 + $0x78] sm:$0xff]
      %v225 = vld [vmem:[%s199 + $0x80] sm:$0xff]
      %v226 = vld [vmem:[%s199 + $0x88] sm:$0xff]
      %v227 = vld [vmem:[%s199 + $0x90] sm:$0xff]
      %v228 = vld [vmem:[%s199 + $0x98] sm:$0xff]
      %v229 = vld [vmem:[%s199 + $0xa0] sm:$0xff]
      %v230 = vld [vmem:[%s199 + $0xa8] sm:$0xff]
      %v231 = vld [vmem:[%s199 + $0xb0] sm:$0xff]
      %v232 = vld [vmem:[%s199 + $0xb8] sm:$0xff]
      %v233 = vld [vmem:[%s199 + $0xc0] sm:$0xff]
      %v234 = vld [vmem:[%s199 + $0xc8] sm:$0xff]
      %v235 = vld [vmem:[%s199 + $0xd0] sm:$0xff]
      %v236 = vld [vmem:[%s199 + $0xd8] sm:$0xff]
      %v237 = vld [vmem:[%s199 + $0xe0] sm:$0xff]
      %v238 = vld [vmem:[%s199 + $0xe8] sm:$0xff]
      %v239 = vld [vmem:[%s199 + $0xf0] sm:$0xff]
      %v240 = vld [vmem:[%s199 + $0xf8] sm:$0xff]
      %p241 = scmp.eq.s32.totalorder %s16, 0
      // Predicated region
      $region33: #{residual_block_forward.3} parent=31 // pred_check
        %p242 = pneg %p241
      $region34: #{residual_block_forward.3} parent=31 // pred_check_branch
        %244 = sbr.rel (%p242) target = $region36
      $region35: #{residual_block_forward.3} parent=31 // pred_region
        %245 = vst [vmem:[#allocation2] sm:$0xff] 0.0
        %246 = vst [vmem:[#allocation2 + $0x8] sm:$0xff] 0.0
        %247 = vst [vmem:[#allocation2 + $0x10] sm:$0x3] 0.0
        %248 = vst [vmem:[#allocation2 + $0x18] sm:$0xff] 0.0
        %249 = vst [vmem:[#allocation2 + $0x20] sm:$0xff] 0.0
        %250 = vst [vmem:[#allocation2 + $0x28] sm:$0x3] 0.0
        %251 = vst [vmem:[#allocation2 + $0x30] sm:$0xff] 0.0
        %252 = vst [vmem:[#allocation2 + $0x38] sm:$0xff] 0.0
        %253 = vst [vmem:[#allocation2 + $0x40] sm:$0x3] 0.0
        %254 = vst [vmem:[#allocation2 + $0x48] sm:$0xff] 0.0
        %255 = vst [vmem:[#allocation2 + $0x50] sm:$0xff] 0.0
        %256 = vst [vmem:[#allocation2 + $0x58] sm:$0x3] 0.0
        %257 = vst [vmem:[#allocation2 + $0x60] sm:$0xff] 0.0
        %258 = vst [vmem:[#allocation2 + $0x68] sm:$0xff] 0.0
        %259 = vst [vmem:[#allocation2 + $0x70] sm:$0x3] 0.0
        %260 = vst [vmem:[#allocation2 + $0x78] sm:$0xff] 0.0
        %261 = vst [vmem:[#allocation2 + $0x80] sm:$0xff] 0.0
        %262 = vst [vmem:[#allocation2 + $0x88] sm:$0x3] 0.0
        %263 = vst [vmem:[#allocation2 + $0x90] sm:$0xff] 0.0
        %264 = vst [vmem:[#allocation2 + $0x98] sm:$0xff] 0.0
        %265 = vst [vmem:[#allocation2 + $0xa0] sm:$0x3] 0.0
        %266 = vst [vmem:[#allocation2 + $0xa8] sm:$0xff] 0.0
        %267 = vst [vmem:[#allocation2 + $0xb0] sm:$0xff] 0.0
        %268 = vst [vmem:[#allocation2 + $0xb8] sm:$0x3] 0.0
        %269 = vst [vmem:[#allocation2 + $0xc0] sm:$0xff] 0.0
        %270 = vst [vmem:[#allocation2 + $0xc8] sm:$0xff] 0.0
        %271 = vst [vmem:[#allocation2 + $0xd0] sm:$0x3] 0.0
        %272 = vst [vmem:[#allocation2 + $0xd8] sm:$0xff] 0.0
        %273 = vst [vmem:[#allocation2 + $0xe0] sm:$0xff] 0.0
        %274 = vst [vmem:[#allocation2 + $0xe8] sm:$0x3] 0.0
        %275 = vst [vmem:[#allocation2 + $0xf0] sm:$0xff] 0.0
        %276 = vst [vmem:[#allocation2 + $0xf8] sm:$0xff] 0.0
        %277 = vst [vmem:[#allocation2 + $0x100] sm:$0x3] 0.0
        %278 = vst [vmem:[#allocation2 + $0x108] sm:$0xff] 0.0
        %279 = vst [vmem:[#allocation2 + $0x110] sm:$0xff] 0.0
        %280 = vst [vmem:[#allocation2 + $0x118] sm:$0x3] 0.0
        %281 = vst [vmem:[#allocation2 + $0x120] sm:$0xff] 0.0
        %282 = vst [vmem:[#allocation2 + $0x128] sm:$0xff] 0.0
        %283 = vst [vmem:[#allocation2 + $0x130] sm:$0x3] 0.0
        %284 = vst [vmem:[#allocation2 + $0x138] sm:$0xff] 0.0
        %285 = vst [vmem:[#allocation2 + $0x140] sm:$0xff] 0.0
        %286 = vst [vmem:[#allocation2 + $0x148] sm:$0x3] 0.0
        %287 = vst [vmem:[#allocation2 + $0x150] sm:$0xff] 0.0
        %288 = vst [vmem:[#allocation2 + $0x158] sm:$0xff] 0.0
        %289 = vst [vmem:[#allocation2 + $0x160] sm:$0x3] 0.0
        %290 = vst [vmem:[#allocation2 + $0x168] sm:$0xff] 0.0
        %291 = vst [vmem:[#allocation2 + $0x170] sm:$0xff] 0.0
        %292 = vst [vmem:[#allocation2 + $0x178] sm:$0x3] 0.0
        %293 = vst [vmem:[#allocation2 + $0x180] sm:$0xff] 0.0
        %294 = vst [vmem:[#allocation2 + $0x188] sm:$0xff] 0.0
        %295 = vst [vmem:[#allocation2 + $0x190] sm:$0x3] 0.0
        %296 = vst [vmem:[#allocation2 + $0x198] sm:$0xff] 0.0
        %297 = vst [vmem:[#allocation2 + $0x1a0] sm:$0xff] 0.0
        %298 = vst [vmem:[#allocation2 + $0x1a8] sm:$0x3] 0.0
      $region36: #{residual_block_forward.3} parent=31 // pred_fallthru
        _
      %s299 = scalar_lea.vmem [#allocation2], 24
      %300 = vst [vmem:[%s299 + $0x1] sm:$0xff] %v209
      %301 = vst [vmem:[%s299 + $0x9] sm:$0xff] %v210
      %302 = vst [vmem:[%s299 + $0x19] sm:$0xff] %v211
      %303 = vst [vmem:[%s299 + $0x21] sm:$0xff] %v212
      %304 = vst [vmem:[%s299 + $0x31] sm:$0xff] %v213
      %305 = vst [vmem:[%s299 + $0x39] sm:$0xff] %v214
      %306 = vst [vmem:[%s299 + $0x49] sm:$0xff] %v215
      %307 = vst [vmem:[%s299 + $0x51] sm:$0xff] %v216
      %308 = vst [vmem:[%s299 + $0x61] sm:$0xff] %v217
      %309 = vst [vmem:[%s299 + $0x69] sm:$0xff] %v218
      %310 = vst [vmem:[%s299 + $0x79] sm:$0xff] %v219
      %311 = vst [vmem:[%s299 + $0x81] sm:$0xff] %v220
      %312 = vst [vmem:[%s299 + $0x91] sm:$0xff] %v221
      %313 = vst [vmem:[%s299 + $0x99] sm:$0xff] %v222
      %314 = vst [vmem:[%s299 + $0xa9] sm:$0xff] %v223
      %315 = vst [vmem:[%s299 + $0xb1] sm:$0xff] %v224
      %316 = vst [vmem:[%s299 + $0xc1] sm:$0xff] %v225
      %317 = vst [vmem:[%s299 + $0xc9] sm:$0xff] %v226
      %318 = vst [vmem:[%s299 + $0xd9] sm:$0xff] %v227
      %319 = vst [vmem:[%s299 + $0xe1] sm:$0xff] %v228
      %320 = vst [vmem:[%s299 + $0xf1] sm:$0xff] %v229
      %321 = vst [vmem:[%s299 + $0xf9] sm:$0xff] %v230
      %322 = vst [vmem:[%s299 + $0x109] sm:$0xff] %v231
      %323 = vst [vmem:[%s299 + $0x111] sm:$0xff] %v232
      %324 = vst [vmem:[%s299 + $0x121] sm:$0xff] %v233
      %325 = vst [vmem:[%s299 + $0x129] sm:$0xff] %v234
      %326 = vst [vmem:[%s299 + $0x139] sm:$0xff] %v235
      %327 = vst [vmem:[%s299 + $0x141] sm:$0xff] %v236
      %328 = vst [vmem:[%s299 + $0x151] sm:$0xff] %v237
      %329 = vst [vmem:[%s299 + $0x159] sm:$0xff] %v238
      %330 = vst [vmem:[%s299 + $0x169] sm:$0xff] %v239
      %331 = vst [vmem:[%s299 + $0x171] sm:$0xff] %v240
      %v332 = vld [vmem:[#allocation2] sm:$0xff]
      %v333 = vld [vmem:[#allocation2 + $0x8] sm:$0xff]
      %v334 = vld [vmem:[#allocation2 + $0x18] sm:$0xff]
      %v335 = vld [vmem:[#allocation2 + $0x20] sm:$0xff]
      %v336 = vld [vmem:[#allocation2 + $0x30] sm:$0xff]
      %v337 = vld [vmem:[#allocation2 + $0x38] sm:$0xff]
      %v338 = vld [vmem:[#allocation2 + $0x48] sm:$0xff]
      %v339 = vld [vmem:[#allocation2 + $0x50] sm:$0xff]
      %v340 = vld [vmem:[#allocation2 + $0x60] sm:$0xff]
      %v341 = vld [vmem:[#allocation2 + $0x68] sm:$0xff]
      %v342 = vld [vmem:[#allocation2 + $0x78] sm:$0xff]
      %v343 = vld [vmem:[#allocation2 + $0x80] sm:$0xff]
      %v344 = vld [vmem:[#allocation2 + $0x90] sm:$0xff]
      %v345 = vld [vmem:[#allocation2 + $0x98] sm:$0xff]
      %v346 = vld [vmem:[#allocation2 + $0xa8] sm:$0xff]
      %v347 = vld [vmem:[#allocation2 + $0xb0] sm:$0xff]
      %v348 = vld [vmem:[#allocation2 + $0xc0] sm:$0xff]
      %v349 = vld [vmem:[#allocation2 + $0xc8] sm:$0xff]
      %v350 = vld [vmem:[#allocation2 + $0xd8] sm:$0xff]
      %v351 = vld [vmem:[#allocation2 + $0xe0] sm:$0xff]
      %v352 = vld [vmem:[#allocation2 + $0xf0] sm:$0xff]
      %v353 = vld [vmem:[#allocation2 + $0xf8] sm:$0xff]
      %v354 = vld [vmem:[#allocation2 + $0x108] sm:$0xff]
      %v355 = vld [vmem:[#allocation2 + $0x110] sm:$0xff]
      %v356 = vld [vmem:[#allocation2 + $0x120] sm:$0xff]
      %v357 = vld [vmem:[#allocation2 + $0x128] sm:$0xff]
      %v358 = vld [vmem:[#allocation2 + $0x138] sm:$0xff]
      %v359 = vld [vmem:[#allocation2 + $0x140] sm:$0xff]
      %v360 = vld [vmem:[#allocation2 + $0x150] sm:$0xff]
      %v361 = vld [vmem:[#allocation2 + $0x158] sm:$0xff]
      %v362 = vld [vmem:[#allocation2 + $0x168] sm:$0xff]
      %v363 = vld [vmem:[#allocation2 + $0x170] sm:$0xff]
      %v364 = vld [vmem:[%s1] sm:$0xff]
      %v365 = vld [vmem:[%s1 + $0x8] sm:$0xff]
      %v366 = vld [vmem:[%s1 + $0x10] sm:$0xff]
      %v367 = vld [vmem:[%s1 + $0x18] sm:$0xff]
      %v368 = vld [vmem:[%s1 + $0x20] sm:$0xff]
      %v369 = vld [vmem:[%s1 + $0x28] sm:$0xff]
      %v370 = vld [vmem:[%s1 + $0x30] sm:$0xff]
      %v371 = vld [vmem:[%s1 + $0x38] sm:$0xff]
      %v372 = vld [vmem:[%s1 + $0x40] sm:$0xff]
      %v373 = vld [vmem:[%s1 + $0x48] sm:$0xff]
      %v374 = vld [vmem:[%s1 + $0x50] sm:$0xff]
      %v375 = vld [vmem:[%s1 + $0x58] sm:$0xff]
      %v376 = vld [vmem:[%s1 + $0x60] sm:$0xff]
      %v377 = vld [vmem:[%s1 + $0x68] sm:$0xff]
      %v378 = vld [vmem:[%s1 + $0x70] sm:$0xff]
      %v379 = vld [vmem:[%s1 + $0x78] sm:$0xff]
      %v380 = vld [vmem:[#allocation2 + $0x1] sm:$0xff]
      %v381 = vld [vmem:[#allocation2 + $0x9] sm:$0xff]
      %v382 = vld [vmem:[#allocation2 + $0x19] sm:$0xff]
      %v383 = vld [vmem:[#allocation2 + $0x21] sm:$0xff]
      %v384 = vld [vmem:[#allocation2 + $0x31] sm:$0xff]
      %v385 = vld [vmem:[#allocation2 + $0x39] sm:$0xff]
      %v386 = vld [vmem:[#allocation2 + $0x49] sm:$0xff]
      %v387 = vld [vmem:[#allocation2 + $0x51] sm:$0xff]
      %v388 = vld [vmem:[#allocation2 + $0x61] sm:$0xff]
      %v389 = vld [vmem:[#allocation2 + $0x69] sm:$0xff]
      %v390 = vld [vmem:[#allocation2 + $0x79] sm:$0xff]
      %v391 = vld [vmem:[#allocation2 + $0x81] sm:$0xff]
      %v392 = vld [vmem:[#allocation2 + $0x91] sm:$0xff]
      %v393 = vld [vmem:[#allocation2 + $0x99] sm:$0xff]
      %v394 = vld [vmem:[#allocation2 + $0xa9] sm:$0xff]
      %v395 = vld [vmem:[#allocation2 + $0xb1] sm:$0xff]
      %v396 = vld [vmem:[#allocation2 + $0xc1] sm:$0xff]
      %v397 = vld [vmem:[#allocation2 + $0xc9] sm:$0xff]
      %v398 = vld [vmem:[#allocation2 + $0xd9] sm:$0xff]
      %v399 = vld [vmem:[#allocation2 + $0xe1] sm:$0xff]
      %v400 = vld [vmem:[#allocation2 + $0xf1] sm:$0xff]
      %v401 = vld [vmem:[#allocation2 + $0xf9] sm:$0xff]
      %v402 = vld [vmem:[#allocation2 + $0x109] sm:$0xff]
      %v403 = vld [vmem:[#allocation2 + $0x111] sm:$0xff]
      %v404 = vld [vmem:[#allocation2 + $0x121] sm:$0xff]
      %v405 = vld [vmem:[#allocation2 + $0x129] sm:$0xff]
      %v406 = vld [vmem:[#allocation2 + $0x139] sm:$0xff]
      %v407 = vld [vmem:[#allocation2 + $0x141] sm:$0xff]
      %v408 = vld [vmem:[#allocation2 + $0x151] sm:$0xff]
      %v409 = vld [vmem:[#allocation2 + $0x159] sm:$0xff]
      %v410 = vld [vmem:[#allocation2 + $0x169] sm:$0xff]
      %v411 = vld [vmem:[#allocation2 + $0x171] sm:$0xff]
      %s412 = scalar_lea.vmem %s1, 128
      %v413 = vld [vmem:[%s412] sm:$0xff]
      %v414 = vld [vmem:[%s412 + $0x8] sm:$0xff]
      %v415 = vld [vmem:[%s412 + $0x10] sm:$0xff]
      %v416 = vld [vmem:[%s412 + $0x18] sm:$0xff]
      %v417 = vld [vmem:[%s412 + $0x20] sm:$0xff]
      %v418 = vld [vmem:[%s412 + $0x28] sm:$0xff]
      %v419 = vld [vmem:[%s412 + $0x30] sm:$0xff]
      %v420 = vld [vmem:[%s412 + $0x38] sm:$0xff]
      %v421 = vld [vmem:[%s412 + $0x40] sm:$0xff]
      %v422 = vld [vmem:[%s412 + $0x48] sm:$0xff]
      %v423 = vld [vmem:[%s412 + $0x50] sm:$0xff]
      %v424 = vld [vmem:[%s412 + $0x58] sm:$0xff]
      %v425 = vld [vmem:[%s412 + $0x60] sm:$0xff]
      %v426 = vld [vmem:[%s412 + $0x68] sm:$0xff]
      %v427 = vld [vmem:[%s412 + $0x70] sm:$0xff]
      %v428 = vld [vmem:[%s412 + $0x78] sm:$0xff]
      %429 = vmatprep.subr.mxu0 0.0
      %430 = vmatpush1.msra.mxu0 %v413
      %431 = vmatprep.subr.mxu0 0.0
      %432 = vmatpush1.msra.mxu0 %v414
      %433 = vmatprep.subr.mxu0 0.0
      %434 = vmatpush1.msra.mxu0 %v415
      %435 = vmatprep.subr.mxu0 0.0
      %436 = vmatpush1.msra.mxu0 %v416
      %437 = vmatprep.subr.mxu0 0.0
      %438 = vmatpush1.msra.mxu0 %v417
      %439 = vmatprep.subr.mxu0 0.0
      %440 = vmatpush1.msra.mxu0 %v418
      %441 = vmatprep.subr.mxu0 0.0
      %442 = vmatpush1.msra.mxu0 %v419
      %443 = vmatprep.subr.mxu0 0.0
      %444 = vmatpush1.msra.mxu0 %v420
      %445 = vmatprep.subr.mxu0 0.0
      %446 = vmatpush1.msra.mxu0 %v421
      %447 = vmatprep.subr.mxu0 0.0
      %448 = vmatpush1.msra.mxu0 %v422
      %449 = vmatprep.subr.mxu0 0.0
      %450 = vmatpush1.msra.mxu0 %v423
      %451 = vmatprep.subr.mxu0 0.0
      %452 = vmatpush1.msra.mxu0 %v424
      %453 = vmatprep.subr.mxu0 0.0
      %454 = vmatpush1.msra.mxu0 %v425
      %455 = vmatprep.subr.mxu0 0.0
      %456 = vmatpush1.msra.mxu0 %v426
      %457 = vmatprep.subr.mxu0 0.0
      %458 = vmatpush1.msra.mxu0 %v427
      %459 = vmatprep.subr.mxu0 0.0
      %460 = vmatpush1.msra.mxu0 %v428
      %461 = vmatprep.subr.mxu0 0.0
      %462 = vmatpush1.msra.mxu0 0.0
      %463 = vmatprep.subr.mxu0 0.0
      %464 = vmatpush1.msra.mxu0 0.0
      %465 = vmatprep.subr.mxu0 0.0
      %466 = vmatpush1.msra.mxu0 0.0
      %467 = vmatprep.subr.mxu0 0.0
      %468 = vmatpush1.msra.mxu0 0.0
      %469 = vmatprep.subr.mxu0 0.0
      %470 = vmatpush1.msra.mxu0 0.0
      %471 = vmatprep.subr.mxu0 0.0
      %472 = vmatpush1.msra.mxu0 0.0
      %473 = vmatprep.subr.mxu0 0.0
      %474 = vmatpush1.msra.mxu0 0.0
      %475 = vmatprep.subr.mxu0 0.0
      %476 = vmatpush1.msra.mxu0 0.0
      %477 = vmatprep.subr.mxu0 0.0
      %478 = vmatpush1.msra.mxu0 0.0
      %479 = vmatprep.subr.mxu0 0.0
      %480 = vmatpush1.msra.mxu0 0.0
      %481 = vmatprep.subr.mxu0 0.0
      %482 = vmatpush1.msra.mxu0 0.0
      %483 = vmatprep.subr.mxu0 0.0
      %484 = vmatpush1.msra.mxu0 0.0
      %485 = vmatprep.subr.mxu0 0.0
      %486 = vmatpush1.msra.mxu0 0.0
      %487 = vmatprep.subr.mxu0 0.0
      %488 = vmatpush1.msra.mxu0 0.0
      %489 = vmatprep.subr.mxu0 0.0
      %490 = vmatpush1.msra.mxu0 0.0
      %491 = vmatprep.subr.mxu0 0.0
      %492 = vmatpush1.msra.mxu0 0.0
      %493 = vmatprep.mubr.f32.mxu0 0.0
      %494 = vmatmul.mubr.f32.gmra.mrb[0].mxu0 %v380
      %v495 = vpop.f32.mrb[0].mxu0
      %v496 = vadd.f32 0.0, %v495
      %v497 = vpop.f32.mrb[0].mxu0
      %498 = vmatprep.mubr.f32.mxu0 0.0
      %499 = vmatmul.mubr.f32.gmra.mrb[0].mxu0 %v381
      %v500 = vpop.f32.mrb[0].mxu0
      %v501 = vadd.f32 0.0, %v500
      %v502 = vpop.f32.mrb[0].mxu0
      %503 = vmatprep.mubr.f32.mxu0 0.0
      %504 = vmatmul.mubr.f32.gmra.mrb[0].mxu0 %v382
      %v505 = vpop.f32.mrb[0].mxu0
      %v506 = vadd.f32 0.0, %v505
      %v507 = vpop.f32.mrb[0].mxu0
      %508 = vmatprep.mubr.f32.mxu0 0.0
      %509 = vmatmul.mubr.f32.gmra.mrb[0].mxu0 %v383
      %v510 = vpop.f32.mrb[0].mxu0
      %v511 = vadd.f32 0.0, %v510
      %v512 = vpop.f32.mrb[0].mxu0
      %513 = vmatprep.mubr.f32.mxu0 0.0
      %514 = vmatmul.mubr.f32.gmra.mrb[0].mxu0 %v384
      %v515 = vpop.f32.mrb[0].mxu0
      %v516 = vadd.f32 0.0, %v515
      %v517 = vpop.f32.mrb[0].mxu0
      %518 = vmatprep.mubr.f32.mxu0 0.0
      %519 = vmatmul.mubr.f32.gmra.mrb[0].mxu0 %v385
      %v520 = vpop.f32.mrb[0].mxu0
      %v521 = vadd.f32 0.0, %v520
      %v522 = vpop.f32.mrb[0].mxu0
      %523 = vmatprep.mubr.f32.mxu0 0.0
      %524 = vmatmul.mubr.f32.gmra.mrb[0].mxu0 %v386
      %v525 = vpop.f32.mrb[0].mxu0
      %v526 = vadd.f32 0.0, %v525
      %v527 = vpop.f32.mrb[0].mxu0
      %528 = vmatprep.mubr.f32.mxu0 0.0
      %529 = vmatmul.mubr.f32.gmra.mrb[0].mxu0 %v387
      %v530 = vpop.f32.mrb[0].mxu0
      %v531 = vadd.f32 0.0, %v530
      %v532 = vpop.f32.mrb[0].mxu0
      %533 = vmatprep.mubr.f32.mxu0 0.0
      %534 = vmatmul.mubr.f32.gmra.mrb[0].mxu0 %v388
      %v535 = vpop.f32.mrb[0].mxu0
      %v536 = vadd.f32 0.0, %v535
      %v537 = vpop.f32.mrb[0].mxu0
      %538 = vmatprep.mubr.f32.mxu0 0.0
      %539 = vmatmul.mubr.f32.gmra.mrb[0].mxu0 %v389
      %v540 = vpop.f32.mrb[0].mxu0
      %v541 = vadd.f32 0.0, %v540
      %v542 = vpop.f32.mrb[0].mxu0
      %543 = vmatprep.mubr.f32.mxu0 0.0
      %544 = vmatmul.mubr.f32.gmra.mrb[0].mxu0 %v390
      %v545 = vpop.f32.mrb[0].mxu0
      %v546 = vadd.f32 0.0, %v545
      %v547 = vpop.f32.mrb[0].mxu0
      %548 = vmatprep.mubr.f32.mxu0 0.0
      %549 = vmatmul.mubr.f32.gmra.mrb[0].mxu0 %v391
      %v550 = vpop.f32.mrb[0].mxu0
      %v551 = vadd.f32 0.0, %v550
      %v552 = vpop.f32.mrb[0].mxu0
      %553 = vmatprep.mubr.f32.mxu0 0.0
      %554 = vmatmul.mubr.f32.gmra.mrb[0].mxu0 %v392
      %v555 = vpop.f32.mrb[0].mxu0
      %v556 = vadd.f32 0.0, %v555
      %v557 = vpop.f32.mrb[0].mxu0
      %558 = vmatprep.mubr.f32.mxu0 0.0
      %559 = vmatmul.mubr.f32.gmra.mrb[0].mxu0 %v393
      %v560 = vpop.f32.mrb[0].mxu0
      %v561 = vadd.f32 0.0, %v560
      %v562 = vpop.f32.mrb[0].mxu0
      %563 = vmatprep.mubr.f32.mxu0 0.0
      %564 = vmatmul.mubr.f32.gmra.mrb[0].mxu0 %v394
      %v565 = vpop.f32.mrb[0].mxu0
      %v566 = vadd.f32 0.0, %v565
      %v567 = vpop.f32.mrb[0].mxu0
      %568 = vmatprep.mubr.f32.mxu0 0.0
      %569 = vmatmul.mubr.f32.gmra.mrb[0].mxu0 %v395
      %v570 = vpop.f32.mrb[0].mxu0
      %v571 = vadd.f32 0.0, %v570
      %v572 = vpop.f32.mrb[0].mxu0
      %573 = vmatprep.mubr.f32.mxu0 0.0
      %574 = vmatmul.mubr.f32.gmra.mrb[0].mxu0 %v396
      %v575 = vpop.f32.mrb[0].mxu0
      %v576 = vadd.f32 0.0, %v575
      %v577 = vpop.f32.mrb[0].mxu0
      %578 = vmatprep.mubr.f32.mxu0 0.0
      %579 = vmatmul.mubr.f32.gmra.mrb[0].mxu0 %v397
      %v580 = vpop.f32.mrb[0].mxu0
      %v581 = vadd.f32 0.0, %v580
      %v582 = vpop.f32.mrb[0].mxu0
      %583 = vmatprep.mubr.f32.mxu0 0.0
      %584 = vmatmul.mubr.f32.gmra.mrb[0].mxu0 %v398
      %v585 = vpop.f32.mrb[0].mxu0
      %v586 = vadd.f32 0.0, %v585
      %v587 = vpop.f32.mrb[0].mxu0
      %588 = vmatprep.mubr.f32.mxu0 0.0
      %589 = vmatmul.mubr.f32.gmra.mrb[0].mxu0 %v399
      %v590 = vpop.f32.mrb[0].mxu0
      %v591 = vadd.f32 0.0, %v590
      %v592 = vpop.f32.mrb[0].mxu0
      %593 = vmatprep.mubr.f32.mxu0 0.0
      %594 = vmatmul.mubr.f32.gmra.mrb[0].mxu0 %v400
      %v595 = vpop.f32.mrb[0].mxu0
      %v596 = vadd.f32 0.0, %v595
      %v597 = vpop.f32.mrb[0].mxu0
      %598 = vmatprep.mubr.f32.mxu0 0.0
      %599 = vmatmul.mubr.f32.gmra.mrb[0].mxu0 %v401
      %v600 = vpop.f32.mrb[0].mxu0
      %v601 = vadd.f32 0.0, %v600
      %v602 = vpop.f32.mrb[0].mxu0
      %603 = vmatprep.mubr.f32.mxu0 0.0
      %604 = vmatmul.mubr.f32.gmra.mrb[0].mxu0 %v402
      %v605 = vpop.f32.mrb[0].mxu0
      %v606 = vadd.f32 0.0, %v605
      %v607 = vpop.f32.mrb[0].mxu0
      %608 = vmatprep.mubr.f32.mxu0 0.0
      %609 = vmatmul.mubr.f32.gmra.mrb[0].mxu0 %v403
      %v610 = vpop.f32.mrb[0].mxu0
      %v611 = vadd.f32 0.0, %v610
      %v612 = vpop.f32.mrb[0].mxu0
      %613 = vmatprep.mubr.f32.mxu0 0.0
      %614 = vmatmul.mubr.f32.gmra.mrb[0].mxu0 %v404
      %v615 = vpop.f32.mrb[0].mxu0
      %v616 = vadd.f32 0.0, %v615
      %v617 = vpop.f32.mrb[0].mxu0
      %618 = vmatprep.mubr.f32.mxu0 0.0
      %619 = vmatmul.mubr.f32.gmra.mrb[0].mxu0 %v405
      %v620 = vpop.f32.mrb[0].mxu0
      %v621 = vadd.f32 0.0, %v620
      %v622 = vpop.f32.mrb[0].mxu0
      %623 = vmatprep.mubr.f32.mxu0 0.0
      %624 = vmatmul.mubr.f32.gmra.mrb[0].mxu0 %v406
      %v625 = vpop.f32.mrb[0].mxu0
      %v626 = vadd.f32 0.0, %v625
      %v627 = vpop.f32.mrb[0].mxu0
      %628 = vmatprep.mubr.f32.mxu0 0.0
      %629 = vmatmul.mubr.f32.gmra.mrb[0].mxu0 %v407
      %v630 = vpop.f32.mrb[0].mxu0
      %v631 = vadd.f32 0.0, %v630
      %v632 = vpop.f32.mrb[0].mxu0
      %633 = vmatprep.mubr.f32.mxu0 0.0
      %634 = vmatmul.mubr.f32.gmra.mrb[0].mxu0 %v408
      %v635 = vpop.f32.mrb[0].mxu0
      %v636 = vadd.f32 0.0, %v635
      %v637 = vpop.f32.mrb[0].mxu0
      %638 = vmatprep.mubr.f32.mxu0 0.0
      %639 = vmatmul.mubr.f32.gmra.mrb[0].mxu0 %v409
      %v640 = vpop.f32.mrb[0].mxu0
      %v641 = vadd.f32 0.0, %v640
      %v642 = vpop.f32.mrb[0].mxu0
      %643 = vmatprep.mubr.f32.mxu0 0.0
      %644 = vmatmul.mubr.f32.gmra.mrb[0].mxu0 %v410
      %v645 = vpop.f32.mrb[0].mxu0
      %v646 = vadd.f32 0.0, %v645
      %v647 = vpop.f32.mrb[0].mxu0
      %648 = vmatprep.mubr.f32.mxu0 0.0
      %649 = vmatmul.mubr.f32.gmra.mrb[0].mxu0 %v411
      %v650 = vpop.f32.mrb[0].mxu0
      %v651 = vadd.f32 0.0, %v650
      %v652 = vpop.f32.mrb[0].mxu0
      %653 = vdwg.mxu0
      %654 = vmatprep.subr.mxu0 0.0
      %655 = vmatpush1.msra.mxu0 %v364
      %656 = vmatprep.subr.mxu0 0.0
      %657 = vmatpush1.msra.mxu0 %v365
      %658 = vmatprep.subr.mxu0 0.0
      %659 = vmatpush1.msra.mxu0 %v366
      %660 = vmatprep.subr.mxu0 0.0
      %661 = vmatpush1.msra.mxu0 %v367
      %662 = vmatprep.subr.mxu0 0.0
      %663 = vmatpush1.msra.mxu0 %v368
      %664 = vmatprep.subr.mxu0 0.0
      %665 = vmatpush1.msra.mxu0 %v369
      %666 = vmatprep.subr.mxu0 0.0
      %667 = vmatpush1.msra.mxu0 %v370
      %668 = vmatprep.subr.mxu0 0.0
      %669 = vmatpush1.msra.mxu0 %v371
      %670 = vmatprep.subr.mxu0 0.0
      %671 = vmatpush1.msra.mxu0 %v372
      %672 = vmatprep.subr.mxu0 0.0
      %673 = vmatpush1.msra.mxu0 %v373
      %674 = vmatprep.subr.mxu0 0.0
      %675 = vmatpush1.msra.mxu0 %v374
      %676 = vmatprep.subr.mxu0 0.0
      %677 = vmatpush1.msra.mxu0 %v375
      %678 = vmatprep.subr.mxu0 0.0
      %679 = vmatpush1.msra.mxu0 %v376
      %680 = vmatprep.subr.mxu0 0.0
      %681 = vmatpush1.msra.mxu0 %v377
      %682 = vmatprep.subr.mxu0 0.0
      %683 = vmatpush1.msra.mxu0 %v378
      %684 = vmatprep.subr.mxu0 0.0
      %685 = vmatpush1.msra.mxu0 %v379
      %686 = vmatprep.subr.mxu0 0.0
      %687 = vmatpush1.msra.mxu0 0.0
      %688 = vmatprep.subr.mxu0 0.0
      %689 = vmatpush1.msra.mxu0 0.0
      %690 = vmatprep.subr.mxu0 0.0
      %691 = vmatpush1.msra.mxu0 0.0
      %692 = vmatprep.subr.mxu0 0.0
      %693 = vmatpush1.msra.mxu0 0.0
      %694 = vmatprep.subr.mxu0 0.0
      %695 = vmatpush1.msra.mxu0 0.0
      %696 = vmatprep.subr.mxu0 0.0
      %697 = vmatpush1.msra.mxu0 0.0
      %698 = vmatprep.subr.mxu0 0.0
      %699 = vmatpush1.msra.mxu0 0.0
      %700 = vmatprep.subr.mxu0 0.0
      %701 = vmatpush1.msra.mxu0 0.0
      %702 = vmatprep.subr.mxu0 0.0
      %703 = vmatpush1.msra.mxu0 0.0
      %704 = vmatprep.subr.mxu0 0.0
      %705 = vmatpush1.msra.mxu0 0.0
      %706 = vmatprep.subr.mxu0 0.0
      %707 = vmatpush1.msra.mxu0 0.0
      %708 = vmatprep.subr.mxu0 0.0
      %709 = vmatpush1.msra.mxu0 0.0
      %710 = vmatprep.subr.mxu0 0.0
      %711 = vmatpush1.msra.mxu0 0.0
      %712 = vmatprep.subr.mxu0 0.0
      %713 = vmatpush1.msra.mxu0 0.0
      %714 = vmatprep.subr.mxu0 0.0
      %715 = vmatpush1.msra.mxu0 0.0
      %716 = vmatprep.subr.mxu0 0.0
      %717 = vmatpush1.msra.mxu0 0.0
      %718 = vmatprep.mubr.f32.mxu0 0.0
      %719 = vmatmul.mubr.f32.gmra.mrb[0].mxu0 %v332
      %v720 = vpop.f32.mrb[0].mxu0
      %v721 = vadd.f32 %v496, %v720
      %v722 = vpop.f32.mrb[0].mxu0
      %723 = vmatprep.mubr.f32.mxu0 0.0
      %724 = vmatmul.mubr.f32.gmra.mrb[0].mxu0 %v333
      %v725 = vpop.f32.mrb[0].mxu0
      %v726 = vadd.f32 %v501, %v725
      %v727 = vpop.f32.mrb[0].mxu0
      %728 = vmatprep.mubr.f32.mxu0 0.0
      %729 = vmatmul.mubr.f32.gmra.mrb[0].mxu0 %v334
      %v730 = vpop.f32.mrb[0].mxu0
      %v731 = vadd.f32 %v506, %v730
      %v732 = vpop.f32.mrb[0].mxu0
      %733 = vmatprep.mubr.f32.mxu0 0.0
      %734 = vmatmul.mubr.f32.gmra.mrb[0].mxu0 %v335
      %v735 = vpop.f32.mrb[0].mxu0
      %v736 = vadd.f32 %v511, %v735
      %v737 = vpop.f32.mrb[0].mxu0
      %738 = vmatprep.mubr.f32.mxu0 0.0
      %739 = vmatmul.mubr.f32.gmra.mrb[0].mxu0 %v336
      %v740 = vpop.f32.mrb[0].mxu0
      %v741 = vadd.f32 %v516, %v740
      %v742 = vpop.f32.mrb[0].mxu0
      %743 = vmatprep.mubr.f32.mxu0 0.0
      %744 = vmatmul.mubr.f32.gmra.mrb[0].mxu0 %v337
      %v745 = vpop.f32.mrb[0].mxu0
      %v746 = vadd.f32 %v521, %v745
      %v747 = vpop.f32.mrb[0].mxu0
      %748 = vmatprep.mubr.f32.mxu0 0.0
      %749 = vmatmul.mubr.f32.gmra.mrb[0].mxu0 %v338
      %v750 = vpop.f32.mrb[0].mxu0
      %v751 = vadd.f32 %v526, %v750
      %v752 = vpop.f32.mrb[0].mxu0
      %753 = vmatprep.mubr.f32.mxu0 0.0
      %754 = vmatmul.mubr.f32.gmra.mrb[0].mxu0 %v339
      %v755 = vpop.f32.mrb[0].mxu0
      %v756 = vadd.f32 %v531, %v755
      %v757 = vpop.f32.mrb[0].mxu0
      %758 = vmatprep.mubr.f32.mxu0 0.0
      %759 = vmatmul.mubr.f32.gmra.mrb[0].mxu0 %v340
      %v760 = vpop.f32.mrb[0].mxu0
      %v761 = vadd.f32 %v536, %v760
      %v762 = vpop.f32.mrb[0].mxu0
      %763 = vmatprep.mubr.f32.mxu0 0.0
      %764 = vmatmul.mubr.f32.gmra.mrb[0].mxu0 %v341
      %v765 = vpop.f32.mrb[0].mxu0
      %v766 = vadd.f32 %v541, %v765
      %v767 = vpop.f32.mrb[0].mxu0
      %768 = vmatprep.mubr.f32.mxu0 0.0
      %769 = vmatmul.mubr.f32.gmra.mrb[0].mxu0 %v342
      %v770 = vpop.f32.mrb[0].mxu0
      %v771 = vadd.f32 %v546, %v770
      %v772 = vpop.f32.mrb[0].mxu0
      %773 = vmatprep.mubr.f32.mxu0 0.0
      %774 = vmatmul.mubr.f32.gmra.mrb[0].mxu0 %v343
      %v775 = vpop.f32.mrb[0].mxu0
      %v776 = vadd.f32 %v551, %v775
      %v777 = vpop.f32.mrb[0].mxu0
      %778 = vmatprep.mubr.f32.mxu0 0.0
      %779 = vmatmul.mubr.f32.gmra.mrb[0].mxu0 %v344
      %v780 = vpop.f32.mrb[0].mxu0
      %v781 = vadd.f32 %v556, %v780
      %v782 = vpop.f32.mrb[0].mxu0
      %783 = vmatprep.mubr.f32.mxu0 0.0
      %784 = vmatmul.mubr.f32.gmra.mrb[0].mxu0 %v345
      %v785 = vpop.f32.mrb[0].mxu0
      %v786 = vadd.f32 %v561, %v785
      %v787 = vpop.f32.mrb[0].mxu0
      %788 = vmatprep.mubr.f32.mxu0 0.0
      %789 = vmatmul.mubr.f32.gmra.mrb[0].mxu0 %v346
      %v790 = vpop.f32.mrb[0].mxu0
      %v791 = vadd.f32 %v566, %v790
      %v792 = vpop.f32.mrb[0].mxu0
      %793 = vmatprep.mubr.f32.mxu0 0.0
      %794 = vmatmul.mubr.f32.gmra.mrb[0].mxu0 %v347
      %v795 = vpop.f32.mrb[0].mxu0
      %v796 = vadd.f32 %v571, %v795
      %v797 = vpop.f32.mrb[0].mxu0
      %798 = vmatprep.mubr.f32.mxu0 0.0
      %799 = vmatmul.mubr.f32.gmra.mrb[0].mxu0 %v348
      %v800 = vpop.f32.mrb[0].mxu0
      %v801 = vadd.f32 %v576, %v800
      %v802 = vpop.f32.mrb[0].mxu0
      %803 = vmatprep.mubr.f32.mxu0 0.0
      %804 = vmatmul.mubr.f32.gmra.mrb[0].mxu0 %v349
      %v805 = vpop.f32.mrb[0].mxu0
      %v806 = vadd.f32 %v581, %v805
      %v807 = vpop.f32.mrb[0].mxu0
      %808 = vmatprep.mubr.f32.mxu0 0.0
      %809 = vmatmul.mubr.f32.gmra.mrb[0].mxu0 %v350
      %v810 = vpop.f32.mrb[0].mxu0
      %v811 = vadd.f32 %v586, %v810
      %v812 = vpop.f32.mrb[0].mxu0
      %813 = vmatprep.mubr.f32.mxu0 0.0
      %814 = vmatmul.mubr.f32.gmra.mrb[0].mxu0 %v351
      %v815 = vpop.f32.mrb[0].mxu0
      %v816 = vadd.f32 %v591, %v815
      %v817 = vpop.f32.mrb[0].mxu0
      %818 = vmatprep.mubr.f32.mxu0 0.0
      %819 = vmatmul.mubr.f32.gmra.mrb[0].mxu0 %v352
      %v820 = vpop.f32.mrb[0].mxu0
      %v821 = vadd.f32 %v596, %v820
      %v822 = vpop.f32.mrb[0].mxu0
      %823 = vmatprep.mubr.f32.mxu0 0.0
      %824 = vmatmul.mubr.f32.gmra.mrb[0].mxu0 %v353
      %v825 = vpop.f32.mrb[0].mxu0
      %v826 = vadd.f32 %v601, %v825
      %v827 = vpop.f32.mrb[0].mxu0
      %828 = vmatprep.mubr.f32.mxu0 0.0
      %829 = vmatmul.mubr.f32.gmra.mrb[0].mxu0 %v354
      %v830 = vpop.f32.mrb[0].mxu0
      %v831 = vadd.f32 %v606, %v830
      %v832 = vpop.f32.mrb[0].mxu0
      %833 = vmatprep.mubr.f32.mxu0 0.0
      %834 = vmatmul.mubr.f32.gmra.mrb[0].mxu0 %v355
      %v835 = vpop.f32.mrb[0].mxu0
      %v836 = vadd.f32 %v611, %v835
      %v837 = vpop.f32.mrb[0].mxu0
      %838 = vmatprep.mubr.f32.mxu0 0.0
      %839 = vmatmul.mubr.f32.gmra.mrb[0].mxu0 %v356
      %v840 = vpop.f32.mrb[0].mxu0
      %v841 = vadd.f32 %v616, %v840
      %v842 = vpop.f32.mrb[0].mxu0
      %843 = vmatprep.mubr.f32.mxu0 0.0
      %844 = vmatmul.mubr.f32.gmra.mrb[0].mxu0 %v357
      %v845 = vpop.f32.mrb[0].mxu0
      %v846 = vadd.f32 %v621, %v845
      %v847 = vpop.f32.mrb[0].mxu0
      %848 = vmatprep.mubr.f32.mxu0 0.0
      %849 = vmatmul.mubr.f32.gmra.mrb[0].mxu0 %v358
      %v850 = vpop.f32.mrb[0].mxu0
      %v851 = vadd.f32 %v626, %v850
      %v852 = vpop.f32.mrb[0].mxu0
      %853 = vmatprep.mubr.f32.mxu0 0.0
      %854 = vmatmul.mubr.f32.gmra.mrb[0].mxu0 %v359
      %v855 = vpop.f32.mrb[0].mxu0
      %v856 = vadd.f32 %v631, %v855
      %v857 = vpop.f32.mrb[0].mxu0
      %858 = vmatprep.mubr.f32.mxu0 0.0
      %859 = vmatmul.mubr.f32.gmra.mrb[0].mxu0 %v360
      %v860 = vpop.f32.mrb[0].mxu0
      %v861 = vadd.f32 %v636, %v860
      %v862 = vpop.f32.mrb[0].mxu0
      %863 = vmatprep.mubr.f32.mxu0 0.0
      %864 = vmatmul.mubr.f32.gmra.mrb[0].mxu0 %v361
      %v865 = vpop.f32.mrb[0].mxu0
      %v866 = vadd.f32 %v641, %v865
      %v867 = vpop.f32.mrb[0].mxu0
      %868 = vmatprep.mubr.f32.mxu0 0.0
      %869 = vmatmul.mubr.f32.gmra.mrb[0].mxu0 %v362
      %v870 = vpop.f32.mrb[0].mxu0
      %v871 = vadd.f32 %v646, %v870
      %v872 = vpop.f32.mrb[0].mxu0
      %873 = vmatprep.mubr.f32.mxu0 0.0
      %874 = vmatmul.mubr.f32.gmra.mrb[0].mxu0 %v363
      %v875 = vpop.f32.mrb[0].mxu0
      %v876 = vadd.f32 %v651, %v875
      %v877 = vpop.f32.mrb[0].mxu0
      %878 = vdwg.mxu0
      %v879 = vld [vmem:[#allocation2 + $0x2] sm:$0xff]
      %v880 = vld [vmem:[#allocation2 + $0xa] sm:$0xff]
      %v881 = vld [vmem:[#allocation2 + $0x1a] sm:$0xff]
      %v882 = vld [vmem:[#allocation2 + $0x22] sm:$0xff]
      %v883 = vld [vmem:[#allocation2 + $0x32] sm:$0xff]
      %v884 = vld [vmem:[#allocation2 + $0x3a] sm:$0xff]
      %v885 = vld [vmem:[#allocation2 + $0x4a] sm:$0xff]
      %v886 = vld [vmem:[#allocation2 + $0x52] sm:$0xff]
      %v887 = vld [vmem:[#allocation2 + $0x62] sm:$0xff]
      %v888 = vld [vmem:[#allocation2 + $0x6a] sm:$0xff]
      %v889 = vld [vmem:[#allocation2 + $0x7a] sm:$0xff]
      %v890 = vld [vmem:[#allocation2 + $0x82] sm:$0xff]
      %v891 = vld [vmem:[#allocation2 + $0x92] sm:$0xff]
      %v892 = vld [vmem:[#allocation2 + $0x9a] sm:$0xff]
      %v893 = vld [vmem:[#allocation2 + $0xaa] sm:$0xff]
      %v894 = vld [vmem:[#allocation2 + $0xb2] sm:$0xff]
      %v895 = vld [vmem:[#allocation2 + $0xc2] sm:$0xff]
      %v896 = vld [vmem:[#allocation2 + $0xca] sm:$0xff]
      %v897 = vld [vmem:[#allocation2 + $0xda] sm:$0xff]
      %v898 = vld [vmem:[#allocation2 + $0xe2] sm:$0xff]
      %v899 = vld [vmem:[#allocation2 + $0xf2] sm:$0xff]
      %v900 = vld [vmem:[#allocation2 + $0xfa] sm:$0xff]
      %v901 = vld [vmem:[#allocation2 + $0x10a] sm:$0xff]
      %v902 = vld [vmem:[#allocation2 + $0x112] sm:$0xff]
      %v903 = vld [vmem:[#allocation2 + $0x122] sm:$0xff]
      %v904 = vld [vmem:[#allocation2 + $0x12a] sm:$0xff]
      %v905 = vld [vmem:[#allocation2 + $0x13a] sm:$0xff]
      %v906 = vld [vmem:[#allocation2 + $0x142] sm:$0xff]
      %v907 = vld [vmem:[#allocation2 + $0x152] sm:$0xff]
      %v908 = vld [vmem:[#allocation2 + $0x15a] sm:$0xff]
      %v909 = vld [vmem:[#allocation2 + $0x16a] sm:$0xff]
      %v910 = vld [vmem:[#allocation2 + $0x172] sm:$0xff]
      %s911 = scalar_lea.vmem %s1, 256
      %v912 = vld [vmem:[%s911] sm:$0xff]
      %v913 = vld [vmem:[%s911 + $0x8] sm:$0xff]
      %v914 = vld [vmem:[%s911 + $0x10] sm:$0xff]
      %v915 = vld [vmem:[%s911 + $0x18] sm:$0xff]
      %v916 = vld [vmem:[%s911 + $0x20] sm:$0xff]
      %v917 = vld [vmem:[%s911 + $0x28] sm:$0xff]
      %v918 = vld [vmem:[%s911 + $0x30] sm:$0xff]
      %v919 = vld [vmem:[%s911 + $0x38] sm:$0xff]
      %v920 = vld [vmem:[%s911 + $0x40] sm:$0xff]
      %v921 = vld [vmem:[%s911 + $0x48] sm:$0xff]
      %v922 = vld [vmem:[%s911 + $0x50] sm:$0xff]
      %v923 = vld [vmem:[%s911 + $0x58] sm:$0xff]
      %v924 = vld [vmem:[%s911 + $0x60] sm:$0xff]
      %v925 = vld [vmem:[%s911 + $0x68] sm:$0xff]
      %v926 = vld [vmem:[%s911 + $0x70] sm:$0xff]
      %v927 = vld [vmem:[%s911 + $0x78] sm:$0xff]
      %928 = vmatprep.subr.mxu0 0.0
      %929 = vmatpush1.msra.mxu0 %v912
      %930 = vmatprep.subr.mxu0 0.0
      %931 = vmatpush1.msra.mxu0 %v913
      %932 = vmatprep.subr.mxu0 0.0
      %933 = vmatpush1.msra.mxu0 %v914
      %934 = vmatprep.subr.mxu0 0.0
      %935 = vmatpush1.msra.mxu0 %v915
      %936 = vmatprep.subr.mxu0 0.0
      %937 = vmatpush1.msra.mxu0 %v916
      %938 = vmatprep.subr.mxu0 0.0
      %939 = vmatpush1.msra.mxu0 %v917
      %940 = vmatprep.subr.mxu0 0.0
      %941 = vmatpush1.msra.mxu0 %v918
      %942 = vmatprep.subr.mxu0 0.0
      %943 = vmatpush1.msra.mxu0 %v919
      %944 = vmatprep.subr.mxu0 0.0
      %945 = vmatpush1.msra.mxu0 %v920
      %946 = vmatprep.subr.mxu0 0.0
      %947 = vmatpush1.msra.mxu0 %v921
      %948 = vmatprep.subr.mxu0 0.0
      %949 = vmatpush1.msra.mxu0 %v922
      %950 = vmatprep.subr.mxu0 0.0
      %951 = vmatpush1.msra.mxu0 %v923
      %952 = vmatprep.subr.mxu0 0.0
      %953 = vmatpush1.msra.mxu0 %v924
      %954 = vmatprep.subr.mxu0 0.0
      %955 = vmatpush1.msra.mxu0 %v925
      %956 = vmatprep.subr.mxu0 0.0
      %957 = vmatpush1.msra.mxu0 %v926
      %958 = vmatprep.subr.mxu0 0.0
      %959 = vmatpush1.msra.mxu0 %v927
      %960 = vmatprep.subr.mxu0 0.0
      %961 = vmatpush1.msra.mxu0 0.0
      %962 = vmatprep.subr.mxu0 0.0
      %963 = vmatpush1.msra.mxu0 0.0
      %964 = vmatprep.subr.mxu0 0.0
      %965 = vmatpush1.msra.mxu0 0.0
      %966 = vmatprep.subr.mxu0 0.0
      %967 = vmatpush1.msra.mxu0 0.0
      %968 = vmatprep.subr.mxu0 0.0
      %969 = vmatpush1.msra.mxu0 0.0
      %970 = vmatprep.subr.mxu0 0.0
      %971 = vmatpush1.msra.mxu0 0.0
      %972 = vmatprep.subr.mxu0 0.0
      %973 = vmatpush1.msra.mxu0 0.0
      %974 = vmatprep.subr.mxu0 0.0
      %975 = vmatpush1.msra.mxu0 0.0
      %976 = vmatprep.subr.mxu0 0.0
      %977 = vmatpush1.msra.mxu0 0.0
      %978 = vmatprep.subr.mxu0 0.0
      %979 = vmatpush1.msra.mxu0 0.0
      %980 = vmatprep.subr.mxu0 0.0
      %981 = vmatpush1.msra.mxu0 0.0
      %982 = vmatprep.subr.mxu0 0.0
      %983 = vmatpush1.msra.mxu0 0.0
      %984 = vmatprep.subr.mxu0 0.0
      %985 = vmatpush1.msra.mxu0 0.0
      %986 = vmatprep.subr.mxu0 0.0
      %987 = vmatpush1.msra.mxu0 0.0
      %988 = vmatprep.subr.mxu0 0.0
      %989 = vmatpush1.msra.mxu0 0.0
      %990 = vmatprep.subr.mxu0 0.0
      %991 = vmatpush1.msra.mxu0 0.0
      %992 = vmatprep.mubr.f32.mxu0 0.0
      %993 = vmatmul.mubr.f32.gmra.mrb[0].mxu0 %v879
      %v994 = vpop.f32.mrb[0].mxu0
      %v995 = vadd.f32 0.0, %v994
      %v996 = vpop.f32.mrb[0].mxu0
      %997 = vmatprep.mubr.f32.mxu0 0.0
      %998 = vmatmul.mubr.f32.gmra.mrb[0].mxu0 %v880
      %v999 = vpop.f32.mrb[0].mxu0
      %v1000 = vadd.f32 0.0, %v999
      %v1001 = vpop.f32.mrb[0].mxu0
      %1002 = vmatprep.mubr.f32.mxu0 0.0
      %1003 = vmatmul.mubr.f32.gmra.mrb[0].mxu0 %v881
      %v1004 = vpop.f32.mrb[0].mxu0
      %v1005 = vadd.f32 0.0, %v1004
      %v1006 = vpop.f32.mrb[0].mxu0
      %1007 = vmatprep.mubr.f32.mxu0 0.0
      %1008 = vmatmul.mubr.f32.gmra.mrb[0].mxu0 %v882
      %v1009 = vpop.f32.mrb[0].mxu0
      %v1010 = vadd.f32 0.0, %v1009
      %v1011 = vpop.f32.mrb[0].mxu0
      %1012 = vmatprep.mubr.f32.mxu0 0.0
      %1013 = vmatmul.mubr.f32.gmra.mrb[0].mxu0 %v883
      %v1014 = vpop.f32.mrb[0].mxu0
      %v1015 = vadd.f32 0.0, %v1014
      %v1016 = vpop.f32.mrb[0].mxu0
      %1017 = vmatprep.mubr.f32.mxu0 0.0
      %1018 = vmatmul.mubr.f32.gmra.mrb[0].mxu0 %v884
      %v1019 = vpop.f32.mrb[0].mxu0
      %v1020 = vadd.f32 0.0, %v1019
      %v1021 = vpop.f32.mrb[0].mxu0
      %1022 = vmatprep.mubr.f32.mxu0 0.0
      %1023 = vmatmul.mubr.f32.gmra.mrb[0].mxu0 %v885
      %v1024 = vpop.f32.mrb[0].mxu0
      %v1025 = vadd.f32 0.0, %v1024
      %v1026 = vpop.f32.mrb[0].mxu0
      %1027 = vmatprep.mubr.f32.mxu0 0.0
      %1028 = vmatmul.mubr.f32.gmra.mrb[0].mxu0 %v886
      %v1029 = vpop.f32.mrb[0].mxu0
      %v1030 = vadd.f32 0.0, %v1029
      %v1031 = vpop.f32.mrb[0].mxu0
      %1032 = vmatprep.mubr.f32.mxu0 0.0
      %1033 = vmatmul.mubr.f32.gmra.mrb[0].mxu0 %v887
      %v1034 = vpop.f32.mrb[0].mxu0
      %v1035 = vadd.f32 0.0, %v1034
      %v1036 = vpop.f32.mrb[0].mxu0
      %1037 = vmatprep.mubr.f32.mxu0 0.0
      %1038 = vmatmul.mubr.f32.gmra.mrb[0].mxu0 %v888
      %v1039 = vpop.f32.mrb[0].mxu0
      %v1040 = vadd.f32 0.0, %v1039
      %v1041 = vpop.f32.mrb[0].mxu0
      %1042 = vmatprep.mubr.f32.mxu0 0.0
      %1043 = vmatmul.mubr.f32.gmra.mrb[0].mxu0 %v889
      %v1044 = vpop.f32.mrb[0].mxu0
      %v1045 = vadd.f32 0.0, %v1044
      %v1046 = vpop.f32.mrb[0].mxu0
      %1047 = vmatprep.mubr.f32.mxu0 0.0
      %1048 = vmatmul.mubr.f32.gmra.mrb[0].mxu0 %v890
      %v1049 = vpop.f32.mrb[0].mxu0
      %v1050 = vadd.f32 0.0, %v1049
      %v1051 = vpop.f32.mrb[0].mxu0
      %1052 = vmatprep.mubr.f32.mxu0 0.0
      %1053 = vmatmul.mubr.f32.gmra.mrb[0].mxu0 %v891
      %v1054 = vpop.f32.mrb[0].mxu0
      %v1055 = vadd.f32 0.0, %v1054
      %v1056 = vpop.f32.mrb[0].mxu0
      %1057 = vmatprep.mubr.f32.mxu0 0.0
      %1058 = vmatmul.mubr.f32.gmra.mrb[0].mxu0 %v892
      %v1059 = vpop.f32.mrb[0].mxu0
      %v1060 = vadd.f32 0.0, %v1059
      %v1061 = vpop.f32.mrb[0].mxu0
      %1062 = vmatprep.mubr.f32.mxu0 0.0
      %1063 = vmatmul.mubr.f32.gmra.mrb[0].mxu0 %v893
      %v1064 = vpop.f32.mrb[0].mxu0
      %v1065 = vadd.f32 0.0, %v1064
      %v1066 = vpop.f32.mrb[0].mxu0
      %1067 = vmatprep.mubr.f32.mxu0 0.0
      %1068 = vmatmul.mubr.f32.gmra.mrb[0].mxu0 %v894
      %v1069 = vpop.f32.mrb[0].mxu0
      %v1070 = vadd.f32 0.0, %v1069
      %v1071 = vpop.f32.mrb[0].mxu0
      %1072 = vmatprep.mubr.f32.mxu0 0.0
      %1073 = vmatmul.mubr.f32.gmra.mrb[0].mxu0 %v895
      %v1074 = vpop.f32.mrb[0].mxu0
      %v1075 = vadd.f32 0.0, %v1074
      %v1076 = vpop.f32.mrb[0].mxu0
      %1077 = vmatprep.mubr.f32.mxu0 0.0
      %1078 = vmatmul.mubr.f32.gmra.mrb[0].mxu0 %v896
      %v1079 = vpop.f32.mrb[0].mxu0
      %v1080 = vadd.f32 0.0, %v1079
      %v1081 = vpop.f32.mrb[0].mxu0
      %1082 = vmatprep.mubr.f32.mxu0 0.0
      %1083 = vmatmul.mubr.f32.gmra.mrb[0].mxu0 %v897
      %v1084 = vpop.f32.mrb[0].mxu0
      %v1085 = vadd.f32 0.0, %v1084
      %v1086 = vpop.f32.mrb[0].mxu0
      %1087 = vmatprep.mubr.f32.mxu0 0.0
      %1088 = vmatmul.mubr.f32.gmra.mrb[0].mxu0 %v898
      %v1089 = vpop.f32.mrb[0].mxu0
      %v1090 = vadd.f32 0.0, %v1089
      %v1091 = vpop.f32.mrb[0].mxu0
      %1092 = vmatprep.mubr.f32.mxu0 0.0
      %1093 = vmatmul.mubr.f32.gmra.mrb[0].mxu0 %v899
      %v1094 = vpop.f32.mrb[0].mxu0
      %v1095 = vadd.f32 0.0, %v1094
      %v1096 = vpop.f32.mrb[0].mxu0
      %1097 = vmatprep.mubr.f32.mxu0 0.0
      %1098 = vmatmul.mubr.f32.gmra.mrb[0].mxu0 %v900
      %v1099 = vpop.f32.mrb[0].mxu0
      %v1100 = vadd.f32 0.0, %v1099
      %v1101 = vpop.f32.mrb[0].mxu0
      %1102 = vmatprep.mubr.f32.mxu0 0.0
      %1103 = vmatmul.mubr.f32.gmra.mrb[0].mxu0 %v901
      %v1104 = vpop.f32.mrb[0].mxu0
      %v1105 = vadd.f32 0.0, %v1104
      %v1106 = vpop.f32.mrb[0].mxu0
      %1107 = vmatprep.mubr.f32.mxu0 0.0
      %1108 = vmatmul.mubr.f32.gmra.mrb[0].mxu0 %v902
      %v1109 = vpop.f32.mrb[0].mxu0
      %v1110 = vadd.f32 0.0, %v1109
      %v1111 = vpop.f32.mrb[0].mxu0
      %1112 = vmatprep.mubr.f32.mxu0 0.0
      %1113 = vmatmul.mubr.f32.gmra.mrb[0].mxu0 %v903
      %v1114 = vpop.f32.mrb[0].mxu0
      %v1115 = vadd.f32 0.0, %v1114
      %v1116 = vpop.f32.mrb[0].mxu0
      %1117 = vmatprep.mubr.f32.mxu0 0.0
      %1118 = vmatmul.mubr.f32.gmra.mrb[0].mxu0 %v904
      %v1119 = vpop.f32.mrb[0].mxu0
      %v1120 = vadd.f32 0.0, %v1119
      %v1121 = vpop.f32.mrb[0].mxu0
      %1122 = vmatprep.mubr.f32.mxu0 0.0
      %1123 = vmatmul.mubr.f32.gmra.mrb[0].mxu0 %v905
      %v1124 = vpop.f32.mrb[0].mxu0
      %v1125 = vadd.f32 0.0, %v1124
      %v1126 = vpop.f32.mrb[0].mxu0
      %1127 = vmatprep.mubr.f32.mxu0 0.0
      %1128 = vmatmul.mubr.f32.gmra.mrb[0].mxu0 %v906
      %v1129 = vpop.f32.mrb[0].mxu0
      %v1130 = vadd.f32 0.0, %v1129
      %v1131 = vpop.f32.mrb[0].mxu0
      %1132 = vmatprep.mubr.f32.mxu0 0.0
      %1133 = vmatmul.mubr.f32.gmra.mrb[0].mxu0 %v907
      %v1134 = vpop.f32.mrb[0].mxu0
      %v1135 = vadd.f32 0.0, %v1134
      %v1136 = vpop.f32.mrb[0].mxu0
      %1137 = vmatprep.mubr.f32.mxu0 0.0
      %1138 = vmatmul.mubr.f32.gmra.mrb[0].mxu0 %v908
      %v1139 = vpop.f32.mrb[0].mxu0
      %v1140 = vadd.f32 0.0, %v1139
      %v1141 = vpop.f32.mrb[0].mxu0
      %1142 = vmatprep.mubr.f32.mxu0 0.0
      %1143 = vmatmul.mubr.f32.gmra.mrb[0].mxu0 %v909
      %v1144 = vpop.f32.mrb[0].mxu0
      %v1145 = vadd.f32 0.0, %v1144
      %v1146 = vpop.f32.mrb[0].mxu0
      %1147 = vmatprep.mubr.f32.mxu0 0.0
      %1148 = vmatmul.mubr.f32.gmra.mrb[0].mxu0 %v910
      %v1149 = vpop.f32.mrb[0].mxu0
      %v1150 = vadd.f32 0.0, %v1149
      %v1151 = vpop.f32.mrb[0].mxu0
      %1152 = vdwg.mxu0
      %v1153 = vadd.f32 %v721, %v995
      %v1154 = vadd.f32 %v726, %v1000
      %v1155 = vadd.f32 %v731, %v1005
      %v1156 = vadd.f32 %v736, %v1010
      %v1157 = vadd.f32 %v741, %v1015
      %v1158 = vadd.f32 %v746, %v1020
      %v1159 = vadd.f32 %v751, %v1025
      %v1160 = vadd.f32 %v756, %v1030
      %v1161 = vadd.f32 %v761, %v1035
      %v1162 = vadd.f32 %v766, %v1040
      %v1163 = vadd.f32 %v771, %v1045
      %v1164 = vadd.f32 %v776, %v1050
      %v1165 = vadd.f32 %v781, %v1055
      %v1166 = vadd.f32 %v786, %v1060
      %v1167 = vadd.f32 %v791, %v1065
      %v1168 = vadd.f32 %v796, %v1070
      %v1169 = vadd.f32 %v801, %v1075
      %v1170 = vadd.f32 %v806, %v1080
      %v1171 = vadd.f32 %v811, %v1085
      %v1172 = vadd.f32 %v816, %v1090
      %v1173 = vadd.f32 %v821, %v1095
      %v1174 = vadd.f32 %v826, %v1100
      %v1175 = vadd.f32 %v831, %v1105
      %v1176 = vadd.f32 %v836, %v1110
      %v1177 = vadd.f32 %v841, %v1115
      %v1178 = vadd.f32 %v846, %v1120
      %v1179 = vadd.f32 %v851, %v1125
      %v1180 = vadd.f32 %v856, %v1130
      %v1181 = vadd.f32 %v861, %v1135
      %v1182 = vadd.f32 %v866, %v1140
      %v1183 = vadd.f32 %v871, %v1145
      %v1184 = vadd.f32 %v876, %v1150
      %v1185 = vld [vmem:[%s299] sm:$0xff]
      %v1186 = vld [vmem:[%s299 + $0x8] sm:$0xff]
      %v1187 = vld [vmem:[%s299 + $0x18] sm:$0xff]
      %v1188 = vld [vmem:[%s299 + $0x20] sm:$0xff]
      %v1189 = vld [vmem:[%s299 + $0x30] sm:$0xff]
      %v1190 = vld [vmem:[%s299 + $0x38] sm:$0xff]
      %v1191 = vld [vmem:[%s299 + $0x48] sm:$0xff]
      %v1192 = vld [vmem:[%s299 + $0x50] sm:$0xff]
      %v1193 = vld [vmem:[%s299 + $0x60] sm:$0xff]
      %v1194 = vld [vmem:[%s299 + $0x68] sm:$0xff]
      %v1195 = vld [vmem:[%s299 + $0x78] sm:$0xff]
      %v1196 = vld [vmem:[%s299 + $0x80] sm:$0xff]
      %v1197 = vld [vmem:[%s299 + $0x90] sm:$0xff]
      %v1198 = vld [vmem:[%s299 + $0x98] sm:$0xff]
      %v1199 = vld [vmem:[%s299 + $0xa8] sm:$0xff]
      %v1200 = vld [vmem:[%s299 + $0xb0] sm:$0xff]
      %v1201 = vld [vmem:[%s299 + $0xc0] sm:$0xff]
      %v1202 = vld [vmem:[%s299 + $0xc8] sm:$0xff]
      %v1203 = vld [vmem:[%s299 + $0xd8] sm:$0xff]
      %v1204 = vld [vmem:[%s299 + $0xe0] sm:$0xff]
      %v1205 = vld [vmem:[%s299 + $0xf0] sm:$0xff]
      %v1206 = vld [vmem:[%s299 + $0xf8] sm:$0xff]
      %v1207 = vld [vmem:[%s299 + $0x108] sm:$0xff]
      %v1208 = vld [vmem:[%s299 + $0x110] sm:$0xff]
      %v1209 = vld [vmem:[%s299 + $0x120] sm:$0xff]
      %v1210 = vld [vmem:[%s299 + $0x128] sm:$0xff]
      %v1211 = vld [vmem:[%s299 + $0x138] sm:$0xff]
      %v1212 = vld [vmem:[%s299 + $0x140] sm:$0xff]
      %v1213 = vld [vmem:[%s299 + $0x150] sm:$0xff]
      %v1214 = vld [vmem:[%s299 + $0x158] sm:$0xff]
      %v1215 = vld [vmem:[%s299 + $0x168] sm:$0xff]
      %v1216 = vld [vmem:[%s299 + $0x170] sm:$0xff]
      %s1217 = scalar_lea.vmem %s1, 384
      %v1218 = vld [vmem:[%s1217] sm:$0xff]
      %v1219 = vld [vmem:[%s1217 + $0x8] sm:$0xff]
      %v1220 = vld [vmem:[%s1217 + $0x10] sm:$0xff]
      %v1221 = vld [vmem:[%s1217 + $0x18] sm:$0xff]
      %v1222 = vld [vmem:[%s1217 + $0x20] sm:$0xff]
      %v1223 = vld [vmem:[%s1217 + $0x28] sm:$0xff]
      %v1224 = vld [vmem:[%s1217 + $0x30] sm:$0xff]
      %v1225 = vld [vmem:[%s1217 + $0x38] sm:$0xff]
      %v1226 = vld [vmem:[%s1217 + $0x40] sm:$0xff]
      %v1227 = vld [vmem:[%s1217 + $0x48] sm:$0xff]
      %v1228 = vld [vmem:[%s1217 + $0x50] sm:$0xff]
      %v1229 = vld [vmem:[%s1217 + $0x58] sm:$0xff]
      %v1230 = vld [vmem:[%s1217 + $0x60] sm:$0xff]
      %v1231 = vld [vmem:[%s1217 + $0x68] sm:$0xff]
      %v1232 = vld [vmem:[%s1217 + $0x70] sm:$0xff]
      %v1233 = vld [vmem:[%s1217 + $0x78] sm:$0xff]
      %1234 = vmatprep.subr.mxu0 0.0
      %1235 = vmatpush1.msra.mxu0 %v1218
      %1236 = vmatprep.subr.mxu0 0.0
      %1237 = vmatpush1.msra.mxu0 %v1219
      %1238 = vmatprep.subr.mxu0 0.0
      %1239 = vmatpush1.msra.mxu0 %v1220
      %1240 = vmatprep.subr.mxu0 0.0
      %1241 = vmatpush1.msra.mxu0 %v1221
      %1242 = vmatprep.subr.mxu0 0.0
      %1243 = vmatpush1.msra.mxu0 %v1222
      %1244 = vmatprep.subr.mxu0 0.0
      %1245 = vmatpush1.msra.mxu0 %v1223
      %1246 = vmatprep.subr.mxu0 0.0
      %1247 = vmatpush1.msra.mxu0 %v1224
      %1248 = vmatprep.subr.mxu0 0.0
      %1249 = vmatpush1.msra.mxu0 %v1225
      %1250 = vmatprep.subr.mxu0 0.0
      %1251 = vmatpush1.msra.mxu0 %v1226
      %1252 = vmatprep.subr.mxu0 0.0
      %1253 = vmatpush1.msra.mxu0 %v1227
      %1254 = vmatprep.subr.mxu0 0.0
      %1255 = vmatpush1.msra.mxu0 %v1228
      %1256 = vmatprep.subr.mxu0 0.0
      %1257 = vmatpush1.msra.mxu0 %v1229
      %1258 = vmatprep.subr.mxu0 0.0
      %1259 = vmatpush1.msra.mxu0 %v1230
      %1260 = vmatprep.subr.mxu0 0.0
      %1261 = vmatpush1.msra.mxu0 %v1231
      %1262 = vmatprep.subr.mxu0 0.0
      %1263 = vmatpush1.msra.mxu0 %v1232
      %1264 = vmatprep.subr.mxu0 0.0
      %1265 = vmatpush1.msra.mxu0 %v1233
      %1266 = vmatprep.subr.mxu0 0.0
      %1267 = vmatpush1.msra.mxu0 0.0
      %1268 = vmatprep.subr.mxu0 0.0
      %1269 = vmatpush1.msra.mxu0 0.0
      %1270 = vmatprep.subr.mxu0 0.0
      %1271 = vmatpush1.msra.mxu0 0.0
      %1272 = vmatprep.subr.mxu0 0.0
      %1273 = vmatpush1.msra.mxu0 0.0
      %1274 = vmatprep.subr.mxu0 0.0
      %1275 = vmatpush1.msra.mxu0 0.0
      %1276 = vmatprep.subr.mxu0 0.0
      %1277 = vmatpush1.msra.mxu0 0.0
      %1278 = vmatprep.subr.mxu0 0.0
      %1279 = vmatpush1.msra.mxu0 0.0
      %1280 = vmatprep.subr.mxu0 0.0
      %1281 = vmatpush1.msra.mxu0 0.0
      %1282 = vmatprep.subr.mxu0 0.0
      %1283 = vmatpush1.msra.mxu0 0.0
      %1284 = vmatprep.subr.mxu0 0.0
      %1285 = vmatpush1.msra.mxu0 0.0
      %1286 = vmatprep.subr.mxu0 0.0
      %1287 = vmatpush1.msra.mxu0 0.0
      %1288 = vmatprep.subr.mxu0 0.0
      %1289 = vmatpush1.msra.mxu0 0.0
      %1290 = vmatprep.subr.mxu0 0.0
      %1291 = vmatpush1.msra.mxu0 0.0
      %1292 = vmatprep.subr.mxu0 0.0
      %1293 = vmatpush1.msra.mxu0 0.0
      %1294 = vmatprep.subr.mxu0 0.0
      %1295 = vmatpush1.msra.mxu0 0.0
      %1296 = vmatprep.subr.mxu0 0.0
      %1297 = vmatpush1.msra.mxu0 0.0
      %1298 = vmatprep.mubr.f32.mxu0 0.0
      %1299 = vmatmul.mubr.f32.gmra.mrb[0].mxu0 %v1185
      %v1300 = vpop.f32.mrb[0].mxu0
      %v1301 = vadd.f32 0.0, %v1300
      %v1302 = vpop.f32.mrb[0].mxu0
      %1303 = vmatprep.mubr.f32.mxu0 0.0
      %1304 = vmatmul.mubr.f32.gmra.mrb[0].mxu0 %v1186
      %v1305 = vpop.f32.mrb[0].mxu0
      %v1306 = vadd.f32 0.0, %v1305
      %v1307 = vpop.f32.mrb[0].mxu0
      %1308 = vmatprep.mubr.f32.mxu0 0.0
      %1309 = vmatmul.mubr.f32.gmra.mrb[0].mxu0 %v1187
      %v1310 = vpop.f32.mrb[0].mxu0
      %v1311 = vadd.f32 0.0, %v1310
      %v1312 = vpop.f32.mrb[0].mxu0
      %1313 = vmatprep.mubr.f32.mxu0 0.0
      %1314 = vmatmul.mubr.f32.gmra.mrb[0].mxu0 %v1188
      %v1315 = vpop.f32.mrb[0].mxu0
      %v1316 = vadd.f32 0.0, %v1315
      %v1317 = vpop.f32.mrb[0].mxu0
      %1318 = vmatprep.mubr.f32.mxu0 0.0
      %1319 = vmatmul.mubr.f32.gmra.mrb[0].mxu0 %v1189
      %v1320 = vpop.f32.mrb[0].mxu0
      %v1321 = vadd.f32 0.0, %v1320
      %v1322 = vpop.f32.mrb[0].mxu0
      %1323 = vmatprep.mubr.f32.mxu0 0.0
      %1324 = vmatmul.mubr.f32.gmra.mrb[0].mxu0 %v1190
      %v1325 = vpop.f32.mrb[0].mxu0
      %v1326 = vadd.f32 0.0, %v1325
      %v1327 = vpop.f32.mrb[0].mxu0
      %1328 = vmatprep.mubr.f32.mxu0 0.0
      %1329 = vmatmul.mubr.f32.gmra.mrb[0].mxu0 %v1191
      %v1330 = vpop.f32.mrb[0].mxu0
      %v1331 = vadd.f32 0.0, %v1330
      %v1332 = vpop.f32.mrb[0].mxu0
      %1333 = vmatprep.mubr.f32.mxu0 0.0
      %1334 = vmatmul.mubr.f32.gmra.mrb[0].mxu0 %v1192
      %v1335 = vpop.f32.mrb[0].mxu0
      %v1336 = vadd.f32 0.0, %v1335
      %v1337 = vpop.f32.mrb[0].mxu0
      %1338 = vmatprep.mubr.f32.mxu0 0.0
      %1339 = vmatmul.mubr.f32.gmra.mrb[0].mxu0 %v1193
      %v1340 = vpop.f32.mrb[0].mxu0
      %v1341 = vadd.f32 0.0, %v1340
      %v1342 = vpop.f32.mrb[0].mxu0
      %1343 = vmatprep.mubr.f32.mxu0 0.0
      %1344 = vmatmul.mubr.f32.gmra.mrb[0].mxu0 %v1194
      %v1345 = vpop.f32.mrb[0].mxu0
      %v1346 = vadd.f32 0.0, %v1345
      %v1347 = vpop.f32.mrb[0].mxu0
      %1348 = vmatprep.mubr.f32.mxu0 0.0
      %1349 = vmatmul.mubr.f32.gmra.mrb[0].mxu0 %v1195
      %v1350 = vpop.f32.mrb[0].mxu0
      %v1351 = vadd.f32 0.0, %v1350
      %v1352 = vpop.f32.mrb[0].mxu0
      %1353 = vmatprep.mubr.f32.mxu0 0.0
      %1354 = vmatmul.mubr.f32.gmra.mrb[0].mxu0 %v1196
      %v1355 = vpop.f32.mrb[0].mxu0
      %v1356 = vadd.f32 0.0, %v1355
      %v1357 = vpop.f32.mrb[0].mxu0
      %1358 = vmatprep.mubr.f32.mxu0 0.0
      %1359 = vmatmul.mubr.f32.gmra.mrb[0].mxu0 %v1197
      %v1360 = vpop.f32.mrb[0].mxu0
      %v1361 = vadd.f32 0.0, %v1360
      %v1362 = vpop.f32.mrb[0].mxu0
      %1363 = vmatprep.mubr.f32.mxu0 0.0
      %1364 = vmatmul.mubr.f32.gmra.mrb[0].mxu0 %v1198
      %v1365 = vpop.f32.mrb[0].mxu0
      %v1366 = vadd.f32 0.0, %v1365
      %v1367 = vpop.f32.mrb[0].mxu0
      %1368 = vmatprep.mubr.f32.mxu0 0.0
      %1369 = vmatmul.mubr.f32.gmra.mrb[0].mxu0 %v1199
      %v1370 = vpop.f32.mrb[0].mxu0
      %v1371 = vadd.f32 0.0, %v1370
      %v1372 = vpop.f32.mrb[0].mxu0
      %1373 = vmatprep.mubr.f32.mxu0 0.0
      %1374 = vmatmul.mubr.f32.gmra.mrb[0].mxu0 %v1200
      %v1375 = vpop.f32.mrb[0].mxu0
      %v1376 = vadd.f32 0.0, %v1375
      %v1377 = vpop.f32.mrb[0].mxu0
      %1378 = vmatprep.mubr.f32.mxu0 0.0
      %1379 = vmatmul.mubr.f32.gmra.mrb[0].mxu0 %v1201
      %v1380 = vpop.f32.mrb[0].mxu0
      %v1381 = vadd.f32 0.0, %v1380
      %v1382 = vpop.f32.mrb[0].mxu0
      %1383 = vmatprep.mubr.f32.mxu0 0.0
      %1384 = vmatmul.mubr.f32.gmra.mrb[0].mxu0 %v1202
      %v1385 = vpop.f32.mrb[0].mxu0
      %v1386 = vadd.f32 0.0, %v1385
      %v1387 = vpop.f32.mrb[0].mxu0
      %1388 = vmatprep.mubr.f32.mxu0 0.0
      %1389 = vmatmul.mubr.f32.gmra.mrb[0].mxu0 %v1203
      %v1390 = vpop.f32.mrb[0].mxu0
      %v1391 = vadd.f32 0.0, %v1390
      %v1392 = vpop.f32.mrb[0].mxu0
      %1393 = vmatprep.mubr.f32.mxu0 0.0
      %1394 = vmatmul.mubr.f32.gmra.mrb[0].mxu0 %v1204
      %v1395 = vpop.f32.mrb[0].mxu0
      %v1396 = vadd.f32 0.0, %v1395
      %v1397 = vpop.f32.mrb[0].mxu0
      %1398 = vmatprep.mubr.f32.mxu0 0.0
      %1399 = vmatmul.mubr.f32.gmra.mrb[0].mxu0 %v1205
      %v1400 = vpop.f32.mrb[0].mxu0
      %v1401 = vadd.f32 0.0, %v1400
      %v1402 = vpop.f32.mrb[0].mxu0
      %1403 = vmatprep.mubr.f32.mxu0 0.0
      %1404 = vmatmul.mubr.f32.gmra.mrb[0].mxu0 %v1206
      %v1405 = vpop.f32.mrb[0].mxu0
      %v1406 = vadd.f32 0.0, %v1405
      %v1407 = vpop.f32.mrb[0].mxu0
      %1408 = vmatprep.mubr.f32.mxu0 0.0
      %1409 = vmatmul.mubr.f32.gmra.mrb[0].mxu0 %v1207
      %v1410 = vpop.f32.mrb[0].mxu0
      %v1411 = vadd.f32 0.0, %v1410
      %v1412 = vpop.f32.mrb[0].mxu0
      %1413 = vmatprep.mubr.f32.mxu0 0.0
      %1414 = vmatmul.mubr.f32.gmra.mrb[0].mxu0 %v1208
      %v1415 = vpop.f32.mrb[0].mxu0
      %v1416 = vadd.f32 0.0, %v1415
      %v1417 = vpop.f32.mrb[0].mxu0
      %1418 = vmatprep.mubr.f32.mxu0 0.0
      %1419 = vmatmul.mubr.f32.gmra.mrb[0].mxu0 %v1209
      %v1420 = vpop.f32.mrb[0].mxu0
      %v1421 = vadd.f32 0.0, %v1420
      %v1422 = vpop.f32.mrb[0].mxu0
      %1423 = vmatprep.mubr.f32.mxu0 0.0
      %1424 = vmatmul.mubr.f32.gmra.mrb[0].mxu0 %v1210
      %v1425 = vpop.f32.mrb[0].mxu0
      %v1426 = vadd.f32 0.0, %v1425
      %v1427 = vpop.f32.mrb[0].mxu0
      %1428 = vmatprep.mubr.f32.mxu0 0.0
      %1429 = vmatmul.mubr.f32.gmra.mrb[0].mxu0 %v1211
      %v1430 = vpop.f32.mrb[0].mxu0
      %v1431 = vadd.f32 0.0, %v1430
      %v1432 = vpop.f32.mrb[0].mxu0
      %1433 = vmatprep.mubr.f32.mxu0 0.0
      %1434 = vmatmul.mubr.f32.gmra.mrb[0].mxu0 %v1212
      %v1435 = vpop.f32.mrb[0].mxu0
      %v1436 = vadd.f32 0.0, %v1435
      %v1437 = vpop.f32.mrb[0].mxu0
      %1438 = vmatprep.mubr.f32.mxu0 0.0
      %1439 = vmatmul.mubr.f32.gmra.mrb[0].mxu0 %v1213
      %v1440 = vpop.f32.mrb[0].mxu0
      %v1441 = vadd.f32 0.0, %v1440
      %v1442 = vpop.f32.mrb[0].mxu0
      %1443 = vmatprep.mubr.f32.mxu0 0.0
      %1444 = vmatmul.mubr.f32.gmra.mrb[0].mxu0 %v1214
      %v1445 = vpop.f32.mrb[0].mxu0
      %v1446 = vadd.f32 0.0, %v1445
      %v1447 = vpop.f32.mrb[0].mxu0
      %1448 = vmatprep.mubr.f32.mxu0 0.0
      %1449 = vmatmul.mubr.f32.gmra.mrb[0].mxu0 %v1215
      %v1450 = vpop.f32.mrb[0].mxu0
      %v1451 = vadd.f32 0.0, %v1450
      %v1452 = vpop.f32.mrb[0].mxu0
      %1453 = vmatprep.mubr.f32.mxu0 0.0
      %1454 = vmatmul.mubr.f32.gmra.mrb[0].mxu0 %v1216
      %v1455 = vpop.f32.mrb[0].mxu0
      %v1456 = vadd.f32 0.0, %v1455
      %v1457 = vpop.f32.mrb[0].mxu0
      %1458 = vdwg.mxu0
      %v1459 = vadd.f32 %v1153, %v1301
      %v1460 = vadd.f32 %v1154, %v1306
      %v1461 = vadd.f32 %v1155, %v1311
      %v1462 = vadd.f32 %v1156, %v1316
      %v1463 = vadd.f32 %v1157, %v1321
      %v1464 = vadd.f32 %v1158, %v1326
      %v1465 = vadd.f32 %v1159, %v1331
      %v1466 = vadd.f32 %v1160, %v1336
      %v1467 = vadd.f32 %v1161, %v1341
      %v1468 = vadd.f32 %v1162, %v1346
      %v1469 = vadd.f32 %v1163, %v1351
      %v1470 = vadd.f32 %v1164, %v1356
      %v1471 = vadd.f32 %v1165, %v1361
      %v1472 = vadd.f32 %v1166, %v1366
      %v1473 = vadd.f32 %v1167, %v1371
      %v1474 = vadd.f32 %v1168, %v1376
      %v1475 = vadd.f32 %v1169, %v1381
      %v1476 = vadd.f32 %v1170, %v1386
      %v1477 = vadd.f32 %v1171, %v1391
      %v1478 = vadd.f32 %v1172, %v1396
      %v1479 = vadd.f32 %v1173, %v1401
      %v1480 = vadd.f32 %v1174, %v1406
      %v1481 = vadd.f32 %v1175, %v1411
      %v1482 = vadd.f32 %v1176, %v1416
      %v1483 = vadd.f32 %v1177, %v1421
      %v1484 = vadd.f32 %v1178, %v1426
      %v1485 = vadd.f32 %v1179, %v1431
      %v1486 = vadd.f32 %v1180, %v1436
      %v1487 = vadd.f32 %v1181, %v1441
      %v1488 = vadd.f32 %v1182, %v1446
      %v1489 = vadd.f32 %v1183, %v1451
      %v1490 = vadd.f32 %v1184, %v1456
      %v1491 = vld [vmem:[%s299 + $0x1] sm:$0xff]
      %v1492 = vld [vmem:[%s299 + $0x9] sm:$0xff]
      %v1493 = vld [vmem:[%s299 + $0x19] sm:$0xff]
      %v1494 = vld [vmem:[%s299 + $0x21] sm:$0xff]
      %v1495 = vld [vmem:[%s299 + $0x31] sm:$0xff]
      %v1496 = vld [vmem:[%s299 + $0x39] sm:$0xff]
      %v1497 = vld [vmem:[%s299 + $0x49] sm:$0xff]
      %v1498 = vld [vmem:[%s299 + $0x51] sm:$0xff]
      %v1499 = vld [vmem:[%s299 + $0x61] sm:$0xff]
      %v1500 = vld [vmem:[%s299 + $0x69] sm:$0xff]
      %v1501 = vld [vmem:[%s299 + $0x79] sm:$0xff]
      %v1502 = vld [vmem:[%s299 + $0x81] sm:$0xff]
      %v1503 = vld [vmem:[%s299 + $0x91] sm:$0xff]
      %v1504 = vld [vmem:[%s299 + $0x99] sm:$0xff]
      %v1505 = vld [vmem:[%s299 + $0xa9] sm:$0xff]
      %v1506 = vld [vmem:[%s299 + $0xb1] sm:$0xff]
      %v1507 = vld [vmem:[%s299 + $0xc1] sm:$0xff]
      %v1508 = vld [vmem:[%s299 + $0xc9] sm:$0xff]
      %v1509 = vld [vmem:[%s299 + $0xd9] sm:$0xff]
      %v1510 = vld [vmem:[%s299 + $0xe1] sm:$0xff]
      %v1511 = vld [vmem:[%s299 + $0xf1] sm:$0xff]
      %v1512 = vld [vmem:[%s299 + $0xf9] sm:$0xff]
      %v1513 = vld [vmem:[%s299 + $0x109] sm:$0xff]
      %v1514 = vld [vmem:[%s299 + $0x111] sm:$0xff]
      %v1515 = vld [vmem:[%s299 + $0x121] sm:$0xff]
      %v1516 = vld [vmem:[%s299 + $0x129] sm:$0xff]
      %v1517 = vld [vmem:[%s299 + $0x139] sm:$0xff]
      %v1518 = vld [vmem:[%s299 + $0x141] sm:$0xff]
      %v1519 = vld [vmem:[%s299 + $0x151] sm:$0xff]
      %v1520 = vld [vmem:[%s299 + $0x159] sm:$0xff]
      %v1521 = vld [vmem:[%s299 + $0x169] sm:$0xff]
      %v1522 = vld [vmem:[%s299 + $0x171] sm:$0xff]
      %s1523 = scalar_lea.vmem %s1, 512
      %v1524 = vld [vmem:[%s1523] sm:$0xff]
      %v1525 = vld [vmem:[%s1523 + $0x8] sm:$0xff]
      %v1526 = vld [vmem:[%s1523 + $0x10] sm:$0xff]
      %v1527 = vld [vmem:[%s1523 + $0x18] sm:$0xff]
      %v1528 = vld [vmem:[%s1523 + $0x20] sm:$0xff]
      %v1529 = vld [vmem:[%s1523 + $0x28] sm:$0xff]
      %v1530 = vld [vmem:[%s1523 + $0x30] sm:$0xff]
      %v1531 = vld [vmem:[%s1523 + $0x38] sm:$0xff]
      %v1532 = vld [vmem:[%s1523 + $0x40] sm:$0xff]
      %v1533 = vld [vmem:[%s1523 + $0x48] sm:$0xff]
      %v1534 = vld [vmem:[%s1523 + $0x50] sm:$0xff]
      %v1535 = vld [vmem:[%s1523 + $0x58] sm:$0xff]
      %v1536 = vld [vmem:[%s1523 + $0x60] sm:$0xff]
      %v1537 = vld [vmem:[%s1523 + $0x68] sm:$0xff]
      %v1538 = vld [vmem:[%s1523 + $0x70] sm:$0xff]
      %v1539 = vld [vmem:[%s1523 + $0x78] sm:$0xff]
      %1540 = vmatprep.subr.mxu0 0.0
      %1541 = vmatpush1.msra.mxu0 %v1524
      %1542 = vmatprep.subr.mxu0 0.0
      %1543 = vmatpush1.msra.mxu0 %v1525
      %1544 = vmatprep.subr.mxu0 0.0
      %1545 = vmatpush1.msra.mxu0 %v1526
      %1546 = vmatprep.subr.mxu0 0.0
      %1547 = vmatpush1.msra.mxu0 %v1527
      %1548 = vmatprep.subr.mxu0 0.0
      %1549 = vmatpush1.msra.mxu0 %v1528
      %1550 = vmatprep.subr.mxu0 0.0
      %1551 = vmatpush1.msra.mxu0 %v1529
      %1552 = vmatprep.subr.mxu0 0.0
      %1553 = vmatpush1.msra.mxu0 %v1530
      %1554 = vmatprep.subr.mxu0 0.0
      %1555 = vmatpush1.msra.mxu0 %v1531
      %1556 = vmatprep.subr.mxu0 0.0
      %1557 = vmatpush1.msra.mxu0 %v1532
      %1558 = vmatprep.subr.mxu0 0.0
      %1559 = vmatpush1.msra.mxu0 %v1533
      %1560 = vmatprep.subr.mxu0 0.0
      %1561 = vmatpush1.msra.mxu0 %v1534
      %1562 = vmatprep.subr.mxu0 0.0
      %1563 = vmatpush1.msra.mxu0 %v1535
      %1564 = vmatprep.subr.mxu0 0.0
      %1565 = vmatpush1.msra.mxu0 %v1536
      %1566 = vmatprep.subr.mxu0 0.0
      %1567 = vmatpush1.msra.mxu0 %v1537
      %1568 = vmatprep.subr.mxu0 0.0
      %1569 = vmatpush1.msra.mxu0 %v1538
      %1570 = vmatprep.subr.mxu0 0.0
      %1571 = vmatpush1.msra.mxu0 %v1539
      %1572 = vmatprep.subr.mxu0 0.0
      %1573 = vmatpush1.msra.mxu0 0.0
      %1574 = vmatprep.subr.mxu0 0.0
      %1575 = vmatpush1.msra.mxu0 0.0
      %1576 = vmatprep.subr.mxu0 0.0
      %1577 = vmatpush1.msra.mxu0 0.0
      %1578 = vmatprep.subr.mxu0 0.0
      %1579 = vmatpush1.msra.mxu0 0.0
      %1580 = vmatprep.subr.mxu0 0.0
      %1581 = vmatpush1.msra.mxu0 0.0
      %1582 = vmatprep.subr.mxu0 0.0
      %1583 = vmatpush1.msra.mxu0 0.0
      %1584 = vmatprep.subr.mxu0 0.0
      %1585 = vmatpush1.msra.mxu0 0.0
      %1586 = vmatprep.subr.mxu0 0.0
      %1587 = vmatpush1.msra.mxu0 0.0
      %1588 = vmatprep.subr.mxu0 0.0
      %1589 = vmatpush1.msra.mxu0 0.0
      %1590 = vmatprep.subr.mxu0 0.0
      %1591 = vmatpush1.msra.mxu0 0.0
      %1592 = vmatprep.subr.mxu0 0.0
      %1593 = vmatpush1.msra.mxu0 0.0
      %1594 = vmatprep.subr.mxu0 0.0
      %1595 = vmatpush1.msra.mxu0 0.0
      %1596 = vmatprep.subr.mxu0 0.0
      %1597 = vmatpush1.msra.mxu0 0.0
      %1598 = vmatprep.subr.mxu0 0.0
      %1599 = vmatpush1.msra.mxu0 0.0
      %1600 = vmatprep.subr.mxu0 0.0
      %1601 = vmatpush1.msra.mxu0 0.0
      %1602 = vmatprep.subr.mxu0 0.0
      %1603 = vmatpush1.msra.mxu0 0.0
      %1604 = vmatprep.mubr.f32.mxu0 0.0
      %1605 = vmatmul.mubr.f32.gmra.mrb[0].mxu0 %v1491
      %v1606 = vpop.f32.mrb[0].mxu0
      %v1607 = vadd.f32 0.0, %v1606
      %v1608 = vpop.f32.mrb[0].mxu0
      %1609 = vmatprep.mubr.f32.mxu0 0.0
      %1610 = vmatmul.mubr.f32.gmra.mrb[0].mxu0 %v1492
      %v1611 = vpop.f32.mrb[0].mxu0
      %v1612 = vadd.f32 0.0, %v1611
      %v1613 = vpop.f32.mrb[0].mxu0
      %1614 = vmatprep.mubr.f32.mxu0 0.0
      %1615 = vmatmul.mubr.f32.gmra.mrb[0].mxu0 %v1493
      %v1616 = vpop.f32.mrb[0].mxu0
      %v1617 = vadd.f32 0.0, %v1616
      %v1618 = vpop.f32.mrb[0].mxu0
      %1619 = vmatprep.mubr.f32.mxu0 0.0
      %1620 = vmatmul.mubr.f32.gmra.mrb[0].mxu0 %v1494
      %v1621 = vpop.f32.mrb[0].mxu0
      %v1622 = vadd.f32 0.0, %v1621
      %v1623 = vpop.f32.mrb[0].mxu0
      %1624 = vmatprep.mubr.f32.mxu0 0.0
      %1625 = vmatmul.mubr.f32.gmra.mrb[0].mxu0 %v1495
      %v1626 = vpop.f32.mrb[0].mxu0
      %v1627 = vadd.f32 0.0, %v1626
      %v1628 = vpop.f32.mrb[0].mxu0
      %1629 = vmatprep.mubr.f32.mxu0 0.0
      %1630 = vmatmul.mubr.f32.gmra.mrb[0].mxu0 %v1496
      %v1631 = vpop.f32.mrb[0].mxu0
      %v1632 = vadd.f32 0.0, %v1631
      %v1633 = vpop.f32.mrb[0].mxu0
      %1634 = vmatprep.mubr.f32.mxu0 0.0
      %1635 = vmatmul.mubr.f32.gmra.mrb[0].mxu0 %v1497
      %v1636 = vpop.f32.mrb[0].mxu0
      %v1637 = vadd.f32 0.0, %v1636
      %v1638 = vpop.f32.mrb[0].mxu0
      %1639 = vmatprep.mubr.f32.mxu0 0.0
      %1640 = vmatmul.mubr.f32.gmra.mrb[0].mxu0 %v1498
      %v1641 = vpop.f32.mrb[0].mxu0
      %v1642 = vadd.f32 0.0, %v1641
      %v1643 = vpop.f32.mrb[0].mxu0
      %1644 = vmatprep.mubr.f32.mxu0 0.0
      %1645 = vmatmul.mubr.f32.gmra.mrb[0].mxu0 %v1499
      %v1646 = vpop.f32.mrb[0].mxu0
      %v1647 = vadd.f32 0.0, %v1646
      %v1648 = vpop.f32.mrb[0].mxu0
      %1649 = vmatprep.mubr.f32.mxu0 0.0
      %1650 = vmatmul.mubr.f32.gmra.mrb[0].mxu0 %v1500
      %v1651 = vpop.f32.mrb[0].mxu0
      %v1652 = vadd.f32 0.0, %v1651
      %v1653 = vpop.f32.mrb[0].mxu0
      %1654 = vmatprep.mubr.f32.mxu0 0.0
      %1655 = vmatmul.mubr.f32.gmra.mrb[0].mxu0 %v1501
      %v1656 = vpop.f32.mrb[0].mxu0
      %v1657 = vadd.f32 0.0, %v1656
      %v1658 = vpop.f32.mrb[0].mxu0
      %1659 = vmatprep.mubr.f32.mxu0 0.0
      %1660 = vmatmul.mubr.f32.gmra.mrb[0].mxu0 %v1502
      %v1661 = vpop.f32.mrb[0].mxu0
      %v1662 = vadd.f32 0.0, %v1661
      %v1663 = vpop.f32.mrb[0].mxu0
      %1664 = vmatprep.mubr.f32.mxu0 0.0
      %1665 = vmatmul.mubr.f32.gmra.mrb[0].mxu0 %v1503
      %v1666 = vpop.f32.mrb[0].mxu0
      %v1667 = vadd.f32 0.0, %v1666
      %v1668 = vpop.f32.mrb[0].mxu0
      %1669 = vmatprep.mubr.f32.mxu0 0.0
      %1670 = vmatmul.mubr.f32.gmra.mrb[0].mxu0 %v1504
      %v1671 = vpop.f32.mrb[0].mxu0
      %v1672 = vadd.f32 0.0, %v1671
      %v1673 = vpop.f32.mrb[0].mxu0
      %1674 = vmatprep.mubr.f32.mxu0 0.0
      %1675 = vmatmul.mubr.f32.gmra.mrb[0].mxu0 %v1505
      %v1676 = vpop.f32.mrb[0].mxu0
      %v1677 = vadd.f32 0.0, %v1676
      %v1678 = vpop.f32.mrb[0].mxu0
      %1679 = vmatprep.mubr.f32.mxu0 0.0
      %1680 = vmatmul.mubr.f32.gmra.mrb[0].mxu0 %v1506
      %v1681 = vpop.f32.mrb[0].mxu0
      %v1682 = vadd.f32 0.0, %v1681
      %v1683 = vpop.f32.mrb[0].mxu0
      %1684 = vmatprep.mubr.f32.mxu0 0.0
      %1685 = vmatmul.mubr.f32.gmra.mrb[0].mxu0 %v1507
      %v1686 = vpop.f32.mrb[0].mxu0
      %v1687 = vadd.f32 0.0, %v1686
      %v1688 = vpop.f32.mrb[0].mxu0
      %1689 = vmatprep.mubr.f32.mxu0 0.0
      %1690 = vmatmul.mubr.f32.gmra.mrb[0].mxu0 %v1508
      %v1691 = vpop.f32.mrb[0].mxu0
      %v1692 = vadd.f32 0.0, %v1691
      %v1693 = vpop.f32.mrb[0].mxu0
      %1694 = vmatprep.mubr.f32.mxu0 0.0
      %1695 = vmatmul.mubr.f32.gmra.mrb[0].mxu0 %v1509
      %v1696 = vpop.f32.mrb[0].mxu0
      %v1697 = vadd.f32 0.0, %v1696
      %v1698 = vpop.f32.mrb[0].mxu0
      %1699 = vmatprep.mubr.f32.mxu0 0.0
      %1700 = vmatmul.mubr.f32.gmra.mrb[0].mxu0 %v1510
      %v1701 = vpop.f32.mrb[0].mxu0
      %v1702 = vadd.f32 0.0, %v1701
      %v1703 = vpop.f32.mrb[0].mxu0
      %1704 = vmatprep.mubr.f32.mxu0 0.0
      %1705 = vmatmul.mubr.f32.gmra.mrb[0].mxu0 %v1511
      %v1706 = vpop.f32.mrb[0].mxu0
      %v1707 = vadd.f32 0.0, %v1706
      %v1708 = vpop.f32.mrb[0].mxu0
      %1709 = vmatprep.mubr.f32.mxu0 0.0
      %1710 = vmatmul.mubr.f32.gmra.mrb[0].mxu0 %v1512
      %v1711 = vpop.f32.mrb[0].mxu0
      %v1712 = vadd.f32 0.0, %v1711
      %v1713 = vpop.f32.mrb[0].mxu0
      %1714 = vmatprep.mubr.f32.mxu0 0.0
      %1715 = vmatmul.mubr.f32.gmra.mrb[0].mxu0 %v1513
      %v1716 = vpop.f32.mrb[0].mxu0
      %v1717 = vadd.f32 0.0, %v1716
      %v1718 = vpop.f32.mrb[0].mxu0
      %1719 = vmatprep.mubr.f32.mxu0 0.0
      %1720 = vmatmul.mubr.f32.gmra.mrb[0].mxu0 %v1514
      %v1721 = vpop.f32.mrb[0].mxu0
      %v1722 = vadd.f32 0.0, %v1721
      %v1723 = vpop.f32.mrb[0].mxu0
      %1724 = vmatprep.mubr.f32.mxu0 0.0
      %1725 = vmatmul.mubr.f32.gmra.mrb[0].mxu0 %v1515
      %v1726 = vpop.f32.mrb[0].mxu0
      %v1727 = vadd.f32 0.0, %v1726
      %v1728 = vpop.f32.mrb[0].mxu0
      %1729 = vmatprep.mubr.f32.mxu0 0.0
      %1730 = vmatmul.mubr.f32.gmra.mrb[0].mxu0 %v1516
      %v1731 = vpop.f32.mrb[0].mxu0
      %v1732 = vadd.f32 0.0, %v1731
      %v1733 = vpop.f32.mrb[0].mxu0
      %1734 = vmatprep.mubr.f32.mxu0 0.0
      %1735 = vmatmul.mubr.f32.gmra.mrb[0].mxu0 %v1517
      %v1736 = vpop.f32.mrb[0].mxu0
      %v1737 = vadd.f32 0.0, %v1736
      %v1738 = vpop.f32.mrb[0].mxu0
      %1739 = vmatprep.mubr.f32.mxu0 0.0
      %1740 = vmatmul.mubr.f32.gmra.mrb[0].mxu0 %v1518
      %v1741 = vpop.f32.mrb[0].mxu0
      %v1742 = vadd.f32 0.0, %v1741
      %v1743 = vpop.f32.mrb[0].mxu0
      %1744 = vmatprep.mubr.f32.mxu0 0.0
      %1745 = vmatmul.mubr.f32.gmra.mrb[0].mxu0 %v1519
      %v1746 = vpop.f32.mrb[0].mxu0
      %v1747 = vadd.f32 0.0, %v1746
      %v1748 = vpop.f32.mrb[0].mxu0
      %1749 = vmatprep.mubr.f32.mxu0 0.0
      %1750 = vmatmul.mubr.f32.gmra.mrb[0].mxu0 %v1520
      %v1751 = vpop.f32.mrb[0].mxu0
      %v1752 = vadd.f32 0.0, %v1751
      %v1753 = vpop.f32.mrb[0].mxu0
      %1754 = vmatprep.mubr.f32.mxu0 0.0
      %1755 = vmatmul.mubr.f32.gmra.mrb[0].mxu0 %v1521
      %v1756 = vpop.f32.mrb[0].mxu0
      %v1757 = vadd.f32 0.0, %v1756
      %v1758 = vpop.f32.mrb[0].mxu0
      %1759 = vmatprep.mubr.f32.mxu0 0.0
      %1760 = vmatmul.mubr.f32.gmra.mrb[0].mxu0 %v1522
      %v1761 = vpop.f32.mrb[0].mxu0
      %v1762 = vadd.f32 0.0, %v1761
      %v1763 = vpop.f32.mrb[0].mxu0
      %1764 = vdwg.mxu0
      %v1765 = vadd.f32 %v1459, %v1607
      %v1766 = vadd.f32 %v1460, %v1612
      %v1767 = vadd.f32 %v1461, %v1617
      %v1768 = vadd.f32 %v1462, %v1622
      %v1769 = vadd.f32 %v1463, %v1627
      %v1770 = vadd.f32 %v1464, %v1632
      %v1771 = vadd.f32 %v1465, %v1637
      %v1772 = vadd.f32 %v1466, %v1642
      %v1773 = vadd.f32 %v1467, %v1647
      %v1774 = vadd.f32 %v1468, %v1652
      %v1775 = vadd.f32 %v1469, %v1657
      %v1776 = vadd.f32 %v1470, %v1662
      %v1777 = vadd.f32 %v1471, %v1667
      %v1778 = vadd.f32 %v1472, %v1672
      %v1779 = vadd.f32 %v1473, %v1677
      %v1780 = vadd.f32 %v1474, %v1682
      %v1781 = vadd.f32 %v1475, %v1687
      %v1782 = vadd.f32 %v1476, %v1692
      %v1783 = vadd.f32 %v1477, %v1697
      %v1784 = vadd.f32 %v1478, %v1702
      %v1785 = vadd.f32 %v1479, %v1707
      %v1786 = vadd.f32 %v1480, %v1712
      %v1787 = vadd.f32 %v1481, %v1717
      %v1788 = vadd.f32 %v1482, %v1722
      %v1789 = vadd.f32 %v1483, %v1727
      %v1790 = vadd.f32 %v1484, %v1732
      %v1791 = vadd.f32 %v1485, %v1737
      %v1792 = vadd.f32 %v1486, %v1742
      %v1793 = vadd.f32 %v1487, %v1747
      %v1794 = vadd.f32 %v1488, %v1752
      %v1795 = vadd.f32 %v1489, %v1757
      %v1796 = vadd.f32 %v1490, %v1762
      %v1797 = vld [vmem:[%s299 + $0x2] sm:$0xff]
      %v1798 = vld [vmem:[%s299 + $0xa] sm:$0xff]
      %v1799 = vld [vmem:[%s299 + $0x1a] sm:$0xff]
      %v1800 = vld [vmem:[%s299 + $0x22] sm:$0xff]
      %v1801 = vld [vmem:[%s299 + $0x32] sm:$0xff]
      %v1802 = vld [vmem:[%s299 + $0x3a] sm:$0xff]
      %v1803 = vld [vmem:[%s299 + $0x4a] sm:$0xff]
      %v1804 = vld [vmem:[%s299 + $0x52] sm:$0xff]
      %v1805 = vld [vmem:[%s299 + $0x62] sm:$0xff]
      %v1806 = vld [vmem:[%s299 + $0x6a] sm:$0xff]
      %v1807 = vld [vmem:[%s299 + $0x7a] sm:$0xff]
      %v1808 = vld [vmem:[%s299 + $0x82] sm:$0xff]
      %v1809 = vld [vmem:[%s299 + $0x92] sm:$0xff]
      %v1810 = vld [vmem:[%s299 + $0x9a] sm:$0xff]
      %v1811 = vld [vmem:[%s299 + $0xaa] sm:$0xff]
      %v1812 = vld [vmem:[%s299 + $0xb2] sm:$0xff]
      %v1813 = vld [vmem:[%s299 + $0xc2] sm:$0xff]
      %v1814 = vld [vmem:[%s299 + $0xca] sm:$0xff]
      %v1815 = vld [vmem:[%s299 + $0xda] sm:$0xff]
      %v1816 = vld [vmem:[%s299 + $0xe2] sm:$0xff]
      %v1817 = vld [vmem:[%s299 + $0xf2] sm:$0xff]
      %v1818 = vld [vmem:[%s299 + $0xfa] sm:$0xff]
      %v1819 = vld [vmem:[%s299 + $0x10a] sm:$0xff]
      %v1820 = vld [vmem:[%s299 + $0x112] sm:$0xff]
      %v1821 = vld [vmem:[%s299 + $0x122] sm:$0xff]
      %v1822 = vld [vmem:[%s299 + $0x12a] sm:$0xff]
      %v1823 = vld [vmem:[%s299 + $0x13a] sm:$0xff]
      %v1824 = vld [vmem:[%s299 + $0x142] sm:$0xff]
      %v1825 = vld [vmem:[%s299 + $0x152] sm:$0xff]
      %v1826 = vld [vmem:[%s299 + $0x15a] sm:$0xff]
      %v1827 = vld [vmem:[%s299 + $0x16a] sm:$0xff]
      %v1828 = vld [vmem:[%s299 + $0x172] sm:$0xff]
      %s1829 = scalar_lea.vmem %s1, 640
      %v1830 = vld [vmem:[%s1829] sm:$0xff]
      %v1831 = vld [vmem:[%s1829 + $0x8] sm:$0xff]
      %v1832 = vld [vmem:[%s1829 + $0x10] sm:$0xff]
      %v1833 = vld [vmem:[%s1829 + $0x18] sm:$0xff]
      %v1834 = vld [vmem:[%s1829 + $0x20] sm:$0xff]
      %v1835 = vld [vmem:[%s1829 + $0x28] sm:$0xff]
      %v1836 = vld [vmem:[%s1829 + $0x30] sm:$0xff]
      %v1837 = vld [vmem:[%s1829 + $0x38] sm:$0xff]
      %v1838 = vld [vmem:[%s1829 + $0x40] sm:$0xff]
      %v1839 = vld [vmem:[%s1829 + $0x48] sm:$0xff]
      %v1840 = vld [vmem:[%s1829 + $0x50] sm:$0xff]
      %v1841 = vld [vmem:[%s1829 + $0x58] sm:$0xff]
      %v1842 = vld [vmem:[%s1829 + $0x60] sm:$0xff]
      %v1843 = vld [vmem:[%s1829 + $0x68] sm:$0xff]
      %v1844 = vld [vmem:[%s1829 + $0x70] sm:$0xff]
      %v1845 = vld [vmem:[%s1829 + $0x78] sm:$0xff]
      %1846 = vmatprep.subr.mxu0 0.0
      %1847 = vmatpush1.msra.mxu0 %v1830
      %1848 = vmatprep.subr.mxu0 0.0
      %1849 = vmatpush1.msra.mxu0 %v1831
      %1850 = vmatprep.subr.mxu0 0.0
      %1851 = vmatpush1.msra.mxu0 %v1832
      %1852 = vmatprep.subr.mxu0 0.0
      %1853 = vmatpush1.msra.mxu0 %v1833
      %1854 = vmatprep.subr.mxu0 0.0
      %1855 = vmatpush1.msra.mxu0 %v1834
      %1856 = vmatprep.subr.mxu0 0.0
      %1857 = vmatpush1.msra.mxu0 %v1835
      %1858 = vmatprep.subr.mxu0 0.0
      %1859 = vmatpush1.msra.mxu0 %v1836
      %1860 = vmatprep.subr.mxu0 0.0
      %1861 = vmatpush1.msra.mxu0 %v1837
      %1862 = vmatprep.subr.mxu0 0.0
      %1863 = vmatpush1.msra.mxu0 %v1838
      %1864 = vmatprep.subr.mxu0 0.0
      %1865 = vmatpush1.msra.mxu0 %v1839
      %1866 = vmatprep.subr.mxu0 0.0
      %1867 = vmatpush1.msra.mxu0 %v1840
      %1868 = vmatprep.subr.mxu0 0.0
      %1869 = vmatpush1.msra.mxu0 %v1841
      %1870 = vmatprep.subr.mxu0 0.0
      %1871 = vmatpush1.msra.mxu0 %v1842
      %1872 = vmatprep.subr.mxu0 0.0
      %1873 = vmatpush1.msra.mxu0 %v1843
      %1874 = vmatprep.subr.mxu0 0.0
      %1875 = vmatpush1.msra.mxu0 %v1844
      %1876 = vmatprep.subr.mxu0 0.0
      %1877 = vmatpush1.msra.mxu0 %v1845
      %1878 = vmatprep.subr.mxu0 0.0
      %1879 = vmatpush1.msra.mxu0 0.0
      %1880 = vmatprep.subr.mxu0 0.0
      %1881 = vmatpush1.msra.mxu0 0.0
      %1882 = vmatprep.subr.mxu0 0.0
      %1883 = vmatpush1.msra.mxu0 0.0
      %1884 = vmatprep.subr.mxu0 0.0
      %1885 = vmatpush1.msra.mxu0 0.0
      %1886 = vmatprep.subr.mxu0 0.0
      %1887 = vmatpush1.msra.mxu0 0.0
      %1888 = vmatprep.subr.mxu0 0.0
      %1889 = vmatpush1.msra.mxu0 0.0
      %1890 = vmatprep.subr.mxu0 0.0
      %1891 = vmatpush1.msra.mxu0 0.0
      %1892 = vmatprep.subr.mxu0 0.0
      %1893 = vmatpush1.msra.mxu0 0.0
      %1894 = vmatprep.subr.mxu0 0.0
      %1895 = vmatpush1.msra.mxu0 0.0
      %1896 = vmatprep.subr.mxu0 0.0
      %1897 = vmatpush1.msra.mxu0 0.0
      %1898 = vmatprep.subr.mxu0 0.0
      %1899 = vmatpush1.msra.mxu0 0.0
      %1900 = vmatprep.subr.mxu0 0.0
      %1901 = vmatpush1.msra.mxu0 0.0
      %1902 = vmatprep.subr.mxu0 0.0
      %1903 = vmatpush1.msra.mxu0 0.0
      %1904 = vmatprep.subr.mxu0 0.0
      %1905 = vmatpush1.msra.mxu0 0.0
      %1906 = vmatprep.subr.mxu0 0.0
      %1907 = vmatpush1.msra.mxu0 0.0
      %1908 = vmatprep.subr.mxu0 0.0
      %1909 = vmatpush1.msra.mxu0 0.0
      %1910 = vmatprep.mubr.f32.mxu0 0.0
      %1911 = vmatmul.mubr.f32.gmra.mrb[0].mxu0 %v1797
      %v1912 = vpop.f32.mrb[0].mxu0
      %v1913 = vadd.f32 0.0, %v1912
      %v1914 = vpop.f32.mrb[0].mxu0
      %1915 = vmatprep.mubr.f32.mxu0 0.0
      %1916 = vmatmul.mubr.f32.gmra.mrb[0].mxu0 %v1798
      %v1917 = vpop.f32.mrb[0].mxu0
      %v1918 = vadd.f32 0.0, %v1917
      %v1919 = vpop.f32.mrb[0].mxu0
      %1920 = vmatprep.mubr.f32.mxu0 0.0
      %1921 = vmatmul.mubr.f32.gmra.mrb[0].mxu0 %v1799
      %v1922 = vpop.f32.mrb[0].mxu0
      %v1923 = vadd.f32 0.0, %v1922
      %v1924 = vpop.f32.mrb[0].mxu0
      %1925 = vmatprep.mubr.f32.mxu0 0.0
      %1926 = vmatmul.mubr.f32.gmra.mrb[0].mxu0 %v1800
      %v1927 = vpop.f32.mrb[0].mxu0
      %v1928 = vadd.f32 0.0, %v1927
      %v1929 = vpop.f32.mrb[0].mxu0
      %1930 = vmatprep.mubr.f32.mxu0 0.0
      %1931 = vmatmul.mubr.f32.gmra.mrb[0].mxu0 %v1801
      %v1932 = vpop.f32.mrb[0].mxu0
      %v1933 = vadd.f32 0.0, %v1932
      %v1934 = vpop.f32.mrb[0].mxu0
      %1935 = vmatprep.mubr.f32.mxu0 0.0
      %1936 = vmatmul.mubr.f32.gmra.mrb[0].mxu0 %v1802
      %v1937 = vpop.f32.mrb[0].mxu0
      %v1938 = vadd.f32 0.0, %v1937
      %v1939 = vpop.f32.mrb[0].mxu0
      %1940 = vmatprep.mubr.f32.mxu0 0.0
      %1941 = vmatmul.mubr.f32.gmra.mrb[0].mxu0 %v1803
      %v1942 = vpop.f32.mrb[0].mxu0
      %v1943 = vadd.f32 0.0, %v1942
      %v1944 = vpop.f32.mrb[0].mxu0
      %1945 = vmatprep.mubr.f32.mxu0 0.0
      %1946 = vmatmul.mubr.f32.gmra.mrb[0].mxu0 %v1804
      %v1947 = vpop.f32.mrb[0].mxu0
      %v1948 = vadd.f32 0.0, %v1947
      %v1949 = vpop.f32.mrb[0].mxu0
      %1950 = vmatprep.mubr.f32.mxu0 0.0
      %1951 = vmatmul.mubr.f32.gmra.mrb[0].mxu0 %v1805
      %v1952 = vpop.f32.mrb[0].mxu0
      %v1953 = vadd.f32 0.0, %v1952
      %v1954 = vpop.f32.mrb[0].mxu0
      %1955 = vmatprep.mubr.f32.mxu0 0.0
      %1956 = vmatmul.mubr.f32.gmra.mrb[0].mxu0 %v1806
      %v1957 = vpop.f32.mrb[0].mxu0
      %v1958 = vadd.f32 0.0, %v1957
      %v1959 = vpop.f32.mrb[0].mxu0
      %1960 = vmatprep.mubr.f32.mxu0 0.0
      %1961 = vmatmul.mubr.f32.gmra.mrb[0].mxu0 %v1807
      %v1962 = vpop.f32.mrb[0].mxu0
      %v1963 = vadd.f32 0.0, %v1962
      %v1964 = vpop.f32.mrb[0].mxu0
      %1965 = vmatprep.mubr.f32.mxu0 0.0
      %1966 = vmatmul.mubr.f32.gmra.mrb[0].mxu0 %v1808
      %v1967 = vpop.f32.mrb[0].mxu0
      %v1968 = vadd.f32 0.0, %v1967
      %v1969 = vpop.f32.mrb[0].mxu0
      %1970 = vmatprep.mubr.f32.mxu0 0.0
      %1971 = vmatmul.mubr.f32.gmra.mrb[0].mxu0 %v1809
      %v1972 = vpop.f32.mrb[0].mxu0
      %v1973 = vadd.f32 0.0, %v1972
      %v1974 = vpop.f32.mrb[0].mxu0
      %1975 = vmatprep.mubr.f32.mxu0 0.0
      %1976 = vmatmul.mubr.f32.gmra.mrb[0].mxu0 %v1810
      %v1977 = vpop.f32.mrb[0].mxu0
      %v1978 = vadd.f32 0.0, %v1977
      %v1979 = vpop.f32.mrb[0].mxu0
      %1980 = vmatprep.mubr.f32.mxu0 0.0
      %1981 = vmatmul.mubr.f32.gmra.mrb[0].mxu0 %v1811
      %v1982 = vpop.f32.mrb[0].mxu0
      %v1983 = vadd.f32 0.0, %v1982
      %v1984 = vpop.f32.mrb[0].mxu0
      %1985 = vmatprep.mubr.f32.mxu0 0.0
      %1986 = vmatmul.mubr.f32.gmra.mrb[0].mxu0 %v1812
      %v1987 = vpop.f32.mrb[0].mxu0
      %v1988 = vadd.f32 0.0, %v1987
      %v1989 = vpop.f32.mrb[0].mxu0
      %1990 = vmatprep.mubr.f32.mxu0 0.0
      %1991 = vmatmul.mubr.f32.gmra.mrb[0].mxu0 %v1813
      %v1992 = vpop.f32.mrb[0].mxu0
      %v1993 = vadd.f32 0.0, %v1992
      %v1994 = vpop.f32.mrb[0].mxu0
      %1995 = vmatprep.mubr.f32.mxu0 0.0
      %1996 = vmatmul.mubr.f32.gmra.mrb[0].mxu0 %v1814
      %v1997 = vpop.f32.mrb[0].mxu0
      %v1998 = vadd.f32 0.0, %v1997
      %v1999 = vpop.f32.mrb[0].mxu0
      %2000 = vmatprep.mubr.f32.mxu0 0.0
      %2001 = vmatmul.mubr.f32.gmra.mrb[0].mxu0 %v1815
      %v2002 = vpop.f32.mrb[0].mxu0
      %v2003 = vadd.f32 0.0, %v2002
      %v2004 = vpop.f32.mrb[0].mxu0
      %2005 = vmatprep.mubr.f32.mxu0 0.0
      %2006 = vmatmul.mubr.f32.gmra.mrb[0].mxu0 %v1816
      %v2007 = vpop.f32.mrb[0].mxu0
      %v2008 = vadd.f32 0.0, %v2007
      %v2009 = vpop.f32.mrb[0].mxu0
      %2010 = vmatprep.mubr.f32.mxu0 0.0
      %2011 = vmatmul.mubr.f32.gmra.mrb[0].mxu0 %v1817
      %v2012 = vpop.f32.mrb[0].mxu0
      %v2013 = vadd.f32 0.0, %v2012
      %v2014 = vpop.f32.mrb[0].mxu0
      %2015 = vmatprep.mubr.f32.mxu0 0.0
      %2016 = vmatmul.mubr.f32.gmra.mrb[0].mxu0 %v1818
      %v2017 = vpop.f32.mrb[0].mxu0
      %v2018 = vadd.f32 0.0, %v2017
      %v2019 = vpop.f32.mrb[0].mxu0
      %2020 = vmatprep.mubr.f32.mxu0 0.0
      %2021 = vmatmul.mubr.f32.gmra.mrb[0].mxu0 %v1819
      %v2022 = vpop.f32.mrb[0].mxu0
      %v2023 = vadd.f32 0.0, %v2022
      %v2024 = vpop.f32.mrb[0].mxu0
      %2025 = vmatprep.mubr.f32.mxu0 0.0
      %2026 = vmatmul.mubr.f32.gmra.mrb[0].mxu0 %v1820
      %v2027 = vpop.f32.mrb[0].mxu0
      %v2028 = vadd.f32 0.0, %v2027
      %v2029 = vpop.f32.mrb[0].mxu0
      %2030 = vmatprep.mubr.f32.mxu0 0.0
      %2031 = vmatmul.mubr.f32.gmra.mrb[0].mxu0 %v1821
      %v2032 = vpop.f32.mrb[0].mxu0
      %v2033 = vadd.f32 0.0, %v2032
      %v2034 = vpop.f32.mrb[0].mxu0
      %2035 = vmatprep.mubr.f32.mxu0 0.0
      %2036 = vmatmul.mubr.f32.gmra.mrb[0].mxu0 %v1822
      %v2037 = vpop.f32.mrb[0].mxu0
      %v2038 = vadd.f32 0.0, %v2037
      %v2039 = vpop.f32.mrb[0].mxu0
      %2040 = vmatprep.mubr.f32.mxu0 0.0
      %2041 = vmatmul.mubr.f32.gmra.mrb[0].mxu0 %v1823
      %v2042 = vpop.f32.mrb[0].mxu0
      %v2043 = vadd.f32 0.0, %v2042
      %v2044 = vpop.f32.mrb[0].mxu0
      %2045 = vmatprep.mubr.f32.mxu0 0.0
      %2046 = vmatmul.mubr.f32.gmra.mrb[0].mxu0 %v1824
      %v2047 = vpop.f32.mrb[0].mxu0
      %v2048 = vadd.f32 0.0, %v2047
      %v2049 = vpop.f32.mrb[0].mxu0
      %2050 = vmatprep.mubr.f32.mxu0 0.0
      %2051 = vmatmul.mubr.f32.gmra.mrb[0].mxu0 %v1825
      %v2052 = vpop.f32.mrb[0].mxu0
      %v2053 = vadd.f32 0.0, %v2052
      %v2054 = vpop.f32.mrb[0].mxu0
      %2055 = vmatprep.mubr.f32.mxu0 0.0
      %2056 = vmatmul.mubr.f32.gmra.mrb[0].mxu0 %v1826
      %v2057 = vpop.f32.mrb[0].mxu0
      %v2058 = vadd.f32 0.0, %v2057
      %v2059 = vpop.f32.mrb[0].mxu0
      %2060 = vmatprep.mubr.f32.mxu0 0.0
      %2061 = vmatmul.mubr.f32.gmra.mrb[0].mxu0 %v1827
      %v2062 = vpop.f32.mrb[0].mxu0
      %v2063 = vadd.f32 0.0, %v2062
      %v2064 = vpop.f32.mrb[0].mxu0
      %2065 = vmatprep.mubr.f32.mxu0 0.0
      %2066 = vmatmul.mubr.f32.gmra.mrb[0].mxu0 %v1828
      %v2067 = vpop.f32.mrb[0].mxu0
      %v2068 = vadd.f32 0.0, %v2067
      %v2069 = vpop.f32.mrb[0].mxu0
      %2070 = vdwg.mxu0
      %v2071 = vadd.f32 %v1765, %v1913
      %v2072 = vadd.f32 %v1766, %v1918
      %v2073 = vadd.f32 %v1767, %v1923
      %v2074 = vadd.f32 %v1768, %v1928
      %v2075 = vadd.f32 %v1769, %v1933
      %v2076 = vadd.f32 %v1770, %v1938
      %v2077 = vadd.f32 %v1771, %v1943
      %v2078 = vadd.f32 %v1772, %v1948
      %v2079 = vadd.f32 %v1773, %v1953
      %v2080 = vadd.f32 %v1774, %v1958
      %v2081 = vadd.f32 %v1775, %v1963
      %v2082 = vadd.f32 %v1776, %v1968
      %v2083 = vadd.f32 %v1777, %v1973
      %v2084 = vadd.f32 %v1778, %v1978
      %v2085 = vadd.f32 %v1779, %v1983
      %v2086 = vadd.f32 %v1780, %v1988
      %v2087 = vadd.f32 %v1781, %v1993
      %v2088 = vadd.f32 %v1782, %v1998
      %v2089 = vadd.f32 %v1783, %v2003
      %v2090 = vadd.f32 %v1784, %v2008
      %v2091 = vadd.f32 %v1785, %v2013
      %v2092 = vadd.f32 %v1786, %v2018
      %v2093 = vadd.f32 %v1787, %v2023
      %v2094 = vadd.f32 %v1788, %v2028
      %v2095 = vadd.f32 %v1789, %v2033
      %v2096 = vadd.f32 %v1790, %v2038
      %v2097 = vadd.f32 %v1791, %v2043
      %v2098 = vadd.f32 %v1792, %v2048
      %v2099 = vadd.f32 %v1793, %v2053
      %v2100 = vadd.f32 %v1794, %v2058
      %v2101 = vadd.f32 %v1795, %v2063
      %v2102 = vadd.f32 %v1796, %v2068
      %s2103 = scalar_lea.vmem [#allocation2], 48
      %v2104 = vld [vmem:[%s2103] sm:$0xff]
      %v2105 = vld [vmem:[%s2103 + $0x8] sm:$0xff]
      %v2106 = vld [vmem:[%s2103 + $0x18] sm:$0xff]
      %v2107 = vld [vmem:[%s2103 + $0x20] sm:$0xff]
      %v2108 = vld [vmem:[%s2103 + $0x30] sm:$0xff]
      %v2109 = vld [vmem:[%s2103 + $0x38] sm:$0xff]
      %v2110 = vld [vmem:[%s2103 + $0x48] sm:$0xff]
      %v2111 = vld [vmem:[%s2103 + $0x50] sm:$0xff]
      %v2112 = vld [vmem:[%s2103 + $0x60] sm:$0xff]
      %v2113 = vld [vmem:[%s2103 + $0x68] sm:$0xff]
      %v2114 = vld [vmem:[%s2103 + $0x78] sm:$0xff]
      %v2115 = vld [vmem:[%s2103 + $0x80] sm:$0xff]
      %v2116 = vld [vmem:[%s2103 + $0x90] sm:$0xff]
      %v2117 = vld [vmem:[%s2103 + $0x98] sm:$0xff]
      %v2118 = vld [vmem:[%s2103 + $0xa8] sm:$0xff]
      %v2119 = vld [vmem:[%s2103 + $0xb0] sm:$0xff]
      %v2120 = vld [vmem:[%s2103 + $0xc0] sm:$0xff]
      %v2121 = vld [vmem:[%s2103 + $0xc8] sm:$0xff]
      %v2122 = vld [vmem:[%s2103 + $0xd8] sm:$0xff]
      %v2123 = vld [vmem:[%s2103 + $0xe0] sm:$0xff]
      %v2124 = vld [vmem:[%s2103 + $0xf0] sm:$0xff]
      %v2125 = vld [vmem:[%s2103 + $0xf8] sm:$0xff]
      %v2126 = vld [vmem:[%s2103 + $0x108] sm:$0xff]
      %v2127 = vld [vmem:[%s2103 + $0x110] sm:$0xff]
      %v2128 = vld [vmem:[%s2103 + $0x120] sm:$0xff]
      %v2129 = vld [vmem:[%s2103 + $0x128] sm:$0xff]
      %v2130 = vld [vmem:[%s2103 + $0x138] sm:$0xff]
      %v2131 = vld [vmem:[%s2103 + $0x140] sm:$0xff]
      %v2132 = vld [vmem:[%s2103 + $0x150] sm:$0xff]
      %v2133 = vld [vmem:[%s2103 + $0x158] sm:$0xff]
      %v2134 = vld [vmem:[%s2103 + $0x168] sm:$0xff]
      %v2135 = vld [vmem:[%s2103 + $0x170] sm:$0xff]
      %s2136 = scalar_lea.vmem %s1, 768
      %v2137 = vld [vmem:[%s2136] sm:$0xff]
      %v2138 = vld [vmem:[%s2136 + $0x8] sm:$0xff]
      %v2139 = vld [vmem:[%s2136 + $0x10] sm:$0xff]
      %v2140 = vld [vmem:[%s2136 + $0x18] sm:$0xff]
      %v2141 = vld [vmem:[%s2136 + $0x20] sm:$0xff]
      %v2142 = vld [vmem:[%s2136 + $0x28] sm:$0xff]
      %v2143 = vld [vmem:[%s2136 + $0x30] sm:$0xff]
      %v2144 = vld [vmem:[%s2136 + $0x38] sm:$0xff]
      %v2145 = vld [vmem:[%s2136 + $0x40] sm:$0xff]
      %v2146 = vld [vmem:[%s2136 + $0x48] sm:$0xff]
      %v2147 = vld [vmem:[%s2136 + $0x50] sm:$0xff]
      %v2148 = vld [vmem:[%s2136 + $0x58] sm:$0xff]
      %v2149 = vld [vmem:[%s2136 + $0x60] sm:$0xff]
      %v2150 = vld [vmem:[%s2136 + $0x68] sm:$0xff]
      %v2151 = vld [vmem:[%s2136 + $0x70] sm:$0xff]
      %v2152 = vld [vmem:[%s2136 + $0x78] sm:$0xff]
      %2153 = vmatprep.subr.mxu0 0.0
      %2154 = vmatpush1.msra.mxu0 %v2137
      %2155 = vmatprep.subr.mxu0 0.0
      %2156 = vmatpush1.msra.mxu0 %v2138
      %2157 = vmatprep.subr.mxu0 0.0
      %2158 = vmatpush1.msra.mxu0 %v2139
      %2159 = vmatprep.subr.mxu0 0.0
      %2160 = vmatpush1.msra.mxu0 %v2140
      %2161 = vmatprep.subr.mxu0 0.0
      %2162 = vmatpush1.msra.mxu0 %v2141
      %2163 = vmatprep.subr.mxu0 0.0
      %2164 = vmatpush1.msra.mxu0 %v2142
      %2165 = vmatprep.subr.mxu0 0.0
      %2166 = vmatpush1.msra.mxu0 %v2143
      %2167 = vmatprep.subr.mxu0 0.0
      %2168 = vmatpush1.msra.mxu0 %v2144
      %2169 = vmatprep.subr.mxu0 0.0
      %2170 = vmatpush1.msra.mxu0 %v2145
      %2171 = vmatprep.subr.mxu0 0.0
      %2172 = vmatpush1.msra.mxu0 %v2146
      %2173 = vmatprep.subr.mxu0 0.0
      %2174 = vmatpush1.msra.mxu0 %v2147
      %2175 = vmatprep.subr.mxu0 0.0
      %2176 = vmatpush1.msra.mxu0 %v2148
      %2177 = vmatprep.subr.mxu0 0.0
      %2178 = vmatpush1.msra.mxu0 %v2149
      %2179 = vmatprep.subr.mxu0 0.0
      %2180 = vmatpush1.msra.mxu0 %v2150
      %2181 = vmatprep.subr.mxu0 0.0
      %2182 = vmatpush1.msra.mxu0 %v2151
      %2183 = vmatprep.subr.mxu0 0.0
      %2184 = vmatpush1.msra.mxu0 %v2152
      %2185 = vmatprep.subr.mxu0 0.0
      %2186 = vmatpush1.msra.mxu0 0.0
      %2187 = vmatprep.subr.mxu0 0.0
      %2188 = vmatpush1.msra.mxu0 0.0
      %2189 = vmatprep.subr.mxu0 0.0
      %2190 = vmatpush1.msra.mxu0 0.0
      %2191 = vmatprep.subr.mxu0 0.0
      %2192 = vmatpush1.msra.mxu0 0.0
      %2193 = vmatprep.subr.mxu0 0.0
      %2194 = vmatpush1.msra.mxu0 0.0
      %2195 = vmatprep.subr.mxu0 0.0
      %2196 = vmatpush1.msra.mxu0 0.0
      %2197 = vmatprep.subr.mxu0 0.0
      %2198 = vmatpush1.msra.mxu0 0.0
      %2199 = vmatprep.subr.mxu0 0.0
      %2200 = vmatpush1.msra.mxu0 0.0
      %2201 = vmatprep.subr.mxu0 0.0
      %2202 = vmatpush1.msra.mxu0 0.0
      %2203 = vmatprep.subr.mxu0 0.0
      %2204 = vmatpush1.msra.mxu0 0.0
      %2205 = vmatprep.subr.mxu0 0.0
      %2206 = vmatpush1.msra.mxu0 0.0
      %2207 = vmatprep.subr.mxu0 0.0
      %2208 = vmatpush1.msra.mxu0 0.0
      %2209 = vmatprep.subr.mxu0 0.0
      %2210 = vmatpush1.msra.mxu0 0.0
      %2211 = vmatprep.subr.mxu0 0.0
      %2212 = vmatpush1.msra.mxu0 0.0
      %2213 = vmatprep.subr.mxu0 0.0
      %2214 = vmatpush1.msra.mxu0 0.0
      %2215 = vmatprep.subr.mxu0 0.0
      %2216 = vmatpush1.msra.mxu0 0.0
      %2217 = vmatprep.mubr.f32.mxu0 0.0
      %2218 = vmatmul.mubr.f32.gmra.mrb[0].mxu0 %v2104
      %v2219 = vpop.f32.mrb[0].mxu0
      %v2220 = vadd.f32 0.0, %v2219
      %v2221 = vpop.f32.mrb[0].mxu0
      %2222 = vmatprep.mubr.f32.mxu0 0.0
      %2223 = vmatmul.mubr.f32.gmra.mrb[0].mxu0 %v2105
      %v2224 = vpop.f32.mrb[0].mxu0
      %v2225 = vadd.f32 0.0, %v2224
      %v2226 = vpop.f32.mrb[0].mxu0
      %2227 = vmatprep.mubr.f32.mxu0 0.0
      %2228 = vmatmul.mubr.f32.gmra.mrb[0].mxu0 %v2106
      %v2229 = vpop.f32.mrb[0].mxu0
      %v2230 = vadd.f32 0.0, %v2229
      %v2231 = vpop.f32.mrb[0].mxu0
      %2232 = vmatprep.mubr.f32.mxu0 0.0
      %2233 = vmatmul.mubr.f32.gmra.mrb[0].mxu0 %v2107
      %v2234 = vpop.f32.mrb[0].mxu0
      %v2235 = vadd.f32 0.0, %v2234
      %v2236 = vpop.f32.mrb[0].mxu0
      %2237 = vmatprep.mubr.f32.mxu0 0.0
      %2238 = vmatmul.mubr.f32.gmra.mrb[0].mxu0 %v2108
      %v2239 = vpop.f32.mrb[0].mxu0
      %v2240 = vadd.f32 0.0, %v2239
      %v2241 = vpop.f32.mrb[0].mxu0
      %2242 = vmatprep.mubr.f32.mxu0 0.0
      %2243 = vmatmul.mubr.f32.gmra.mrb[0].mxu0 %v2109
      %v2244 = vpop.f32.mrb[0].mxu0
      %v2245 = vadd.f32 0.0, %v2244
      %v2246 = vpop.f32.mrb[0].mxu0
      %2247 = vmatprep.mubr.f32.mxu0 0.0
      %2248 = vmatmul.mubr.f32.gmra.mrb[0].mxu0 %v2110
      %v2249 = vpop.f32.mrb[0].mxu0
      %v2250 = vadd.f32 0.0, %v2249
      %v2251 = vpop.f32.mrb[0].mxu0
      %2252 = vmatprep.mubr.f32.mxu0 0.0
      %2253 = vmatmul.mubr.f32.gmra.mrb[0].mxu0 %v2111
      %v2254 = vpop.f32.mrb[0].mxu0
      %v2255 = vadd.f32 0.0, %v2254
      %v2256 = vpop.f32.mrb[0].mxu0
      %2257 = vmatprep.mubr.f32.mxu0 0.0
      %2258 = vmatmul.mubr.f32.gmra.mrb[0].mxu0 %v2112
      %v2259 = vpop.f32.mrb[0].mxu0
      %v2260 = vadd.f32 0.0, %v2259
      %v2261 = vpop.f32.mrb[0].mxu0
      %2262 = vmatprep.mubr.f32.mxu0 0.0
      %2263 = vmatmul.mubr.f32.gmra.mrb[0].mxu0 %v2113
      %v2264 = vpop.f32.mrb[0].mxu0
      %v2265 = vadd.f32 0.0, %v2264
      %v2266 = vpop.f32.mrb[0].mxu0
      %2267 = vmatprep.mubr.f32.mxu0 0.0
      %2268 = vmatmul.mubr.f32.gmra.mrb[0].mxu0 %v2114
      %v2269 = vpop.f32.mrb[0].mxu0
      %v2270 = vadd.f32 0.0, %v2269
      %v2271 = vpop.f32.mrb[0].mxu0
      %2272 = vmatprep.mubr.f32.mxu0 0.0
      %2273 = vmatmul.mubr.f32.gmra.mrb[0].mxu0 %v2115
      %v2274 = vpop.f32.mrb[0].mxu0
      %v2275 = vadd.f32 0.0, %v2274
      %v2276 = vpop.f32.mrb[0].mxu0
      %2277 = vmatprep.mubr.f32.mxu0 0.0
      %2278 = vmatmul.mubr.f32.gmra.mrb[0].mxu0 %v2116
      %v2279 = vpop.f32.mrb[0].mxu0
      %v2280 = vadd.f32 0.0, %v2279
      %v2281 = vpop.f32.mrb[0].mxu0
      %2282 = vmatprep.mubr.f32.mxu0 0.0
      %2283 = vmatmul.mubr.f32.gmra.mrb[0].mxu0 %v2117
      %v2284 = vpop.f32.mrb[0].mxu0
      %v2285 = vadd.f32 0.0, %v2284
      %v2286 = vpop.f32.mrb[0].mxu0
      %2287 = vmatprep.mubr.f32.mxu0 0.0
      %2288 = vmatmul.mubr.f32.gmra.mrb[0].mxu0 %v2118
      %v2289 = vpop.f32.mrb[0].mxu0
      %v2290 = vadd.f32 0.0, %v2289
      %v2291 = vpop.f32.mrb[0].mxu0
      %2292 = vmatprep.mubr.f32.mxu0 0.0
      %2293 = vmatmul.mubr.f32.gmra.mrb[0].mxu0 %v2119
      %v2294 = vpop.f32.mrb[0].mxu0
      %v2295 = vadd.f32 0.0, %v2294
      %v2296 = vpop.f32.mrb[0].mxu0
      %2297 = vmatprep.mubr.f32.mxu0 0.0
      %2298 = vmatmul.mubr.f32.gmra.mrb[0].mxu0 %v2120
      %v2299 = vpop.f32.mrb[0].mxu0
      %v2300 = vadd.f32 0.0, %v2299
      %v2301 = vpop.f32.mrb[0].mxu0
      %2302 = vmatprep.mubr.f32.mxu0 0.0
      %2303 = vmatmul.mubr.f32.gmra.mrb[0].mxu0 %v2121
      %v2304 = vpop.f32.mrb[0].mxu0
      %v2305 = vadd.f32 0.0, %v2304
      %v2306 = vpop.f32.mrb[0].mxu0
      %2307 = vmatprep.mubr.f32.mxu0 0.0
      %2308 = vmatmul.mubr.f32.gmra.mrb[0].mxu0 %v2122
      %v2309 = vpop.f32.mrb[0].mxu0
      %v2310 = vadd.f32 0.0, %v2309
      %v2311 = vpop.f32.mrb[0].mxu0
      %2312 = vmatprep.mubr.f32.mxu0 0.0
      %2313 = vmatmul.mubr.f32.gmra.mrb[0].mxu0 %v2123
      %v2314 = vpop.f32.mrb[0].mxu0
      %v2315 = vadd.f32 0.0, %v2314
      %v2316 = vpop.f32.mrb[0].mxu0
      %2317 = vmatprep.mubr.f32.mxu0 0.0
      %2318 = vmatmul.mubr.f32.gmra.mrb[0].mxu0 %v2124
      %v2319 = vpop.f32.mrb[0].mxu0
      %v2320 = vadd.f32 0.0, %v2319
      %v2321 = vpop.f32.mrb[0].mxu0
      %2322 = vmatprep.mubr.f32.mxu0 0.0
      %2323 = vmatmul.mubr.f32.gmra.mrb[0].mxu0 %v2125
      %v2324 = vpop.f32.mrb[0].mxu0
      %v2325 = vadd.f32 0.0, %v2324
      %v2326 = vpop.f32.mrb[0].mxu0
      %2327 = vmatprep.mubr.f32.mxu0 0.0
      %2328 = vmatmul.mubr.f32.gmra.mrb[0].mxu0 %v2126
      %v2329 = vpop.f32.mrb[0].mxu0
      %v2330 = vadd.f32 0.0, %v2329
      %v2331 = vpop.f32.mrb[0].mxu0
      %2332 = vmatprep.mubr.f32.mxu0 0.0
      %2333 = vmatmul.mubr.f32.gmra.mrb[0].mxu0 %v2127
      %v2334 = vpop.f32.mrb[0].mxu0
      %v2335 = vadd.f32 0.0, %v2334
      %v2336 = vpop.f32.mrb[0].mxu0
      %2337 = vmatprep.mubr.f32.mxu0 0.0
      %2338 = vmatmul.mubr.f32.gmra.mrb[0].mxu0 %v2128
      %v2339 = vpop.f32.mrb[0].mxu0
      %v2340 = vadd.f32 0.0, %v2339
      %v2341 = vpop.f32.mrb[0].mxu0
      %2342 = vmatprep.mubr.f32.mxu0 0.0
      %2343 = vmatmul.mubr.f32.gmra.mrb[0].mxu0 %v2129
      %v2344 = vpop.f32.mrb[0].mxu0
      %v2345 = vadd.f32 0.0, %v2344
      %v2346 = vpop.f32.mrb[0].mxu0
      %2347 = vmatprep.mubr.f32.mxu0 0.0
      %2348 = vmatmul.mubr.f32.gmra.mrb[0].mxu0 %v2130
      %v2349 = vpop.f32.mrb[0].mxu0
      %v2350 = vadd.f32 0.0, %v2349
      %v2351 = vpop.f32.mrb[0].mxu0
      %2352 = vmatprep.mubr.f32.mxu0 0.0
      %2353 = vmatmul.mubr.f32.gmra.mrb[0].mxu0 %v2131
      %v2354 = vpop.f32.mrb[0].mxu0
      %v2355 = vadd.f32 0.0, %v2354
      %v2356 = vpop.f32.mrb[0].mxu0
      %2357 = vmatprep.mubr.f32.mxu0 0.0
      %2358 = vmatmul.mubr.f32.gmra.mrb[0].mxu0 %v2132
      %v2359 = vpop.f32.mrb[0].mxu0
      %v2360 = vadd.f32 0.0, %v2359
      %v2361 = vpop.f32.mrb[0].mxu0
      %2362 = vmatprep.mubr.f32.mxu0 0.0
      %2363 = vmatmul.mubr.f32.gmra.mrb[0].mxu0 %v2133
      %v2364 = vpop.f32.mrb[0].mxu0
      %v2365 = vadd.f32 0.0, %v2364
      %v2366 = vpop.f32.mrb[0].mxu0
      %2367 = vmatprep.mubr.f32.mxu0 0.0
      %2368 = vmatmul.mubr.f32.gmra.mrb[0].mxu0 %v2134
      %v2369 = vpop.f32.mrb[0].mxu0
      %v2370 = vadd.f32 0.0, %v2369
      %v2371 = vpop.f32.mrb[0].mxu0
      %2372 = vmatprep.mubr.f32.mxu0 0.0
      %2373 = vmatmul.mubr.f32.gmra.mrb[0].mxu0 %v2135
      %v2374 = vpop.f32.mrb[0].mxu0
      %v2375 = vadd.f32 0.0, %v2374
      %v2376 = vpop.f32.mrb[0].mxu0
      %2377 = vdwg.mxu0
      %v2378 = vadd.f32 %v2071, %v2220
      %v2379 = vadd.f32 %v2072, %v2225
      %v2380 = vadd.f32 %v2073, %v2230
      %v2381 = vadd.f32 %v2074, %v2235
      %v2382 = vadd.f32 %v2075, %v2240
      %v2383 = vadd.f32 %v2076, %v2245
      %v2384 = vadd.f32 %v2077, %v2250
      %v2385 = vadd.f32 %v2078, %v2255
      %v2386 = vadd.f32 %v2079, %v2260
      %v2387 = vadd.f32 %v2080, %v2265
      %v2388 = vadd.f32 %v2081, %v2270
      %v2389 = vadd.f32 %v2082, %v2275
      %v2390 = vadd.f32 %v2083, %v2280
      %v2391 = vadd.f32 %v2084, %v2285
      %v2392 = vadd.f32 %v2085, %v2290
      %v2393 = vadd.f32 %v2086, %v2295
      %v2394 = vadd.f32 %v2087, %v2300
      %v2395 = vadd.f32 %v2088, %v2305
      %v2396 = vadd.f32 %v2089, %v2310
      %v2397 = vadd.f32 %v2090, %v2315
      %v2398 = vadd.f32 %v2091, %v2320
      %v2399 = vadd.f32 %v2092, %v2325
      %v2400 = vadd.f32 %v2093, %v2330
      %v2401 = vadd.f32 %v2094, %v2335
      %v2402 = vadd.f32 %v2095, %v2340
      %v2403 = vadd.f32 %v2096, %v2345
      %v2404 = vadd.f32 %v2097, %v2350
      %v2405 = vadd.f32 %v2098, %v2355
      %v2406 = vadd.f32 %v2099, %v2360
      %v2407 = vadd.f32 %v2100, %v2365
      %v2408 = vadd.f32 %v2101, %v2370
      %v2409 = vadd.f32 %v2102, %v2375
      %v2410 = vld [vmem:[%s2103 + $0x1] sm:$0xff]
      %v2411 = vld [vmem:[%s2103 + $0x9] sm:$0xff]
      %v2412 = vld [vmem:[%s2103 + $0x19] sm:$0xff]
      %v2413 = vld [vmem:[%s2103 + $0x21] sm:$0xff]
      %v2414 = vld [vmem:[%s2103 + $0x31] sm:$0xff]
      %v2415 = vld [vmem:[%s2103 + $0x39] sm:$0xff]
      %v2416 = vld [vmem:[%s2103 + $0x49] sm:$0xff]
      %v2417 = vld [vmem:[%s2103 + $0x51] sm:$0xff]
      %v2418 = vld [vmem:[%s2103 + $0x61] sm:$0xff]
      %v2419 = vld [vmem:[%s2103 + $0x69] sm:$0xff]
      %v2420 = vld [vmem:[%s2103 + $0x79] sm:$0xff]
      %v2421 = vld [vmem:[%s2103 + $0x81] sm:$0xff]
      %v2422 = vld [vmem:[%s2103 + $0x91] sm:$0xff]
      %v2423 = vld [vmem:[%s2103 + $0x99] sm:$0xff]
      %v2424 = vld [vmem:[%s2103 + $0xa9] sm:$0xff]
      %v2425 = vld [vmem:[%s2103 + $0xb1] sm:$0xff]
      %v2426 = vld [vmem:[%s2103 + $0xc1] sm:$0xff]
      %v2427 = vld [vmem:[%s2103 + $0xc9] sm:$0xff]
      %v2428 = vld [vmem:[%s2103 + $0xd9] sm:$0xff]
      %v2429 = vld [vmem:[%s2103 + $0xe1] sm:$0xff]
      %v2430 = vld [vmem:[%s2103 + $0xf1] sm:$0xff]
      %v2431 = vld [vmem:[%s2103 + $0xf9] sm:$0xff]
      %v2432 = vld [vmem:[%s2103 + $0x109] sm:$0xff]
      %v2433 = vld [vmem:[%s2103 + $0x111] sm:$0xff]
      %v2434 = vld [vmem:[%s2103 + $0x121] sm:$0xff]
      %v2435 = vld [vmem:[%s2103 + $0x129] sm:$0xff]
      %v2436 = vld [vmem:[%s2103 + $0x139] sm:$0xff]
      %v2437 = vld [vmem:[%s2103 + $0x141] sm:$0xff]
      %v2438 = vld [vmem:[%s2103 + $0x151] sm:$0xff]
      %v2439 = vld [vmem:[%s2103 + $0x159] sm:$0xff]
      %v2440 = vld [vmem:[%s2103 + $0x169] sm:$0xff]
      %v2441 = vld [vmem:[%s2103 + $0x171] sm:$0xff]
      %s2442 = scalar_lea.vmem %s1, 896
      %v2443 = vld [vmem:[%s2442] sm:$0xff]
      %v2444 = vld [vmem:[%s2442 + $0x8] sm:$0xff]
      %v2445 = vld [vmem:[%s2442 + $0x10] sm:$0xff]
      %v2446 = vld [vmem:[%s2442 + $0x18] sm:$0xff]
      %v2447 = vld [vmem:[%s2442 + $0x20] sm:$0xff]
      %v2448 = vld [vmem:[%s2442 + $0x28] sm:$0xff]
      %v2449 = vld [vmem:[%s2442 + $0x30] sm:$0xff]
      %v2450 = vld [vmem:[%s2442 + $0x38] sm:$0xff]
      %v2451 = vld [vmem:[%s2442 + $0x40] sm:$0xff]
      %v2452 = vld [vmem:[%s2442 + $0x48] sm:$0xff]
      %v2453 = vld [vmem:[%s2442 + $0x50] sm:$0xff]
      %v2454 = vld [vmem:[%s2442 + $0x58] sm:$0xff]
      %v2455 = vld [vmem:[%s2442 + $0x60] sm:$0xff]
      %v2456 = vld [vmem:[%s2442 + $0x68] sm:$0xff]
      %v2457 = vld [vmem:[%s2442 + $0x70] sm:$0xff]
      %v2458 = vld [vmem:[%s2442 + $0x78] sm:$0xff]
      %2459 = vmatprep.subr.mxu0 0.0
      %2460 = vmatpush1.msra.mxu0 %v2443
      %2461 = vmatprep.subr.mxu0 0.0
      %2462 = vmatpush1.msra.mxu0 %v2444
      %2463 = vmatprep.subr.mxu0 0.0
      %2464 = vmatpush1.msra.mxu0 %v2445
      %2465 = vmatprep.subr.mxu0 0.0
      %2466 = vmatpush1.msra.mxu0 %v2446
      %2467 = vmatprep.subr.mxu0 0.0
      %2468 = vmatpush1.msra.mxu0 %v2447
      %2469 = vmatprep.subr.mxu0 0.0
      %2470 = vmatpush1.msra.mxu0 %v2448
      %2471 = vmatprep.subr.mxu0 0.0
      %2472 = vmatpush1.msra.mxu0 %v2449
      %2473 = vmatprep.subr.mxu0 0.0
      %2474 = vmatpush1.msra.mxu0 %v2450
      %2475 = vmatprep.subr.mxu0 0.0
      %2476 = vmatpush1.msra.mxu0 %v2451
      %2477 = vmatprep.subr.mxu0 0.0
      %2478 = vmatpush1.msra.mxu0 %v2452
      %2479 = vmatprep.subr.mxu0 0.0
      %2480 = vmatpush1.msra.mxu0 %v2453
      %2481 = vmatprep.subr.mxu0 0.0
      %2482 = vmatpush1.msra.mxu0 %v2454
      %2483 = vmatprep.subr.mxu0 0.0
      %2484 = vmatpush1.msra.mxu0 %v2455
      %2485 = vmatprep.subr.mxu0 0.0
      %2486 = vmatpush1.msra.mxu0 %v2456
      %2487 = vmatprep.subr.mxu0 0.0
      %2488 = vmatpush1.msra.mxu0 %v2457
      %2489 = vmatprep.subr.mxu0 0.0
      %2490 = vmatpush1.msra.mxu0 %v2458
      %2491 = vmatprep.subr.mxu0 0.0
      %2492 = vmatpush1.msra.mxu0 0.0
      %2493 = vmatprep.subr.mxu0 0.0
      %2494 = vmatpush1.msra.mxu0 0.0
      %2495 = vmatprep.subr.mxu0 0.0
      %2496 = vmatpush1.msra.mxu0 0.0
      %2497 = vmatprep.subr.mxu0 0.0
      %2498 = vmatpush1.msra.mxu0 0.0
      %2499 = vmatprep.subr.mxu0 0.0
      %2500 = vmatpush1.msra.mxu0 0.0
      %2501 = vmatprep.subr.mxu0 0.0
      %2502 = vmatpush1.msra.mxu0 0.0
      %2503 = vmatprep.subr.mxu0 0.0
      %2504 = vmatpush1.msra.mxu0 0.0
      %2505 = vmatprep.subr.mxu0 0.0
      %2506 = vmatpush1.msra.mxu0 0.0
      %2507 = vmatprep.subr.mxu0 0.0
      %2508 = vmatpush1.msra.mxu0 0.0
      %2509 = vmatprep.subr.mxu0 0.0
      %2510 = vmatpush1.msra.mxu0 0.0
      %2511 = vmatprep.subr.mxu0 0.0
      %2512 = vmatpush1.msra.mxu0 0.0
      %2513 = vmatprep.subr.mxu0 0.0
      %2514 = vmatpush1.msra.mxu0 0.0
      %2515 = vmatprep.subr.mxu0 0.0
      %2516 = vmatpush1.msra.mxu0 0.0
      %2517 = vmatprep.subr.mxu0 0.0
      %2518 = vmatpush1.msra.mxu0 0.0
      %2519 = vmatprep.subr.mxu0 0.0
      %2520 = vmatpush1.msra.mxu0 0.0
      %2521 = vmatprep.subr.mxu0 0.0
      %2522 = vmatpush1.msra.mxu0 0.0
      %2523 = vmatprep.mubr.f32.mxu0 0.0
      %2524 = vmatmul.mubr.f32.gmra.mrb[0].mxu0 %v2410
      %v2525 = vpop.f32.mrb[0].mxu0
      %v2526 = vadd.f32 0.0, %v2525
      %v2527 = vpop.f32.mrb[0].mxu0
      %2528 = vmatprep.mubr.f32.mxu0 0.0
      %2529 = vmatmul.mubr.f32.gmra.mrb[0].mxu0 %v2411
      %v2530 = vpop.f32.mrb[0].mxu0
      %v2531 = vadd.f32 0.0, %v2530
      %v2532 = vpop.f32.mrb[0].mxu0
      %2533 = vmatprep.mubr.f32.mxu0 0.0
      %2534 = vmatmul.mubr.f32.gmra.mrb[0].mxu0 %v2412
      %v2535 = vpop.f32.mrb[0].mxu0
      %v2536 = vadd.f32 0.0, %v2535
      %v2537 = vpop.f32.mrb[0].mxu0
      %2538 = vmatprep.mubr.f32.mxu0 0.0
      %2539 = vmatmul.mubr.f32.gmra.mrb[0].mxu0 %v2413
      %v2540 = vpop.f32.mrb[0].mxu0
      %v2541 = vadd.f32 0.0, %v2540
      %v2542 = vpop.f32.mrb[0].mxu0
      %2543 = vmatprep.mubr.f32.mxu0 0.0
      %2544 = vmatmul.mubr.f32.gmra.mrb[0].mxu0 %v2414
      %v2545 = vpop.f32.mrb[0].mxu0
      %v2546 = vadd.f32 0.0, %v2545
      %v2547 = vpop.f32.mrb[0].mxu0
      %2548 = vmatprep.mubr.f32.mxu0 0.0
      %2549 = vmatmul.mubr.f32.gmra.mrb[0].mxu0 %v2415
      %v2550 = vpop.f32.mrb[0].mxu0
      %v2551 = vadd.f32 0.0, %v2550
      %v2552 = vpop.f32.mrb[0].mxu0
      %2553 = vmatprep.mubr.f32.mxu0 0.0
      %2554 = vmatmul.mubr.f32.gmra.mrb[0].mxu0 %v2416
      %v2555 = vpop.f32.mrb[0].mxu0
      %v2556 = vadd.f32 0.0, %v2555
      %v2557 = vpop.f32.mrb[0].mxu0
      %2558 = vmatprep.mubr.f32.mxu0 0.0
      %2559 = vmatmul.mubr.f32.gmra.mrb[0].mxu0 %v2417
      %v2560 = vpop.f32.mrb[0].mxu0
      %v2561 = vadd.f32 0.0, %v2560
      %v2562 = vpop.f32.mrb[0].mxu0
      %2563 = vmatprep.mubr.f32.mxu0 0.0
      %2564 = vmatmul.mubr.f32.gmra.mrb[0].mxu0 %v2418
      %v2565 = vpop.f32.mrb[0].mxu0
      %v2566 = vadd.f32 0.0, %v2565
      %v2567 = vpop.f32.mrb[0].mxu0
      %2568 = vmatprep.mubr.f32.mxu0 0.0
      %2569 = vmatmul.mubr.f32.gmra.mrb[0].mxu0 %v2419
      %v2570 = vpop.f32.mrb[0].mxu0
      %v2571 = vadd.f32 0.0, %v2570
      %v2572 = vpop.f32.mrb[0].mxu0
      %2573 = vmatprep.mubr.f32.mxu0 0.0
      %2574 = vmatmul.mubr.f32.gmra.mrb[0].mxu0 %v2420
      %v2575 = vpop.f32.mrb[0].mxu0
      %v2576 = vadd.f32 0.0, %v2575
      %v2577 = vpop.f32.mrb[0].mxu0
      %2578 = vmatprep.mubr.f32.mxu0 0.0
      %2579 = vmatmul.mubr.f32.gmra.mrb[0].mxu0 %v2421
      %v2580 = vpop.f32.mrb[0].mxu0
      %v2581 = vadd.f32 0.0, %v2580
      %v2582 = vpop.f32.mrb[0].mxu0
      %2583 = vmatprep.mubr.f32.mxu0 0.0
      %2584 = vmatmul.mubr.f32.gmra.mrb[0].mxu0 %v2422
      %v2585 = vpop.f32.mrb[0].mxu0
      %v2586 = vadd.f32 0.0, %v2585
      %v2587 = vpop.f32.mrb[0].mxu0
      %2588 = vmatprep.mubr.f32.mxu0 0.0
      %2589 = vmatmul.mubr.f32.gmra.mrb[0].mxu0 %v2423
      %v2590 = vpop.f32.mrb[0].mxu0
      %v2591 = vadd.f32 0.0, %v2590
      %v2592 = vpop.f32.mrb[0].mxu0
      %2593 = vmatprep.mubr.f32.mxu0 0.0
      %2594 = vmatmul.mubr.f32.gmra.mrb[0].mxu0 %v2424
      %v2595 = vpop.f32.mrb[0].mxu0
      %v2596 = vadd.f32 0.0, %v2595
      %v2597 = vpop.f32.mrb[0].mxu0
      %2598 = vmatprep.mubr.f32.mxu0 0.0
      %2599 = vmatmul.mubr.f32.gmra.mrb[0].mxu0 %v2425
      %v2600 = vpop.f32.mrb[0].mxu0
      %v2601 = vadd.f32 0.0, %v2600
      %v2602 = vpop.f32.mrb[0].mxu0
      %2603 = vmatprep.mubr.f32.mxu0 0.0
      %2604 = vmatmul.mubr.f32.gmra.mrb[0].mxu0 %v2426
      %v2605 = vpop.f32.mrb[0].mxu0
      %v2606 = vadd.f32 0.0, %v2605
      %v2607 = vpop.f32.mrb[0].mxu0
      %2608 = vmatprep.mubr.f32.mxu0 0.0
      %2609 = vmatmul.mubr.f32.gmra.mrb[0].mxu0 %v2427
      %v2610 = vpop.f32.mrb[0].mxu0
      %v2611 = vadd.f32 0.0, %v2610
      %v2612 = vpop.f32.mrb[0].mxu0
      %2613 = vmatprep.mubr.f32.mxu0 0.0
      %2614 = vmatmul.mubr.f32.gmra.mrb[0].mxu0 %v2428
      %v2615 = vpop.f32.mrb[0].mxu0
      %v2616 = vadd.f32 0.0, %v2615
      %v2617 = vpop.f32.mrb[0].mxu0
      %2618 = vmatprep.mubr.f32.mxu0 0.0
      %2619 = vmatmul.mubr.f32.gmra.mrb[0].mxu0 %v2429
      %v2620 = vpop.f32.mrb[0].mxu0
      %v2621 = vadd.f32 0.0, %v2620
      %v2622 = vpop.f32.mrb[0].mxu0
      %2623 = vmatprep.mubr.f32.mxu0 0.0
      %2624 = vmatmul.mubr.f32.gmra.mrb[0].mxu0 %v2430
      %v2625 = vpop.f32.mrb[0].mxu0
      %v2626 = vadd.f32 0.0, %v2625
      %v2627 = vpop.f32.mrb[0].mxu0
      %2628 = vmatprep.mubr.f32.mxu0 0.0
      %2629 = vmatmul.mubr.f32.gmra.mrb[0].mxu0 %v2431
      %v2630 = vpop.f32.mrb[0].mxu0
      %v2631 = vadd.f32 0.0, %v2630
      %v2632 = vpop.f32.mrb[0].mxu0
      %2633 = vmatprep.mubr.f32.mxu0 0.0
      %2634 = vmatmul.mubr.f32.gmra.mrb[0].mxu0 %v2432
      %v2635 = vpop.f32.mrb[0].mxu0
      %v2636 = vadd.f32 0.0, %v2635
      %v2637 = vpop.f32.mrb[0].mxu0
      %2638 = vmatprep.mubr.f32.mxu0 0.0
      %2639 = vmatmul.mubr.f32.gmra.mrb[0].mxu0 %v2433
      %v2640 = vpop.f32.mrb[0].mxu0
      %v2641 = vadd.f32 0.0, %v2640
      %v2642 = vpop.f32.mrb[0].mxu0
      %2643 = vmatprep.mubr.f32.mxu0 0.0
      %2644 = vmatmul.mubr.f32.gmra.mrb[0].mxu0 %v2434
      %v2645 = vpop.f32.mrb[0].mxu0
      %v2646 = vadd.f32 0.0, %v2645
      %v2647 = vpop.f32.mrb[0].mxu0
      %2648 = vmatprep.mubr.f32.mxu0 0.0
      %2649 = vmatmul.mubr.f32.gmra.mrb[0].mxu0 %v2435
      %v2650 = vpop.f32.mrb[0].mxu0
      %v2651 = vadd.f32 0.0, %v2650
      %v2652 = vpop.f32.mrb[0].mxu0
      %2653 = vmatprep.mubr.f32.mxu0 0.0
      %2654 = vmatmul.mubr.f32.gmra.mrb[0].mxu0 %v2436
      %v2655 = vpop.f32.mrb[0].mxu0
      %v2656 = vadd.f32 0.0, %v2655
      %v2657 = vpop.f32.mrb[0].mxu0
      %2658 = vmatprep.mubr.f32.mxu0 0.0
      %2659 = vmatmul.mubr.f32.gmra.mrb[0].mxu0 %v2437
      %v2660 = vpop.f32.mrb[0].mxu0
      %v2661 = vadd.f32 0.0, %v2660
      %v2662 = vpop.f32.mrb[0].mxu0
      %2663 = vmatprep.mubr.f32.mxu0 0.0
      %2664 = vmatmul.mubr.f32.gmra.mrb[0].mxu0 %v2438
      %v2665 = vpop.f32.mrb[0].mxu0
      %v2666 = vadd.f32 0.0, %v2665
      %v2667 = vpop.f32.mrb[0].mxu0
      %2668 = vmatprep.mubr.f32.mxu0 0.0
      %2669 = vmatmul.mubr.f32.gmra.mrb[0].mxu0 %v2439
      %v2670 = vpop.f32.mrb[0].mxu0
      %v2671 = vadd.f32 0.0, %v2670
      %v2672 = vpop.f32.mrb[0].mxu0
      %2673 = vmatprep.mubr.f32.mxu0 0.0
      %2674 = vmatmul.mubr.f32.gmra.mrb[0].mxu0 %v2440
      %v2675 = vpop.f32.mrb[0].mxu0
      %v2676 = vadd.f32 0.0, %v2675
      %v2677 = vpop.f32.mrb[0].mxu0
      %2678 = vmatprep.mubr.f32.mxu0 0.0
      %2679 = vmatmul.mubr.f32.gmra.mrb[0].mxu0 %v2441
      %v2680 = vpop.f32.mrb[0].mxu0
      %v2681 = vadd.f32 0.0, %v2680
      %v2682 = vpop.f32.mrb[0].mxu0
      %2683 = vdwg.mxu0
      %v2684 = vadd.f32 %v2378, %v2526
      %v2685 = vadd.f32 %v2379, %v2531
      %v2686 = vadd.f32 %v2380, %v2536
      %v2687 = vadd.f32 %v2381, %v2541
      %v2688 = vadd.f32 %v2382, %v2546
      %v2689 = vadd.f32 %v2383, %v2551
      %v2690 = vadd.f32 %v2384, %v2556
      %v2691 = vadd.f32 %v2385, %v2561
      %v2692 = vadd.f32 %v2386, %v2566
      %v2693 = vadd.f32 %v2387, %v2571
      %v2694 = vadd.f32 %v2388, %v2576
      %v2695 = vadd.f32 %v2389, %v2581
      %v2696 = vadd.f32 %v2390, %v2586
      %v2697 = vadd.f32 %v2391, %v2591
      %v2698 = vadd.f32 %v2392, %v2596
      %v2699 = vadd.f32 %v2393, %v2601
      %v2700 = vadd.f32 %v2394, %v2606
      %v2701 = vadd.f32 %v2395, %v2611
      %v2702 = vadd.f32 %v2396, %v2616
      %v2703 = vadd.f32 %v2397, %v2621
      %v2704 = vadd.f32 %v2398, %v2626
      %v2705 = vadd.f32 %v2399, %v2631
      %v2706 = vadd.f32 %v2400, %v2636
      %v2707 = vadd.f32 %v2401, %v2641
      %v2708 = vadd.f32 %v2402, %v2646
      %v2709 = vadd.f32 %v2403, %v2651
      %v2710 = vadd.f32 %v2404, %v2656
      %v2711 = vadd.f32 %v2405, %v2661
      %v2712 = vadd.f32 %v2406, %v2666
      %v2713 = vadd.f32 %v2407, %v2671
      %v2714 = vadd.f32 %v2408, %v2676
      %v2715 = vadd.f32 %v2409, %v2681
      %v2716 = vld [vmem:[%s2103 + $0x2] sm:$0xff]
      %v2717 = vld [vmem:[%s2103 + $0xa] sm:$0xff]
      %v2718 = vld [vmem:[%s2103 + $0x1a] sm:$0xff]
      %v2719 = vld [vmem:[%s2103 + $0x22] sm:$0xff]
      %v2720 = vld [vmem:[%s2103 + $0x32] sm:$0xff]
      %v2721 = vld [vmem:[%s2103 + $0x3a] sm:$0xff]
      %v2722 = vld [vmem:[%s2103 + $0x4a] sm:$0xff]
      %v2723 = vld [vmem:[%s2103 + $0x52] sm:$0xff]
      %v2724 = vld [vmem:[%s2103 + $0x62] sm:$0xff]
      %v2725 = vld [vmem:[%s2103 + $0x6a] sm:$0xff]
      %v2726 = vld [vmem:[%s2103 + $0x7a] sm:$0xff]
      %v2727 = vld [vmem:[%s2103 + $0x82] sm:$0xff]
      %v2728 = vld [vmem:[%s2103 + $0x92] sm:$0xff]
      %v2729 = vld [vmem:[%s2103 + $0x9a] sm:$0xff]
      %v2730 = vld [vmem:[%s2103 + $0xaa] sm:$0xff]
      %v2731 = vld [vmem:[%s2103 + $0xb2] sm:$0xff]
      %v2732 = vld [vmem:[%s2103 + $0xc2] sm:$0xff]
      %v2733 = vld [vmem:[%s2103 + $0xca] sm:$0xff]
      %v2734 = vld [vmem:[%s2103 + $0xda] sm:$0xff]
      %v2735 = vld [vmem:[%s2103 + $0xe2] sm:$0xff]
      %v2736 = vld [vmem:[%s2103 + $0xf2] sm:$0xff]
      %v2737 = vld [vmem:[%s2103 + $0xfa] sm:$0xff]
      %v2738 = vld [vmem:[%s2103 + $0x10a] sm:$0xff]
      %v2739 = vld [vmem:[%s2103 + $0x112] sm:$0xff]
      %v2740 = vld [vmem:[%s2103 + $0x122] sm:$0xff]
      %v2741 = vld [vmem:[%s2103 + $0x12a] sm:$0xff]
      %v2742 = vld [vmem:[%s2103 + $0x13a] sm:$0xff]
      %v2743 = vld [vmem:[%s2103 + $0x142] sm:$0xff]
      %v2744 = vld [vmem:[%s2103 + $0x152] sm:$0xff]
      %v2745 = vld [vmem:[%s2103 + $0x15a] sm:$0xff]
      %v2746 = vld [vmem:[%s2103 + $0x16a] sm:$0xff]
      %v2747 = vld [vmem:[%s2103 + $0x172] sm:$0xff]
      %s2748 = scalar_lea.vmem %s1, 1024
      %v2749 = vld [vmem:[%s2748] sm:$0xff]
      %v2750 = vld [vmem:[%s2748 + $0x8] sm:$0xff]
      %v2751 = vld [vmem:[%s2748 + $0x10] sm:$0xff]
      %v2752 = vld [vmem:[%s2748 + $0x18] sm:$0xff]
      %v2753 = vld [vmem:[%s2748 + $0x20] sm:$0xff]
      %v2754 = vld [vmem:[%s2748 + $0x28] sm:$0xff]
      %v2755 = vld [vmem:[%s2748 + $0x30] sm:$0xff]
      %v2756 = vld [vmem:[%s2748 + $0x38] sm:$0xff]
      %v2757 = vld [vmem:[%s2748 + $0x40] sm:$0xff]
      %v2758 = vld [vmem:[%s2748 + $0x48] sm:$0xff]
      %v2759 = vld [vmem:[%s2748 + $0x50] sm:$0xff]
      %v2760 = vld [vmem:[%s2748 + $0x58] sm:$0xff]
      %v2761 = vld [vmem:[%s2748 + $0x60] sm:$0xff]
      %v2762 = vld [vmem:[%s2748 + $0x68] sm:$0xff]
      %v2763 = vld [vmem:[%s2748 + $0x70] sm:$0xff]
      %v2764 = vld [vmem:[%s2748 + $0x78] sm:$0xff]
      %2765 = vmatprep.subr.mxu0 0.0
      %2766 = vmatpush1.msra.mxu0 %v2749
      %2767 = vmatprep.subr.mxu0 0.0
      %2768 = vmatpush1.msra.mxu0 %v2750
      %2769 = vmatprep.subr.mxu0 0.0
      %2770 = vmatpush1.msra.mxu0 %v2751
      %2771 = vmatprep.subr.mxu0 0.0
      %2772 = vmatpush1.msra.mxu0 %v2752
      %2773 = vmatprep.subr.mxu0 0.0
      %2774 = vmatpush1.msra.mxu0 %v2753
      %2775 = vmatprep.subr.mxu0 0.0
      %2776 = vmatpush1.msra.mxu0 %v2754
      %2777 = vmatprep.subr.mxu0 0.0
      %2778 = vmatpush1.msra.mxu0 %v2755
      %2779 = vmatprep.subr.mxu0 0.0
      %2780 = vmatpush1.msra.mxu0 %v2756
      %2781 = vmatprep.subr.mxu0 0.0
      %2782 = vmatpush1.msra.mxu0 %v2757
      %2783 = vmatprep.subr.mxu0 0.0
      %2784 = vmatpush1.msra.mxu0 %v2758
      %2785 = vmatprep.subr.mxu0 0.0
      %2786 = vmatpush1.msra.mxu0 %v2759
      %2787 = vmatprep.subr.mxu0 0.0
      %2788 = vmatpush1.msra.mxu0 %v2760
      %2789 = vmatprep.subr.mxu0 0.0
      %2790 = vmatpush1.msra.mxu0 %v2761
      %2791 = vmatprep.subr.mxu0 0.0
      %2792 = vmatpush1.msra.mxu0 %v2762
      %2793 = vmatprep.subr.mxu0 0.0
      %2794 = vmatpush1.msra.mxu0 %v2763
      %2795 = vmatprep.subr.mxu0 0.0
      %2796 = vmatpush1.msra.mxu0 %v2764
      %2797 = vmatprep.subr.mxu0 0.0
      %2798 = vmatpush1.msra.mxu0 0.0
      %2799 = vmatprep.subr.mxu0 0.0
      %2800 = vmatpush1.msra.mxu0 0.0
      %2801 = vmatprep.subr.mxu0 0.0
      %2802 = vmatpush1.msra.mxu0 0.0
      %2803 = vmatprep.subr.mxu0 0.0
      %2804 = vmatpush1.msra.mxu0 0.0
      %2805 = vmatprep.subr.mxu0 0.0
      %2806 = vmatpush1.msra.mxu0 0.0
      %2807 = vmatprep.subr.mxu0 0.0
      %2808 = vmatpush1.msra.mxu0 0.0
      %2809 = vmatprep.subr.mxu0 0.0
      %2810 = vmatpush1.msra.mxu0 0.0
      %2811 = vmatprep.subr.mxu0 0.0
      %2812 = vmatpush1.msra.mxu0 0.0
      %2813 = vmatprep.subr.mxu0 0.0
      %2814 = vmatpush1.msra.mxu0 0.0
      %2815 = vmatprep.subr.mxu0 0.0
      %2816 = vmatpush1.msra.mxu0 0.0
      %2817 = vmatprep.subr.mxu0 0.0
      %2818 = vmatpush1.msra.mxu0 0.0
      %2819 = vmatprep.subr.mxu0 0.0
      %2820 = vmatpush1.msra.mxu0 0.0
      %2821 = vmatprep.subr.mxu0 0.0
      %2822 = vmatpush1.msra.mxu0 0.0
      %2823 = vmatprep.subr.mxu0 0.0
      %2824 = vmatpush1.msra.mxu0 0.0
      %2825 = vmatprep.subr.mxu0 0.0
      %2826 = vmatpush1.msra.mxu0 0.0
      %2827 = vmatprep.subr.mxu0 0.0
      %2828 = vmatpush1.msra.mxu0 0.0
      %2829 = vmatprep.mubr.f32.mxu0 0.0
      %2830 = vmatmul.mubr.f32.gmra.mrb[0].mxu0 %v2716
      %v2831 = vpop.f32.mrb[0].mxu0
      %v2832 = vadd.f32 0.0, %v2831
      %v2833 = vpop.f32.mrb[0].mxu0
      %2834 = vmatprep.mubr.f32.mxu0 0.0
      %2835 = vmatmul.mubr.f32.gmra.mrb[0].mxu0 %v2717
      %v2836 = vpop.f32.mrb[0].mxu0
      %v2837 = vadd.f32 0.0, %v2836
      %v2838 = vpop.f32.mrb[0].mxu0
      %2839 = vmatprep.mubr.f32.mxu0 0.0
      %2840 = vmatmul.mubr.f32.gmra.mrb[0].mxu0 %v2718
      %v2841 = vpop.f32.mrb[0].mxu0
      %v2842 = vadd.f32 0.0, %v2841
      %v2843 = vpop.f32.mrb[0].mxu0
      %2844 = vmatprep.mubr.f32.mxu0 0.0
      %2845 = vmatmul.mubr.f32.gmra.mrb[0].mxu0 %v2719
      %v2846 = vpop.f32.mrb[0].mxu0
      %v2847 = vadd.f32 0.0, %v2846
      %v2848 = vpop.f32.mrb[0].mxu0
      %2849 = vmatprep.mubr.f32.mxu0 0.0
      %2850 = vmatmul.mubr.f32.gmra.mrb[0].mxu0 %v2720
      %v2851 = vpop.f32.mrb[0].mxu0
      %v2852 = vadd.f32 0.0, %v2851
      %v2853 = vpop.f32.mrb[0].mxu0
      %2854 = vmatprep.mubr.f32.mxu0 0.0
      %2855 = vmatmul.mubr.f32.gmra.mrb[0].mxu0 %v2721
      %v2856 = vpop.f32.mrb[0].mxu0
      %v2857 = vadd.f32 0.0, %v2856
      %v2858 = vpop.f32.mrb[0].mxu0
      %2859 = vmatprep.mubr.f32.mxu0 0.0
      %2860 = vmatmul.mubr.f32.gmra.mrb[0].mxu0 %v2722
      %v2861 = vpop.f32.mrb[0].mxu0
      %v2862 = vadd.f32 0.0, %v2861
      %v2863 = vpop.f32.mrb[0].mxu0
      %2864 = vmatprep.mubr.f32.mxu0 0.0
      %2865 = vmatmul.mubr.f32.gmra.mrb[0].mxu0 %v2723
      %v2866 = vpop.f32.mrb[0].mxu0
      %v2867 = vadd.f32 0.0, %v2866
      %v2868 = vpop.f32.mrb[0].mxu0
      %2869 = vmatprep.mubr.f32.mxu0 0.0
      %2870 = vmatmul.mubr.f32.gmra.mrb[0].mxu0 %v2724
      %v2871 = vpop.f32.mrb[0].mxu0
      %v2872 = vadd.f32 0.0, %v2871
      %v2873 = vpop.f32.mrb[0].mxu0
      %2874 = vmatprep.mubr.f32.mxu0 0.0
      %2875 = vmatmul.mubr.f32.gmra.mrb[0].mxu0 %v2725
      %v2876 = vpop.f32.mrb[0].mxu0
      %v2877 = vadd.f32 0.0, %v2876
      %v2878 = vpop.f32.mrb[0].mxu0
      %2879 = vmatprep.mubr.f32.mxu0 0.0
      %2880 = vmatmul.mubr.f32.gmra.mrb[0].mxu0 %v2726
      %v2881 = vpop.f32.mrb[0].mxu0
      %v2882 = vadd.f32 0.0, %v2881
      %v2883 = vpop.f32.mrb[0].mxu0
      %2884 = vmatprep.mubr.f32.mxu0 0.0
      %2885 = vmatmul.mubr.f32.gmra.mrb[0].mxu0 %v2727
      %v2886 = vpop.f32.mrb[0].mxu0
      %v2887 = vadd.f32 0.0, %v2886
      %v2888 = vpop.f32.mrb[0].mxu0
      %2889 = vmatprep.mubr.f32.mxu0 0.0
      %2890 = vmatmul.mubr.f32.gmra.mrb[0].mxu0 %v2728
      %v2891 = vpop.f32.mrb[0].mxu0
      %v2892 = vadd.f32 0.0, %v2891
      %v2893 = vpop.f32.mrb[0].mxu0
      %2894 = vmatprep.mubr.f32.mxu0 0.0
      %2895 = vmatmul.mubr.f32.gmra.mrb[0].mxu0 %v2729
      %v2896 = vpop.f32.mrb[0].mxu0
      %v2897 = vadd.f32 0.0, %v2896
      %v2898 = vpop.f32.mrb[0].mxu0
      %2899 = vmatprep.mubr.f32.mxu0 0.0
      %2900 = vmatmul.mubr.f32.gmra.mrb[0].mxu0 %v2730
      %v2901 = vpop.f32.mrb[0].mxu0
      %v2902 = vadd.f32 0.0, %v2901
      %v2903 = vpop.f32.mrb[0].mxu0
      %2904 = vmatprep.mubr.f32.mxu0 0.0
      %2905 = vmatmul.mubr.f32.gmra.mrb[0].mxu0 %v2731
      %v2906 = vpop.f32.mrb[0].mxu0
      %v2907 = vadd.f32 0.0, %v2906
      %v2908 = vpop.f32.mrb[0].mxu0
      %2909 = vmatprep.mubr.f32.mxu0 0.0
      %2910 = vmatmul.mubr.f32.gmra.mrb[0].mxu0 %v2732
      %v2911 = vpop.f32.mrb[0].mxu0
      %v2912 = vadd.f32 0.0, %v2911
      %v2913 = vpop.f32.mrb[0].mxu0
      %2914 = vmatprep.mubr.f32.mxu0 0.0
      %2915 = vmatmul.mubr.f32.gmra.mrb[0].mxu0 %v2733
      %v2916 = vpop.f32.mrb[0].mxu0
      %v2917 = vadd.f32 0.0, %v2916
      %v2918 = vpop.f32.mrb[0].mxu0
      %2919 = vmatprep.mubr.f32.mxu0 0.0
      %2920 = vmatmul.mubr.f32.gmra.mrb[0].mxu0 %v2734
      %v2921 = vpop.f32.mrb[0].mxu0
      %v2922 = vadd.f32 0.0, %v2921
      %v2923 = vpop.f32.mrb[0].mxu0
      %2924 = vmatprep.mubr.f32.mxu0 0.0
      %2925 = vmatmul.mubr.f32.gmra.mrb[0].mxu0 %v2735
      %v2926 = vpop.f32.mrb[0].mxu0
      %v2927 = vadd.f32 0.0, %v2926
      %v2928 = vpop.f32.mrb[0].mxu0
      %2929 = vmatprep.mubr.f32.mxu0 0.0
      %2930 = vmatmul.mubr.f32.gmra.mrb[0].mxu0 %v2736
      %v2931 = vpop.f32.mrb[0].mxu0
      %v2932 = vadd.f32 0.0, %v2931
      %v2933 = vpop.f32.mrb[0].mxu0
      %2934 = vmatprep.mubr.f32.mxu0 0.0
      %2935 = vmatmul.mubr.f32.gmra.mrb[0].mxu0 %v2737
      %v2936 = vpop.f32.mrb[0].mxu0
      %v2937 = vadd.f32 0.0, %v2936
      %v2938 = vpop.f32.mrb[0].mxu0
      %2939 = vmatprep.mubr.f32.mxu0 0.0
      %2940 = vmatmul.mubr.f32.gmra.mrb[0].mxu0 %v2738
      %v2941 = vpop.f32.mrb[0].mxu0
      %v2942 = vadd.f32 0.0, %v2941
      %v2943 = vpop.f32.mrb[0].mxu0
      %2944 = vmatprep.mubr.f32.mxu0 0.0
      %2945 = vmatmul.mubr.f32.gmra.mrb[0].mxu0 %v2739
      %v2946 = vpop.f32.mrb[0].mxu0
      %v2947 = vadd.f32 0.0, %v2946
      %v2948 = vpop.f32.mrb[0].mxu0
      %2949 = vmatprep.mubr.f32.mxu0 0.0
      %2950 = vmatmul.mubr.f32.gmra.mrb[0].mxu0 %v2740
      %v2951 = vpop.f32.mrb[0].mxu0
      %v2952 = vadd.f32 0.0, %v2951
      %v2953 = vpop.f32.mrb[0].mxu0
      %2954 = vmatprep.mubr.f32.mxu0 0.0
      %2955 = vmatmul.mubr.f32.gmra.mrb[0].mxu0 %v2741
      %v2956 = vpop.f32.mrb[0].mxu0
      %v2957 = vadd.f32 0.0, %v2956
      %v2958 = vpop.f32.mrb[0].mxu0
      %2959 = vmatprep.mubr.f32.mxu0 0.0
      %2960 = vmatmul.mubr.f32.gmra.mrb[0].mxu0 %v2742
      %v2961 = vpop.f32.mrb[0].mxu0
      %v2962 = vadd.f32 0.0, %v2961
      %v2963 = vpop.f32.mrb[0].mxu0
      %2964 = vmatprep.mubr.f32.mxu0 0.0
      %2965 = vmatmul.mubr.f32.gmra.mrb[0].mxu0 %v2743
      %v2966 = vpop.f32.mrb[0].mxu0
      %v2967 = vadd.f32 0.0, %v2966
      %v2968 = vpop.f32.mrb[0].mxu0
      %2969 = vmatprep.mubr.f32.mxu0 0.0
      %2970 = vmatmul.mubr.f32.gmra.mrb[0].mxu0 %v2744
      %v2971 = vpop.f32.mrb[0].mxu0
      %v2972 = vadd.f32 0.0, %v2971
      %v2973 = vpop.f32.mrb[0].mxu0
      %2974 = vmatprep.mubr.f32.mxu0 0.0
      %2975 = vmatmul.mubr.f32.gmra.mrb[0].mxu0 %v2745
      %v2976 = vpop.f32.mrb[0].mxu0
      %v2977 = vadd.f32 0.0, %v2976
      %v2978 = vpop.f32.mrb[0].mxu0
      %2979 = vmatprep.mubr.f32.mxu0 0.0
      %2980 = vmatmul.mubr.f32.gmra.mrb[0].mxu0 %v2746
      %v2981 = vpop.f32.mrb[0].mxu0
      %v2982 = vadd.f32 0.0, %v2981
      %v2983 = vpop.f32.mrb[0].mxu0
      %2984 = vmatprep.mubr.f32.mxu0 0.0
      %2985 = vmatmul.mubr.f32.gmra.mrb[0].mxu0 %v2747
      %v2986 = vpop.f32.mrb[0].mxu0
      %v2987 = vadd.f32 0.0, %v2986
      %v2988 = vpop.f32.mrb[0].mxu0
      %2989 = vdwg.mxu0
      %v2990 = vadd.f32 %v2684, %v2832
      %v2991 = vadd.f32 %v2685, %v2837
      %v2992 = vadd.f32 %v2686, %v2842
      %v2993 = vadd.f32 %v2687, %v2847
      %v2994 = vadd.f32 %v2688, %v2852
      %v2995 = vadd.f32 %v2689, %v2857
      %v2996 = vadd.f32 %v2690, %v2862
      %v2997 = vadd.f32 %v2691, %v2867
      %v2998 = vadd.f32 %v2692, %v2872
      %v2999 = vadd.f32 %v2693, %v2877
      %v3000 = vadd.f32 %v2694, %v2882
      %v3001 = vadd.f32 %v2695, %v2887
      %v3002 = vadd.f32 %v2696, %v2892
      %v3003 = vadd.f32 %v2697, %v2897
      %v3004 = vadd.f32 %v2698, %v2902
      %v3005 = vadd.f32 %v2699, %v2907
      %v3006 = vadd.f32 %v2700, %v2912
      %v3007 = vadd.f32 %v2701, %v2917
      %v3008 = vadd.f32 %v2702, %v2922
      %v3009 = vadd.f32 %v2703, %v2927
      %v3010 = vadd.f32 %v2704, %v2932
      %v3011 = vadd.f32 %v2705, %v2937
      %v3012 = vadd.f32 %v2706, %v2942
      %v3013 = vadd.f32 %v2707, %v2947
      %v3014 = vadd.f32 %v2708, %v2952
      %v3015 = vadd.f32 %v2709, %v2957
      %v3016 = vadd.f32 %v2710, %v2962
      %v3017 = vadd.f32 %v2711, %v2967
      %v3018 = vadd.f32 %v2712, %v2972
      %v3019 = vadd.f32 %v2713, %v2977
      %v3020 = vadd.f32 %v2714, %v2982
      %v3021 = vadd.f32 %v2715, %v2987
      %v3022 = vld [vmem:[%s2] sm:$0x1]
      %v3024 = vlaneseq
      %v3025 = vshrl.u32 %v3024, 7
      %v3026 = vsub.s32 0, %v3025
      %v3027 = vrot.slane %v3022, %v3026
      %v3029 = vadd.f32 %v2990, %v3027
      %v3030 = vadd.f32 %v2991, %v3027
      %v3031 = vadd.f32 %v2992, %v3027
      %v3032 = vadd.f32 %v2993, %v3027
      %v3033 = vadd.f32 %v2994, %v3027
      %v3034 = vadd.f32 %v2995, %v3027
      %v3035 = vadd.f32 %v2996, %v3027
      %v3036 = vadd.f32 %v2997, %v3027
      %v3037 = vadd.f32 %v2998, %v3027
      %v3038 = vadd.f32 %v2999, %v3027
      %v3039 = vadd.f32 %v3000, %v3027
      %v3040 = vadd.f32 %v3001, %v3027
      %v3041 = vadd.f32 %v3002, %v3027
      %v3042 = vadd.f32 %v3003, %v3027
      %v3043 = vadd.f32 %v3004, %v3027
      %v3044 = vadd.f32 %v3005, %v3027
      %v3045 = vadd.f32 %v3006, %v3027
      %v3046 = vadd.f32 %v3007, %v3027
      %v3047 = vadd.f32 %v3008, %v3027
      %v3048 = vadd.f32 %v3009, %v3027
      %v3049 = vadd.f32 %v3010, %v3027
      %v3050 = vadd.f32 %v3011, %v3027
      %v3051 = vadd.f32 %v3012, %v3027
      %v3052 = vadd.f32 %v3013, %v3027
      %v3053 = vadd.f32 %v3014, %v3027
      %v3054 = vadd.f32 %v3015, %v3027
      %v3055 = vadd.f32 %v3016, %v3027
      %v3056 = vadd.f32 %v3017, %v3027
      %v3057 = vadd.f32 %v3018, %v3027
      %v3058 = vadd.f32 %v3019, %v3027
      %v3059 = vadd.f32 %v3020, %v3027
      %v3060 = vadd.f32 %v3021, %v3027
      %v3061 = vadd.f32 %v3029, %v3030
      %v3062 = vadd.f32 %v3061, %v3031
      %v3063 = vadd.f32 %v3062, %v3032
      %v3064 = vadd.f32 %v3063, %v3033
      %v3065 = vadd.f32 %v3064, %v3034
      %v3066 = vadd.f32 %v3065, %v3035
      %v3067 = vadd.f32 %v3066, %v3036
      %v3068 = vadd.f32 %v3067, %v3037
      %v3069 = vadd.f32 %v3068, %v3038
      %v3070 = vadd.f32 %v3069, %v3039
      %v3071 = vadd.f32 %v3070, %v3040
      %v3072 = vadd.f32 %v3071, %v3041
      %v3073 = vadd.f32 %v3072, %v3042
      %v3074 = vadd.f32 %v3073, %v3043
      %v3075 = vadd.f32 %v3074, %v3044
      %v3076 = vadd.f32 %v3075, %v3045
      %v3077 = vadd.f32 %v3076, %v3046
      %v3078 = vadd.f32 %v3077, %v3047
      %v3079 = vadd.f32 %v3078, %v3048
      %v3080 = vadd.f32 %v3079, %v3049
      %v3081 = vadd.f32 %v3080, %v3050
      %v3082 = vadd.f32 %v3081, %v3051
      %v3083 = vadd.f32 %v3082, %v3052
      %v3084 = vadd.f32 %v3083, %v3053
      %v3085 = vadd.f32 %v3084, %v3054
      %v3086 = vadd.f32 %v3085, %v3055
      %v3087 = vadd.f32 %v3086, %v3056
      %v3088 = vadd.f32 %v3087, %v3057
      %v3089 = vadd.f32 %v3088, %v3058
      %v3090 = vadd.f32 %v3089, %v3059
      %v3091 = vadd.f32 %v3090, %v3060
      %v3092 = vrot.slane %v3091, 4
      %v3093 = vadd.f32 %v3091, %v3092
      %v3094 = vrot.slane %v3093, 2
      %v3095 = vadd.f32 %v3093, %v3094
      %v3096 = vrot.slane %v3095, 1
      %v3097 = vadd.f32 %v3095, %v3096
      %v3098 = vmul.f32 %v3029, %v3029
      %v3099 = vmul.f32 %v3030, %v3030
      %v3100 = vmul.f32 %v3031, %v3031
      %v3101 = vmul.f32 %v3032, %v3032
      %v3102 = vmul.f32 %v3033, %v3033
      %v3103 = vmul.f32 %v3034, %v3034
      %v3104 = vmul.f32 %v3035, %v3035
      %v3105 = vmul.f32 %v3036, %v3036
      %v3106 = vmul.f32 %v3037, %v3037
      %v3107 = vmul.f32 %v3038, %v3038
      %v3108 = vmul.f32 %v3039, %v3039
      %v3109 = vmul.f32 %v3040, %v3040
      %v3110 = vmul.f32 %v3041, %v3041
      %v3111 = vmul.f32 %v3042, %v3042
      %v3112 = vmul.f32 %v3043, %v3043
      %v3113 = vmul.f32 %v3044, %v3044
      %v3114 = vmul.f32 %v3045, %v3045
      %v3115 = vmul.f32 %v3046, %v3046
      %v3116 = vmul.f32 %v3047, %v3047
      %v3117 = vmul.f32 %v3048, %v3048
      %v3118 = vmul.f32 %v3049, %v3049
      %v3119 = vmul.f32 %v3050, %v3050
      %v3120 = vmul.f32 %v3051, %v3051
      %v3121 = vmul.f32 %v3052, %v3052
      %v3122 = vmul.f32 %v3053, %v3053
      %v3123 = vmul.f32 %v3054, %v3054
      %v3124 = vmul.f32 %v3055, %v3055
      %v3125 = vmul.f32 %v3056, %v3056
      %v3126 = vmul.f32 %v3057, %v3057
      %v3127 = vmul.f32 %v3058, %v3058
      %v3128 = vmul.f32 %v3059, %v3059
      %v3129 = vmul.f32 %v3060, %v3060
      %v3130 = vadd.f32 %v3098, %v3099
      %v3131 = vadd.f32 %v3130, %v3100
      %v3132 = vadd.f32 %v3131, %v3101
      %v3133 = vadd.f32 %v3132, %v3102
      %v3134 = vadd.f32 %v3133, %v3103
      %v3135 = vadd.f32 %v3134, %v3104
      %v3136 = vadd.f32 %v3135, %v3105
      %v3137 = vadd.f32 %v3136, %v3106
      %v3138 = vadd.f32 %v3137, %v3107
      %v3139 = vadd.f32 %v3138, %v3108
      %v3140 = vadd.f32 %v3139, %v3109
      %v3141 = vadd.f32 %v3140, %v3110
      %v3142 = vadd.f32 %v3141, %v3111
      %v3143 = vadd.f32 %v3142, %v3112
      %v3144 = vadd.f32 %v3143, %v3113
      %v3145 = vadd.f32 %v3144, %v3114
      %v3146 = vadd.f32 %v3145, %v3115
      %v3147 = vadd.f32 %v3146, %v3116
      %v3148 = vadd.f32 %v3147, %v3117
      %v3149 = vadd.f32 %v3148, %v3118
      %v3150 = vadd.f32 %v3149, %v3119
      %v3151 = vadd.f32 %v3150, %v3120
      %v3152 = vadd.f32 %v3151, %v3121
      %v3153 = vadd.f32 %v3152, %v3122
      %v3154 = vadd.f32 %v3153, %v3123
      %v3155 = vadd.f32 %v3154, %v3124
      %v3156 = vadd.f32 %v3155, %v3125
      %v3157 = vadd.f32 %v3156, %v3126
      %v3158 = vadd.f32 %v3157, %v3127
      %v3159 = vadd.f32 %v3158, %v3128
      %v3160 = vadd.f32 %v3159, %v3129
      %v3161 = vrot.slane %v3160, 4
      %v3162 = vadd.f32 %v3160, %v3161
      %v3163 = vrot.slane %v3162, 2
      %v3164 = vadd.f32 %v3162, %v3163
      %v3165 = vrot.slane %v3164, 1
      %v3166 = vadd.f32 %v3164, %v3165
      %vm3167 = vcmask 1040384
      %v3168 = vsel %vm3167, %v3097, %v3166
      %3169 = vst [vmem:[%s208] sm:$0x3] %v3168
      %3170 = vst [vmem:[%s204] sm:$0xff] %v3029
      %3171 = vst [vmem:[%s204 + $0x8] sm:$0xff] %v3030
      %3172 = vst [vmem:[%s204 + $0x10] sm:$0xff] %v3031
      %3173 = vst [vmem:[%s204 + $0x18] sm:$0xff] %v3032
      %3174 = vst [vmem:[%s204 + $0x20] sm:$0xff] %v3033
      %3175 = vst [vmem:[%s204 + $0x28] sm:$0xff] %v3034
      %3176 = vst [vmem:[%s204 + $0x30] sm:$0xff] %v3035
      %3177 = vst [vmem:[%s204 + $0x38] sm:$0xff] %v3036
      %3178 = vst [vmem:[%s204 + $0x40] sm:$0xff] %v3037
      %3179 = vst [vmem:[%s204 + $0x48] sm:$0xff] %v3038
      %3180 = vst [vmem:[%s204 + $0x50] sm:$0xff] %v3039
      %3181 = vst [vmem:[%s204 + $0x58] sm:$0xff] %v3040
      %3182 = vst [vmem:[%s204 + $0x60] sm:$0xff] %v3041
      %3183 = vst [vmem:[%s204 + $0x68] sm:$0xff] %v3042
      %3184 = vst [vmem:[%s204 + $0x70] sm:$0xff] %v3043
      %3185 = vst [vmem:[%s204 + $0x78] sm:$0xff] %v3044
      %3186 = vst [vmem:[%s204 + $0x80] sm:$0xff] %v3045
      %3187 = vst [vmem:[%s204 + $0x88] sm:$0xff] %v3046
      %3188 = vst [vmem:[%s204 + $0x90] sm:$0xff] %v3047
      %3189 = vst [vmem:[%s204 + $0x98] sm:$0xff] %v3048
      %3190 = vst [vmem:[%s204 + $0xa0] sm:$0xff] %v3049
      %3191 = vst [vmem:[%s204 + $0xa8] sm:$0xff] %v3050
      %3192 = vst [vmem:[%s204 + $0xb0] sm:$0xff] %v3051
      %3193 = vst [vmem:[%s204 + $0xb8] sm:$0xff] %v3052
      %3194 = vst [vmem:[%s204 + $0xc0] sm:$0xff] %v3053
      %3195 = vst [vmem:[%s204 + $0xc8] sm:$0xff] %v3054
      %3196 = vst [vmem:[%s204 + $0xd0] sm:$0xff] %v3055
      %3197 = vst [vmem:[%s204 + $0xd8] sm:$0xff] %v3056
      %3198 = vst [vmem:[%s204 + $0xe0] sm:$0xff] %v3057
      %3199 = vst [vmem:[%s204 + $0xe8] sm:$0xff] %v3058
      %3200 = vst [vmem:[%s204 + $0xf0] sm:$0xff] %v3059
      %3201 = vst [vmem:[%s204 + $0xf8] sm:$0xff] %v3060
      %p3202 = scmp.lt.s32.totalorder %s16, 1
      %s3203 = scalar_select %p3202, %s16, 1
      %s3204 = smul.addr %s3203, 32
      %s3205 = smul.addr %s3204, 8
      %s3206 = scalar_lea.vmem %s3, %s3205
      %p3207 = scmp.lt.s32.totalorder %s16, 1
      %s3208 = scalar_select %p3207, %s16, 1
      %s3209 = smul.addr %s3208, 2
      %s3210 = scalar_lea.vmem %s4, %s3209
      // Predicated region
      $region37: #{residual_block_forward.3} parent=31 // pred_check
        %p3211 = pneg %p102
      $region38: #{residual_block_forward.3} parent=31 // pred_check_branch
        %3213 = sbr.rel (%p3211) target = $region40
      $region39: #{residual_block_forward.3} parent=31 // pred_region
        _
      $region40: #{residual_block_forward.3} parent=31 // pred_fallthru
        _
      // Predicated region
      $region41: #{residual_block_forward.3} parent=31 // pred_check
        %p3214 = pneg %p128
      $region42: #{residual_block_forward.3} parent=31 // pred_check_branch
        %3216 = sbr.rel (%p3214) target = $region44
      $region43: #{residual_block_forward.3} parent=31 // pred_region
        _
      $region44: #{residual_block_forward.3} parent=31 // pred_fallthru
        _
    $region32: #{residual_block_forward.3} parent=5 // pred_fallthru
      _
    %p3217 = scmp.le.s32.totalorder 2, %s11
    // Predicated region
    $region45: #{residual_block_forward.3} parent=5 // pred_check
      %p3218 = pneg %p3217
    $region46: #{residual_block_forward.3} parent=5 // pred_check_branch
      %3220 = sbr.rel (%p3218) target = $region48
    $region47: #{residual_block_forward.3} parent=5 // pred_region
      %s3221 = ssub.s32 %s11, 2
      // Predicated region
      $region49: #{residual_block_forward.3} parent=47 // pred_check
        %p3222 = pneg %p108
      $region50: #{residual_block_forward.3} parent=47 // pred_check_branch
        %3224 = sbr.rel (%p3222) target = $region52
      $region51: #{residual_block_forward.3} parent=47 // pred_region
        %p3225 = scmp.lt.s32.totalorder %s17, 1
        %s3226 = scalar_select %p3225, %s17, 1
        %s3227 = smul.addr %s3226, 32
        %s3228 = smul.addr %s3227, 8
        %s3229 = scalar_lea.vmem %s3, %s3228
      $region52: #{residual_block_forward.3} parent=47 // pred_fallthru
        _
      // Predicated region
      $region53: #{residual_block_forward.3} parent=47 // pred_check
        %p3230 = pneg %p134
      $region54: #{residual_block_forward.3} parent=47 // pred_check_branch
        %3232 = sbr.rel (%p3230) target = $region56
      $region55: #{residual_block_forward.3} parent=47 // pred_region
        %p3233 = scmp.lt.s32.totalorder %s17, 1
        %s3234 = scalar_select %p3233, %s17, 1
        %s3235 = smul.addr %s3234, 2
        %s3236 = scalar_lea.vmem %s4, %s3235
      $region56: #{residual_block_forward.3} parent=47 // pred_fallthru
        _
    $region48: #{residual_block_forward.3} parent=5 // pred_fallthru
      _
  $region6: #{residual_block_forward.3} parent=0 // loop_footer
    %s15 = sadd.s32 1, %s11
  $region7: #{residual_block_forward.3} parent=0 // loop_footer_branch
    %10 = sbr.rel target = $region3
  $region8: #{residual_block_forward.3} parent=0 // loop_exit
    _

</llo_original>
